<compile_context>
chip_gen: v7x
topology: tpu7x:2x2x1
jax: 0.10.0
libtpu: 0.0.40
codegen_flags: <defaults>
</compile_context>

<pallas_src>
import jax
import jax.numpy as jnp
from jax import lax
from jax.experimental import pallas as pl
from jax.experimental.pallas import tpu as pltpu

BN_EPS = 1e-5
LANE = 128
# MXU-operand / HBM-intermediate dtype.  Set to jnp.float32 for exact validation.
MXU_DTYPE = jnp.bfloat16


def _round_up(x, m):
    return (x + m - 1) // m * m


def _pick_l_tile(L, cap=1024):
    """Largest divisor of L that is a multiple of 8 and <= cap (else full L)."""
    best = None
    c = 8
    while c <= min(L, cap):
        if L % c == 0:
            best = c
        c += 8
    return best if best is not None else L


def _vmem_limit_bytes():
    """Per-generation VMEM scoped limit (v7x has 64 MiB physical, v5e/v6e 128 MiB)."""
    try:
        cap = pltpu.get_tpu_info().vmem_capacity_bytes
        return max(32 * 1024 * 1024, min(cap // 2, 64 * 1024 * 1024))
    except Exception:
        return 32 * 1024 * 1024


# ----------------------------- kernel helpers --------------------------------
def _packed_taps(act, L):
    """Pack the three k=3 conv taps of an unpadded (L, C) slab along K.

    Returns (L, 3C) in MXU_DTYPE laid out as [x[l-1] | x[l] | x[l+1]] with the
    conv zero-padding handled by masking the wrapped roll rows (XLU roll, VPU
    select -- both off the MXU/DMA critical path).
    """
    rows = lax.broadcasted_iota(jnp.int32, act.shape, 0)
    left = jnp.where(rows >= 1, pltpu.roll(act, 1, axis=0),
                     jnp.zeros_like(act))                      # x[l-1], x[-1]=0
    right = jnp.where(rows <= L - 2, pltpu.roll(act, L - 1, axis=0),
                      jnp.zeros_like(act))                     # x[l+1], x[L]=0
    return jnp.concatenate([left, act, right], axis=1).astype(MXU_DTYPE)


def _accum_stats(st_ref, y, is_first):
    """Accumulate per-channel [sum; sum-of-squares] of y (L, C) into st_ref (1,2,C)."""
    @pl.when(is_first)
    def _():
        st_ref[...] = jnp.zeros_like(st_ref)

    st = jnp.concatenate([jnp.sum(y, axis=0, keepdims=True),
                          jnp.sum(y * y, axis=0, keepdims=True)], axis=0)
    st_ref[...] += st[None]                                    # one (2, C) RMW


# ------------------------------ kernel bodies --------------------------------
def _make_conv1_kernel(L, Cout_p, has_ds):
    """conv1 (taps packed along K) + fused 1x1 downsample (stats only)."""
    if has_ds:
        def kernel(x_ref, w_ref, h_ref, st1_ref, std_ref):
            first = pl.program_id(1) == 0
            lhs = _packed_taps(x_ref[0].astype(jnp.float32), L)   # (L, 3*Cin_p)
            y = jnp.dot(lhs, w_ref[...], preferred_element_type=jnp.float32)
            h = y[:, :Cout_p]                                     # conv1 output
            h_ref[...] = h.astype(h_ref.dtype)[None]
            _accum_stats(st1_ref, h, first)
            _accum_stats(std_ref, y[:, Cout_p:], first)           # downsample stats
    else:
        def kernel(x_ref, w_ref, h_ref, st1_ref):
            first = pl.program_id(1) == 0
            lhs = _packed_taps(x_ref[0].astype(jnp.float32), L)
            h = jnp.dot(lhs, w_ref[...], preferred_element_type=jnp.float32)
            h_ref[...] = h.astype(h_ref.dtype)[None]
            _accum_stats(st1_ref, h, first)
    return kernel


def _make_affine_conv_kernel(L):
    """per-channel BN-affine + ReLU of the bf16 input -> K-packed 3-tap conv -> stats."""
    def kernel(a_ref, sc_ref, sh_ref, w_ref, h_ref, st_ref):
        first = pl.program_id(1) == 0
        a = a_ref[0].astype(jnp.float32)                          # (L, Cin) f32
        act = jnp.maximum(a * sc_ref[...] + sh_ref[...], 0.0)
        h = jnp.dot(_packed_taps(act, L), w_ref[...],
                    preferred_element_type=jnp.float32)           # (L, Cout) f32
        h_ref[...] = h.astype(h_ref.dtype)[None]
        _accum_stats(st_ref, h, first)
    return kernel


def _make_finalize_kernel(Cout, has_ds):
    """out = relu(BN3(h3) + BNd(x @ wd)) (or + x identity), written as NCL block."""
    if has_ds:
        def kernel(h3_ref, x_ref, wd_ref, s3_ref, sd_ref, sh_ref, o_ref):
            h3 = h3_ref[0].astype(jnp.float32)                    # (tL, Cout_p)
            idn = jnp.dot(x_ref[0], wd_ref[...],
                          preferred_element_type=jnp.float32)     # recomputed 1x1
            y = jnp.maximum(h3 * s3_ref[...] + idn * sd_ref[...] + sh_ref[...], 0.0)
            o_ref[...] = jnp.transpose(y)[:Cout, :][None]         # NCL, lane-dense in L
    else:
        def kernel(h3_ref, x_ref, s3_ref, sd_ref, sh_ref, o_ref):
            h3 = h3_ref[0].astype(jnp.float32)
            idn = x_ref[0].astype(jnp.float32)                    # pure identity residual
            y = jnp.maximum(h3 * s3_ref[...] + idn * sd_ref[...] + sh_ref[...], 0.0)
            o_ref[...] = jnp.transpose(y)[:Cout, :][None]
    return kernel


# --------------------------------- wrapper ------------------------------------
def resnet_block(x_ncl, p):
    """ResNet_Block forward (stride=1).  x_ncl: (B, Cin, L) f32 -> (B, Cout, L) f32."""
    B, Cin, L = x_ncl.shape
    Cout = p["w1"].shape[0]
    Cin_p, Cout_p = _round_up(Cin, LANE), _round_up(Cout, LANE)
    n_elems = float(B * L)
    has_downsample = (Cin != Cout)                # stride is fixed to 1 here

    # split the batch grid across cores (useful on v7x; serial elsewhere)
    ncore = 2 if (B % 2 == 0 and B >= 2) else 1
    Bc = B // ncore
    vmem_limit = _vmem_limit_bytes()
    cparams_conv = pltpu.CompilerParams(
        dimension_semantics=("parallel", "arbitrary"), vmem_limit_bytes=vmem_limit)

    # channels-last bf16 input, lane-padded channels (read by stage 1 and finalize)
    x_blc = jnp.transpose(x_ncl, (0, 2, 1)).astype(jnp.float32)
    x_blc = jnp.pad(x_blc, ((0, 0), (0, 0), (0, Cin_p - Cin))).astype(MXU_DTYPE)

    def conv_w(w, ci, co, cip, cop):              # torch (O, I, 3) -> K-packed (3*I_p, O_p)
        wt = jnp.transpose(w, (2, 1, 0)).astype(jnp.float32)      # (3, I, O) tap-major
        wt = jnp.pad(wt, ((0, 0), (0, cip - ci), (0, cop - co)))
        return wt.reshape(3 * cip, cop).astype(MXU_DTYPE)

    def chan_vec(v, c, cp):
        return jnp.pad(v.astype(jnp.float32), (0, cp - c))

    w1 = conv_w(p["w1"], Cin, Cout, Cin_p, Cout_p)
    w2 = conv_w(p["w2"], Cout, Cin, Cout_p, Cin_p)
    w3 = conv_w(p["w3"], Cin, Cout, Cin_p, Cout_p)
    g1, be1 = chan_vec(p["g1"], Cout, Cout_p), chan_vec(p["be1"], Cout, Cout_p)
    g2, be2 = chan_vec(p["g2"], Cin, Cin_p), chan_vec(p["be2"], Cin, Cin_p)
    g3, be3 = chan_vec(p["g3"], Cout, Cout_p), chan_vec(p["be3"], Cout, Cout_p)
    # NOTE: conv biases b1/b2/b3/bd are intentionally unused: a per-channel bias
    # added before training-mode BatchNorm cancels exactly in (x - mean).

    if has_downsample:
        wd = jnp.transpose(p["wd"][:, :, 0], (1, 0)).astype(jnp.float32)
        wd = jnp.pad(wd, ((0, Cin_p - Cin), (0, Cout_p - Cout)))
        wd_centre = jnp.concatenate(                      # wd lives in the centre-tap rows
            [jnp.zeros((Cin_p, Cout_p), jnp.float32), wd,
             jnp.zeros((Cin_p, Cout_p), jnp.float32)], axis=0)
        w1_comb = jnp.concatenate([w1, wd_centre.astype(MXU_DTYPE)], axis=1)
        wd = wd.astype(MXU_DTYPE)
        gd, bed = chan_vec(p["gd"], Cout, Cout_p), chan_vec(p["bed"], Cout, Cout_p)
    else:
        w1_comb = w1

    batch_blk = lambda c, b: (c * Bc + b, 0, 0)
    core_blk = lambda c, b: (c, 0, 0)
    rep2 = lambda c, b: (0, 0)

    def conv_cost(cin_p, n_cols):
        flops = 2 * B * L * 3 * cin_p * n_cols
        bytes_accessed = 2 * B * L * (cin_p + n_cols) + 2 * 3 * cin_p * n_cols
        return pl.CostEstimate(flops=flops, transcendentals=0,
                               bytes_accessed=bytes_accessed)

    # ---- stage 1: conv1 (+ fused 1x1 downsample stats), grid (core, batch) ----
    n1 = w1_comb.shape[1]
    out_shapes = [jax.ShapeDtypeStruct((B, L, Cout_p), MXU_DTYPE),
                  jax.ShapeDtypeStruct((ncore, 2, Cout_p), jnp.float32)]
    out_specs = [pl.BlockSpec((1, L, Cout_p), batch_blk),
                 pl.BlockSpec((1, 2, Cout_p), core_blk)]
    if has_downsample:
        out_shapes.append(jax.ShapeDtypeStruct((ncore, 2, Cout_p), jnp.float32))
        out_specs.append(pl.BlockSpec((1, 2, Cout_p), core_blk))

    res1 = pl.pallas_call(
        _make_conv1_kernel(L, Cout_p, has_downsample),
        grid=(ncore, Bc),
        in_specs=[pl.BlockSpec((1, L, Cin_p), batch_blk),
                  pl.BlockSpec((3 * Cin_p, n1), rep2)],
        out_specs=out_specs,
        out_shape=out_shapes,
        compiler_params=cparams_conv,
        cost_estimate=conv_cost(Cin_p, n1),
    )(x_blc, w1_comb)
    if has_downsample:
        h1, st1, std = res1
    else:
        h1, st1 = res1

    # per-channel BN fold (tiny, done in plain JAX between stages)
    def fold_bn(stats, gamma, beta):
        st = jnp.sum(stats, axis=0)               # reduce per-core partials -> (2, C)
        mu = st[0] / n_elems
        var = jnp.maximum(st[1] / n_elems - mu * mu, 0.0)
        scale = gamma * lax.rsqrt(var + BN_EPS)
        shift = beta - mu * scale
        return scale.reshape(1, -1), shift.reshape(1, -1)

    # ---- stage 2: BN1+ReLU fused into conv2 + stats ---------------------------
    s1, sh1 = fold_bn(st1, g1, be1)
    h2, st2 = pl.pallas_call(
        _make_affine_conv_kernel(L),
        grid=(ncore, Bc),
        in_specs=[pl.BlockSpec((1, L, Cout_p), batch_blk),
                  pl.BlockSpec((1, Cout_p), rep2),
                  pl.BlockSpec((1, Cout_p), rep2),
                  pl.BlockSpec((3 * Cout_p, Cin_p), rep2)],
        out_specs=[pl.BlockSpec((1, L, Cin_p), batch_blk),
                   pl.BlockSpec((1, 2, Cin_p), core_blk)],
        out_shape=[jax.ShapeDtypeStruct((B, L, Cin_p), MXU_DTYPE),
                   jax.ShapeDtypeStruct((ncore, 2, Cin_p), jnp.float32)],
        compiler_params=cparams_conv,
        cost_estimate=conv_cost(Cout_p, Cin_p),
    )(h1, s1, sh1, w2)

    # ---- stage 3: BN2+ReLU fused into conv3 + stats ---------------------------
    s2, sh2 = fold_bn(st2, g2, be2)
    h3, st3 = pl.pallas_call(
        _make_affine_conv_kernel(L),
        grid=(ncore, Bc),
        in_specs=[pl.BlockSpec((1, L, Cin_p), batch_blk),
                  pl.BlockSpec((1, Cin_p), rep2),
                  pl.BlockSpec((1, Cin_p), rep2),
                  pl.BlockSpec((3 * Cin_p, Cout_p), rep2)],
        out_specs=[pl.BlockSpec((1, L, Cout_p), batch_blk),
                   pl.BlockSpec((1, 2, Cout_p), core_blk)],
        out_shape=[jax.ShapeDtypeStruct((B, L, Cout_p), MXU_DTYPE),
                   jax.ShapeDtypeStruct((ncore, 2, Cout_p), jnp.float32)],
        compiler_params=cparams_conv,
        cost_estimate=conv_cost(Cin_p, Cout_p),
    )(h2, s2, sh2, w3)

    # ---- stage 4: BN3(h3) + BNd(x@wd) (recomputed), residual add, ReLU --------
    s3, sh3 = fold_bn(st3, g3, be3)
    if has_downsample:
        sd, shd = fold_bn(std, gd, bed)
        sh_comb = sh3 + shd                        # fold both shifts into one vector
    else:
        sd = jnp.ones((1, Cout_p), jnp.float32)
        sh_comb = sh3

    tL = _pick_l_tile(L)
    nL = L // tL
    act_blk = lambda b, l: (b, l, 0)
    vec_blk = lambda b, l: (0, 0)
    out_blk = lambda b, l: (b, 0, l)

    in_specs = [pl.BlockSpec((1, tL, Cout_p), act_blk),
                pl.BlockSpec((1, tL, Cin_p), act_blk)]
    args = [h3, x_blc]
    if has_downsample:
        in_specs.append(pl.BlockSpec((Cin_p, Cout_p), vec_blk))
        args.append(wd)
    in_specs += [pl.BlockSpec((1, Cout_p), vec_blk),
                 pl.BlockSpec((1, Cout_p), vec_blk),
                 pl.BlockSpec((1, Cout_p), vec_blk)]
    args += [s3, sd, sh_comb]

    out = pl.pallas_call(
        _make_finalize_kernel(Cout, has_downsample),
        grid=(B, nL),
        in_specs=in_specs,
        out_specs=pl.BlockSpec((1, Cout, tL), out_blk),
        out_shape=jax.ShapeDtypeStruct((B, Cout, L), jnp.float32),
        compiler_params=pltpu.CompilerParams(
            dimension_semantics=("parallel", "parallel"),
            vmem_limit_bytes=vmem_limit),
    )(*args)
    return out                                    # already NCL, unpadded


# ---------------- pure-JAX reference (true f32 module semantics) --------------
def _ref_conv1d(x, w, b, padding):
    y = lax.conv_general_dilated(
        x, w, window_strides=(1,), padding=[(padding, padding)],
        dimension_numbers=("NCH", "OIH", "NCH"))
    return y + b[None, :, None]


def _ref_bn(x, g, be):
    mu = jnp.mean(x, axis=(0, 2), keepdims=True)
    var = jnp.mean((x - mu) ** 2, axis=(0, 2), keepdims=True)
    return (x - mu) / jnp.sqrt(var + BN_EPS) * g[None, :, None] + be[None, :, None]


def resnet_block_ref(x, p):
    Cin, Cout = x.shape[1], p["w1"].shape[0]
    idn = x
    h = jax.nn.relu(_ref_bn(_ref_conv1d(x, p["w1"], p["b1"], 1), p["g1"], p["be1"]))
    h = jax.nn.relu(_ref_bn(_ref_conv1d(h, p["w2"], p["b2"], 1), p["g2"], p["be2"]))
    h = _ref_bn(_ref_conv1d(h, p["w3"], p["b3"], 1), p["g3"], p["be3"])
    if Cin != Cout:                                # module only builds downsample then
        idn = _ref_bn(_ref_conv1d(idn, p["wd"], p["bd"], 0), p["gd"], p["bed"])
    return jax.nn.relu(h + idn)


if __name__ == "__main__":
    # small shapes; Cin != Cout -> downsample branch active; B even -> core-split path
    B, Cin, Cout, L = 2, 4, 8, 512
    key = jax.random.PRNGKey(0)
    ks = jax.random.split(key, 17)

    def nrm(k, shape, s=0.3):
        return s * jax.random.normal(k, shape, jnp.float32)

    p = {
        "w1": nrm(ks[0], (Cout, Cin, 3)), "b1": nrm(ks[1], (Cout,), 0.1),
        "g1": 1.0 + nrm(ks[2], (Cout,), 0.1), "be1": nrm(ks[3], (Cout,), 0.1),
        "w2": nrm(ks[4], (Cin, Cout, 3)), "b2": nrm(ks[5], (Cin,), 0.1),
        "g2": 1.0 + nrm(ks[6], (Cin,), 0.1), "be2": nrm(ks[7], (Cin,), 0.1),
        "w3": nrm(ks[8], (Cout, Cin, 3)), "b3": nrm(ks[9], (Cout,), 0.1),
        "g3": 1.0 + nrm(ks[10], (Cout,), 0.1), "be3": nrm(ks[11], (Cout,), 0.1),
        "wd": nrm(ks[12], (Cout, Cin, 1)), "bd": nrm(ks[13], (Cout,), 0.1),
        "gd": 1.0 + nrm(ks[14], (Cout,), 0.1), "bed": nrm(ks[15], (Cout,), 0.1),
    }
    x = jax.random.normal(ks[16], (B, Cin, L), jnp.float32)

    out = jax.block_until_ready(jax.jit(resnet_block)(x, p))
    ref = resnet_block_ref(x, p)

    assert out.shape == (B, Cout, L), out.shape
    # bf16 MXU operands + bf16 stored intermediates over three cascaded conv/BN
    # stages -> relaxed tolerance; with MXU_DTYPE = float32 this matches ~1e-3.
    tol = 2e-3 if MXU_DTYPE == jnp.float32 else 1e-1
    if not jnp.allclose(out, ref, atol=tol, rtol=tol):
        raise AssertionError(
            f"mismatch: max abs err = {float(jnp.max(jnp.abs(out - ref)))}")
    print("KERNEL_OK")
</pallas_src>

<mosaic_0001>
module attributes {stable_mosaic.version = 11 : i64} {
  func.func @kernel(%arg0: i32, %arg1: i32, %arg2: memref<1x512x128xbf16, #tpu.memory_space<vmem>>, %arg3: memref<384x256xbf16, #tpu.memory_space<vmem>>, %arg4: memref<1x512x128xbf16, #tpu.memory_space<vmem>>, %arg5: memref<1x2x128xf32, #tpu.memory_space<vmem>>, %arg6: memref<1x2x128xf32, #tpu.memory_space<vmem>>) attributes {dimension_semantics = [#tpu.dimension_semantics<parallel>, #tpu.dimension_semantics<arbitrary>], iteration_bounds = array<i64: 2, 1>, scalar_prefetch = 0 : i64, scratch_operands = 0 : i64, tpu.core_type = #tpu.core_type<tc>, window_params = [{transform_indices = @transform_0, window_bounds = array<i64: 1, 512, 128>}, {pipeline_mode = #tpu.pipeline_mode<synchronous>, transform_indices = @transform_1, window_bounds = array<i64: 384, 256>}, {transform_indices = @transform_2, window_bounds = array<i64: 1, 512, 128>}, {transform_indices = @transform_3, window_bounds = array<i64: 1, 2, 128>}, {transform_indices = @transform_4, window_bounds = array<i64: 1, 2, 128>}]} {
    %c0_i32 = arith.constant 0 : i32
    %0 = arith.cmpi eq, %arg1, %c0_i32 : i32
    %c0 = arith.constant 0 : index
    %c0_0 = arith.constant 0 : index
    %c0_1 = arith.constant 0 : index
    %1 = vector.load %arg2[%c0, %c0_0, %c0_1] : memref<1x512x128xbf16, #tpu.memory_space<vmem>>, vector<1x512x128xbf16>
    %2 = vector.shape_cast %1 : vector<1x512x128xbf16> to vector<512x128xbf16>
    %3 = arith.extf %2 : vector<512x128xbf16> to vector<512x128xf32>
    %4 = tpu.iota {dimensions = array<i32: 0>} : vector<512x128xi32>
    %c1_i32 = arith.constant 1 : i32
    %5 = vector.broadcast %c1_i32 : i32 to vector<512x128xi32>
    %6 = arith.cmpi sge, %4, %5 : vector<512x128xi32>
    %c1_i32_2 = arith.constant 1 : i32
    %7 = tpu.dynamic_rotate %3 by %c1_i32_2 dim 0 : vector<512x128xf32>, i32 -> vector<512x128xf32>
    %cst = arith.constant 0.000000e+00 : f32
    %8 = vector.broadcast %cst : f32 to vector<512x128xf32>
    %9 = arith.select %6, %7, %8 : vector<512x128xi1>, vector<512x128xf32>
    %c510_i32 = arith.constant 510 : i32
    %10 = vector.broadcast %c510_i32 : i32 to vector<512x128xi32>
    %11 = arith.cmpi sle, %4, %10 : vector<512x128xi32>
    %c511_i32 = arith.constant 511 : i32
    %12 = tpu.dynamic_rotate %3 by %c511_i32 dim 0 : vector<512x128xf32>, i32 -> vector<512x128xf32>
    %cst_3 = arith.constant 0.000000e+00 : f32
    %13 = vector.broadcast %cst_3 : f32 to vector<512x128xf32>
    %14 = arith.select %11, %12, %13 : vector<512x128xi1>, vector<512x128xf32>
    %15 = tpu.concatenate %9, %3, %14 in 1 : vector<512x128xf32>, vector<512x128xf32>, vector<512x128xf32> -> vector<512x384xf32>
    %16 = arith.truncf %15 : vector<512x384xf32> to vector<512x384xbf16>
    %c0_4 = arith.constant 0 : index
    %c0_5 = arith.constant 0 : index
    %17 = vector.load %arg3[%c0_4, %c0_5] : memref<384x256xbf16, #tpu.memory_space<vmem>>, vector<384x256xbf16>
    %cst_6 = arith.constant dense<0.000000e+00> : vector<512x256xf32>
    %18 = tpu.matmul %16, %17, %cst_6 {dimension_numbers = #tpu.dot_dimension_numbers<[1], [0], [0], [1], [0, 0, 1, 1], [], []>} : vector<512x384xbf16>, vector<384x256xbf16>, vector<512x256xf32> -> vector<512x256xf32>
    %19 = vector.extract_strided_slice %18 {offsets = [0, 0], sizes = [512, 128], strides = [1, 1]} : vector<512x256xf32> to vector<512x128xf32>
    %20 = arith.truncf %19 : vector<512x128xf32> to vector<512x128xbf16>
    %21 = vector.shape_cast %20 : vector<512x128xbf16> to vector<1x512x128xbf16>
    %c0_7 = arith.constant 0 : index
    %c0_8 = arith.constant 0 : index
    %c0_9 = arith.constant 0 : index
    %22 = vector.load %arg4[%c0_7, %c0_8, %c0_9] : memref<1x512x128xbf16, #tpu.memory_space<vmem>>, vector<1x512x128xbf16>
    tpu.vector_store %arg4[%c0_7, %c0_8, %c0_9], %21 {strides = array<i32>} : memref<1x512x128xbf16, #tpu.memory_space<vmem>>, vector<1x512x128xbf16>,
    %23 = arith.extui %0 : i1 to i32
    %c0_i32_10 = arith.constant 0 : i32
    %24 = arith.cmpi ne, %23, %c0_i32_10 : i32
    scf.if %24 {
      %cst_28 = arith.constant 0.000000e+00 : f32
      %48 = vector.broadcast %cst_28 : f32 to vector<1x2x128xf32>
      %c0_29 = arith.constant 0 : index
      %c0_30 = arith.constant 0 : index
      %c0_31 = arith.constant 0 : index
      %49 = vector.load %arg5[%c0_29, %c0_30, %c0_31] : memref<1x2x128xf32, #tpu.memory_space<vmem>>, vector<1x2x128xf32>
      tpu.vector_store %arg5[%c0_29, %c0_30, %c0_31], %48 {strides = array<i32>} : memref<1x2x128xf32, #tpu.memory_space<vmem>>, vector<1x2x128xf32>,
    } else {
    }
    %cst_11 = arith.constant dense<0.000000e+00> : vector<128xf32>
    %25 = vector.multi_reduction <add>, %19, %cst_11 [0] : vector<512x128xf32> to vector<128xf32>
    %26 = vector.shape_cast %25 : vector<128xf32> to vector<1x128xf32>
    %27 = arith.mulf %19, %19 : vector<512x128xf32>
    %cst_12 = arith.constant dense<0.000000e+00> : vector<128xf32>
    %28 = vector.multi_reduction <add>, %27, %cst_12 [0] : vector<512x128xf32> to vector<128xf32>
    %29 = vector.shape_cast %28 : vector<128xf32> to vector<1x128xf32>
    %30 = tpu.concatenate %26, %29 in 0 : vector<1x128xf32>, vector<1x128xf32> -> vector<2x128xf32>
    %c0_13 = arith.constant 0 : index
    %c0_14 = arith.constant 0 : index
    %c0_15 = arith.constant 0 : index
    %31 = vector.load %arg5[%c0_13, %c0_14, %c0_15] : memref<1x2x128xf32, #tpu.memory_space<vmem>>, vector<1x2x128xf32>
    %32 = vector.shape_cast %30 : vector<2x128xf32> to vector<1x2x128xf32>
    %33 = arith.addf %31, %32 : vector<1x2x128xf32>
    %c0_16 = arith.constant 0 : index
    %c0_17 = arith.constant 0 : index
    %c0_18 = arith.constant 0 : index
    %34 = vector.load %arg5[%c0_16, %c0_17, %c0_18] : memref<1x2x128xf32, #tpu.memory_space<vmem>>, vector<1x2x128xf32>
    tpu.vector_store %arg5[%c0_16, %c0_17, %c0_18], %33 {strides = array<i32>} : memref<1x2x128xf32, #tpu.memory_space<vmem>>, vector<1x2x128xf32>,
    %35 = vector.extract_strided_slice %18 {offsets = [0, 128], sizes = [512, 128], strides = [1, 1]} : vector<512x256xf32> to vector<512x128xf32>
    %36 = arith.extui %0 : i1 to i32
    %c0_i32_19 = arith.constant 0 : i32
    %37 = arith.cmpi ne, %36, %c0_i32_19 : i32
    scf.if %37 {
      %cst_28 = arith.constant 0.000000e+00 : f32
      %48 = vector.broadcast %cst_28 : f32 to vector<1x2x128xf32>
      %c0_29 = arith.constant 0 : index
      %c0_30 = arith.constant 0 : index
      %c0_31 = arith.constant 0 : index
      %49 = vector.load %arg6[%c0_29, %c0_30, %c0_31] : memref<1x2x128xf32, #tpu.memory_space<vmem>>, vector<1x2x128xf32>
      tpu.vector_store %arg6[%c0_29, %c0_30, %c0_31], %48 {strides = array<i32>} : memref<1x2x128xf32, #tpu.memory_space<vmem>>, vector<1x2x128xf32>,
    } else {
    }
    %cst_20 = arith.constant dense<0.000000e+00> : vector<128xf32>
    %38 = vector.multi_reduction <add>, %35, %cst_20 [0] : vector<512x128xf32> to vector<128xf32>
    %39 = vector.shape_cast %38 : vector<128xf32> to vector<1x128xf32>
    %40 = arith.mulf %35, %35 : vector<512x128xf32>
    %cst_21 = arith.constant dense<0.000000e+00> : vector<128xf32>
    %41 = vector.multi_reduction <add>, %40, %cst_21 [0] : vector<512x128xf32> to vector<128xf32>
    %42 = vector.shape_cast %41 : vector<128xf32> to vector<1x128xf32>
    %43 = tpu.concatenate %39, %42 in 0 : vector<1x128xf32>, vector<1x128xf32> -> vector<2x128xf32>
    %c0_22 = arith.constant 0 : index
    %c0_23 = arith.constant 0 : index
    %c0_24 = arith.constant 0 : index
    %44 = vector.load %arg6[%c0_22, %c0_23, %c0_24] : memref<1x2x128xf32, #tpu.memory_space<vmem>>, vector<1x2x128xf32>
    %45 = vector.shape_cast %43 : vector<2x128xf32> to vector<1x2x128xf32>
    %46 = arith.addf %44, %45 : vector<1x2x128xf32>
    %c0_25 = arith.constant 0 : index
    %c0_26 = arith.constant 0 : index
    %c0_27 = arith.constant 0 : index
    %47 = vector.load %arg6[%c0_25, %c0_26, %c0_27] : memref<1x2x128xf32, #tpu.memory_space<vmem>>, vector<1x2x128xf32>
    tpu.vector_store %arg6[%c0_25, %c0_26, %c0_27], %46 {strides = array<i32>} : memref<1x2x128xf32, #tpu.memory_space<vmem>>, vector<1x2x128xf32>,
    return
  }
  func.func @transform_0(%arg0: i32, %arg1: i32) -> (i32, i32, i32) {
    %c1_i32 = arith.constant 1 : i32
    %0 = arith.muli %arg0, %c1_i32 : i32
    %1 = arith.addi %0, %arg1 : i32
    %c0_i32 = arith.constant 0 : i32
    %c0_i32_0 = arith.constant 0 : i32
    %c0_i32_1 = arith.constant 0 : i32
    return %1, %c0_i32, %c0_i32_0 : i32, i32, i32
  }
  func.func @transform_1(%arg0: i32, %arg1: i32) -> (i32, i32) {
    %c0_i32 = arith.constant 0 : i32
    %c0_i32_0 = arith.constant 0 : i32
    %c0_i32_1 = arith.constant 0 : i32
    return %c0_i32, %c0_i32_0 : i32, i32
  }
  func.func @transform_2(%arg0: i32, %arg1: i32) -> (i32, i32, i32) {
    %c1_i32 = arith.constant 1 : i32
    %0 = arith.muli %arg0, %c1_i32 : i32
    %1 = arith.addi %0, %arg1 : i32
    %c0_i32 = arith.constant 0 : i32
    %c0_i32_0 = arith.constant 0 : i32
    %c0_i32_1 = arith.constant 0 : i32
    return %1, %c0_i32, %c0_i32_0 : i32, i32, i32
  }
  func.func @transform_3(%arg0: i32, %arg1: i32) -> (i32, i32, i32) {
    %c0_i32 = arith.constant 0 : i32
    %c0_i32_0 = arith.constant 0 : i32
    %c0_i32_1 = arith.constant 0 : i32
    return %arg0, %c0_i32, %c0_i32_0 : i32, i32, i32
  }
  func.func @transform_4(%arg0: i32, %arg1: i32) -> (i32, i32, i32) {
    %c0_i32 = arith.constant 0 : i32
    %c0_i32_0 = arith.constant 0 : i32
    %c0_i32_1 = arith.constant 0 : i32
    return %arg0, %c0_i32, %c0_i32_0 : i32, i32, i32
  }
}

module attributes {stable_mosaic.version = 11 : i64} {
  func.func @kernel(%arg0: i32, %arg1: i32, %arg2: memref<1x512x128xbf16, #tpu.memory_space<vmem>>, %arg3: memref<1x128xf32, #tpu.memory_space<vmem>>, %arg4: memref<1x128xf32, #tpu.memory_space<vmem>>, %arg5: memref<384x128xbf16, #tpu.memory_space<vmem>>, %arg6: memref<1x512x128xbf16, #tpu.memory_space<vmem>>, %arg7: memref<1x2x128xf32, #tpu.memory_space<vmem>>) attributes {dimension_semantics = [#tpu.dimension_semantics<parallel>, #tpu.dimension_semantics<arbitrary>], iteration_bounds = array<i64: 2, 1>, scalar_prefetch = 0 : i64, scratch_operands = 0 : i64, tpu.core_type = #tpu.core_type<tc>, window_params = [{transform_indices = @transform_0, window_bounds = array<i64: 1, 512, 128>}, {pipeline_mode = #tpu.pipeline_mode<synchronous>, transform_indices = @transform_1, window_bounds = array<i64: 1, 128>}, {pipeline_mode = #tpu.pipeline_mode<synchronous>, transform_indices = @transform_2, window_bounds = array<i64: 1, 128>}, {pipeline_mode = #tpu.pipeline_mode<synchronous>, transform_indices = @transform_3, window_bounds = array<i64: 384, 128>}, {transform_indices = @transform_4, window_bounds = array<i64: 1, 512, 128>}, {transform_indices = @transform_5, window_bounds = array<i64: 1, 2, 128>}]} {
    %c0_i32 = arith.constant 0 : i32
    %0 = arith.cmpi eq, %arg1, %c0_i32 : i32
    %c0 = arith.constant 0 : index
    %c0_0 = arith.constant 0 : index
    %c0_1 = arith.constant 0 : index
    %1 = vector.load %arg2[%c0, %c0_0, %c0_1] : memref<1x512x128xbf16, #tpu.memory_space<vmem>>, vector<1x512x128xbf16>
    %2 = vector.shape_cast %1 : vector<1x512x128xbf16> to vector<512x128xbf16>
    %3 = arith.extf %2 : vector<512x128xbf16> to vector<512x128xf32>
    %c0_2 = arith.constant 0 : index
    %c0_3 = arith.constant 0 : index
    %4 = vector.load %arg3[%c0_2, %c0_3] : memref<1x128xf32, #tpu.memory_space<vmem>>, vector<1x128xf32>
    %5 = vector.broadcast %4 : vector<1x128xf32> to vector<512x128xf32>
    %6 = arith.mulf %3, %5 : vector<512x128xf32>
    %c0_4 = arith.constant 0 : index
    %c0_5 = arith.constant 0 : index
    %7 = vector.load %arg4[%c0_4, %c0_5] : memref<1x128xf32, #tpu.memory_space<vmem>>, vector<1x128xf32>
    %8 = vector.broadcast %7 : vector<1x128xf32> to vector<512x128xf32>
    %9 = arith.addf %6, %8 : vector<512x128xf32>
    %cst = arith.constant 0.000000e+00 : f32
    %10 = vector.broadcast %cst : f32 to vector<512x128xf32>
    %11 = arith.maximumf %9, %10 : vector<512x128xf32>
    %12 = tpu.iota {dimensions = array<i32: 0>} : vector<512x128xi32>
    %c1_i32 = arith.constant 1 : i32
    %13 = vector.broadcast %c1_i32 : i32 to vector<512x128xi32>
    %14 = arith.cmpi sge, %12, %13 : vector<512x128xi32>
    %c1_i32_6 = arith.constant 1 : i32
    %15 = tpu.dynamic_rotate %11 by %c1_i32_6 dim 0 : vector<512x128xf32>, i32 -> vector<512x128xf32>
    %cst_7 = arith.constant 0.000000e+00 : f32
    %16 = vector.broadcast %cst_7 : f32 to vector<512x128xf32>
    %17 = arith.select %14, %15, %16 : vector<512x128xi1>, vector<512x128xf32>
    %c510_i32 = arith.constant 510 : i32
    %18 = vector.broadcast %c510_i32 : i32 to vector<512x128xi32>
    %19 = arith.cmpi sle, %12, %18 : vector<512x128xi32>
    %c511_i32 = arith.constant 511 : i32
    %20 = tpu.dynamic_rotate %11 by %c511_i32 dim 0 : vector<512x128xf32>, i32 -> vector<512x128xf32>
    %cst_8 = arith.constant 0.000000e+00 : f32
    %21 = vector.broadcast %cst_8 : f32 to vector<512x128xf32>
    %22 = arith.select %19, %20, %21 : vector<512x128xi1>, vector<512x128xf32>
    %23 = tpu.concatenate %17, %11, %22 in 1 : vector<512x128xf32>, vector<512x128xf32>, vector<512x128xf32> -> vector<512x384xf32>
    %24 = arith.truncf %23 : vector<512x384xf32> to vector<512x384xbf16>
    %c0_9 = arith.constant 0 : index
    %c0_10 = arith.constant 0 : index
    %25 = vector.load %arg5[%c0_9, %c0_10] : memref<384x128xbf16, #tpu.memory_space<vmem>>, vector<384x128xbf16>
    %cst_11 = arith.constant dense<0.000000e+00> : vector<512x128xf32>
    %26 = tpu.matmul %24, %25, %cst_11 {dimension_numbers = #tpu.dot_dimension_numbers<[1], [0], [0], [1], [0, 0, 1, 1], [], []>} : vector<512x384xbf16>, vector<384x128xbf16>, vector<512x128xf32> -> vector<512x128xf32>
    %27 = arith.truncf %26 : vector<512x128xf32> to vector<512x128xbf16>
    %28 = vector.shape_cast %27 : vector<512x128xbf16> to vector<1x512x128xbf16>
    %c0_12 = arith.constant 0 : index
    %c0_13 = arith.constant 0 : index
    %c0_14 = arith.constant 0 : index
    %29 = vector.load %arg6[%c0_12, %c0_13, %c0_14] : memref<1x512x128xbf16, #tpu.memory_space<vmem>>, vector<1x512x128xbf16>
    tpu.vector_store %arg6[%c0_12, %c0_13, %c0_14], %28 {strides = array<i32>} : memref<1x512x128xbf16, #tpu.memory_space<vmem>>, vector<1x512x128xbf16>,
    %30 = arith.extui %0 : i1 to i32
    %c0_i32_15 = arith.constant 0 : i32
    %31 = arith.cmpi ne, %30, %c0_i32_15 : i32
    scf.if %31 {
      %cst_24 = arith.constant 0.000000e+00 : f32
      %42 = vector.broadcast %cst_24 : f32 to vector<1x2x128xf32>
      %c0_25 = arith.constant 0 : index
      %c0_26 = arith.constant 0 : index
      %c0_27 = arith.constant 0 : index
      %43 = vector.load %arg7[%c0_25, %c0_26, %c0_27] : memref<1x2x128xf32, #tpu.memory_space<vmem>>, vector<1x2x128xf32>
      tpu.vector_store %arg7[%c0_25, %c0_26, %c0_27], %42 {strides = array<i32>} : memref<1x2x128xf32, #tpu.memory_space<vmem>>, vector<1x2x128xf32>,
    } else {
    }
    %cst_16 = arith.constant dense<0.000000e+00> : vector<128xf32>
    %32 = vector.multi_reduction <add>, %26, %cst_16 [0] : vector<512x128xf32> to vector<128xf32>
    %33 = vector.shape_cast %32 : vector<128xf32> to vector<1x128xf32>
    %34 = arith.mulf %26, %26 : vector<512x128xf32>
    %cst_17 = arith.constant dense<0.000000e+00> : vector<128xf32>
    %35 = vector.multi_reduction <add>, %34, %cst_17 [0] : vector<512x128xf32> to vector<128xf32>
    %36 = vector.shape_cast %35 : vector<128xf32> to vector<1x128xf32>
    %37 = tpu.concatenate %33, %36 in 0 : vector<1x128xf32>, vector<1x128xf32> -> vector<2x128xf32>
    %c0_18 = arith.constant 0 : index
    %c0_19 = arith.constant 0 : index
    %c0_20 = arith.constant 0 : index
    %38 = vector.load %arg7[%c0_18, %c0_19, %c0_20] : memref<1x2x128xf32, #tpu.memory_space<vmem>>, vector<1x2x128xf32>
    %39 = vector.shape_cast %37 : vector<2x128xf32> to vector<1x2x128xf32>
    %40 = arith.addf %38, %39 : vector<1x2x128xf32>
    %c0_21 = arith.constant 0 : index
    %c0_22 = arith.constant 0 : index
    %c0_23 = arith.constant 0 : index
    %41 = vector.load %arg7[%c0_21, %c0_22, %c0_23] : memref<1x2x128xf32, #tpu.memory_space<vmem>>, vector<1x2x128xf32>
    tpu.vector_store %arg7[%c0_21, %c0_22, %c0_23], %40 {strides = array<i32>} : memref<1x2x128xf32, #tpu.memory_space<vmem>>, vector<1x2x128xf32>,
    return
  }
  func.func @transform_0(%arg0: i32, %arg1: i32) -> (i32, i32, i32) {
    %c1_i32 = arith.constant 1 : i32
    %0 = arith.muli %arg0, %c1_i32 : i32
    %1 = arith.addi %0, %arg1 : i32
    %c0_i32 = arith.constant 0 : i32
    %c0_i32_0 = arith.constant 0 : i32
    %c0_i32_1 = arith.constant 0 : i32
    return %1, %c0_i32, %c0_i32_0 : i32, i32, i32
  }
  func.func @transform_1(%arg0: i32, %arg1: i32) -> (i32, i32) {
    %c0_i32 = arith.constant 0 : i32
    %c0_i32_0 = arith.constant 0 : i32
    %c0_i32_1 = arith.constant 0 : i32
    return %c0_i32, %c0_i32_0 : i32, i32
  }
  func.func @transform_2(%arg0: i32, %arg1: i32) -> (i32, i32) {
    %c0_i32 = arith.constant 0 : i32
    %c0_i32_0 = arith.constant 0 : i32
    %c0_i32_1 = arith.constant 0 : i32
    return %c0_i32, %c0_i32_0 : i32, i32
  }
  func.func @transform_3(%arg0: i32, %arg1: i32) -> (i32, i32) {
    %c0_i32 = arith.constant 0 : i32
    %c0_i32_0 = arith.constant 0 : i32
    %c0_i32_1 = arith.constant 0 : i32
    return %c0_i32, %c0_i32_0 : i32, i32
  }
  func.func @transform_4(%arg0: i32, %arg1: i32) -> (i32, i32, i32) {
    %c1_i32 = arith.constant 1 : i32
    %0 = arith.muli %arg0, %c1_i32 : i32
    %1 = arith.addi %0, %arg1 : i32
    %c0_i32 = arith.constant 0 : i32
    %c0_i32_0 = arith.constant 0 : i32
    %c0_i32_1 = arith.constant 0 : i32
    return %1, %c0_i32, %c0_i32_0 : i32, i32, i32
  }
  func.func @transform_5(%arg0: i32, %arg1: i32) -> (i32, i32, i32) {
    %c0_i32 = arith.constant 0 : i32
    %c0_i32_0 = arith.constant 0 : i32
    %c0_i32_1 = arith.constant 0 : i32
    return %arg0, %c0_i32, %c0_i32_0 : i32, i32, i32
  }
}

module attributes {stable_mosaic.version = 11 : i64} {
  func.func @kernel(%arg0: i32, %arg1: i32, %arg2: memref<1x512x128xbf16, #tpu.memory_space<vmem>>, %arg3: memref<1x512x128xbf16, #tpu.memory_space<vmem>>, %arg4: memref<128x128xbf16, #tpu.memory_space<vmem>>, %arg5: memref<1x128xf32, #tpu.memory_space<vmem>>, %arg6: memref<1x128xf32, #tpu.memory_space<vmem>>, %arg7: memref<1x128xf32, #tpu.memory_space<vmem>>, %arg8: memref<1x8x512xf32, #tpu.memory_space<vmem>>) attributes {dimension_semantics = [#tpu.dimension_semantics<parallel>, #tpu.dimension_semantics<parallel>], iteration_bounds = array<i64: 2, 1>, scalar_prefetch = 0 : i64, scratch_operands = 0 : i64, tpu.core_type = #tpu.core_type<tc>, window_params = [{transform_indices = @transform_0, window_bounds = array<i64: 1, 512, 128>}, {transform_indices = @transform_1, window_bounds = array<i64: 1, 512, 128>}, {pipeline_mode = #tpu.pipeline_mode<synchronous>, transform_indices = @transform_2, window_bounds = array<i64: 128, 128>}, {pipeline_mode = #tpu.pipeline_mode<synchronous>, transform_indices = @transform_3, window_bounds = array<i64: 1, 128>}, {pipeline_mode = #tpu.pipeline_mode<synchronous>, transform_indices = @transform_4, window_bounds = array<i64: 1, 128>}, {pipeline_mode = #tpu.pipeline_mode<synchronous>, transform_indices = @transform_5, window_bounds = array<i64: 1, 128>}, {transform_indices = @transform_6, window_bounds = array<i64: 1, 8, 512>}]} {
    %c0 = arith.constant 0 : index
    %c0_0 = arith.constant 0 : index
    %c0_1 = arith.constant 0 : index
    %0 = vector.load %arg2[%c0, %c0_0, %c0_1] : memref<1x512x128xbf16, #tpu.memory_space<vmem>>, vector<1x512x128xbf16>
    %1 = vector.shape_cast %0 : vector<1x512x128xbf16> to vector<512x128xbf16>
    %2 = arith.extf %1 : vector<512x128xbf16> to vector<512x128xf32>
    %c0_2 = arith.constant 0 : index
    %c0_3 = arith.constant 0 : index
    %c0_4 = arith.constant 0 : index
    %3 = vector.load %arg3[%c0_2, %c0_3, %c0_4] : memref<1x512x128xbf16, #tpu.memory_space<vmem>>, vector<1x512x128xbf16>
    %4 = vector.shape_cast %3 : vector<1x512x128xbf16> to vector<512x128xbf16>
    %c0_5 = arith.constant 0 : index
    %c0_6 = arith.constant 0 : index
    %5 = vector.load %arg4[%c0_5, %c0_6] : memref<128x128xbf16, #tpu.memory_space<vmem>>, vector<128x128xbf16>
    %cst = arith.constant dense<0.000000e+00> : vector<512x128xf32>
    %6 = tpu.matmul %4, %5, %cst {dimension_numbers = #tpu.dot_dimension_numbers<[1], [0], [0], [1], [0, 0, 1, 1], [], []>} : vector<512x128xbf16>, vector<128x128xbf16>, vector<512x128xf32> -> vector<512x128xf32>
    %c0_7 = arith.constant 0 : index
    %c0_8 = arith.constant 0 : index
    %7 = vector.load %arg5[%c0_7, %c0_8] : memref<1x128xf32, #tpu.memory_space<vmem>>, vector<1x128xf32>
    %8 = vector.broadcast %7 : vector<1x128xf32> to vector<512x128xf32>
    %9 = arith.mulf %2, %8 : vector<512x128xf32>
    %c0_9 = arith.constant 0 : index
    %c0_10 = arith.constant 0 : index
    %10 = vector.load %arg6[%c0_9, %c0_10] : memref<1x128xf32, #tpu.memory_space<vmem>>, vector<1x128xf32>
    %11 = vector.broadcast %10 : vector<1x128xf32> to vector<512x128xf32>
    %12 = arith.mulf %6, %11 : vector<512x128xf32>
    %13 = arith.addf %9, %12 : vector<512x128xf32>
    %c0_11 = arith.constant 0 : index
    %c0_12 = arith.constant 0 : index
    %14 = vector.load %arg7[%c0_11, %c0_12] : memref<1x128xf32, #tpu.memory_space<vmem>>, vector<1x128xf32>
    %15 = vector.broadcast %14 : vector<1x128xf32> to vector<512x128xf32>
    %16 = arith.addf %13, %15 : vector<512x128xf32>
    %cst_13 = arith.constant 0.000000e+00 : f32
    %17 = vector.broadcast %cst_13 : f32 to vector<512x128xf32>
    %18 = arith.maximumf %16, %17 : vector<512x128xf32>
    %19 = tpu.transpose %18, [1, 0] : vector<512x128xf32> -> vector<128x512xf32>
    %20 = vector.extract_strided_slice %19 {offsets = [0, 0], sizes = [8, 512], strides = [1, 1]} : vector<128x512xf32> to vector<8x512xf32>
    %21 = vector.shape_cast %20 : vector<8x512xf32> to vector<1x8x512xf32>
    %c0_14 = arith.constant 0 : index
    %c0_15 = arith.constant 0 : index
    %c0_16 = arith.constant 0 : index
    %22 = vector.load %arg8[%c0_14, %c0_15, %c0_16] : memref<1x8x512xf32, #tpu.memory_space<vmem>>, vector<1x8x512xf32>
    tpu.vector_store %arg8[%c0_14, %c0_15, %c0_16], %21 {strides = array<i32>} : memref<1x8x512xf32, #tpu.memory_space<vmem>>, vector<1x8x512xf32>,
    return
  }
  func.func @transform_0(%arg0: i32, %arg1: i32) -> (i32, i32, i32) {
    %c0_i32 = arith.constant 0 : i32
    %c0_i32_0 = arith.constant 0 : i32
    return %arg0, %arg1, %c0_i32 : i32, i32, i32
  }
  func.func @transform_1(%arg0: i32, %arg1: i32) -> (i32, i32, i32) {
    %c0_i32 = arith.constant 0 : i32
    %c0_i32_0 = arith.constant 0 : i32
    return %arg0, %arg1, %c0_i32 : i32, i32, i32
  }
  func.func @transform_2(%arg0: i32, %arg1: i32) -> (i32, i32) {
    %c0_i32 = arith.constant 0 : i32
    %c0_i32_0 = arith.constant 0 : i32
    %c0_i32_1 = arith.constant 0 : i32
    return %c0_i32, %c0_i32_0 : i32, i32
  }
  func.func @transform_3(%arg0: i32, %arg1: i32) -> (i32, i32) {
    %c0_i32 = arith.constant 0 : i32
    %c0_i32_0 = arith.constant 0 : i32
    %c0_i32_1 = arith.constant 0 : i32
    return %c0_i32, %c0_i32_0 : i32, i32
  }
  func.func @transform_4(%arg0: i32, %arg1: i32) -> (i32, i32) {
    %c0_i32 = arith.constant 0 : i32
    %c0_i32_0 = arith.constant 0 : i32
    %c0_i32_1 = arith.constant 0 : i32
    return %c0_i32, %c0_i32_0 : i32, i32
  }
  func.func @transform_5(%arg0: i32, %arg1: i32) -> (i32, i32) {
    %c0_i32 = arith.constant 0 : i32
    %c0_i32_0 = arith.constant 0 : i32
    %c0_i32_1 = arith.constant 0 : i32
    return %c0_i32, %c0_i32_0 : i32, i32
  }
  func.func @transform_6(%arg0: i32, %arg1: i32) -> (i32, i32, i32) {
    %c0_i32 = arith.constant 0 : i32
    %c0_i32_0 = arith.constant 0 : i32
    return %arg0, %c0_i32, %arg1 : i32, i32, i32
  }
}

</mosaic_0001>

<llo_original>
// kernel: resnet_block.7
$region0: #{resnet_block.7}
  #allocation0 [shape = 'u32[]', space=smem, size = 0x4, offset = 0x4, fixed_abs, tag = 'smem constant byte address 0x4 - core index']
  #allocation1 [shape = 'u32[144,128]{1,0:T(1,128)}', space=vmem, size = 0x12000, scoped, tag = 'internal scratch']
  %s0 = inlined_call_operand.vmem [shape: bf16[2,512,128], index: 0, kind: input, shape index: {}]
  %s1 = inlined_call_operand.vmem [shape: bf16[2,512,128], index: 1, kind: input, shape index: {}]
  %s2 = inlined_call_operand.vmem [shape: bf16[128,128], index: 2, kind: input, shape index: {}]
  %s3 = inlined_call_operand.vmem [shape: f32[1,128], index: 3, kind: input, shape index: {}]
  %s4 = inlined_call_operand.vmem [shape: f32[1,128], index: 4, kind: input, shape index: {}]
  %s5 = inlined_call_operand.vmem [shape: f32[1,128], index: 5, kind: input, shape index: {}]
  %s6 = inlined_call_operand.hbm [shape: f32[2,8,512], index: 6, kind: output, shape index: {}]
  %s7 = sld [smem:[#allocation0]]
  $region57: #{resnet_block.7} parent=0
    _
  %s9 = ssub.s32 1, %s7
  %s10 = scalar_select 0, %s9, %s7
  $region1: #{resnet_block.7} parent=0
    #allocation2 [shape = 'u8[32768]{0}', space=vmem, size = 0x8000, scoped, tag = 'output window, operand 0']
    #allocation3 [shape = 's32[2]{0}', space=sflag, size = 0x8, scoped, tag = 'scoped memory for resnet_block.7']
    %11 = vsyncpa [#allocation3], 0
    %s12 = scalar_lea.sflag [#allocation3], 1
    %13 = vsyncpa %s12, 0
    loop: start=0, step=1, limit=4
    $region2: #{resnet_block.7} parent=1 // loop_pre_header
      _
    $region3: #{resnet_block.7} parent=1 // loop_header
      %s15 = sphi 0, %s19
      %p16 = scmp.ge.s32.totalorder %s15, 4
      %s22 = sphi 0, %s34
      %s23 = sphi 0, %s30
      %s24 = sphi 0, %s22
      %s25 = sphi 0, %s23
      %s26 = sphi 0, %s24
      %s27 = sphi 0, %s25
      %s39 = sphi 0, %s41
      %s42 = sphi 0, %s39
      %s43 = sphi 0, %s42
      %s59 = sphi 0, %s43
      %s67 = sphi 0, %s69
      %s70 = sphi 0, %s67
      %s71 = sphi 0, %s70
      %s87 = sphi 0, %s71
      %s91 = sphi 0, %s91
      %s93 = sphi 0, %s91
      %s94 = sphi 0, %s93
      %s108 = sphi 0, %s94
      %s112 = sphi 0, %s112
      %s114 = sphi 0, %s112
      %s115 = sphi 0, %s114
      %s129 = sphi 0, %s115
      %s133 = sphi 0, %s133
      %s135 = sphi 0, %s133
      %s136 = sphi 0, %s135
      %s150 = sphi 0, %s136
      %s154 = sphi 0, %s154
      %s156 = sphi 0, %s154
      %s157 = sphi 0, %s156
      %s171 = sphi 0, %s157
      %s179 = sphi 0, %s181
      %s182 = sphi 0, %s179
      %s183 = sphi 0, %s182
      %s199 = sphi 0, %s183
    $region4: #{resnet_block.7} parent=1 // loop_header_branch
      %18 = sbr.rel (%p16) target = $region8
    $region5: #{resnet_block.7} parent=1 // loop_body
      %s20 = ssub.s32 %s15, 1
      %s21 = ssub.s32 %s15, 2
      %s28 = sadd.s32 1, %s23
      %p29 = scmp.ge.s32.totalorder %s28, 1
      %s30 = scalar_select %p29, 0, %s28
      %s31 = sadd.s32 1, %s22
      %s32 = scalar_select %p29, %s31, %s22
      %p33 = scmp.ge.s32.totalorder %s32, 2
      %s34 = scalar_select %p33, 0, %s32
      %s35 = ssub.s32 %s22, %s34
      %s36 = ssub.s32 %s23, %s30
      %s37 = sor.u32 %s35, %s36
      %p38 = scmp.eq.s32.totalorder %s37, 0
      %s40 = sadd.s32 %s39, 1
      %s41 = scalar_select %p38, %s39, %s40
      %p44 = pneg %p38
      %p45 = scmp.eq.s32.totalorder %s15, 1
      %p46 = por %p44, %p45
      %p47 = scmp.ne.s32.totalorder %s39, %s42
      %p48 = scmp.eq.s32.totalorder %s15, 0
      %p49 = por %p47, %p48
      %p50 = scmp.ne.s32.totalorder %s39, %s42
      %p51 = scmp.eq.s32.totalorder %s20, 1
      %p52 = por %p50, %p51
      %p53 = scmp.ne.s32.totalorder %s42, %s43
      %p54 = scmp.eq.s32.totalorder %s20, 0
      %p55 = por %p53, %p54
      %p56 = scmp.ne.s32.totalorder %s42, %s43
      %p57 = scmp.eq.s32.totalorder %s21, 1
      %p58 = por %p56, %p57
      %p60 = scmp.ne.s32.totalorder %s43, %s59
      %p61 = scmp.eq.s32.totalorder %s21, 0
      %p62 = por %p60, %p61
      %s63 = ssub.s32 %s22, %s34
      %s64 = ssub.s32 %s23, %s30
      %s65 = sor.u32 %s63, %s64
      %p66 = scmp.eq.s32.totalorder %s65, 0
      %s68 = sadd.s32 %s67, 1
      %s69 = scalar_select %p66, %s67, %s68
      %p72 = pneg %p66
      %p73 = scmp.eq.s32.totalorder %s15, 1
      %p74 = por %p72, %p73
      %p75 = scmp.ne.s32.totalorder %s67, %s70
      %p76 = scmp.eq.s32.totalorder %s15, 0
      %p77 = por %p75, %p76
      %p78 = scmp.ne.s32.totalorder %s67, %s70
      %p79 = scmp.eq.s32.totalorder %s20, 1
      %p80 = por %p78, %p79
      %p81 = scmp.ne.s32.totalorder %s70, %s71
      %p82 = scmp.eq.s32.totalorder %s20, 0
      %p83 = por %p81, %p82
      %p84 = scmp.ne.s32.totalorder %s70, %s71
      %p85 = scmp.eq.s32.totalorder %s21, 1
      %p86 = por %p84, %p85
      %p88 = scmp.ne.s32.totalorder %s71, %s87
      %p89 = scmp.eq.s32.totalorder %s21, 0
      %p90 = por %p88, %p89
      %s92 = sadd.s32 %s91, 1
      %p95 = scmp.eq.s32.totalorder %s15, 1
      %p96 = scmp.ne.s32.totalorder %s91, %s93
      %p97 = scmp.eq.s32.totalorder %s15, 0
      %p98 = por %p96, %p97
      %p99 = scmp.ne.s32.totalorder %s91, %s93
      %p100 = scmp.eq.s32.totalorder %s20, 1
      %p101 = por %p99, %p100
      %p102 = scmp.ne.s32.totalorder %s93, %s94
      %p103 = scmp.eq.s32.totalorder %s20, 0
      %p104 = por %p102, %p103
      %p105 = scmp.ne.s32.totalorder %s93, %s94
      %p106 = scmp.eq.s32.totalorder %s21, 1
      %p107 = por %p105, %p106
      %p109 = scmp.ne.s32.totalorder %s94, %s108
      %p110 = scmp.eq.s32.totalorder %s21, 0
      %p111 = por %p109, %p110
      %s113 = sadd.s32 %s112, 1
      %p116 = scmp.eq.s32.totalorder %s15, 1
      %p117 = scmp.ne.s32.totalorder %s112, %s114
      %p118 = scmp.eq.s32.totalorder %s15, 0
      %p119 = por %p117, %p118
      %p120 = scmp.ne.s32.totalorder %s112, %s114
      %p121 = scmp.eq.s32.totalorder %s20, 1
      %p122 = por %p120, %p121
      %p123 = scmp.ne.s32.totalorder %s114, %s115
      %p124 = scmp.eq.s32.totalorder %s20, 0
      %p125 = por %p123, %p124
      %p126 = scmp.ne.s32.totalorder %s114, %s115
      %p127 = scmp.eq.s32.totalorder %s21, 1
      %p128 = por %p126, %p127
      %p130 = scmp.ne.s32.totalorder %s115, %s129
      %p131 = scmp.eq.s32.totalorder %s21, 0
      %p132 = por %p130, %p131
      %s134 = sadd.s32 %s133, 1
      %p137 = scmp.eq.s32.totalorder %s15, 1
      %p138 = scmp.ne.s32.totalorder %s133, %s135
      %p139 = scmp.eq.s32.totalorder %s15, 0
      %p140 = por %p138, %p139
      %p141 = scmp.ne.s32.totalorder %s133, %s135
      %p142 = scmp.eq.s32.totalorder %s20, 1
      %p143 = por %p141, %p142
      %p144 = scmp.ne.s32.totalorder %s135, %s136
      %p145 = scmp.eq.s32.totalorder %s20, 0
      %p146 = por %p144, %p145
      %p147 = scmp.ne.s32.totalorder %s135, %s136
      %p148 = scmp.eq.s32.totalorder %s21, 1
      %p149 = por %p147, %p148
      %p151 = scmp.ne.s32.totalorder %s136, %s150
      %p152 = scmp.eq.s32.totalorder %s21, 0
      %p153 = por %p151, %p152
      %s155 = sadd.s32 %s154, 1
      %p158 = scmp.eq.s32.totalorder %s15, 1
      %p159 = scmp.ne.s32.totalorder %s154, %s156
      %p160 = scmp.eq.s32.totalorder %s15, 0
      %p161 = por %p159, %p160
      %p162 = scmp.ne.s32.totalorder %s154, %s156
      %p163 = scmp.eq.s32.totalorder %s20, 1
      %p164 = por %p162, %p163
      %p165 = scmp.ne.s32.totalorder %s156, %s157
      %p166 = scmp.eq.s32.totalorder %s20, 0
      %p167 = por %p165, %p166
      %p168 = scmp.ne.s32.totalorder %s156, %s157
      %p169 = scmp.eq.s32.totalorder %s21, 1
      %p170 = por %p168, %p169
      %p172 = scmp.ne.s32.totalorder %s157, %s171
      %p173 = scmp.eq.s32.totalorder %s21, 0
      %p174 = por %p172, %p173
      %s175 = ssub.s32 %s22, %s34
      %s176 = ssub.s32 %s23, %s30
      %s177 = sor.u32 %s175, %s176
      %p178 = scmp.eq.s32.totalorder %s177, 0
      %s180 = sadd.s32 %s179, 1
      %s181 = scalar_select %p178, %s179, %s180
      %p184 = pneg %p178
      %p185 = scmp.eq.s32.totalorder %s15, 1
      %p186 = por %p184, %p185
      %p187 = scmp.ne.s32.totalorder %s179, %s182
      %p188 = scmp.eq.s32.totalorder %s15, 0
      %p189 = por %p187, %p188
      %p190 = scmp.ne.s32.totalorder %s179, %s182
      %p191 = scmp.eq.s32.totalorder %s20, 1
      %p192 = por %p190, %p191
      %p193 = scmp.ne.s32.totalorder %s182, %s183
      %p194 = scmp.eq.s32.totalorder %s20, 0
      %p195 = por %p193, %p194
      %p196 = scmp.ne.s32.totalorder %s182, %s183
      %p197 = scmp.eq.s32.totalorder %s21, 1
      %p198 = por %p196, %p197
      %p200 = scmp.ne.s32.totalorder %s183, %s199
      %p201 = scmp.eq.s32.totalorder %s21, 0
      %p202 = por %p200, %p201
      %p203 = scmp.le.s32.totalorder 1, %s15
      %p204 = scmp.lt.s32.totalorder %s15, 3
      %p205 = pnand %p203, %p204
      %p206 = pneg %p205
      // Predicated region
      $region9: #{resnet_block.7} parent=5 // pred_check
        _
      $region10: #{resnet_block.7} parent=5 // pred_check_branch
        %208 = sbr.rel (%p205) target = $region12
      $region11: #{resnet_block.7} parent=5 // pred_region
        %s209 = ssub.s32 %s15, 1
        // Predicated region
        $region13: #{resnet_block.7} parent=11 // pred_check
          %p210 = pneg %p104
        $region14: #{resnet_block.7} parent=11 // pred_check_branch
          %212 = sbr.rel (%p210) target = $region16
        $region15: #{resnet_block.7} parent=11 // pred_region
          _
        $region16: #{resnet_block.7} parent=11 // pred_fallthru
          _
        // Predicated region
        $region17: #{resnet_block.7} parent=11 // pred_check
          %p213 = pneg %p125
        $region18: #{resnet_block.7} parent=11 // pred_check_branch
          %215 = sbr.rel (%p213) target = $region20
        $region19: #{resnet_block.7} parent=11 // pred_region
          _
        $region20: #{resnet_block.7} parent=11 // pred_fallthru
          _
        // Predicated region
        $region21: #{resnet_block.7} parent=11 // pred_check
          %p216 = pneg %p146
        $region22: #{resnet_block.7} parent=11 // pred_check_branch
          %218 = sbr.rel (%p216) target = $region24
        $region23: #{resnet_block.7} parent=11 // pred_region
          _
        $region24: #{resnet_block.7} parent=11 // pred_fallthru
          _
        // Predicated region
        $region25: #{resnet_block.7} parent=11 // pred_check
          %p219 = pneg %p167
        $region26: #{resnet_block.7} parent=11 // pred_check_branch
          %221 = sbr.rel (%p219) target = $region28
        $region27: #{resnet_block.7} parent=11 // pred_region
          _
        $region28: #{resnet_block.7} parent=11 // pred_fallthru
          _
      $region12: #{resnet_block.7} parent=5 // pred_fallthru
        _
      %p222 = scmp.lt.s32.totalorder %s15, 2
      // Predicated region
      $region29: #{resnet_block.7} parent=5 // pred_check
        %p223 = pneg %p222
      $region30: #{resnet_block.7} parent=5 // pred_check_branch
        %225 = sbr.rel (%p223) target = $region32
      $region31: #{resnet_block.7} parent=5 // pred_region
        // Predicated region
        $region33: #{resnet_block.7} parent=31 // pred_check
          %p226 = pneg %p49
        $region34: #{resnet_block.7} parent=31 // pred_check_branch
          %228 = sbr.rel (%p226) target = $region36
        $region35: #{resnet_block.7} parent=31 // pred_region
          %s229 = smul.u32 64, %s23
          %p230 = scmp.lt.s32.totalorder %s22, 1
          %s231 = scalar_select %p230, %s22, 1
          %p232 = scmp.lt.s32.totalorder %s229, 63
          %s233 = scalar_select %p232, %s229, 63
          %s234 = smul.addr %s231, 64
          %s235 = sadd.s32 %s233, %s234
          %s236 = smul.addr %s235, 4
          %s237 = scalar_lea.vmem %s0, %s236
          %s238 = smul.u32 64, %s23
        $region36: #{resnet_block.7} parent=31 // pred_fallthru
          _
        // Predicated region
        $region37: #{resnet_block.7} parent=31 // pred_check
          %p239 = pneg %p77
        $region38: #{resnet_block.7} parent=31 // pred_check_branch
          %241 = sbr.rel (%p239) target = $region40
        $region39: #{resnet_block.7} parent=31 // pred_region
          %s242 = smul.u32 64, %s23
          %p243 = scmp.lt.s32.totalorder %s22, 1
          %s244 = scalar_select %p243, %s22, 1
          %p245 = scmp.lt.s32.totalorder %s242, 63
          %s246 = scalar_select %p245, %s242, 63
          %s247 = smul.addr %s244, 64
          %s248 = sadd.s32 %s246, %s247
          %s249 = smul.addr %s248, 4
          %s250 = scalar_lea.vmem %s1, %s249
          %s251 = smul.u32 64, %s23
        $region40: #{resnet_block.7} parent=31 // pred_fallthru
          _
      $region32: #{resnet_block.7} parent=5 // pred_fallthru
        _
      %p252 = scmp.le.s32.totalorder 1, %s15
      %p253 = scmp.lt.s32.totalorder %s15, 3
      %p254 = pnand %p252, %p253
      %p255 = pneg %p254
      // Predicated region
      $region41: #{resnet_block.7} parent=5 // pred_check
        _
      $region42: #{resnet_block.7} parent=5 // pred_check_branch
        %257 = sbr.rel (%p254) target = $region44
      $region43: #{resnet_block.7} parent=5 // pred_region
        %s258 = ssub.s32 %s15, 1
        %s259 = smul.u32 64, %s25
        %p260 = scmp.lt.s32.totalorder %s24, 1
        %s261 = scalar_select %p260, %s24, 1
        %p262 = scmp.lt.s32.totalorder %s259, 63
        %s263 = scalar_select %p262, %s259, 63
        %s264 = smul.addr %s261, 64
        %s265 = sadd.s32 %s263, %s264
        %s266 = smul.addr %s265, 4
        %s267 = scalar_lea.vmem %s0, %s266
        %p268 = pneg %p55
        %p269 = pneg %p52
        %s270 = smul.u32 64, %s25
        %p271 = scmp.lt.s32.totalorder %s24, 1
        %s272 = scalar_select %p271, %s24, 1
        %p273 = scmp.lt.s32.totalorder %s270, 63
        %s274 = scalar_select %p273, %s270, 63
        %s275 = smul.addr %s272, 64
        %s276 = sadd.s32 %s274, %s275
        %s277 = smul.addr %s276, 4
        %s278 = scalar_lea.vmem %s1, %s277
        %p279 = pneg %p83
        %p280 = pneg %p80
        %p281 = pneg %p104
        %p282 = pneg %p101
        %p283 = pneg %p125
        %p284 = pneg %p122
        %p285 = pneg %p146
        %p286 = pneg %p143
        %p287 = pneg %p167
        %p288 = pneg %p164
        %p289 = pneg %p195
        %p290 = pneg %p192
        %s291 = sand.u32 %s182, 1
        %s292 = scalar_lea.sflag [#allocation3], %s291
        %s293 = sand.u32 %s182, 1
        %s294 = smul.addr %s293, 32
        %s295 = scalar_lea.vmem [#allocation2], %s294
        %s296 = smul.u32 64, %s25
        %p297 = scmp.lt.s32.totalorder %s24, 1
        %s298 = scalar_select %p297, %s24, 1
        %p299 = scmp.lt.s32.totalorder %s296, 63
        %s300 = scalar_select %p299, %s296, 63
        %s301 = smul.addr %s298, 64
        %s302 = sadd.s32 %s300, %s301
        %s303 = smul.addr %s302, 4
        %s304 = scalar_lea.vmem %s0, %s303
        %s305 = smul.u32 64, %s25
        %s306 = smul.u32 64, %s25
        %p307 = scmp.lt.s32.totalorder %s24, 1
        %s308 = scalar_select %p307, %s24, 1
        %p309 = scmp.lt.s32.totalorder %s306, 63
        %s310 = scalar_select %p309, %s306, 63
        %s311 = smul.addr %s308, 64
        %s312 = sadd.s32 %s310, %s311
        %s313 = smul.addr %s312, 4
        %s314 = scalar_lea.vmem %s1, %s313
        %s315 = smul.u32 64, %s25
        %s316 = smul.u32 4, %s25
        %v318 = vld [vmem:[%s304] sm:$0xf]
        %v319 = vld [vmem:[%s304 + $0x4] sm:$0xf]
        %v320 = vld [vmem:[%s304 + $0x8] sm:$0xf]
        %v321 = vld [vmem:[%s304 + $0xc] sm:$0xf]
        %v322 = vld [vmem:[%s304 + $0x10] sm:$0xf]
        %v323 = vld [vmem:[%s304 + $0x14] sm:$0xf]
        %v324 = vld [vmem:[%s304 + $0x18] sm:$0xf]
        %v325 = vld [vmem:[%s304 + $0x1c] sm:$0xf]
        %v326 = vld [vmem:[%s304 + $0x20] sm:$0xf]
        %v327 = vld [vmem:[%s304 + $0x24] sm:$0xf]
        %v328 = vld [vmem:[%s304 + $0x28] sm:$0xf]
        %v329 = vld [vmem:[%s304 + $0x2c] sm:$0xf]
        %v330 = vld [vmem:[%s304 + $0x30] sm:$0xf]
        %v331 = vld [vmem:[%s304 + $0x34] sm:$0xf]
        %v332 = vld [vmem:[%s304 + $0x38] sm:$0xf]
        %v333 = vld [vmem:[%s304 + $0x3c] sm:$0xf]
        %v334 = vld [vmem:[%s304 + $0x40] sm:$0xf]
        %v335 = vld [vmem:[%s304 + $0x44] sm:$0xf]
        %v336 = vld [vmem:[%s304 + $0x48] sm:$0xf]
        %v337 = vld [vmem:[%s304 + $0x4c] sm:$0xf]
        %v338 = vld [vmem:[%s304 + $0x50] sm:$0xf]
        %v339 = vld [vmem:[%s304 + $0x54] sm:$0xf]
        %v340 = vld [vmem:[%s304 + $0x58] sm:$0xf]
        %v341 = vld [vmem:[%s304 + $0x5c] sm:$0xf]
        %v342 = vld [vmem:[%s304 + $0x60] sm:$0xf]
        %v343 = vld [vmem:[%s304 + $0x64] sm:$0xf]
        %v344 = vld [vmem:[%s304 + $0x68] sm:$0xf]
        %v345 = vld [vmem:[%s304 + $0x6c] sm:$0xf]
        %v346 = vld [vmem:[%s304 + $0x70] sm:$0xf]
        %v347 = vld [vmem:[%s304 + $0x74] sm:$0xf]
        %v348 = vld [vmem:[%s304 + $0x78] sm:$0xf]
        %v349 = vld [vmem:[%s304 + $0x7c] sm:$0xf]
        %v350 = vld [vmem:[%s304 + $0x80] sm:$0xf]
        %v351 = vld [vmem:[%s304 + $0x84] sm:$0xf]
        %v352 = vld [vmem:[%s304 + $0x88] sm:$0xf]
        %v353 = vld [vmem:[%s304 + $0x8c] sm:$0xf]
        %v354 = vld [vmem:[%s304 + $0x90] sm:$0xf]
        %v355 = vld [vmem:[%s304 + $0x94] sm:$0xf]
        %v356 = vld [vmem:[%s304 + $0x98] sm:$0xf]
        %v357 = vld [vmem:[%s304 + $0x9c] sm:$0xf]
        %v358 = vld [vmem:[%s304 + $0xa0] sm:$0xf]
        %v359 = vld [vmem:[%s304 + $0xa4] sm:$0xf]
        %v360 = vld [vmem:[%s304 + $0xa8] sm:$0xf]
        %v361 = vld [vmem:[%s304 + $0xac] sm:$0xf]
        %v362 = vld [vmem:[%s304 + $0xb0] sm:$0xf]
        %v363 = vld [vmem:[%s304 + $0xb4] sm:$0xf]
        %v364 = vld [vmem:[%s304 + $0xb8] sm:$0xf]
        %v365 = vld [vmem:[%s304 + $0xbc] sm:$0xf]
        %v366 = vld [vmem:[%s304 + $0xc0] sm:$0xf]
        %v367 = vld [vmem:[%s304 + $0xc4] sm:$0xf]
        %v368 = vld [vmem:[%s304 + $0xc8] sm:$0xf]
        %v369 = vld [vmem:[%s304 + $0xcc] sm:$0xf]
        %v370 = vld [vmem:[%s304 + $0xd0] sm:$0xf]
        %v371 = vld [vmem:[%s304 + $0xd4] sm:$0xf]
        %v372 = vld [vmem:[%s304 + $0xd8] sm:$0xf]
        %v373 = vld [vmem:[%s304 + $0xdc] sm:$0xf]
        %v374 = vld [vmem:[%s304 + $0xe0] sm:$0xf]
        %v375 = vld [vmem:[%s304 + $0xe4] sm:$0xf]
        %v376 = vld [vmem:[%s304 + $0xe8] sm:$0xf]
        %v377 = vld [vmem:[%s304 + $0xec] sm:$0xf]
        %v378 = vld [vmem:[%s304 + $0xf0] sm:$0xf]
        %v379 = vld [vmem:[%s304 + $0xf4] sm:$0xf]
        %v380 = vld [vmem:[%s304 + $0xf8] sm:$0xf]
        %v381 = vld [vmem:[%s304 + $0xfc] sm:$0xf]
        %v382 = vunpack.c.l.bf16 %v318
        %v383 = vunpack.c.l.bf16 %v319
        %v384 = vunpack.c.l.bf16 %v320
        %v385 = vunpack.c.l.bf16 %v321
        %v386 = vunpack.c.l.bf16 %v322
        %v387 = vunpack.c.l.bf16 %v323
        %v388 = vunpack.c.l.bf16 %v324
        %v389 = vunpack.c.l.bf16 %v325
        %v390 = vunpack.c.l.bf16 %v326
        %v391 = vunpack.c.l.bf16 %v327
        %v392 = vunpack.c.l.bf16 %v328
        %v393 = vunpack.c.l.bf16 %v329
        %v394 = vunpack.c.l.bf16 %v330
        %v395 = vunpack.c.l.bf16 %v331
        %v396 = vunpack.c.l.bf16 %v332
        %v397 = vunpack.c.l.bf16 %v333
        %v398 = vunpack.c.l.bf16 %v334
        %v399 = vunpack.c.l.bf16 %v335
        %v400 = vunpack.c.l.bf16 %v336
        %v401 = vunpack.c.l.bf16 %v337
        %v402 = vunpack.c.l.bf16 %v338
        %v403 = vunpack.c.l.bf16 %v339
        %v404 = vunpack.c.l.bf16 %v340
        %v405 = vunpack.c.l.bf16 %v341
        %v406 = vunpack.c.l.bf16 %v342
        %v407 = vunpack.c.l.bf16 %v343
        %v408 = vunpack.c.l.bf16 %v344
        %v409 = vunpack.c.l.bf16 %v345
        %v410 = vunpack.c.l.bf16 %v346
        %v411 = vunpack.c.l.bf16 %v347
        %v412 = vunpack.c.l.bf16 %v348
        %v413 = vunpack.c.l.bf16 %v349
        %v414 = vunpack.c.l.bf16 %v350
        %v415 = vunpack.c.l.bf16 %v351
        %v416 = vunpack.c.l.bf16 %v352
        %v417 = vunpack.c.l.bf16 %v353
        %v418 = vunpack.c.l.bf16 %v354
        %v419 = vunpack.c.l.bf16 %v355
        %v420 = vunpack.c.l.bf16 %v356
        %v421 = vunpack.c.l.bf16 %v357
        %v422 = vunpack.c.l.bf16 %v358
        %v423 = vunpack.c.l.bf16 %v359
        %v424 = vunpack.c.l.bf16 %v360
        %v425 = vunpack.c.l.bf16 %v361
        %v426 = vunpack.c.l.bf16 %v362
        %v427 = vunpack.c.l.bf16 %v363
        %v428 = vunpack.c.l.bf16 %v364
        %v429 = vunpack.c.l.bf16 %v365
        %v430 = vunpack.c.l.bf16 %v366
        %v431 = vunpack.c.l.bf16 %v367
        %v432 = vunpack.c.l.bf16 %v368
        %v433 = vunpack.c.l.bf16 %v369
        %v434 = vunpack.c.l.bf16 %v370
        %v435 = vunpack.c.l.bf16 %v371
        %v436 = vunpack.c.l.bf16 %v372
        %v437 = vunpack.c.l.bf16 %v373
        %v438 = vunpack.c.l.bf16 %v374
        %v439 = vunpack.c.l.bf16 %v375
        %v440 = vunpack.c.l.bf16 %v376
        %v441 = vunpack.c.l.bf16 %v377
        %v442 = vunpack.c.l.bf16 %v378
        %v443 = vunpack.c.l.bf16 %v379
        %v444 = vunpack.c.l.bf16 %v380
        %v445 = vunpack.c.l.bf16 %v381
        %v446 = vld [vmem:[%s314] sm:$0xf]
        %v447 = vld [vmem:[%s314 + $0x4] sm:$0xf]
        %v448 = vld [vmem:[%s314 + $0x8] sm:$0xf]
        %v449 = vld [vmem:[%s314 + $0xc] sm:$0xf]
        %v450 = vld [vmem:[%s314 + $0x10] sm:$0xf]
        %v451 = vld [vmem:[%s314 + $0x14] sm:$0xf]
        %v452 = vld [vmem:[%s314 + $0x18] sm:$0xf]
        %v453 = vld [vmem:[%s314 + $0x1c] sm:$0xf]
        %v454 = vld [vmem:[%s314 + $0x20] sm:$0xf]
        %v455 = vld [vmem:[%s314 + $0x24] sm:$0xf]
        %v456 = vld [vmem:[%s314 + $0x28] sm:$0xf]
        %v457 = vld [vmem:[%s314 + $0x2c] sm:$0xf]
        %v458 = vld [vmem:[%s314 + $0x30] sm:$0xf]
        %v459 = vld [vmem:[%s314 + $0x34] sm:$0xf]
        %v460 = vld [vmem:[%s314 + $0x38] sm:$0xf]
        %v461 = vld [vmem:[%s314 + $0x3c] sm:$0xf]
        %v462 = vld [vmem:[%s314 + $0x40] sm:$0xf]
        %v463 = vld [vmem:[%s314 + $0x44] sm:$0xf]
        %v464 = vld [vmem:[%s314 + $0x48] sm:$0xf]
        %v465 = vld [vmem:[%s314 + $0x4c] sm:$0xf]
        %v466 = vld [vmem:[%s314 + $0x50] sm:$0xf]
        %v467 = vld [vmem:[%s314 + $0x54] sm:$0xf]
        %v468 = vld [vmem:[%s314 + $0x58] sm:$0xf]
        %v469 = vld [vmem:[%s314 + $0x5c] sm:$0xf]
        %v470 = vld [vmem:[%s314 + $0x60] sm:$0xf]
        %v471 = vld [vmem:[%s314 + $0x64] sm:$0xf]
        %v472 = vld [vmem:[%s314 + $0x68] sm:$0xf]
        %v473 = vld [vmem:[%s314 + $0x6c] sm:$0xf]
        %v474 = vld [vmem:[%s314 + $0x70] sm:$0xf]
        %v475 = vld [vmem:[%s314 + $0x74] sm:$0xf]
        %v476 = vld [vmem:[%s314 + $0x78] sm:$0xf]
        %v477 = vld [vmem:[%s314 + $0x7c] sm:$0xf]
        %v478 = vld [vmem:[%s314 + $0x80] sm:$0xf]
        %v479 = vld [vmem:[%s314 + $0x84] sm:$0xf]
        %v480 = vld [vmem:[%s314 + $0x88] sm:$0xf]
        %v481 = vld [vmem:[%s314 + $0x8c] sm:$0xf]
        %v482 = vld [vmem:[%s314 + $0x90] sm:$0xf]
        %v483 = vld [vmem:[%s314 + $0x94] sm:$0xf]
        %v484 = vld [vmem:[%s314 + $0x98] sm:$0xf]
        %v485 = vld [vmem:[%s314 + $0x9c] sm:$0xf]
        %v486 = vld [vmem:[%s314 + $0xa0] sm:$0xf]
        %v487 = vld [vmem:[%s314 + $0xa4] sm:$0xf]
        %v488 = vld [vmem:[%s314 + $0xa8] sm:$0xf]
        %v489 = vld [vmem:[%s314 + $0xac] sm:$0xf]
        %v490 = vld [vmem:[%s314 + $0xb0] sm:$0xf]
        %v491 = vld [vmem:[%s314 + $0xb4] sm:$0xf]
        %v492 = vld [vmem:[%s314 + $0xb8] sm:$0xf]
        %v493 = vld [vmem:[%s314 + $0xbc] sm:$0xf]
        %v494 = vld [vmem:[%s314 + $0xc0] sm:$0xf]
        %v495 = vld [vmem:[%s314 + $0xc4] sm:$0xf]
        %v496 = vld [vmem:[%s314 + $0xc8] sm:$0xf]
        %v497 = vld [vmem:[%s314 + $0xcc] sm:$0xf]
        %v498 = vld [vmem:[%s314 + $0xd0] sm:$0xf]
        %v499 = vld [vmem:[%s314 + $0xd4] sm:$0xf]
        %v500 = vld [vmem:[%s314 + $0xd8] sm:$0xf]
        %v501 = vld [vmem:[%s314 + $0xdc] sm:$0xf]
        %v502 = vld [vmem:[%s314 + $0xe0] sm:$0xf]
        %v503 = vld [vmem:[%s314 + $0xe4] sm:$0xf]
        %v504 = vld [vmem:[%s314 + $0xe8] sm:$0xf]
        %v505 = vld [vmem:[%s314 + $0xec] sm:$0xf]
        %v506 = vld [vmem:[%s314 + $0xf0] sm:$0xf]
        %v507 = vld [vmem:[%s314 + $0xf4] sm:$0xf]
        %v508 = vld [vmem:[%s314 + $0xf8] sm:$0xf]
        %v509 = vld [vmem:[%s314 + $0xfc] sm:$0xf]
        %v510 = vld [vmem:[%s2] sm:$0xf]
        %v511 = vld [vmem:[%s2 + $0x4] sm:$0xf]
        %v512 = vld [vmem:[%s2 + $0x8] sm:$0xf]
        %v513 = vld [vmem:[%s2 + $0xc] sm:$0xf]
        %v514 = vld [vmem:[%s2 + $0x10] sm:$0xf]
        %v515 = vld [vmem:[%s2 + $0x14] sm:$0xf]
        %v516 = vld [vmem:[%s2 + $0x18] sm:$0xf]
        %v517 = vld [vmem:[%s2 + $0x1c] sm:$0xf]
        %v518 = vld [vmem:[%s2 + $0x20] sm:$0xf]
        %v519 = vld [vmem:[%s2 + $0x24] sm:$0xf]
        %v520 = vld [vmem:[%s2 + $0x28] sm:$0xf]
        %v521 = vld [vmem:[%s2 + $0x2c] sm:$0xf]
        %v522 = vld [vmem:[%s2 + $0x30] sm:$0xf]
        %v523 = vld [vmem:[%s2 + $0x34] sm:$0xf]
        %v524 = vld [vmem:[%s2 + $0x38] sm:$0xf]
        %v525 = vld [vmem:[%s2 + $0x3c] sm:$0xf]
        %v590 = vunpack.c.l.b16 %v446
        %v591 = vunpack.c.l.b16 %v447
        %v592 = vunpack.c.l.b16 %v448
        %v593 = vunpack.c.l.b16 %v449
        %v594 = vunpack.c.l.b16 %v450
        %v595 = vunpack.c.l.b16 %v451
        %v596 = vunpack.c.l.b16 %v452
        %v597 = vunpack.c.l.b16 %v453
        %v598 = vunpack.c.l.b16 %v454
        %v599 = vunpack.c.l.b16 %v455
        %v600 = vunpack.c.l.b16 %v456
        %v601 = vunpack.c.l.b16 %v457
        %v602 = vunpack.c.l.b16 %v458
        %v603 = vunpack.c.l.b16 %v459
        %v604 = vunpack.c.l.b16 %v460
        %v605 = vunpack.c.l.b16 %v461
        %v606 = vunpack.c.l.b16 %v462
        %v607 = vunpack.c.l.b16 %v463
        %v608 = vunpack.c.l.b16 %v464
        %v609 = vunpack.c.l.b16 %v465
        %v610 = vunpack.c.l.b16 %v466
        %v611 = vunpack.c.l.b16 %v467
        %v612 = vunpack.c.l.b16 %v468
        %v613 = vunpack.c.l.b16 %v469
        %v614 = vunpack.c.l.b16 %v470
        %v615 = vunpack.c.l.b16 %v471
        %v616 = vunpack.c.l.b16 %v472
        %v617 = vunpack.c.l.b16 %v473
        %v618 = vunpack.c.l.b16 %v474
        %v619 = vunpack.c.l.b16 %v475
        %v620 = vunpack.c.l.b16 %v476
        %v621 = vunpack.c.l.b16 %v477
        %v622 = vunpack.c.l.b16 %v478
        %v623 = vunpack.c.l.b16 %v479
        %v624 = vunpack.c.l.b16 %v480
        %v625 = vunpack.c.l.b16 %v481
        %v626 = vunpack.c.l.b16 %v482
        %v627 = vunpack.c.l.b16 %v483
        %v628 = vunpack.c.l.b16 %v484
        %v629 = vunpack.c.l.b16 %v485
        %v630 = vunpack.c.l.b16 %v486
        %v631 = vunpack.c.l.b16 %v487
        %v632 = vunpack.c.l.b16 %v488
        %v633 = vunpack.c.l.b16 %v489
        %v634 = vunpack.c.l.b16 %v490
        %v635 = vunpack.c.l.b16 %v491
        %v636 = vunpack.c.l.b16 %v492
        %v637 = vunpack.c.l.b16 %v493
        %v638 = vunpack.c.l.b16 %v494
        %v639 = vunpack.c.l.b16 %v495
        %v640 = vunpack.c.l.b16 %v496
        %v641 = vunpack.c.l.b16 %v497
        %v642 = vunpack.c.l.b16 %v498
        %v643 = vunpack.c.l.b16 %v499
        %v644 = vunpack.c.l.b16 %v500
        %v645 = vunpack.c.l.b16 %v501
        %v646 = vunpack.c.l.b16 %v502
        %v647 = vunpack.c.l.b16 %v503
        %v648 = vunpack.c.l.b16 %v504
        %v649 = vunpack.c.l.b16 %v505
        %v650 = vunpack.c.l.b16 %v506
        %v651 = vunpack.c.l.b16 %v507
        %v652 = vunpack.c.l.b16 %v508
        %v653 = vunpack.c.l.b16 %v509
        %v654 = vpack.c.b16 %v591, %v590
        %v655 = vpack.c.b16 %v593, %v592
        %v656 = vpack.c.b16 %v595, %v594
        %v657 = vpack.c.b16 %v597, %v596
        %v658 = vpack.c.b16 %v599, %v598
        %v659 = vpack.c.b16 %v601, %v600
        %v660 = vpack.c.b16 %v603, %v602
        %v661 = vpack.c.b16 %v605, %v604
        %v662 = vpack.c.b16 %v607, %v606
        %v663 = vpack.c.b16 %v609, %v608
        %v664 = vpack.c.b16 %v611, %v610
        %v665 = vpack.c.b16 %v613, %v612
        %v666 = vpack.c.b16 %v615, %v614
        %v667 = vpack.c.b16 %v617, %v616
        %v668 = vpack.c.b16 %v619, %v618
        %v669 = vpack.c.b16 %v621, %v620
        %v670 = vpack.c.b16 %v623, %v622
        %v671 = vpack.c.b16 %v625, %v624
        %v672 = vpack.c.b16 %v627, %v626
        %v673 = vpack.c.b16 %v629, %v628
        %v674 = vpack.c.b16 %v631, %v630
        %v675 = vpack.c.b16 %v633, %v632
        %v676 = vpack.c.b16 %v635, %v634
        %v677 = vpack.c.b16 %v637, %v636
        %v678 = vpack.c.b16 %v639, %v638
        %v679 = vpack.c.b16 %v641, %v640
        %v680 = vpack.c.b16 %v643, %v642
        %v681 = vpack.c.b16 %v645, %v644
        %v682 = vpack.c.b16 %v647, %v646
        %v683 = vpack.c.b16 %v649, %v648
        %v684 = vpack.c.b16 %v651, %v650
        %v685 = vpack.c.b16 %v653, %v652
        %v734 = vunpack.c.l.b16 %v510
        %v735 = vunpack.c.l.b16 %v511
        %v736 = vunpack.c.l.b16 %v512
        %v737 = vunpack.c.l.b16 %v513
        %v738 = vunpack.c.l.b16 %v514
        %v739 = vunpack.c.l.b16 %v515
        %v740 = vunpack.c.l.b16 %v516
        %v741 = vunpack.c.l.b16 %v517
        %v742 = vunpack.c.l.b16 %v518
        %v743 = vunpack.c.l.b16 %v519
        %v744 = vunpack.c.l.b16 %v520
        %v745 = vunpack.c.l.b16 %v521
        %v746 = vunpack.c.l.b16 %v522
        %v747 = vunpack.c.l.b16 %v523
        %v748 = vunpack.c.l.b16 %v524
        %v749 = vunpack.c.l.b16 %v525
        %v750 = vpack.c.b16 %v735, %v734
        %v751 = vpack.c.b16 %v737, %v736
        %v752 = vpack.c.b16 %v739, %v738
        %v753 = vpack.c.b16 %v741, %v740
        %v754 = vpack.c.b16 %v743, %v742
        %v755 = vpack.c.b16 %v745, %v744
        %v756 = vpack.c.b16 %v747, %v746
        %v757 = vpack.c.b16 %v749, %v748
        %766 = vmatprep.subr.bf16.mxu0 0
        %767 = vmatpush1.bf16.msra.mxu0 %v750
        %768 = vmatprep.subr.bf16.mxu0 0
        %769 = vmatpush1.bf16.msra.mxu0 %v751
        %770 = vmatprep.subr.bf16.mxu0 0
        %771 = vmatpush1.bf16.msra.mxu0 %v752
        %772 = vmatprep.subr.bf16.mxu0 0
        %773 = vmatpush1.bf16.msra.mxu0 %v753
        %774 = vmatprep.subr.bf16.mxu0 0
        %775 = vmatpush1.bf16.msra.mxu0 %v754
        %776 = vmatprep.subr.bf16.mxu0 0
        %777 = vmatpush1.bf16.msra.mxu0 %v755
        %778 = vmatprep.subr.bf16.mxu0 0
        %779 = vmatpush1.bf16.msra.mxu0 %v756
        %780 = vmatprep.subr.bf16.mxu0 0
        %781 = vmatpush1.bf16.msra.mxu0 %v757
        %782 = vmatprep.subr.bf16.mxu0 0
        %783 = vmatpush1.bf16.msra.mxu0 0
        %784 = vmatprep.subr.bf16.mxu0 0
        %785 = vmatpush1.bf16.msra.mxu0 0
        %786 = vmatprep.subr.bf16.mxu0 0
        %787 = vmatpush1.bf16.msra.mxu0 0
        %788 = vmatprep.subr.bf16.mxu0 0
        %789 = vmatpush1.bf16.msra.mxu0 0
        %790 = vmatprep.subr.bf16.mxu0 0
        %791 = vmatpush1.bf16.msra.mxu0 0
        %792 = vmatprep.subr.bf16.mxu0 0
        %793 = vmatpush1.bf16.msra.mxu0 0
        %794 = vmatprep.subr.bf16.mxu0 0
        %795 = vmatpush1.bf16.msra.mxu0 0
        %796 = vmatprep.subr.bf16.mxu0 0
        %797 = vmatpush1.bf16.msra.mxu0 0
        %798 = vmatprep.mubr.bf16.mxu0 0
        %799 = vmatmul.mubr.bf16.gmra.mrb[0].mxu0 %v654
        %v800 = vpop.f32.mrb[0].mxu0
        %v801 = vadd.f32 0.0, %v800
        %v802 = vpop.f32.mrb[0].mxu0
        %v803 = vpop.f32.mrb[0].mxu0
        %v804 = vadd.f32 0.0, %v803
        %v805 = vpop.f32.mrb[0].mxu0
        %806 = vmatprep.mubr.bf16.mxu0 0
        %807 = vmatmul.mubr.bf16.gmra.mrb[0].mxu0 %v655
        %v808 = vpop.f32.mrb[0].mxu0
        %v809 = vadd.f32 0.0, %v808
        %v810 = vpop.f32.mrb[0].mxu0
        %v811 = vpop.f32.mrb[0].mxu0
        %v812 = vadd.f32 0.0, %v811
        %v813 = vpop.f32.mrb[0].mxu0
        %814 = vmatprep.mubr.bf16.mxu0 0
        %815 = vmatmul.mubr.bf16.gmra.mrb[0].mxu0 %v656
        %v816 = vpop.f32.mrb[0].mxu0
        %v817 = vadd.f32 0.0, %v816
        %v818 = vpop.f32.mrb[0].mxu0
        %v819 = vpop.f32.mrb[0].mxu0
        %v820 = vadd.f32 0.0, %v819
        %v821 = vpop.f32.mrb[0].mxu0
        %822 = vmatprep.mubr.bf16.mxu0 0
        %823 = vmatmul.mubr.bf16.gmra.mrb[0].mxu0 %v657
        %v824 = vpop.f32.mrb[0].mxu0
        %v825 = vadd.f32 0.0, %v824
        %v826 = vpop.f32.mrb[0].mxu0
        %v827 = vpop.f32.mrb[0].mxu0
        %v828 = vadd.f32 0.0, %v827
        %v829 = vpop.f32.mrb[0].mxu0
        %830 = vmatprep.mubr.bf16.mxu0 0
        %831 = vmatmul.mubr.bf16.gmra.mrb[0].mxu0 %v658
        %v832 = vpop.f32.mrb[0].mxu0
        %v833 = vadd.f32 0.0, %v832
        %v834 = vpop.f32.mrb[0].mxu0
        %v835 = vpop.f32.mrb[0].mxu0
        %v836 = vadd.f32 0.0, %v835
        %v837 = vpop.f32.mrb[0].mxu0
        %838 = vmatprep.mubr.bf16.mxu0 0
        %839 = vmatmul.mubr.bf16.gmra.mrb[0].mxu0 %v659
        %v840 = vpop.f32.mrb[0].mxu0
        %v841 = vadd.f32 0.0, %v840
        %v842 = vpop.f32.mrb[0].mxu0
        %v843 = vpop.f32.mrb[0].mxu0
        %v844 = vadd.f32 0.0, %v843
        %v845 = vpop.f32.mrb[0].mxu0
        %846 = vmatprep.mubr.bf16.mxu0 0
        %847 = vmatmul.mubr.bf16.gmra.mrb[0].mxu0 %v660
        %v848 = vpop.f32.mrb[0].mxu0
        %v849 = vadd.f32 0.0, %v848
        %v850 = vpop.f32.mrb[0].mxu0
        %v851 = vpop.f32.mrb[0].mxu0
        %v852 = vadd.f32 0.0, %v851
        %v853 = vpop.f32.mrb[0].mxu0
        %854 = vmatprep.mubr.bf16.mxu0 0
        %855 = vmatmul.mubr.bf16.gmra.mrb[0].mxu0 %v661
        %v856 = vpop.f32.mrb[0].mxu0
        %v857 = vadd.f32 0.0, %v856
        %v858 = vpop.f32.mrb[0].mxu0
        %v859 = vpop.f32.mrb[0].mxu0
        %v860 = vadd.f32 0.0, %v859
        %v861 = vpop.f32.mrb[0].mxu0
        %862 = vmatprep.mubr.bf16.mxu0 0
        %863 = vmatmul.mubr.bf16.gmra.mrb[0].mxu0 %v662
        %v864 = vpop.f32.mrb[0].mxu0
        %v865 = vadd.f32 0.0, %v864
        %v866 = vpop.f32.mrb[0].mxu0
        %v867 = vpop.f32.mrb[0].mxu0
        %v868 = vadd.f32 0.0, %v867
        %v869 = vpop.f32.mrb[0].mxu0
        %870 = vmatprep.mubr.bf16.mxu0 0
        %871 = vmatmul.mubr.bf16.gmra.mrb[0].mxu0 %v663
        %v872 = vpop.f32.mrb[0].mxu0
        %v873 = vadd.f32 0.0, %v872
        %v874 = vpop.f32.mrb[0].mxu0
        %v875 = vpop.f32.mrb[0].mxu0
        %v876 = vadd.f32 0.0, %v875
        %v877 = vpop.f32.mrb[0].mxu0
        %878 = vmatprep.mubr.bf16.mxu0 0
        %879 = vmatmul.mubr.bf16.gmra.mrb[0].mxu0 %v664
        %v880 = vpop.f32.mrb[0].mxu0
        %v881 = vadd.f32 0.0, %v880
        %v882 = vpop.f32.mrb[0].mxu0
        %v883 = vpop.f32.mrb[0].mxu0
        %v884 = vadd.f32 0.0, %v883
        %v885 = vpop.f32.mrb[0].mxu0
        %886 = vmatprep.mubr.bf16.mxu0 0
        %887 = vmatmul.mubr.bf16.gmra.mrb[0].mxu0 %v665
        %v888 = vpop.f32.mrb[0].mxu0
        %v889 = vadd.f32 0.0, %v888
        %v890 = vpop.f32.mrb[0].mxu0
        %v891 = vpop.f32.mrb[0].mxu0
        %v892 = vadd.f32 0.0, %v891
        %v893 = vpop.f32.mrb[0].mxu0
        %894 = vmatprep.mubr.bf16.mxu0 0
        %895 = vmatmul.mubr.bf16.gmra.mrb[0].mxu0 %v666
        %v896 = vpop.f32.mrb[0].mxu0
        %v897 = vadd.f32 0.0, %v896
        %v898 = vpop.f32.mrb[0].mxu0
        %v899 = vpop.f32.mrb[0].mxu0
        %v900 = vadd.f32 0.0, %v899
        %v901 = vpop.f32.mrb[0].mxu0
        %902 = vmatprep.mubr.bf16.mxu0 0
        %903 = vmatmul.mubr.bf16.gmra.mrb[0].mxu0 %v667
        %v904 = vpop.f32.mrb[0].mxu0
        %v905 = vadd.f32 0.0, %v904
        %v906 = vpop.f32.mrb[0].mxu0
        %v907 = vpop.f32.mrb[0].mxu0
        %v908 = vadd.f32 0.0, %v907
        %v909 = vpop.f32.mrb[0].mxu0
        %910 = vmatprep.mubr.bf16.mxu0 0
        %911 = vmatmul.mubr.bf16.gmra.mrb[0].mxu0 %v668
        %v912 = vpop.f32.mrb[0].mxu0
        %v913 = vadd.f32 0.0, %v912
        %v914 = vpop.f32.mrb[0].mxu0
        %v915 = vpop.f32.mrb[0].mxu0
        %v916 = vadd.f32 0.0, %v915
        %v917 = vpop.f32.mrb[0].mxu0
        %918 = vmatprep.mubr.bf16.mxu0 0
        %919 = vmatmul.mubr.bf16.gmra.mrb[0].mxu0 %v669
        %v920 = vpop.f32.mrb[0].mxu0
        %v921 = vadd.f32 0.0, %v920
        %v922 = vpop.f32.mrb[0].mxu0
        %v923 = vpop.f32.mrb[0].mxu0
        %v924 = vadd.f32 0.0, %v923
        %v925 = vpop.f32.mrb[0].mxu0
        %926 = vmatprep.mubr.bf16.mxu0 0
        %927 = vmatmul.mubr.bf16.gmra.mrb[0].mxu0 %v670
        %v928 = vpop.f32.mrb[0].mxu0
        %v929 = vadd.f32 0.0, %v928
        %v930 = vpop.f32.mrb[0].mxu0
        %v931 = vpop.f32.mrb[0].mxu0
        %v932 = vadd.f32 0.0, %v931
        %v933 = vpop.f32.mrb[0].mxu0
        %934 = vmatprep.mubr.bf16.mxu0 0
        %935 = vmatmul.mubr.bf16.gmra.mrb[0].mxu0 %v671
        %v936 = vpop.f32.mrb[0].mxu0
        %v937 = vadd.f32 0.0, %v936
        %v938 = vpop.f32.mrb[0].mxu0
        %v939 = vpop.f32.mrb[0].mxu0
        %v940 = vadd.f32 0.0, %v939
        %v941 = vpop.f32.mrb[0].mxu0
        %942 = vmatprep.mubr.bf16.mxu0 0
        %943 = vmatmul.mubr.bf16.gmra.mrb[0].mxu0 %v672
        %v944 = vpop.f32.mrb[0].mxu0
        %v945 = vadd.f32 0.0, %v944
        %v946 = vpop.f32.mrb[0].mxu0
        %v947 = vpop.f32.mrb[0].mxu0
        %v948 = vadd.f32 0.0, %v947
        %v949 = vpop.f32.mrb[0].mxu0
        %950 = vmatprep.mubr.bf16.mxu0 0
        %951 = vmatmul.mubr.bf16.gmra.mrb[0].mxu0 %v673
        %v952 = vpop.f32.mrb[0].mxu0
        %v953 = vadd.f32 0.0, %v952
        %v954 = vpop.f32.mrb[0].mxu0
        %v955 = vpop.f32.mrb[0].mxu0
        %v956 = vadd.f32 0.0, %v955
        %v957 = vpop.f32.mrb[0].mxu0
        %958 = vmatprep.mubr.bf16.mxu0 0
        %959 = vmatmul.mubr.bf16.gmra.mrb[0].mxu0 %v674
        %v960 = vpop.f32.mrb[0].mxu0
        %v961 = vadd.f32 0.0, %v960
        %v962 = vpop.f32.mrb[0].mxu0
        %v963 = vpop.f32.mrb[0].mxu0
        %v964 = vadd.f32 0.0, %v963
        %v965 = vpop.f32.mrb[0].mxu0
        %966 = vmatprep.mubr.bf16.mxu0 0
        %967 = vmatmul.mubr.bf16.gmra.mrb[0].mxu0 %v675
        %v968 = vpop.f32.mrb[0].mxu0
        %v969 = vadd.f32 0.0, %v968
        %v970 = vpop.f32.mrb[0].mxu0
        %v971 = vpop.f32.mrb[0].mxu0
        %v972 = vadd.f32 0.0, %v971
        %v973 = vpop.f32.mrb[0].mxu0
        %974 = vmatprep.mubr.bf16.mxu0 0
        %975 = vmatmul.mubr.bf16.gmra.mrb[0].mxu0 %v676
        %v976 = vpop.f32.mrb[0].mxu0
        %v977 = vadd.f32 0.0, %v976
        %v978 = vpop.f32.mrb[0].mxu0
        %v979 = vpop.f32.mrb[0].mxu0
        %v980 = vadd.f32 0.0, %v979
        %v981 = vpop.f32.mrb[0].mxu0
        %982 = vmatprep.mubr.bf16.mxu0 0
        %983 = vmatmul.mubr.bf16.gmra.mrb[0].mxu0 %v677
        %v984 = vpop.f32.mrb[0].mxu0
        %v985 = vadd.f32 0.0, %v984
        %v986 = vpop.f32.mrb[0].mxu0
        %v987 = vpop.f32.mrb[0].mxu0
        %v988 = vadd.f32 0.0, %v987
        %v989 = vpop.f32.mrb[0].mxu0
        %990 = vmatprep.mubr.bf16.mxu0 0
        %991 = vmatmul.mubr.bf16.gmra.mrb[0].mxu0 %v678
        %v992 = vpop.f32.mrb[0].mxu0
        %v993 = vadd.f32 0.0, %v992
        %v994 = vpop.f32.mrb[0].mxu0
        %v995 = vpop.f32.mrb[0].mxu0
        %v996 = vadd.f32 0.0, %v995
        %v997 = vpop.f32.mrb[0].mxu0
        %998 = vmatprep.mubr.bf16.mxu0 0
        %999 = vmatmul.mubr.bf16.gmra.mrb[0].mxu0 %v679
        %v1000 = vpop.f32.mrb[0].mxu0
        %v1001 = vadd.f32 0.0, %v1000
        %v1002 = vpop.f32.mrb[0].mxu0
        %v1003 = vpop.f32.mrb[0].mxu0
        %v1004 = vadd.f32 0.0, %v1003
        %v1005 = vpop.f32.mrb[0].mxu0
        %1006 = vmatprep.mubr.bf16.mxu0 0
        %1007 = vmatmul.mubr.bf16.gmra.mrb[0].mxu0 %v680
        %v1008 = vpop.f32.mrb[0].mxu0
        %v1009 = vadd.f32 0.0, %v1008
        %v1010 = vpop.f32.mrb[0].mxu0
        %v1011 = vpop.f32.mrb[0].mxu0
        %v1012 = vadd.f32 0.0, %v1011
        %v1013 = vpop.f32.mrb[0].mxu0
        %1014 = vmatprep.mubr.bf16.mxu0 0
        %1015 = vmatmul.mubr.bf16.gmra.mrb[0].mxu0 %v681
        %v1016 = vpop.f32.mrb[0].mxu0
        %v1017 = vadd.f32 0.0, %v1016
        %v1018 = vpop.f32.mrb[0].mxu0
        %v1019 = vpop.f32.mrb[0].mxu0
        %v1020 = vadd.f32 0.0, %v1019
        %v1021 = vpop.f32.mrb[0].mxu0
        %1022 = vmatprep.mubr.bf16.mxu0 0
        %1023 = vmatmul.mubr.bf16.gmra.mrb[0].mxu0 %v682
        %v1024 = vpop.f32.mrb[0].mxu0
        %v1025 = vadd.f32 0.0, %v1024
        %v1026 = vpop.f32.mrb[0].mxu0
        %v1027 = vpop.f32.mrb[0].mxu0
        %v1028 = vadd.f32 0.0, %v1027
        %v1029 = vpop.f32.mrb[0].mxu0
        %1030 = vmatprep.mubr.bf16.mxu0 0
        %1031 = vmatmul.mubr.bf16.gmra.mrb[0].mxu0 %v683
        %v1032 = vpop.f32.mrb[0].mxu0
        %v1033 = vadd.f32 0.0, %v1032
        %v1034 = vpop.f32.mrb[0].mxu0
        %v1035 = vpop.f32.mrb[0].mxu0
        %v1036 = vadd.f32 0.0, %v1035
        %v1037 = vpop.f32.mrb[0].mxu0
        %1038 = vmatprep.mubr.bf16.mxu0 0
        %1039 = vmatmul.mubr.bf16.gmra.mrb[0].mxu0 %v684
        %v1040 = vpop.f32.mrb[0].mxu0
        %v1041 = vadd.f32 0.0, %v1040
        %v1042 = vpop.f32.mrb[0].mxu0
        %v1043 = vpop.f32.mrb[0].mxu0
        %v1044 = vadd.f32 0.0, %v1043
        %v1045 = vpop.f32.mrb[0].mxu0
        %1046 = vmatprep.mubr.bf16.mxu0 0
        %1047 = vmatmul.mubr.bf16.gmra.mrb[0].mxu0 %v685
        %v1048 = vpop.f32.mrb[0].mxu0
        %v1049 = vadd.f32 0.0, %v1048
        %v1050 = vpop.f32.mrb[0].mxu0
        %v1051 = vpop.f32.mrb[0].mxu0
        %v1052 = vadd.f32 0.0, %v1051
        %v1053 = vpop.f32.mrb[0].mxu0
        %1054 = vdwg.mxu0
        %v1055 = vld [vmem:[%s3] sm:$0x1]
        %v1057 = vlaneseq
        %v1058 = vshrl.u32 %v1057, 7
        %v1059 = vsub.s32 0, %v1058
        %v1060 = vrot.slane %v1055, %v1059
        %v1062 = vmul.f32 %v382, %v1060
        %v1063 = vmul.f32 %v383, %v1060
        %v1064 = vmul.f32 %v384, %v1060
        %v1065 = vmul.f32 %v385, %v1060
        %v1066 = vmul.f32 %v386, %v1060
        %v1067 = vmul.f32 %v387, %v1060
        %v1068 = vmul.f32 %v388, %v1060
        %v1069 = vmul.f32 %v389, %v1060
        %v1070 = vmul.f32 %v390, %v1060
        %v1071 = vmul.f32 %v391, %v1060
        %v1072 = vmul.f32 %v392, %v1060
        %v1073 = vmul.f32 %v393, %v1060
        %v1074 = vmul.f32 %v394, %v1060
        %v1075 = vmul.f32 %v395, %v1060
        %v1076 = vmul.f32 %v396, %v1060
        %v1077 = vmul.f32 %v397, %v1060
        %v1078 = vmul.f32 %v398, %v1060
        %v1079 = vmul.f32 %v399, %v1060
        %v1080 = vmul.f32 %v400, %v1060
        %v1081 = vmul.f32 %v401, %v1060
        %v1082 = vmul.f32 %v402, %v1060
        %v1083 = vmul.f32 %v403, %v1060
        %v1084 = vmul.f32 %v404, %v1060
        %v1085 = vmul.f32 %v405, %v1060
        %v1086 = vmul.f32 %v406, %v1060
        %v1087 = vmul.f32 %v407, %v1060
        %v1088 = vmul.f32 %v408, %v1060
        %v1089 = vmul.f32 %v409, %v1060
        %v1090 = vmul.f32 %v410, %v1060
        %v1091 = vmul.f32 %v411, %v1060
        %v1092 = vmul.f32 %v412, %v1060
        %v1093 = vmul.f32 %v413, %v1060
        %v1094 = vmul.f32 %v414, %v1060
        %v1095 = vmul.f32 %v415, %v1060
        %v1096 = vmul.f32 %v416, %v1060
        %v1097 = vmul.f32 %v417, %v1060
        %v1098 = vmul.f32 %v418, %v1060
        %v1099 = vmul.f32 %v419, %v1060
        %v1100 = vmul.f32 %v420, %v1060
        %v1101 = vmul.f32 %v421, %v1060
        %v1102 = vmul.f32 %v422, %v1060
        %v1103 = vmul.f32 %v423, %v1060
        %v1104 = vmul.f32 %v424, %v1060
        %v1105 = vmul.f32 %v425, %v1060
        %v1106 = vmul.f32 %v426, %v1060
        %v1107 = vmul.f32 %v427, %v1060
        %v1108 = vmul.f32 %v428, %v1060
        %v1109 = vmul.f32 %v429, %v1060
        %v1110 = vmul.f32 %v430, %v1060
        %v1111 = vmul.f32 %v431, %v1060
        %v1112 = vmul.f32 %v432, %v1060
        %v1113 = vmul.f32 %v433, %v1060
        %v1114 = vmul.f32 %v434, %v1060
        %v1115 = vmul.f32 %v435, %v1060
        %v1116 = vmul.f32 %v436, %v1060
        %v1117 = vmul.f32 %v437, %v1060
        %v1118 = vmul.f32 %v438, %v1060
        %v1119 = vmul.f32 %v439, %v1060
        %v1120 = vmul.f32 %v440, %v1060
        %v1121 = vmul.f32 %v441, %v1060
        %v1122 = vmul.f32 %v442, %v1060
        %v1123 = vmul.f32 %v443, %v1060
        %v1124 = vmul.f32 %v444, %v1060
        %v1125 = vmul.f32 %v445, %v1060
        %v1126 = vld [vmem:[%s4] sm:$0x1]
        %v1128 = vlaneseq
        %v1129 = vshrl.u32 %v1128, 7
        %v1130 = vsub.s32 0, %v1129
        %v1131 = vrot.slane %v1126, %v1130
        %v1133 = vmul.f32 %v801, %v1131
        %v1134 = vmul.f32 %v804, %v1131
        %v1135 = vmul.f32 %v809, %v1131
        %v1136 = vmul.f32 %v812, %v1131
        %v1137 = vmul.f32 %v817, %v1131
        %v1138 = vmul.f32 %v820, %v1131
        %v1139 = vmul.f32 %v825, %v1131
        %v1140 = vmul.f32 %v828, %v1131
        %v1141 = vmul.f32 %v833, %v1131
        %v1142 = vmul.f32 %v836, %v1131
        %v1143 = vmul.f32 %v841, %v1131
        %v1144 = vmul.f32 %v844, %v1131
        %v1145 = vmul.f32 %v849, %v1131
        %v1146 = vmul.f32 %v852, %v1131
        %v1147 = vmul.f32 %v857, %v1131
        %v1148 = vmul.f32 %v860, %v1131
        %v1149 = vmul.f32 %v865, %v1131
        %v1150 = vmul.f32 %v868, %v1131
        %v1151 = vmul.f32 %v873, %v1131
        %v1152 = vmul.f32 %v876, %v1131
        %v1153 = vmul.f32 %v881, %v1131
        %v1154 = vmul.f32 %v884, %v1131
        %v1155 = vmul.f32 %v889, %v1131
        %v1156 = vmul.f32 %v892, %v1131
        %v1157 = vmul.f32 %v897, %v1131
        %v1158 = vmul.f32 %v900, %v1131
        %v1159 = vmul.f32 %v905, %v1131
        %v1160 = vmul.f32 %v908, %v1131
        %v1161 = vmul.f32 %v913, %v1131
        %v1162 = vmul.f32 %v916, %v1131
        %v1163 = vmul.f32 %v921, %v1131
        %v1164 = vmul.f32 %v924, %v1131
        %v1165 = vmul.f32 %v929, %v1131
        %v1166 = vmul.f32 %v932, %v1131
        %v1167 = vmul.f32 %v937, %v1131
        %v1168 = vmul.f32 %v940, %v1131
        %v1169 = vmul.f32 %v945, %v1131
        %v1170 = vmul.f32 %v948, %v1131
        %v1171 = vmul.f32 %v953, %v1131
        %v1172 = vmul.f32 %v956, %v1131
        %v1173 = vmul.f32 %v961, %v1131
        %v1174 = vmul.f32 %v964, %v1131
        %v1175 = vmul.f32 %v969, %v1131
        %v1176 = vmul.f32 %v972, %v1131
        %v1177 = vmul.f32 %v977, %v1131
        %v1178 = vmul.f32 %v980, %v1131
        %v1179 = vmul.f32 %v985, %v1131
        %v1180 = vmul.f32 %v988, %v1131
        %v1181 = vmul.f32 %v993, %v1131
        %v1182 = vmul.f32 %v996, %v1131
        %v1183 = vmul.f32 %v1001, %v1131
        %v1184 = vmul.f32 %v1004, %v1131
        %v1185 = vmul.f32 %v1009, %v1131
        %v1186 = vmul.f32 %v1012, %v1131
        %v1187 = vmul.f32 %v1017, %v1131
        %v1188 = vmul.f32 %v1020, %v1131
        %v1189 = vmul.f32 %v1025, %v1131
        %v1190 = vmul.f32 %v1028, %v1131
        %v1191 = vmul.f32 %v1033, %v1131
        %v1192 = vmul.f32 %v1036, %v1131
        %v1193 = vmul.f32 %v1041, %v1131
        %v1194 = vmul.f32 %v1044, %v1131
        %v1195 = vmul.f32 %v1049, %v1131
        %v1196 = vmul.f32 %v1052, %v1131
        %v1197 = vadd.f32 %v1062, %v1133
        %v1198 = vadd.f32 %v1063, %v1134
        %v1199 = vadd.f32 %v1064, %v1135
        %v1200 = vadd.f32 %v1065, %v1136
        %v1201 = vadd.f32 %v1066, %v1137
        %v1202 = vadd.f32 %v1067, %v1138
        %v1203 = vadd.f32 %v1068, %v1139
        %v1204 = vadd.f32 %v1069, %v1140
        %v1205 = vadd.f32 %v1070, %v1141
        %v1206 = vadd.f32 %v1071, %v1142
        %v1207 = vadd.f32 %v1072, %v1143
        %v1208 = vadd.f32 %v1073, %v1144
        %v1209 = vadd.f32 %v1074, %v1145
        %v1210 = vadd.f32 %v1075, %v1146
        %v1211 = vadd.f32 %v1076, %v1147
        %v1212 = vadd.f32 %v1077, %v1148
        %v1213 = vadd.f32 %v1078, %v1149
        %v1214 = vadd.f32 %v1079, %v1150
        %v1215 = vadd.f32 %v1080, %v1151
        %v1216 = vadd.f32 %v1081, %v1152
        %v1217 = vadd.f32 %v1082, %v1153
        %v1218 = vadd.f32 %v1083, %v1154
        %v1219 = vadd.f32 %v1084, %v1155
        %v1220 = vadd.f32 %v1085, %v1156
        %v1221 = vadd.f32 %v1086, %v1157
        %v1222 = vadd.f32 %v1087, %v1158
        %v1223 = vadd.f32 %v1088, %v1159
        %v1224 = vadd.f32 %v1089, %v1160
        %v1225 = vadd.f32 %v1090, %v1161
        %v1226 = vadd.f32 %v1091, %v1162
        %v1227 = vadd.f32 %v1092, %v1163
        %v1228 = vadd.f32 %v1093, %v1164
        %v1229 = vadd.f32 %v1094, %v1165
        %v1230 = vadd.f32 %v1095, %v1166
        %v1231 = vadd.f32 %v1096, %v1167
        %v1232 = vadd.f32 %v1097, %v1168
        %v1233 = vadd.f32 %v1098, %v1169
        %v1234 = vadd.f32 %v1099, %v1170
        %v1235 = vadd.f32 %v1100, %v1171
        %v1236 = vadd.f32 %v1101, %v1172
        %v1237 = vadd.f32 %v1102, %v1173
        %v1238 = vadd.f32 %v1103, %v1174
        %v1239 = vadd.f32 %v1104, %v1175
        %v1240 = vadd.f32 %v1105, %v1176
        %v1241 = vadd.f32 %v1106, %v1177
        %v1242 = vadd.f32 %v1107, %v1178
        %v1243 = vadd.f32 %v1108, %v1179
        %v1244 = vadd.f32 %v1109, %v1180
        %v1245 = vadd.f32 %v1110, %v1181
        %v1246 = vadd.f32 %v1111, %v1182
        %v1247 = vadd.f32 %v1112, %v1183
        %v1248 = vadd.f32 %v1113, %v1184
        %v1249 = vadd.f32 %v1114, %v1185
        %v1250 = vadd.f32 %v1115, %v1186
        %v1251 = vadd.f32 %v1116, %v1187
        %v1252 = vadd.f32 %v1117, %v1188
        %v1253 = vadd.f32 %v1118, %v1189
        %v1254 = vadd.f32 %v1119, %v1190
        %v1255 = vadd.f32 %v1120, %v1191
        %v1256 = vadd.f32 %v1121, %v1192
        %v1257 = vadd.f32 %v1122, %v1193
        %v1258 = vadd.f32 %v1123, %v1194
        %v1259 = vadd.f32 %v1124, %v1195
        %v1260 = vadd.f32 %v1125, %v1196
        %v1261 = vld [vmem:[%s5] sm:$0x1]
        %v1263 = vlaneseq
        %v1264 = vshrl.u32 %v1263, 7
        %v1265 = vsub.s32 0, %v1264
        %v1266 = vrot.slane %v1261, %v1265
        %v1268 = vadd.f32 %v1197, %v1266
        %v1269 = vadd.f32 %v1198, %v1266
        %v1270 = vadd.f32 %v1199, %v1266
        %v1271 = vadd.f32 %v1200, %v1266
        %v1272 = vadd.f32 %v1201, %v1266
        %v1273 = vadd.f32 %v1202, %v1266
        %v1274 = vadd.f32 %v1203, %v1266
        %v1275 = vadd.f32 %v1204, %v1266
        %v1276 = vadd.f32 %v1205, %v1266
        %v1277 = vadd.f32 %v1206, %v1266
        %v1278 = vadd.f32 %v1207, %v1266
        %v1279 = vadd.f32 %v1208, %v1266
        %v1280 = vadd.f32 %v1209, %v1266
        %v1281 = vadd.f32 %v1210, %v1266
        %v1282 = vadd.f32 %v1211, %v1266
        %v1283 = vadd.f32 %v1212, %v1266
        %v1284 = vadd.f32 %v1213, %v1266
        %v1285 = vadd.f32 %v1214, %v1266
        %v1286 = vadd.f32 %v1215, %v1266
        %v1287 = vadd.f32 %v1216, %v1266
        %v1288 = vadd.f32 %v1217, %v1266
        %v1289 = vadd.f32 %v1218, %v1266
        %v1290 = vadd.f32 %v1219, %v1266
        %v1291 = vadd.f32 %v1220, %v1266
        %v1292 = vadd.f32 %v1221, %v1266
        %v1293 = vadd.f32 %v1222, %v1266
        %v1294 = vadd.f32 %v1223, %v1266
        %v1295 = vadd.f32 %v1224, %v1266
        %v1296 = vadd.f32 %v1225, %v1266
        %v1297 = vadd.f32 %v1226, %v1266
        %v1298 = vadd.f32 %v1227, %v1266
        %v1299 = vadd.f32 %v1228, %v1266
        %v1300 = vadd.f32 %v1229, %v1266
        %v1301 = vadd.f32 %v1230, %v1266
        %v1302 = vadd.f32 %v1231, %v1266
        %v1303 = vadd.f32 %v1232, %v1266
        %v1304 = vadd.f32 %v1233, %v1266
        %v1305 = vadd.f32 %v1234, %v1266
        %v1306 = vadd.f32 %v1235, %v1266
        %v1307 = vadd.f32 %v1236, %v1266
        %v1308 = vadd.f32 %v1237, %v1266
        %v1309 = vadd.f32 %v1238, %v1266
        %v1310 = vadd.f32 %v1239, %v1266
        %v1311 = vadd.f32 %v1240, %v1266
        %v1312 = vadd.f32 %v1241, %v1266
        %v1313 = vadd.f32 %v1242, %v1266
        %v1314 = vadd.f32 %v1243, %v1266
        %v1315 = vadd.f32 %v1244, %v1266
        %v1316 = vadd.f32 %v1245, %v1266
        %v1317 = vadd.f32 %v1246, %v1266
        %v1318 = vadd.f32 %v1247, %v1266
        %v1319 = vadd.f32 %v1248, %v1266
        %v1320 = vadd.f32 %v1249, %v1266
        %v1321 = vadd.f32 %v1250, %v1266
        %v1322 = vadd.f32 %v1251, %v1266
        %v1323 = vadd.f32 %v1252, %v1266
        %v1324 = vadd.f32 %v1253, %v1266
        %v1325 = vadd.f32 %v1254, %v1266
        %v1326 = vadd.f32 %v1255, %v1266
        %v1327 = vadd.f32 %v1256, %v1266
        %v1328 = vadd.f32 %v1257, %v1266
        %v1329 = vadd.f32 %v1258, %v1266
        %v1330 = vadd.f32 %v1259, %v1266
        %v1331 = vadd.f32 %v1260, %v1266
        %v1332 = vmax.f32 %v1268, 0.0
        %v1333 = vmax.f32 %v1269, 0.0
        %v1334 = vmax.f32 %v1270, 0.0
        %v1335 = vmax.f32 %v1271, 0.0
        %v1336 = vmax.f32 %v1272, 0.0
        %v1337 = vmax.f32 %v1273, 0.0
        %v1338 = vmax.f32 %v1274, 0.0
        %v1339 = vmax.f32 %v1275, 0.0
        %v1340 = vmax.f32 %v1276, 0.0
        %v1341 = vmax.f32 %v1277, 0.0
        %v1342 = vmax.f32 %v1278, 0.0
        %v1343 = vmax.f32 %v1279, 0.0
        %v1344 = vmax.f32 %v1280, 0.0
        %v1345 = vmax.f32 %v1281, 0.0
        %v1346 = vmax.f32 %v1282, 0.0
        %v1347 = vmax.f32 %v1283, 0.0
        %v1348 = vmax.f32 %v1284, 0.0
        %v1349 = vmax.f32 %v1285, 0.0
        %v1350 = vmax.f32 %v1286, 0.0
        %v1351 = vmax.f32 %v1287, 0.0
        %v1352 = vmax.f32 %v1288, 0.0
        %v1353 = vmax.f32 %v1289, 0.0
        %v1354 = vmax.f32 %v1290, 0.0
        %v1355 = vmax.f32 %v1291, 0.0
        %v1356 = vmax.f32 %v1292, 0.0
        %v1357 = vmax.f32 %v1293, 0.0
        %v1358 = vmax.f32 %v1294, 0.0
        %v1359 = vmax.f32 %v1295, 0.0
        %v1360 = vmax.f32 %v1296, 0.0
        %v1361 = vmax.f32 %v1297, 0.0
        %v1362 = vmax.f32 %v1298, 0.0
        %v1363 = vmax.f32 %v1299, 0.0
        %v1364 = vmax.f32 %v1300, 0.0
        %v1365 = vmax.f32 %v1301, 0.0
        %v1366 = vmax.f32 %v1302, 0.0
        %v1367 = vmax.f32 %v1303, 0.0
        %v1368 = vmax.f32 %v1304, 0.0
        %v1369 = vmax.f32 %v1305, 0.0
        %v1370 = vmax.f32 %v1306, 0.0
        %v1371 = vmax.f32 %v1307, 0.0
        %v1372 = vmax.f32 %v1308, 0.0
        %v1373 = vmax.f32 %v1309, 0.0
        %v1374 = vmax.f32 %v1310, 0.0
        %v1375 = vmax.f32 %v1311, 0.0
        %v1376 = vmax.f32 %v1312, 0.0
        %v1377 = vmax.f32 %v1313, 0.0
        %v1378 = vmax.f32 %v1314, 0.0
        %v1379 = vmax.f32 %v1315, 0.0
        %v1380 = vmax.f32 %v1316, 0.0
        %v1381 = vmax.f32 %v1317, 0.0
        %v1382 = vmax.f32 %v1318, 0.0
        %v1383 = vmax.f32 %v1319, 0.0
        %v1384 = vmax.f32 %v1320, 0.0
        %v1385 = vmax.f32 %v1321, 0.0
        %v1386 = vmax.f32 %v1322, 0.0
        %v1387 = vmax.f32 %v1323, 0.0
        %v1388 = vmax.f32 %v1324, 0.0
        %v1389 = vmax.f32 %v1325, 0.0
        %v1390 = vmax.f32 %v1326, 0.0
        %v1391 = vmax.f32 %v1327, 0.0
        %v1392 = vmax.f32 %v1328, 0.0
        %v1393 = vmax.f32 %v1329, 0.0
        %v1394 = vmax.f32 %v1330, 0.0
        %v1395 = vmax.f32 %v1331, 0.0
        %1396 = vxpose.xlu0.b32.start [1/16] %v1332, 128
        %1397 = vxpose.xlu0.b32.cont [2/16] %v1333, 128
        %1398 = vxpose.xlu0.b32.cont [3/16] %v1334, 128
        %1399 = vxpose.xlu0.b32.cont [4/16] %v1335, 128
        %1400 = vxpose.xlu0.b32.cont [5/16] %v1336, 128
        %1401 = vxpose.xlu0.b32.cont [6/16] %v1337, 128
        %1402 = vxpose.xlu0.b32.cont [7/16] %v1338, 128
        %1403 = vxpose.xlu0.b32.cont [8/16] %v1339, 128
        %1404 = vxpose.xlu0.b32.cont [9/16] %v1340, 128
        %1405 = vxpose.xlu0.b32.cont [10/16] %v1341, 128
        %1406 = vxpose.xlu0.b32.cont [11/16] %v1342, 128
        %1407 = vxpose.xlu0.b32.cont [12/16] %v1343, 128
        %1408 = vxpose.xlu0.b32.cont [13/16] %v1344, 128
        %1409 = vxpose.xlu0.b32.cont [14/16] %v1345, 128
        %1410 = vxpose.xlu0.b32.cont [15/16] %v1346, 128
        %1411 = vxpose.xlu0.b32.end [16/16] %v1347, 128
        %v1412 = vpop.trf.xlu0
        %v1413 = vpop.trf.xlu0
        %v1414 = vpop.trf.xlu0
        %v1415 = vpop.trf.xlu0
        %v1416 = vpop.trf.xlu0
        %v1417 = vpop.trf.xlu0
        %v1418 = vpop.trf.xlu0
        %v1419 = vpop.trf.xlu0
        %v1420 = vpop.trf.xlu0
        %v1421 = vpop.trf.xlu0
        %v1422 = vpop.trf.xlu0
        %v1423 = vpop.trf.xlu0
        %v1424 = vpop.trf.xlu0
        %v1425 = vpop.trf.xlu0
        %v1426 = vpop.trf.xlu0
        %v1427 = vpop.trf.xlu0
        %1428 = vxpose.xlu0.b32.start [1/16] %v1348, 128
        %1429 = vxpose.xlu0.b32.cont [2/16] %v1349, 128
        %1430 = vxpose.xlu0.b32.cont [3/16] %v1350, 128
        %1431 = vxpose.xlu0.b32.cont [4/16] %v1351, 128
        %1432 = vxpose.xlu0.b32.cont [5/16] %v1352, 128
        %1433 = vxpose.xlu0.b32.cont [6/16] %v1353, 128
        %1434 = vxpose.xlu0.b32.cont [7/16] %v1354, 128
        %1435 = vxpose.xlu0.b32.cont [8/16] %v1355, 128
        %1436 = vxpose.xlu0.b32.cont [9/16] %v1356, 128
        %1437 = vxpose.xlu0.b32.cont [10/16] %v1357, 128
        %1438 = vxpose.xlu0.b32.cont [11/16] %v1358, 128
        %1439 = vxpose.xlu0.b32.cont [12/16] %v1359, 128
        %1440 = vxpose.xlu0.b32.cont [13/16] %v1360, 128
        %1441 = vxpose.xlu0.b32.cont [14/16] %v1361, 128
        %1442 = vxpose.xlu0.b32.cont [15/16] %v1362, 128
        %1443 = vxpose.xlu0.b32.end [16/16] %v1363, 128
        %v1444 = vpop.trf.xlu0
        %v1445 = vpop.trf.xlu0
        %v1446 = vpop.trf.xlu0
        %v1447 = vpop.trf.xlu0
        %v1448 = vpop.trf.xlu0
        %v1449 = vpop.trf.xlu0
        %v1450 = vpop.trf.xlu0
        %v1451 = vpop.trf.xlu0
        %v1452 = vpop.trf.xlu0
        %v1453 = vpop.trf.xlu0
        %v1454 = vpop.trf.xlu0
        %v1455 = vpop.trf.xlu0
        %v1456 = vpop.trf.xlu0
        %v1457 = vpop.trf.xlu0
        %v1458 = vpop.trf.xlu0
        %v1459 = vpop.trf.xlu0
        %1460 = vxpose.xlu0.b32.start [1/16] %v1364, 128
        %1461 = vxpose.xlu0.b32.cont [2/16] %v1365, 128
        %1462 = vxpose.xlu0.b32.cont [3/16] %v1366, 128
        %1463 = vxpose.xlu0.b32.cont [4/16] %v1367, 128
        %1464 = vxpose.xlu0.b32.cont [5/16] %v1368, 128
        %1465 = vxpose.xlu0.b32.cont [6/16] %v1369, 128
        %1466 = vxpose.xlu0.b32.cont [7/16] %v1370, 128
        %1467 = vxpose.xlu0.b32.cont [8/16] %v1371, 128
        %1468 = vxpose.xlu0.b32.cont [9/16] %v1372, 128
        %1469 = vxpose.xlu0.b32.cont [10/16] %v1373, 128
        %1470 = vxpose.xlu0.b32.cont [11/16] %v1374, 128
        %1471 = vxpose.xlu0.b32.cont [12/16] %v1375, 128
        %1472 = vxpose.xlu0.b32.cont [13/16] %v1376, 128
        %1473 = vxpose.xlu0.b32.cont [14/16] %v1377, 128
        %1474 = vxpose.xlu0.b32.cont [15/16] %v1378, 128
        %1475 = vxpose.xlu0.b32.end [16/16] %v1379, 128
        %v1476 = vpop.trf.xlu0
        %v1477 = vpop.trf.xlu0
        %v1478 = vpop.trf.xlu0
        %v1479 = vpop.trf.xlu0
        %v1480 = vpop.trf.xlu0
        %v1481 = vpop.trf.xlu0
        %v1482 = vpop.trf.xlu0
        %v1483 = vpop.trf.xlu0
        %v1484 = vpop.trf.xlu0
        %v1485 = vpop.trf.xlu0
        %v1486 = vpop.trf.xlu0
        %v1487 = vpop.trf.xlu0
        %v1488 = vpop.trf.xlu0
        %v1489 = vpop.trf.xlu0
        %v1490 = vpop.trf.xlu0
        %v1491 = vpop.trf.xlu0
        %1492 = vxpose.xlu0.b32.start [1/16] %v1380, 128
        %1493 = vxpose.xlu0.b32.cont [2/16] %v1381, 128
        %1494 = vxpose.xlu0.b32.cont [3/16] %v1382, 128
        %1495 = vxpose.xlu0.b32.cont [4/16] %v1383, 128
        %1496 = vxpose.xlu0.b32.cont [5/16] %v1384, 128
        %1497 = vxpose.xlu0.b32.cont [6/16] %v1385, 128
        %1498 = vxpose.xlu0.b32.cont [7/16] %v1386, 128
        %1499 = vxpose.xlu0.b32.cont [8/16] %v1387, 128
        %1500 = vxpose.xlu0.b32.cont [9/16] %v1388, 128
        %1501 = vxpose.xlu0.b32.cont [10/16] %v1389, 128
        %1502 = vxpose.xlu0.b32.cont [11/16] %v1390, 128
        %1503 = vxpose.xlu0.b32.cont [12/16] %v1391, 128
        %1504 = vxpose.xlu0.b32.cont [13/16] %v1392, 128
        %1505 = vxpose.xlu0.b32.cont [14/16] %v1393, 128
        %1506 = vxpose.xlu0.b32.cont [15/16] %v1394, 128
        %1507 = vxpose.xlu0.b32.end [16/16] %v1395, 128
        %v1508 = vpop.trf.xlu0
        %v1509 = vpop.trf.xlu0
        %v1510 = vpop.trf.xlu0
        %v1511 = vpop.trf.xlu0
        %v1512 = vpop.trf.xlu0
        %v1513 = vpop.trf.xlu0
        %v1514 = vpop.trf.xlu0
        %v1515 = vpop.trf.xlu0
        %v1516 = vpop.trf.xlu0
        %v1517 = vpop.trf.xlu0
        %v1518 = vpop.trf.xlu0
        %v1519 = vpop.trf.xlu0
        %v1520 = vpop.trf.xlu0
        %v1521 = vpop.trf.xlu0
        %v1522 = vpop.trf.xlu0
        %v1523 = vpop.trf.xlu0
        %1524 = vst [vmem:[%s295] sm:$0xff] %v1412
        %1525 = vst [vmem:[%s295 + $0x8] sm:$0xff] %v1444
        %1526 = vst [vmem:[%s295 + $0x10] sm:$0xff] %v1476
        %1527 = vst [vmem:[%s295 + $0x18] sm:$0xff] %v1508
        %s1528 = sand.u32 %s182, 1
        %s1529 = scalar_lea.sflag [#allocation3], %s1528
        %s1530 = sand.u32 %s182, 1
        %s1531 = smul.addr %s1530, 32
        %s1532 = scalar_lea.vmem [#allocation2], %s1531
        // Predicated region
        $region45: #{resnet_block.7} parent=43 // pred_check
          %p1533 = pneg %p192
        $region46: #{resnet_block.7} parent=43 // pred_check_branch
          %1535 = sbr.rel (%p1533) target = $region48
        $region47: #{resnet_block.7} parent=43 // pred_region
          %s1536 = smul.u32 4, %s25
          %s1538 = ssub.s32 512, 512
          %1539 = vsyncadd %s1529, %s1538
          %s1540 = smul.addr %s24, 4
          %s1541 = sadd.s32 %s1536, %s1540
          %s1542 = smul.addr %s1541, 128
          %s1543 = scalar_lea.hbm %s6, %s1542
          %s1545 = sshll.u32 %s1532, 4
          %s1546 = int_to_ptr.vmem [resolvable:$true] %s1545
          %1548 = dma.vmem_to_hbm [thread:$0]  %s1546, 512, %s1543, %s1529
        $region48: #{resnet_block.7} parent=43 // pred_fallthru
          _
      $region44: #{resnet_block.7} parent=5 // pred_fallthru
        _
      %p1549 = scmp.le.s32.totalorder 2, %s15
      // Predicated region
      $region49: #{resnet_block.7} parent=5 // pred_check
        %p1550 = pneg %p1549
      $region50: #{resnet_block.7} parent=5 // pred_check_branch
        %1552 = sbr.rel (%p1550) target = $region52
      $region51: #{resnet_block.7} parent=5 // pred_region
        %s1553 = ssub.s32 %s15, 2
        // Predicated region
        $region53: #{resnet_block.7} parent=51 // pred_check
          %p1554 = pneg %p198
        $region54: #{resnet_block.7} parent=51 // pred_check_branch
          %1556 = sbr.rel (%p1554) target = $region56
        $region55: #{resnet_block.7} parent=51 // pred_region
          %s1557 = sand.u32 %s183, 1
          %s1558 = scalar_lea.sflag [#allocation3], %s1557
          %s1559 = sand.u32 %s183, 1
          %s1560 = smul.addr %s1559, 32
          %s1561 = scalar_lea.vmem [#allocation2], %s1560
          %1562 = dma.done %s1558, 512
        $region56: #{resnet_block.7} parent=51 // pred_fallthru
          _
      $region52: #{resnet_block.7} parent=5 // pred_fallthru
        _
    $region6: #{resnet_block.7} parent=1 // loop_footer
      %s19 = sadd.s32 1, %s15
    $region7: #{resnet_block.7} parent=1 // loop_footer_branch
      %14 = sbr.rel target = $region3
    $region8: #{resnet_block.7} parent=1 // loop_exit
      _
    %1563 = vsyncpa [#allocation3], 1
    %s1564 = scalar_lea.sflag [#allocation3], 1
    %1565 = vsyncpa %s1564, 1

// kernel: resnet_block.4
$region0: #{resnet_block.4}
  #allocation0 [shape = 'u32[]', space=smem, size = 0x4, offset = 0x4, fixed_abs, tag = 'smem constant byte address 0x4 - core index']
  #allocation1 [shape = 'u32[144,128]{1,0:T(1,128)}', space=vmem, size = 0x12000, scoped, tag = 'internal scratch']
  %s0 = inlined_call_operand.vmem [shape: bf16[2,512,128], index: 0, kind: input, shape index: {}]
  %s1 = inlined_call_operand.vmem [shape: bf16[384,256], index: 1, kind: input, shape index: {}]
  %s2 = inlined_call_operand.vmem [shape: bf16[2,512,128], index: 2, kind: output, shape index: {0}]
  %s3 = inlined_call_operand.vmem [shape: f32[2,2,128], index: 3, kind: output, shape index: {1}]
  %s4 = inlined_call_operand.vmem [shape: f32[2,2,128], index: 4, kind: output, shape index: {2}]
  %5 = xla_tuple %s2, %s3, %s4
  %s6 = sld [smem:[#allocation0]]
  $region65: #{resnet_block.4} parent=0
    _
  %s8 = ssub.s32 1, %s6
  %s9 = scalar_select 0, %s8, %s6
  loop: start=0, step=1, limit=4
  $region2: #{resnet_block.4} parent=0 // loop_pre_header
    _
  $region3: #{resnet_block.4} parent=0 // loop_header
    %s11 = sphi 0, %s15
    %p12 = scmp.ge.s32.totalorder %s11, 4
    %s18 = sphi 0, %s30
    %s19 = sphi 0, %s26
    %s20 = sphi 0, %s18
    %s21 = sphi 0, %s19
    %s22 = sphi 0, %s20
    %s23 = sphi 0, %s21
    %s35 = sphi 0, %s37
    %s38 = sphi 0, %s35
    %s39 = sphi 0, %s38
    %s55 = sphi 0, %s39
    %s59 = sphi 0, %s59
    %s61 = sphi 0, %s59
    %s62 = sphi 0, %s61
    %s76 = sphi 0, %s62
    %s84 = sphi 0, %s86
    %s87 = sphi 0, %s84
    %s88 = sphi 0, %s87
    %s104 = sphi 0, %s88
    %s110 = sphi 0, %s112
    %s113 = sphi 0, %s110
    %s114 = sphi 0, %s113
    %s130 = sphi 0, %s114
    %s136 = sphi 0, %s138
    %s139 = sphi 0, %s136
    %s140 = sphi 0, %s139
    %s156 = sphi 0, %s140
  $region4: #{resnet_block.4} parent=0 // loop_header_branch
    %14 = sbr.rel (%p12) target = $region8
  $region5: #{resnet_block.4} parent=0 // loop_body
    %s16 = ssub.s32 %s11, 1
    %s17 = ssub.s32 %s11, 2
    %s24 = sadd.s32 1, %s19
    %p25 = scmp.ge.s32.totalorder %s24, 1
    %s26 = scalar_select %p25, 0, %s24
    %s27 = sadd.s32 1, %s18
    %s28 = scalar_select %p25, %s27, %s18
    %p29 = scmp.ge.s32.totalorder %s28, 2
    %s30 = scalar_select %p29, 0, %s28
    %s31 = sadd.s32 %s18, %s19
    %s32 = sadd.s32 %s30, %s26
    %s33 = ssub.s32 %s31, %s32
    %p34 = scmp.eq.s32.totalorder %s33, 0
    %s36 = sadd.s32 %s35, 1
    %s37 = scalar_select %p34, %s35, %s36
    %p40 = pneg %p34
    %p41 = scmp.eq.s32.totalorder %s11, 1
    %p42 = por %p40, %p41
    %p43 = scmp.ne.s32.totalorder %s35, %s38
    %p44 = scmp.eq.s32.totalorder %s11, 0
    %p45 = por %p43, %p44
    %p46 = scmp.ne.s32.totalorder %s35, %s38
    %p47 = scmp.eq.s32.totalorder %s16, 1
    %p48 = por %p46, %p47
    %p49 = scmp.ne.s32.totalorder %s38, %s39
    %p50 = scmp.eq.s32.totalorder %s16, 0
    %p51 = por %p49, %p50
    %p52 = scmp.ne.s32.totalorder %s38, %s39
    %p53 = scmp.eq.s32.totalorder %s17, 1
    %p54 = por %p52, %p53
    %p56 = scmp.ne.s32.totalorder %s39, %s55
    %p57 = scmp.eq.s32.totalorder %s17, 0
    %p58 = por %p56, %p57
    %s60 = sadd.s32 %s59, 1
    %p63 = scmp.eq.s32.totalorder %s11, 1
    %p64 = scmp.ne.s32.totalorder %s59, %s61
    %p65 = scmp.eq.s32.totalorder %s11, 0
    %p66 = por %p64, %p65
    %p67 = scmp.ne.s32.totalorder %s59, %s61
    %p68 = scmp.eq.s32.totalorder %s16, 1
    %p69 = por %p67, %p68
    %p70 = scmp.ne.s32.totalorder %s61, %s62
    %p71 = scmp.eq.s32.totalorder %s16, 0
    %p72 = por %p70, %p71
    %p73 = scmp.ne.s32.totalorder %s61, %s62
    %p74 = scmp.eq.s32.totalorder %s17, 1
    %p75 = por %p73, %p74
    %p77 = scmp.ne.s32.totalorder %s62, %s76
    %p78 = scmp.eq.s32.totalorder %s17, 0
    %p79 = por %p77, %p78
    %s80 = sadd.s32 %s18, %s19
    %s81 = sadd.s32 %s30, %s26
    %s82 = ssub.s32 %s80, %s81
    %p83 = scmp.eq.s32.totalorder %s82, 0
    %s85 = sadd.s32 %s84, 1
    %s86 = scalar_select %p83, %s84, %s85
    %p89 = pneg %p83
    %p90 = scmp.eq.s32.totalorder %s11, 1
    %p91 = por %p89, %p90
    %p92 = scmp.ne.s32.totalorder %s84, %s87
    %p93 = scmp.eq.s32.totalorder %s11, 0
    %p94 = por %p92, %p93
    %p95 = scmp.ne.s32.totalorder %s84, %s87
    %p96 = scmp.eq.s32.totalorder %s16, 1
    %p97 = por %p95, %p96
    %p98 = scmp.ne.s32.totalorder %s87, %s88
    %p99 = scmp.eq.s32.totalorder %s16, 0
    %p100 = por %p98, %p99
    %p101 = scmp.ne.s32.totalorder %s87, %s88
    %p102 = scmp.eq.s32.totalorder %s17, 1
    %p103 = por %p101, %p102
    %p105 = scmp.ne.s32.totalorder %s88, %s104
    %p106 = scmp.eq.s32.totalorder %s17, 0
    %p107 = por %p105, %p106
    %s108 = ssub.s32 %s18, %s30
    %p109 = scmp.eq.s32.totalorder %s108, 0
    %s111 = sadd.s32 %s110, 1
    %s112 = scalar_select %p109, %s110, %s111
    %p115 = pneg %p109
    %p116 = scmp.eq.s32.totalorder %s11, 1
    %p117 = por %p115, %p116
    %p118 = scmp.ne.s32.totalorder %s110, %s113
    %p119 = scmp.eq.s32.totalorder %s11, 0
    %p120 = por %p118, %p119
    %p121 = scmp.ne.s32.totalorder %s110, %s113
    %p122 = scmp.eq.s32.totalorder %s16, 1
    %p123 = por %p121, %p122
    %p124 = scmp.ne.s32.totalorder %s113, %s114
    %p125 = scmp.eq.s32.totalorder %s16, 0
    %p126 = por %p124, %p125
    %p127 = scmp.ne.s32.totalorder %s113, %s114
    %p128 = scmp.eq.s32.totalorder %s17, 1
    %p129 = por %p127, %p128
    %p131 = scmp.ne.s32.totalorder %s114, %s130
    %p132 = scmp.eq.s32.totalorder %s17, 0
    %p133 = por %p131, %p132
    %s134 = ssub.s32 %s18, %s30
    %p135 = scmp.eq.s32.totalorder %s134, 0
    %s137 = sadd.s32 %s136, 1
    %s138 = scalar_select %p135, %s136, %s137
    %p141 = pneg %p135
    %p142 = scmp.eq.s32.totalorder %s11, 1
    %p143 = por %p141, %p142
    %p144 = scmp.ne.s32.totalorder %s136, %s139
    %p145 = scmp.eq.s32.totalorder %s11, 0
    %p146 = por %p144, %p145
    %p147 = scmp.ne.s32.totalorder %s136, %s139
    %p148 = scmp.eq.s32.totalorder %s16, 1
    %p149 = por %p147, %p148
    %p150 = scmp.ne.s32.totalorder %s139, %s140
    %p151 = scmp.eq.s32.totalorder %s16, 0
    %p152 = por %p150, %p151
    %p153 = scmp.ne.s32.totalorder %s139, %s140
    %p154 = scmp.eq.s32.totalorder %s17, 1
    %p155 = por %p153, %p154
    %p157 = scmp.ne.s32.totalorder %s140, %s156
    %p158 = scmp.eq.s32.totalorder %s17, 0
    %p159 = por %p157, %p158
    %p160 = scmp.le.s32.totalorder 1, %s11
    %p161 = scmp.lt.s32.totalorder %s11, 3
    %p162 = pnand %p160, %p161
    %p163 = pneg %p162
    // Predicated region
    $region9: #{resnet_block.4} parent=5 // pred_check
      _
    $region10: #{resnet_block.4} parent=5 // pred_check_branch
      %165 = sbr.rel (%p162) target = $region12
    $region11: #{resnet_block.4} parent=5 // pred_region
      %s166 = ssub.s32 %s11, 1
      // Predicated region
      $region13: #{resnet_block.4} parent=11 // pred_check
        %p167 = pneg %p72
      $region14: #{resnet_block.4} parent=11 // pred_check_branch
        %169 = sbr.rel (%p167) target = $region16
      $region15: #{resnet_block.4} parent=11 // pred_region
        _
      $region16: #{resnet_block.4} parent=11 // pred_fallthru
        _
    $region12: #{resnet_block.4} parent=5 // pred_fallthru
      _
    %p170 = scmp.lt.s32.totalorder %s11, 2
    // Predicated region
    $region17: #{resnet_block.4} parent=5 // pred_check
      %p171 = pneg %p170
    $region18: #{resnet_block.4} parent=5 // pred_check_branch
      %173 = sbr.rel (%p171) target = $region20
    $region19: #{resnet_block.4} parent=5 // pred_region
      // Predicated region
      $region21: #{resnet_block.4} parent=19 // pred_check
        %p174 = pneg %p45
      $region22: #{resnet_block.4} parent=19 // pred_check_branch
        %176 = sbr.rel (%p174) target = $region24
      $region23: #{resnet_block.4} parent=19 // pred_region
        %s177 = sadd.s32 %s18, %s19
        %p178 = scmp.lt.s32.totalorder %s177, 1
        %s179 = scalar_select %p178, %s177, 1
        %s180 = smul.addr %s179, 64
        %s181 = smul.addr %s180, 4
        %s182 = scalar_lea.vmem %s0, %s181
        %s183 = sadd.s32 %s18, %s19
      $region24: #{resnet_block.4} parent=19 // pred_fallthru
        _
    $region20: #{resnet_block.4} parent=5 // pred_fallthru
      _
    %p184 = scmp.le.s32.totalorder 1, %s11
    %p185 = scmp.lt.s32.totalorder %s11, 3
    %p186 = pnand %p184, %p185
    %p187 = pneg %p186
    // Predicated region
    $region25: #{resnet_block.4} parent=5 // pred_check
      _
    $region26: #{resnet_block.4} parent=5 // pred_check_branch
      %189 = sbr.rel (%p186) target = $region28
    $region27: #{resnet_block.4} parent=5 // pred_region
      %s190 = ssub.s32 %s11, 1
      %s191 = sadd.s32 %s20, %s21
      %p192 = scmp.lt.s32.totalorder %s191, 1
      %s193 = scalar_select %p192, %s191, 1
      %s194 = smul.addr %s193, 64
      %s195 = smul.addr %s194, 4
      %s196 = scalar_lea.vmem %s0, %s195
      %p197 = pneg %p51
      %p198 = pneg %p48
      %p199 = pneg %p72
      %p200 = pneg %p69
      %p201 = pneg %p100
      %p202 = pneg %p97
      %s203 = sadd.s32 %s20, %s21
      %p204 = scmp.lt.s32.totalorder %s203, 1
      %s205 = scalar_select %p204, %s203, 1
      %s206 = smul.addr %s205, 64
      %s207 = smul.addr %s206, 4
      %s208 = scalar_lea.vmem %s2, %s207
      %p209 = pneg %p126
      %p210 = pneg %p123
      %p211 = scmp.lt.s32.totalorder %s20, 1
      %s212 = scalar_select %p211, %s20, 1
      %s213 = smul.addr %s212, 2
      %s214 = scalar_lea.vmem %s3, %s213
      %p215 = pneg %p152
      %p216 = pneg %p149
      %p217 = scmp.lt.s32.totalorder %s20, 1
      %s218 = scalar_select %p217, %s20, 1
      %s219 = smul.addr %s218, 2
      %s220 = scalar_lea.vmem %s4, %s219
      %s221 = sadd.s32 %s20, %s21
      %p222 = scmp.lt.s32.totalorder %s221, 1
      %s223 = scalar_select %p222, %s221, 1
      %s224 = smul.addr %s223, 64
      %s225 = smul.addr %s224, 4
      %s226 = scalar_lea.vmem %s0, %s225
      %s227 = sadd.s32 %s20, %s21
      %s228 = sadd.s32 %s20, %s21
      %p229 = scmp.lt.s32.totalorder %s228, 1
      %s230 = scalar_select %p229, %s228, 1
      %s231 = smul.addr %s230, 64
      %s232 = smul.addr %s231, 4
      %s233 = scalar_lea.vmem %s2, %s232
      %s234 = sadd.s32 %s20, %s21
      %p235 = scmp.lt.s32.totalorder %s20, 1
      %s236 = scalar_select %p235, %s20, 1
      %s237 = smul.addr %s236, 2
      %s238 = scalar_lea.vmem %s3, %s237
      %p239 = scmp.lt.s32.totalorder %s20, 1
      %s240 = scalar_select %p239, %s20, 1
      %s241 = smul.addr %s240, 2
      %s242 = scalar_lea.vmem %s4, %s241
      %p244 = scmp.eq.s32.totalorder %s21, 0
      %v245 = vld [vmem:[%s226] sm:$0xf]
      %v246 = vld [vmem:[%s226 + $0x4] sm:$0xf]
      %v247 = vld [vmem:[%s226 + $0x8] sm:$0xf]
      %v248 = vld [vmem:[%s226 + $0xc] sm:$0xf]
      %v249 = vld [vmem:[%s226 + $0x10] sm:$0xf]
      %v250 = vld [vmem:[%s226 + $0x14] sm:$0xf]
      %v251 = vld [vmem:[%s226 + $0x18] sm:$0xf]
      %v252 = vld [vmem:[%s226 + $0x1c] sm:$0xf]
      %v253 = vld [vmem:[%s226 + $0x20] sm:$0xf]
      %v254 = vld [vmem:[%s226 + $0x24] sm:$0xf]
      %v255 = vld [vmem:[%s226 + $0x28] sm:$0xf]
      %v256 = vld [vmem:[%s226 + $0x2c] sm:$0xf]
      %v257 = vld [vmem:[%s226 + $0x30] sm:$0xf]
      %v258 = vld [vmem:[%s226 + $0x34] sm:$0xf]
      %v259 = vld [vmem:[%s226 + $0x38] sm:$0xf]
      %v260 = vld [vmem:[%s226 + $0x3c] sm:$0xf]
      %v261 = vld [vmem:[%s226 + $0x40] sm:$0xf]
      %v262 = vld [vmem:[%s226 + $0x44] sm:$0xf]
      %v263 = vld [vmem:[%s226 + $0x48] sm:$0xf]
      %v264 = vld [vmem:[%s226 + $0x4c] sm:$0xf]
      %v265 = vld [vmem:[%s226 + $0x50] sm:$0xf]
      %v266 = vld [vmem:[%s226 + $0x54] sm:$0xf]
      %v267 = vld [vmem:[%s226 + $0x58] sm:$0xf]
      %v268 = vld [vmem:[%s226 + $0x5c] sm:$0xf]
      %v269 = vld [vmem:[%s226 + $0x60] sm:$0xf]
      %v270 = vld [vmem:[%s226 + $0x64] sm:$0xf]
      %v271 = vld [vmem:[%s226 + $0x68] sm:$0xf]
      %v272 = vld [vmem:[%s226 + $0x6c] sm:$0xf]
      %v273 = vld [vmem:[%s226 + $0x70] sm:$0xf]
      %v274 = vld [vmem:[%s226 + $0x74] sm:$0xf]
      %v275 = vld [vmem:[%s226 + $0x78] sm:$0xf]
      %v276 = vld [vmem:[%s226 + $0x7c] sm:$0xf]
      %v277 = vld [vmem:[%s226 + $0x80] sm:$0xf]
      %v278 = vld [vmem:[%s226 + $0x84] sm:$0xf]
      %v279 = vld [vmem:[%s226 + $0x88] sm:$0xf]
      %v280 = vld [vmem:[%s226 + $0x8c] sm:$0xf]
      %v281 = vld [vmem:[%s226 + $0x90] sm:$0xf]
      %v282 = vld [vmem:[%s226 + $0x94] sm:$0xf]
      %v283 = vld [vmem:[%s226 + $0x98] sm:$0xf]
      %v284 = vld [vmem:[%s226 + $0x9c] sm:$0xf]
      %v285 = vld [vmem:[%s226 + $0xa0] sm:$0xf]
      %v286 = vld [vmem:[%s226 + $0xa4] sm:$0xf]
      %v287 = vld [vmem:[%s226 + $0xa8] sm:$0xf]
      %v288 = vld [vmem:[%s226 + $0xac] sm:$0xf]
      %v289 = vld [vmem:[%s226 + $0xb0] sm:$0xf]
      %v290 = vld [vmem:[%s226 + $0xb4] sm:$0xf]
      %v291 = vld [vmem:[%s226 + $0xb8] sm:$0xf]
      %v292 = vld [vmem:[%s226 + $0xbc] sm:$0xf]
      %v293 = vld [vmem:[%s226 + $0xc0] sm:$0xf]
      %v294 = vld [vmem:[%s226 + $0xc4] sm:$0xf]
      %v295 = vld [vmem:[%s226 + $0xc8] sm:$0xf]
      %v296 = vld [vmem:[%s226 + $0xcc] sm:$0xf]
      %v297 = vld [vmem:[%s226 + $0xd0] sm:$0xf]
      %v298 = vld [vmem:[%s226 + $0xd4] sm:$0xf]
      %v299 = vld [vmem:[%s226 + $0xd8] sm:$0xf]
      %v300 = vld [vmem:[%s226 + $0xdc] sm:$0xf]
      %v301 = vld [vmem:[%s226 + $0xe0] sm:$0xf]
      %v302 = vld [vmem:[%s226 + $0xe4] sm:$0xf]
      %v303 = vld [vmem:[%s226 + $0xe8] sm:$0xf]
      %v304 = vld [vmem:[%s226 + $0xec] sm:$0xf]
      %v305 = vld [vmem:[%s226 + $0xf0] sm:$0xf]
      %v306 = vld [vmem:[%s226 + $0xf4] sm:$0xf]
      %v307 = vld [vmem:[%s226 + $0xf8] sm:$0xf]
      %v308 = vld [vmem:[%s226 + $0xfc] sm:$0xf]
      %v309 = vunpack.c.l.bf16 %v245
      %v310 = vunpack.c.l.bf16 %v246
      %v311 = vunpack.c.l.bf16 %v247
      %v312 = vunpack.c.l.bf16 %v248
      %v313 = vunpack.c.l.bf16 %v249
      %v314 = vunpack.c.l.bf16 %v250
      %v315 = vunpack.c.l.bf16 %v251
      %v316 = vunpack.c.l.bf16 %v252
      %v317 = vunpack.c.l.bf16 %v253
      %v318 = vunpack.c.l.bf16 %v254
      %v319 = vunpack.c.l.bf16 %v255
      %v320 = vunpack.c.l.bf16 %v256
      %v321 = vunpack.c.l.bf16 %v257
      %v322 = vunpack.c.l.bf16 %v258
      %v323 = vunpack.c.l.bf16 %v259
      %v324 = vunpack.c.l.bf16 %v260
      %v325 = vunpack.c.l.bf16 %v261
      %v326 = vunpack.c.l.bf16 %v262
      %v327 = vunpack.c.l.bf16 %v263
      %v328 = vunpack.c.l.bf16 %v264
      %v329 = vunpack.c.l.bf16 %v265
      %v330 = vunpack.c.l.bf16 %v266
      %v331 = vunpack.c.l.bf16 %v267
      %v332 = vunpack.c.l.bf16 %v268
      %v333 = vunpack.c.l.bf16 %v269
      %v334 = vunpack.c.l.bf16 %v270
      %v335 = vunpack.c.l.bf16 %v271
      %v336 = vunpack.c.l.bf16 %v272
      %v337 = vunpack.c.l.bf16 %v273
      %v338 = vunpack.c.l.bf16 %v274
      %v339 = vunpack.c.l.bf16 %v275
      %v340 = vunpack.c.l.bf16 %v276
      %v341 = vunpack.c.l.bf16 %v277
      %v342 = vunpack.c.l.bf16 %v278
      %v343 = vunpack.c.l.bf16 %v279
      %v344 = vunpack.c.l.bf16 %v280
      %v345 = vunpack.c.l.bf16 %v281
      %v346 = vunpack.c.l.bf16 %v282
      %v347 = vunpack.c.l.bf16 %v283
      %v348 = vunpack.c.l.bf16 %v284
      %v349 = vunpack.c.l.bf16 %v285
      %v350 = vunpack.c.l.bf16 %v286
      %v351 = vunpack.c.l.bf16 %v287
      %v352 = vunpack.c.l.bf16 %v288
      %v353 = vunpack.c.l.bf16 %v289
      %v354 = vunpack.c.l.bf16 %v290
      %v355 = vunpack.c.l.bf16 %v291
      %v356 = vunpack.c.l.bf16 %v292
      %v357 = vunpack.c.l.bf16 %v293
      %v358 = vunpack.c.l.bf16 %v294
      %v359 = vunpack.c.l.bf16 %v295
      %v360 = vunpack.c.l.bf16 %v296
      %v361 = vunpack.c.l.bf16 %v297
      %v362 = vunpack.c.l.bf16 %v298
      %v363 = vunpack.c.l.bf16 %v299
      %v364 = vunpack.c.l.bf16 %v300
      %v365 = vunpack.c.l.bf16 %v301
      %v366 = vunpack.c.l.bf16 %v302
      %v367 = vunpack.c.l.bf16 %v303
      %v368 = vunpack.c.l.bf16 %v304
      %v369 = vunpack.c.l.bf16 %v305
      %v370 = vunpack.c.l.bf16 %v306
      %v371 = vunpack.c.l.bf16 %v307
      %v372 = vunpack.c.l.bf16 %v308
      %v373 = vlaneseq
      %v374 = vshrl.u32 %v373, 7
      %v375 = vadd.s32 %v374, 8
      %v376 = vadd.s32 %v374, 16
      %v377 = vadd.s32 %v374, 24
      %v378 = vadd.s32 %v374, 32
      %v379 = vadd.s32 %v374, 40
      %v380 = vadd.s32 %v374, 48
      %v381 = vadd.s32 %v374, 56
      %v382 = vadd.s32 %v374, 64
      %v383 = vadd.s32 %v374, 72
      %v384 = vadd.s32 %v374, 80
      %v385 = vadd.s32 %v374, 88
      %v386 = vadd.s32 %v374, 96
      %v387 = vadd.s32 %v374, 104
      %v388 = vadd.s32 %v374, 112
      %v389 = vadd.s32 %v374, 120
      %v390 = vadd.s32 %v374, 128
      %v391 = vadd.s32 %v374, 136
      %v392 = vadd.s32 %v374, 144
      %v393 = vadd.s32 %v374, 152
      %v394 = vadd.s32 %v374, 160
      %v395 = vadd.s32 %v374, 168
      %v396 = vadd.s32 %v374, 176
      %v397 = vadd.s32 %v374, 184
      %v398 = vadd.s32 %v374, 192
      %v399 = vadd.s32 %v374, 200
      %v400 = vadd.s32 %v374, 208
      %v401 = vadd.s32 %v374, 216
      %v402 = vadd.s32 %v374, 224
      %v403 = vadd.s32 %v374, 232
      %v404 = vadd.s32 %v374, 240
      %v405 = vadd.s32 %v374, 248
      %v406 = vadd.s32 %v374, 256
      %v407 = vadd.s32 %v374, 264
      %v408 = vadd.s32 %v374, 272
      %v409 = vadd.s32 %v374, 280
      %v410 = vadd.s32 %v374, 288
      %v411 = vadd.s32 %v374, 296
      %v412 = vadd.s32 %v374, 304
      %v413 = vadd.s32 %v374, 312
      %v414 = vadd.s32 %v374, 320
      %v415 = vadd.s32 %v374, 328
      %v416 = vadd.s32 %v374, 336
      %v417 = vadd.s32 %v374, 344
      %v418 = vadd.s32 %v374, 352
      %v419 = vadd.s32 %v374, 360
      %v420 = vadd.s32 %v374, 368
      %v421 = vadd.s32 %v374, 376
      %v422 = vadd.s32 %v374, 384
      %v423 = vadd.s32 %v374, 392
      %v424 = vadd.s32 %v374, 400
      %v425 = vadd.s32 %v374, 408
      %v426 = vadd.s32 %v374, 416
      %v427 = vadd.s32 %v374, 424
      %v428 = vadd.s32 %v374, 432
      %v429 = vadd.s32 %v374, 440
      %v430 = vadd.s32 %v374, 448
      %v431 = vadd.s32 %v374, 456
      %v432 = vadd.s32 %v374, 464
      %v433 = vadd.s32 %v374, 472
      %v434 = vadd.s32 %v374, 480
      %v435 = vadd.s32 %v374, 488
      %v436 = vadd.s32 %v374, 496
      %v437 = vadd.s32 %v374, 504
      %vm438 = vcmp.ge.s32.totalorder %v374, 1
      %vm439 = vcmp.ge.s32.totalorder %v375, 1
      %vm440 = vcmp.ge.s32.totalorder %v376, 1
      %vm441 = vcmp.ge.s32.totalorder %v377, 1
      %vm442 = vcmp.ge.s32.totalorder %v378, 1
      %vm443 = vcmp.ge.s32.totalorder %v379, 1
      %vm444 = vcmp.ge.s32.totalorder %v380, 1
      %vm445 = vcmp.ge.s32.totalorder %v381, 1
      %vm446 = vcmp.ge.s32.totalorder %v382, 1
      %vm447 = vcmp.ge.s32.totalorder %v383, 1
      %vm448 = vcmp.ge.s32.totalorder %v384, 1
      %vm449 = vcmp.ge.s32.totalorder %v385, 1
      %vm450 = vcmp.ge.s32.totalorder %v386, 1
      %vm451 = vcmp.ge.s32.totalorder %v387, 1
      %vm452 = vcmp.ge.s32.totalorder %v388, 1
      %vm453 = vcmp.ge.s32.totalorder %v389, 1
      %vm454 = vcmp.ge.s32.totalorder %v390, 1
      %vm455 = vcmp.ge.s32.totalorder %v391, 1
      %vm456 = vcmp.ge.s32.totalorder %v392, 1
      %vm457 = vcmp.ge.s32.totalorder %v393, 1
      %vm458 = vcmp.ge.s32.totalorder %v394, 1
      %vm459 = vcmp.ge.s32.totalorder %v395, 1
      %vm460 = vcmp.ge.s32.totalorder %v396, 1
      %vm461 = vcmp.ge.s32.totalorder %v397, 1
      %vm462 = vcmp.ge.s32.totalorder %v398, 1
      %vm463 = vcmp.ge.s32.totalorder %v399, 1
      %vm464 = vcmp.ge.s32.totalorder %v400, 1
      %vm465 = vcmp.ge.s32.totalorder %v401, 1
      %vm466 = vcmp.ge.s32.totalorder %v402, 1
      %vm467 = vcmp.ge.s32.totalorder %v403, 1
      %vm468 = vcmp.ge.s32.totalorder %v404, 1
      %vm469 = vcmp.ge.s32.totalorder %v405, 1
      %vm470 = vcmp.ge.s32.totalorder %v406, 1
      %vm471 = vcmp.ge.s32.totalorder %v407, 1
      %vm472 = vcmp.ge.s32.totalorder %v408, 1
      %vm473 = vcmp.ge.s32.totalorder %v409, 1
      %vm474 = vcmp.ge.s32.totalorder %v410, 1
      %vm475 = vcmp.ge.s32.totalorder %v411, 1
      %vm476 = vcmp.ge.s32.totalorder %v412, 1
      %vm477 = vcmp.ge.s32.totalorder %v413, 1
      %vm478 = vcmp.ge.s32.totalorder %v414, 1
      %vm479 = vcmp.ge.s32.totalorder %v415, 1
      %vm480 = vcmp.ge.s32.totalorder %v416, 1
      %vm481 = vcmp.ge.s32.totalorder %v417, 1
      %vm482 = vcmp.ge.s32.totalorder %v418, 1
      %vm483 = vcmp.ge.s32.totalorder %v419, 1
      %vm484 = vcmp.ge.s32.totalorder %v420, 1
      %vm485 = vcmp.ge.s32.totalorder %v421, 1
      %vm486 = vcmp.ge.s32.totalorder %v422, 1
      %vm487 = vcmp.ge.s32.totalorder %v423, 1
      %vm488 = vcmp.ge.s32.totalorder %v424, 1
      %vm489 = vcmp.ge.s32.totalorder %v425, 1
      %vm490 = vcmp.ge.s32.totalorder %v426, 1
      %vm491 = vcmp.ge.s32.totalorder %v427, 1
      %vm492 = vcmp.ge.s32.totalorder %v428, 1
      %vm493 = vcmp.ge.s32.totalorder %v429, 1
      %vm494 = vcmp.ge.s32.totalorder %v430, 1
      %vm495 = vcmp.ge.s32.totalorder %v431, 1
      %vm496 = vcmp.ge.s32.totalorder %v432, 1
      %vm497 = vcmp.ge.s32.totalorder %v433, 1
      %vm498 = vcmp.ge.s32.totalorder %v434, 1
      %vm499 = vcmp.ge.s32.totalorder %v435, 1
      %vm500 = vcmp.ge.s32.totalorder %v436, 1
      %vm501 = vcmp.ge.s32.totalorder %v437, 1
      %v502 = vrot.slane %v309, 7
      %v503 = vrot.slane %v310, 7
      %v504 = vrot.slane %v311, 7
      %v505 = vrot.slane %v312, 7
      %v506 = vrot.slane %v313, 7
      %v507 = vrot.slane %v314, 7
      %v508 = vrot.slane %v315, 7
      %v509 = vrot.slane %v316, 7
      %v510 = vrot.slane %v317, 7
      %v511 = vrot.slane %v318, 7
      %v512 = vrot.slane %v319, 7
      %v513 = vrot.slane %v320, 7
      %v514 = vrot.slane %v321, 7
      %v515 = vrot.slane %v322, 7
      %v516 = vrot.slane %v323, 7
      %v517 = vrot.slane %v324, 7
      %v518 = vrot.slane %v325, 7
      %v519 = vrot.slane %v326, 7
      %v520 = vrot.slane %v327, 7
      %v521 = vrot.slane %v328, 7
      %v522 = vrot.slane %v329, 7
      %v523 = vrot.slane %v330, 7
      %v524 = vrot.slane %v331, 7
      %v525 = vrot.slane %v332, 7
      %v526 = vrot.slane %v333, 7
      %v527 = vrot.slane %v334, 7
      %v528 = vrot.slane %v335, 7
      %v529 = vrot.slane %v336, 7
      %v530 = vrot.slane %v337, 7
      %v531 = vrot.slane %v338, 7
      %v532 = vrot.slane %v339, 7
      %v533 = vrot.slane %v340, 7
      %v534 = vrot.slane %v341, 7
      %v535 = vrot.slane %v342, 7
      %v536 = vrot.slane %v343, 7
      %v537 = vrot.slane %v344, 7
      %v538 = vrot.slane %v345, 7
      %v539 = vrot.slane %v346, 7
      %v540 = vrot.slane %v347, 7
      %v541 = vrot.slane %v348, 7
      %v542 = vrot.slane %v349, 7
      %v543 = vrot.slane %v350, 7
      %v544 = vrot.slane %v351, 7
      %v545 = vrot.slane %v352, 7
      %v546 = vrot.slane %v353, 7
      %v547 = vrot.slane %v354, 7
      %v548 = vrot.slane %v355, 7
      %v549 = vrot.slane %v356, 7
      %v550 = vrot.slane %v357, 7
      %v551 = vrot.slane %v358, 7
      %v552 = vrot.slane %v359, 7
      %v553 = vrot.slane %v360, 7
      %v554 = vrot.slane %v361, 7
      %v555 = vrot.slane %v362, 7
      %v556 = vrot.slane %v363, 7
      %v557 = vrot.slane %v364, 7
      %v558 = vrot.slane %v365, 7
      %v559 = vrot.slane %v366, 7
      %v560 = vrot.slane %v367, 7
      %v561 = vrot.slane %v368, 7
      %v562 = vrot.slane %v369, 7
      %v563 = vrot.slane %v370, 7
      %v564 = vrot.slane %v371, 7
      %v565 = vrot.slane %v372, 7
      %vm566 = vcmp.lt.s32.totalorder %v374, 1
      %v567 = vsel %vm566, %v564, %v565
      %v568 = vsel %vm566, %v563, %v564
      %v569 = vsel %vm566, %v562, %v563
      %v570 = vsel %vm566, %v561, %v562
      %v571 = vsel %vm566, %v560, %v561
      %v572 = vsel %vm566, %v559, %v560
      %v573 = vsel %vm566, %v558, %v559
      %v574 = vsel %vm566, %v557, %v558
      %v575 = vsel %vm566, %v556, %v557
      %v576 = vsel %vm566, %v555, %v556
      %v577 = vsel %vm566, %v554, %v555
      %v578 = vsel %vm566, %v553, %v554
      %v579 = vsel %vm566, %v552, %v553
      %v580 = vsel %vm566, %v551, %v552
      %v581 = vsel %vm566, %v550, %v551
      %v582 = vsel %vm566, %v549, %v550
      %v583 = vsel %vm566, %v548, %v549
      %v584 = vsel %vm566, %v547, %v548
      %v585 = vsel %vm566, %v546, %v547
      %v586 = vsel %vm566, %v545, %v546
      %v587 = vsel %vm566, %v544, %v545
      %v588 = vsel %vm566, %v543, %v544
      %v589 = vsel %vm566, %v542, %v543
      %v590 = vsel %vm566, %v541, %v542
      %v591 = vsel %vm566, %v540, %v541
      %v592 = vsel %vm566, %v539, %v540
      %v593 = vsel %vm566, %v538, %v539
      %v594 = vsel %vm566, %v537, %v538
      %v595 = vsel %vm566, %v536, %v537
      %v596 = vsel %vm566, %v535, %v536
      %v597 = vsel %vm566, %v534, %v535
      %v598 = vsel %vm566, %v533, %v534
      %v599 = vsel %vm566, %v532, %v533
      %v600 = vsel %vm566, %v531, %v532
      %v601 = vsel %vm566, %v530, %v531
      %v602 = vsel %vm566, %v529, %v530
      %v603 = vsel %vm566, %v528, %v529
      %v604 = vsel %vm566, %v527, %v528
      %v605 = vsel %vm566, %v526, %v527
      %v606 = vsel %vm566, %v525, %v526
      %v607 = vsel %vm566, %v524, %v525
      %v608 = vsel %vm566, %v523, %v524
      %v609 = vsel %vm566, %v522, %v523
      %v610 = vsel %vm566, %v521, %v522
      %v611 = vsel %vm566, %v520, %v521
      %v612 = vsel %vm566, %v519, %v520
      %v613 = vsel %vm566, %v518, %v519
      %v614 = vsel %vm566, %v517, %v518
      %v615 = vsel %vm566, %v516, %v517
      %v616 = vsel %vm566, %v515, %v516
      %v617 = vsel %vm566, %v514, %v515
      %v618 = vsel %vm566, %v513, %v514
      %v619 = vsel %vm566, %v512, %v513
      %v620 = vsel %vm566, %v511, %v512
      %v621 = vsel %vm566, %v510, %v511
      %v622 = vsel %vm566, %v509, %v510
      %v623 = vsel %vm566, %v508, %v509
      %v624 = vsel %vm566, %v507, %v508
      %v625 = vsel %vm566, %v506, %v507
      %v626 = vsel %vm566, %v505, %v506
      %v627 = vsel %vm566, %v504, %v505
      %v628 = vsel %vm566, %v503, %v504
      %v629 = vsel %vm566, %v502, %v503
      %v630 = vsel %vm566, %v565, %v502
      %v631 = vsel %vm438, %v630, 0.0
      %v632 = vsel %vm439, %v629, 0.0
      %v633 = vsel %vm440, %v628, 0.0
      %v634 = vsel %vm441, %v627, 0.0
      %v635 = vsel %vm442, %v626, 0.0
      %v636 = vsel %vm443, %v625, 0.0
      %v637 = vsel %vm444, %v624, 0.0
      %v638 = vsel %vm445, %v623, 0.0
      %v639 = vsel %vm446, %v622, 0.0
      %v640 = vsel %vm447, %v621, 0.0
      %v641 = vsel %vm448, %v620, 0.0
      %v642 = vsel %vm449, %v619, 0.0
      %v643 = vsel %vm450, %v618, 0.0
      %v644 = vsel %vm451, %v617, 0.0
      %v645 = vsel %vm452, %v616, 0.0
      %v646 = vsel %vm453, %v615, 0.0
      %v647 = vsel %vm454, %v614, 0.0
      %v648 = vsel %vm455, %v613, 0.0
      %v649 = vsel %vm456, %v612, 0.0
      %v650 = vsel %vm457, %v611, 0.0
      %v651 = vsel %vm458, %v610, 0.0
      %v652 = vsel %vm459, %v609, 0.0
      %v653 = vsel %vm460, %v608, 0.0
      %v654 = vsel %vm461, %v607, 0.0
      %v655 = vsel %vm462, %v606, 0.0
      %v656 = vsel %vm463, %v605, 0.0
      %v657 = vsel %vm464, %v604, 0.0
      %v658 = vsel %vm465, %v603, 0.0
      %v659 = vsel %vm466, %v602, 0.0
      %v660 = vsel %vm467, %v601, 0.0
      %v661 = vsel %vm468, %v600, 0.0
      %v662 = vsel %vm469, %v599, 0.0
      %v663 = vsel %vm470, %v598, 0.0
      %v664 = vsel %vm471, %v597, 0.0
      %v665 = vsel %vm472, %v596, 0.0
      %v666 = vsel %vm473, %v595, 0.0
      %v667 = vsel %vm474, %v594, 0.0
      %v668 = vsel %vm475, %v593, 0.0
      %v669 = vsel %vm476, %v592, 0.0
      %v670 = vsel %vm477, %v591, 0.0
      %v671 = vsel %vm478, %v590, 0.0
      %v672 = vsel %vm479, %v589, 0.0
      %v673 = vsel %vm480, %v588, 0.0
      %v674 = vsel %vm481, %v587, 0.0
      %v675 = vsel %vm482, %v586, 0.0
      %v676 = vsel %vm483, %v585, 0.0
      %v677 = vsel %vm484, %v584, 0.0
      %v678 = vsel %vm485, %v583, 0.0
      %v679 = vsel %vm486, %v582, 0.0
      %v680 = vsel %vm487, %v581, 0.0
      %v681 = vsel %vm488, %v580, 0.0
      %v682 = vsel %vm489, %v579, 0.0
      %v683 = vsel %vm490, %v578, 0.0
      %v684 = vsel %vm491, %v577, 0.0
      %v685 = vsel %vm492, %v576, 0.0
      %v686 = vsel %vm493, %v575, 0.0
      %v687 = vsel %vm494, %v574, 0.0
      %v688 = vsel %vm495, %v573, 0.0
      %v689 = vsel %vm496, %v572, 0.0
      %v690 = vsel %vm497, %v571, 0.0
      %v691 = vsel %vm498, %v570, 0.0
      %v692 = vsel %vm499, %v569, 0.0
      %v693 = vsel %vm500, %v568, 0.0
      %v694 = vsel %vm501, %v567, 0.0
      %vm695 = vcmp.le.s32.totalorder %v374, 510
      %vm696 = vcmp.le.s32.totalorder %v375, 510
      %vm697 = vcmp.le.s32.totalorder %v376, 510
      %vm698 = vcmp.le.s32.totalorder %v377, 510
      %vm699 = vcmp.le.s32.totalorder %v378, 510
      %vm700 = vcmp.le.s32.totalorder %v379, 510
      %vm701 = vcmp.le.s32.totalorder %v380, 510
      %vm702 = vcmp.le.s32.totalorder %v381, 510
      %vm703 = vcmp.le.s32.totalorder %v382, 510
      %vm704 = vcmp.le.s32.totalorder %v383, 510
      %vm705 = vcmp.le.s32.totalorder %v384, 510
      %vm706 = vcmp.le.s32.totalorder %v385, 510
      %vm707 = vcmp.le.s32.totalorder %v386, 510
      %vm708 = vcmp.le.s32.totalorder %v387, 510
      %vm709 = vcmp.le.s32.totalorder %v388, 510
      %vm710 = vcmp.le.s32.totalorder %v389, 510
      %vm711 = vcmp.le.s32.totalorder %v390, 510
      %vm712 = vcmp.le.s32.totalorder %v391, 510
      %vm713 = vcmp.le.s32.totalorder %v392, 510
      %vm714 = vcmp.le.s32.totalorder %v393, 510
      %vm715 = vcmp.le.s32.totalorder %v394, 510
      %vm716 = vcmp.le.s32.totalorder %v395, 510
      %vm717 = vcmp.le.s32.totalorder %v396, 510
      %vm718 = vcmp.le.s32.totalorder %v397, 510
      %vm719 = vcmp.le.s32.totalorder %v398, 510
      %vm720 = vcmp.le.s32.totalorder %v399, 510
      %vm721 = vcmp.le.s32.totalorder %v400, 510
      %vm722 = vcmp.le.s32.totalorder %v401, 510
      %vm723 = vcmp.le.s32.totalorder %v402, 510
      %vm724 = vcmp.le.s32.totalorder %v403, 510
      %vm725 = vcmp.le.s32.totalorder %v404, 510
      %vm726 = vcmp.le.s32.totalorder %v405, 510
      %vm727 = vcmp.le.s32.totalorder %v406, 510
      %vm728 = vcmp.le.s32.totalorder %v407, 510
      %vm729 = vcmp.le.s32.totalorder %v408, 510
      %vm730 = vcmp.le.s32.totalorder %v409, 510
      %vm731 = vcmp.le.s32.totalorder %v410, 510
      %vm732 = vcmp.le.s32.totalorder %v411, 510
      %vm733 = vcmp.le.s32.totalorder %v412, 510
      %vm734 = vcmp.le.s32.totalorder %v413, 510
      %vm735 = vcmp.le.s32.totalorder %v414, 510
      %vm736 = vcmp.le.s32.totalorder %v415, 510
      %vm737 = vcmp.le.s32.totalorder %v416, 510
      %vm738 = vcmp.le.s32.totalorder %v417, 510
      %vm739 = vcmp.le.s32.totalorder %v418, 510
      %vm740 = vcmp.le.s32.totalorder %v419, 510
      %vm741 = vcmp.le.s32.totalorder %v420, 510
      %vm742 = vcmp.le.s32.totalorder %v421, 510
      %vm743 = vcmp.le.s32.totalorder %v422, 510
      %vm744 = vcmp.le.s32.totalorder %v423, 510
      %vm745 = vcmp.le.s32.totalorder %v424, 510
      %vm746 = vcmp.le.s32.totalorder %v425, 510
      %vm747 = vcmp.le.s32.totalorder %v426, 510
      %vm748 = vcmp.le.s32.totalorder %v427, 510
      %vm749 = vcmp.le.s32.totalorder %v428, 510
      %vm750 = vcmp.le.s32.totalorder %v429, 510
      %vm751 = vcmp.le.s32.totalorder %v430, 510
      %vm752 = vcmp.le.s32.totalorder %v431, 510
      %vm753 = vcmp.le.s32.totalorder %v432, 510
      %vm754 = vcmp.le.s32.totalorder %v433, 510
      %vm755 = vcmp.le.s32.totalorder %v434, 510
      %vm756 = vcmp.le.s32.totalorder %v435, 510
      %vm757 = vcmp.le.s32.totalorder %v436, 510
      %vm758 = vcmp.le.s32.totalorder %v437, 510
      %v759 = vrot.slane %v309, 1
      %v760 = vrot.slane %v310, 1
      %v761 = vrot.slane %v311, 1
      %v762 = vrot.slane %v312, 1
      %v763 = vrot.slane %v313, 1
      %v764 = vrot.slane %v314, 1
      %v765 = vrot.slane %v315, 1
      %v766 = vrot.slane %v316, 1
      %v767 = vrot.slane %v317, 1
      %v768 = vrot.slane %v318, 1
      %v769 = vrot.slane %v319, 1
      %v770 = vrot.slane %v320, 1
      %v771 = vrot.slane %v321, 1
      %v772 = vrot.slane %v322, 1
      %v773 = vrot.slane %v323, 1
      %v774 = vrot.slane %v324, 1
      %v775 = vrot.slane %v325, 1
      %v776 = vrot.slane %v326, 1
      %v777 = vrot.slane %v327, 1
      %v778 = vrot.slane %v328, 1
      %v779 = vrot.slane %v329, 1
      %v780 = vrot.slane %v330, 1
      %v781 = vrot.slane %v331, 1
      %v782 = vrot.slane %v332, 1
      %v783 = vrot.slane %v333, 1
      %v784 = vrot.slane %v334, 1
      %v785 = vrot.slane %v335, 1
      %v786 = vrot.slane %v336, 1
      %v787 = vrot.slane %v337, 1
      %v788 = vrot.slane %v338, 1
      %v789 = vrot.slane %v339, 1
      %v790 = vrot.slane %v340, 1
      %v791 = vrot.slane %v341, 1
      %v792 = vrot.slane %v342, 1
      %v793 = vrot.slane %v343, 1
      %v794 = vrot.slane %v344, 1
      %v795 = vrot.slane %v345, 1
      %v796 = vrot.slane %v346, 1
      %v797 = vrot.slane %v347, 1
      %v798 = vrot.slane %v348, 1
      %v799 = vrot.slane %v349, 1
      %v800 = vrot.slane %v350, 1
      %v801 = vrot.slane %v351, 1
      %v802 = vrot.slane %v352, 1
      %v803 = vrot.slane %v353, 1
      %v804 = vrot.slane %v354, 1
      %v805 = vrot.slane %v355, 1
      %v806 = vrot.slane %v356, 1
      %v807 = vrot.slane %v357, 1
      %v808 = vrot.slane %v358, 1
      %v809 = vrot.slane %v359, 1
      %v810 = vrot.slane %v360, 1
      %v811 = vrot.slane %v361, 1
      %v812 = vrot.slane %v362, 1
      %v813 = vrot.slane %v363, 1
      %v814 = vrot.slane %v364, 1
      %v815 = vrot.slane %v365, 1
      %v816 = vrot.slane %v366, 1
      %v817 = vrot.slane %v367, 1
      %v818 = vrot.slane %v368, 1
      %v819 = vrot.slane %v369, 1
      %v820 = vrot.slane %v370, 1
      %v821 = vrot.slane %v371, 1
      %v822 = vrot.slane %v372, 1
      %vm823 = vcmp.lt.s32.totalorder %v374, 7
      %v824 = vsel %vm823, %v821, %v822
      %v825 = vsel %vm823, %v820, %v821
      %v826 = vsel %vm823, %v819, %v820
      %v827 = vsel %vm823, %v818, %v819
      %v828 = vsel %vm823, %v817, %v818
      %v829 = vsel %vm823, %v816, %v817
      %v830 = vsel %vm823, %v815, %v816
      %v831 = vsel %vm823, %v814, %v815
      %v832 = vsel %vm823, %v813, %v814
      %v833 = vsel %vm823, %v812, %v813
      %v834 = vsel %vm823, %v811, %v812
      %v835 = vsel %vm823, %v810, %v811
      %v836 = vsel %vm823, %v809, %v810
      %v837 = vsel %vm823, %v808, %v809
      %v838 = vsel %vm823, %v807, %v808
      %v839 = vsel %vm823, %v806, %v807
      %v840 = vsel %vm823, %v805, %v806
      %v841 = vsel %vm823, %v804, %v805
      %v842 = vsel %vm823, %v803, %v804
      %v843 = vsel %vm823, %v802, %v803
      %v844 = vsel %vm823, %v801, %v802
      %v845 = vsel %vm823, %v800, %v801
      %v846 = vsel %vm823, %v799, %v800
      %v847 = vsel %vm823, %v798, %v799
      %v848 = vsel %vm823, %v797, %v798
      %v849 = vsel %vm823, %v796, %v797
      %v850 = vsel %vm823, %v795, %v796
      %v851 = vsel %vm823, %v794, %v795
      %v852 = vsel %vm823, %v793, %v794
      %v853 = vsel %vm823, %v792, %v793
      %v854 = vsel %vm823, %v791, %v792
      %v855 = vsel %vm823, %v790, %v791
      %v856 = vsel %vm823, %v789, %v790
      %v857 = vsel %vm823, %v788, %v789
      %v858 = vsel %vm823, %v787, %v788
      %v859 = vsel %vm823, %v786, %v787
      %v860 = vsel %vm823, %v785, %v786
      %v861 = vsel %vm823, %v784, %v785
      %v862 = vsel %vm823, %v783, %v784
      %v863 = vsel %vm823, %v782, %v783
      %v864 = vsel %vm823, %v781, %v782
      %v865 = vsel %vm823, %v780, %v781
      %v866 = vsel %vm823, %v779, %v780
      %v867 = vsel %vm823, %v778, %v779
      %v868 = vsel %vm823, %v777, %v778
      %v869 = vsel %vm823, %v776, %v777
      %v870 = vsel %vm823, %v775, %v776
      %v871 = vsel %vm823, %v774, %v775
      %v872 = vsel %vm823, %v773, %v774
      %v873 = vsel %vm823, %v772, %v773
      %v874 = vsel %vm823, %v771, %v772
      %v875 = vsel %vm823, %v770, %v771
      %v876 = vsel %vm823, %v769, %v770
      %v877 = vsel %vm823, %v768, %v769
      %v878 = vsel %vm823, %v767, %v768
      %v879 = vsel %vm823, %v766, %v767
      %v880 = vsel %vm823, %v765, %v766
      %v881 = vsel %vm823, %v764, %v765
      %v882 = vsel %vm823, %v763, %v764
      %v883 = vsel %vm823, %v762, %v763
      %v884 = vsel %vm823, %v761, %v762
      %v885 = vsel %vm823, %v760, %v761
      %v886 = vsel %vm823, %v759, %v760
      %v887 = vsel %vm823, %v822, %v759
      %v888 = vsel %vm695, %v886, 0.0
      %v889 = vsel %vm696, %v885, 0.0
      %v890 = vsel %vm697, %v884, 0.0
      %v891 = vsel %vm698, %v883, 0.0
      %v892 = vsel %vm699, %v882, 0.0
      %v893 = vsel %vm700, %v881, 0.0
      %v894 = vsel %vm701, %v880, 0.0
      %v895 = vsel %vm702, %v879, 0.0
      %v896 = vsel %vm703, %v878, 0.0
      %v897 = vsel %vm704, %v877, 0.0
      %v898 = vsel %vm705, %v876, 0.0
      %v899 = vsel %vm706, %v875, 0.0
      %v900 = vsel %vm707, %v874, 0.0
      %v901 = vsel %vm708, %v873, 0.0
      %v902 = vsel %vm709, %v872, 0.0
      %v903 = vsel %vm710, %v871, 0.0
      %v904 = vsel %vm711, %v870, 0.0
      %v905 = vsel %vm712, %v869, 0.0
      %v906 = vsel %vm713, %v868, 0.0
      %v907 = vsel %vm714, %v867, 0.0
      %v908 = vsel %vm715, %v866, 0.0
      %v909 = vsel %vm716, %v865, 0.0
      %v910 = vsel %vm717, %v864, 0.0
      %v911 = vsel %vm718, %v863, 0.0
      %v912 = vsel %vm719, %v862, 0.0
      %v913 = vsel %vm720, %v861, 0.0
      %v914 = vsel %vm721, %v860, 0.0
      %v915 = vsel %vm722, %v859, 0.0
      %v916 = vsel %vm723, %v858, 0.0
      %v917 = vsel %vm724, %v857, 0.0
      %v918 = vsel %vm725, %v856, 0.0
      %v919 = vsel %vm726, %v855, 0.0
      %v920 = vsel %vm727, %v854, 0.0
      %v921 = vsel %vm728, %v853, 0.0
      %v922 = vsel %vm729, %v852, 0.0
      %v923 = vsel %vm730, %v851, 0.0
      %v924 = vsel %vm731, %v850, 0.0
      %v925 = vsel %vm732, %v849, 0.0
      %v926 = vsel %vm733, %v848, 0.0
      %v927 = vsel %vm734, %v847, 0.0
      %v928 = vsel %vm735, %v846, 0.0
      %v929 = vsel %vm736, %v845, 0.0
      %v930 = vsel %vm737, %v844, 0.0
      %v931 = vsel %vm738, %v843, 0.0
      %v932 = vsel %vm739, %v842, 0.0
      %v933 = vsel %vm740, %v841, 0.0
      %v934 = vsel %vm741, %v840, 0.0
      %v935 = vsel %vm742, %v839, 0.0
      %v936 = vsel %vm743, %v838, 0.0
      %v937 = vsel %vm744, %v837, 0.0
      %v938 = vsel %vm745, %v836, 0.0
      %v939 = vsel %vm746, %v835, 0.0
      %v940 = vsel %vm747, %v834, 0.0
      %v941 = vsel %vm748, %v833, 0.0
      %v942 = vsel %vm749, %v832, 0.0
      %v943 = vsel %vm750, %v831, 0.0
      %v944 = vsel %vm751, %v830, 0.0
      %v945 = vsel %vm752, %v829, 0.0
      %v946 = vsel %vm753, %v828, 0.0
      %v947 = vsel %vm754, %v827, 0.0
      %v948 = vsel %vm755, %v826, 0.0
      %v949 = vsel %vm756, %v825, 0.0
      %v950 = vsel %vm757, %v824, 0.0
      %v951 = vsel %vm758, %v887, 0.0
      %v952 = vpack.c.bf16 %v632, %v631
      %v953 = vpack.c.bf16 %v310, %v309
      %v954 = vpack.c.bf16 %v889, %v888
      %v955 = vpack.c.bf16 %v634, %v633
      %v956 = vpack.c.bf16 %v312, %v311
      %v957 = vpack.c.bf16 %v891, %v890
      %v958 = vpack.c.bf16 %v636, %v635
      %v959 = vpack.c.bf16 %v314, %v313
      %v960 = vpack.c.bf16 %v893, %v892
      %v961 = vpack.c.bf16 %v638, %v637
      %v962 = vpack.c.bf16 %v316, %v315
      %v963 = vpack.c.bf16 %v895, %v894
      %v964 = vpack.c.bf16 %v640, %v639
      %v965 = vpack.c.bf16 %v318, %v317
      %v966 = vpack.c.bf16 %v897, %v896
      %v967 = vpack.c.bf16 %v642, %v641
      %v968 = vpack.c.bf16 %v320, %v319
      %v969 = vpack.c.bf16 %v899, %v898
      %v970 = vpack.c.bf16 %v644, %v643
      %v971 = vpack.c.bf16 %v322, %v321
      %v972 = vpack.c.bf16 %v901, %v900
      %v973 = vpack.c.bf16 %v646, %v645
      %v974 = vpack.c.bf16 %v324, %v323
      %v975 = vpack.c.bf16 %v903, %v902
      %v976 = vpack.c.bf16 %v648, %v647
      %v977 = vpack.c.bf16 %v326, %v325
      %v978 = vpack.c.bf16 %v905, %v904
      %v979 = vpack.c.bf16 %v650, %v649
      %v980 = vpack.c.bf16 %v328, %v327
      %v981 = vpack.c.bf16 %v907, %v906
      %v982 = vpack.c.bf16 %v652, %v651
      %v983 = vpack.c.bf16 %v330, %v329
      %v984 = vpack.c.bf16 %v909, %v908
      %v985 = vpack.c.bf16 %v654, %v653
      %v986 = vpack.c.bf16 %v332, %v331
      %v987 = vpack.c.bf16 %v911, %v910
      %v988 = vpack.c.bf16 %v656, %v655
      %v989 = vpack.c.bf16 %v334, %v333
      %v990 = vpack.c.bf16 %v913, %v912
      %v991 = vpack.c.bf16 %v658, %v657
      %v992 = vpack.c.bf16 %v336, %v335
      %v993 = vpack.c.bf16 %v915, %v914
      %v994 = vpack.c.bf16 %v660, %v659
      %v995 = vpack.c.bf16 %v338, %v337
      %v996 = vpack.c.bf16 %v917, %v916
      %v997 = vpack.c.bf16 %v662, %v661
      %v998 = vpack.c.bf16 %v340, %v339
      %v999 = vpack.c.bf16 %v919, %v918
      %v1000 = vpack.c.bf16 %v664, %v663
      %v1001 = vpack.c.bf16 %v342, %v341
      %v1002 = vpack.c.bf16 %v921, %v920
      %v1003 = vpack.c.bf16 %v666, %v665
      %v1004 = vpack.c.bf16 %v344, %v343
      %v1005 = vpack.c.bf16 %v923, %v922
      %v1006 = vpack.c.bf16 %v668, %v667
      %v1007 = vpack.c.bf16 %v346, %v345
      %v1008 = vpack.c.bf16 %v925, %v924
      %v1009 = vpack.c.bf16 %v670, %v669
      %v1010 = vpack.c.bf16 %v348, %v347
      %v1011 = vpack.c.bf16 %v927, %v926
      %v1012 = vpack.c.bf16 %v672, %v671
      %v1013 = vpack.c.bf16 %v350, %v349
      %v1014 = vpack.c.bf16 %v929, %v928
      %v1015 = vpack.c.bf16 %v674, %v673
      %v1016 = vpack.c.bf16 %v352, %v351
      %v1017 = vpack.c.bf16 %v931, %v930
      %v1018 = vpack.c.bf16 %v676, %v675
      %v1019 = vpack.c.bf16 %v354, %v353
      %v1020 = vpack.c.bf16 %v933, %v932
      %v1021 = vpack.c.bf16 %v678, %v677
      %v1022 = vpack.c.bf16 %v356, %v355
      %v1023 = vpack.c.bf16 %v935, %v934
      %v1024 = vpack.c.bf16 %v680, %v679
      %v1025 = vpack.c.bf16 %v358, %v357
      %v1026 = vpack.c.bf16 %v937, %v936
      %v1027 = vpack.c.bf16 %v682, %v681
      %v1028 = vpack.c.bf16 %v360, %v359
      %v1029 = vpack.c.bf16 %v939, %v938
      %v1030 = vpack.c.bf16 %v684, %v683
      %v1031 = vpack.c.bf16 %v362, %v361
      %v1032 = vpack.c.bf16 %v941, %v940
      %v1033 = vpack.c.bf16 %v686, %v685
      %v1034 = vpack.c.bf16 %v364, %v363
      %v1035 = vpack.c.bf16 %v943, %v942
      %v1036 = vpack.c.bf16 %v688, %v687
      %v1037 = vpack.c.bf16 %v366, %v365
      %v1038 = vpack.c.bf16 %v945, %v944
      %v1039 = vpack.c.bf16 %v690, %v689
      %v1040 = vpack.c.bf16 %v368, %v367
      %v1041 = vpack.c.bf16 %v947, %v946
      %v1042 = vpack.c.bf16 %v692, %v691
      %v1043 = vpack.c.bf16 %v370, %v369
      %v1044 = vpack.c.bf16 %v949, %v948
      %v1045 = vpack.c.bf16 %v694, %v693
      %v1046 = vpack.c.bf16 %v372, %v371
      %v1047 = vpack.c.bf16 %v951, %v950
      %v1048 = vld [vmem:[%s1] sm:$0xff]
      %v1049 = vld [vmem:[%s1 + $0x8] sm:$0xff]
      %v1050 = vld [vmem:[%s1 + $0x10] sm:$0xff]
      %v1051 = vld [vmem:[%s1 + $0x18] sm:$0xff]
      %v1052 = vld [vmem:[%s1 + $0x20] sm:$0xff]
      %v1053 = vld [vmem:[%s1 + $0x28] sm:$0xff]
      %v1054 = vld [vmem:[%s1 + $0x30] sm:$0xff]
      %v1055 = vld [vmem:[%s1 + $0x38] sm:$0xff]
      %v1056 = vld [vmem:[%s1 + $0x40] sm:$0xff]
      %v1057 = vld [vmem:[%s1 + $0x48] sm:$0xff]
      %v1058 = vld [vmem:[%s1 + $0x50] sm:$0xff]
      %v1059 = vld [vmem:[%s1 + $0x58] sm:$0xff]
      %v1060 = vld [vmem:[%s1 + $0x60] sm:$0xff]
      %v1061 = vld [vmem:[%s1 + $0x68] sm:$0xff]
      %v1062 = vld [vmem:[%s1 + $0x70] sm:$0xff]
      %v1063 = vld [vmem:[%s1 + $0x78] sm:$0xff]
      %v1064 = vld [vmem:[%s1 + $0x80] sm:$0xff]
      %v1065 = vld [vmem:[%s1 + $0x88] sm:$0xff]
      %v1066 = vld [vmem:[%s1 + $0x90] sm:$0xff]
      %v1067 = vld [vmem:[%s1 + $0x98] sm:$0xff]
      %v1068 = vld [vmem:[%s1 + $0xa0] sm:$0xff]
      %v1069 = vld [vmem:[%s1 + $0xa8] sm:$0xff]
      %v1070 = vld [vmem:[%s1 + $0xb0] sm:$0xff]
      %v1071 = vld [vmem:[%s1 + $0xb8] sm:$0xff]
      %v1072 = vld [vmem:[%s1 + $0xc0] sm:$0xff]
      %v1073 = vld [vmem:[%s1 + $0xc8] sm:$0xff]
      %v1074 = vld [vmem:[%s1 + $0xd0] sm:$0xff]
      %v1075 = vld [vmem:[%s1 + $0xd8] sm:$0xff]
      %v1076 = vld [vmem:[%s1 + $0xe0] sm:$0xff]
      %v1077 = vld [vmem:[%s1 + $0xe8] sm:$0xff]
      %v1078 = vld [vmem:[%s1 + $0xf0] sm:$0xff]
      %v1079 = vld [vmem:[%s1 + $0xf8] sm:$0xff]
      %v1080 = vld [vmem:[%s1 + $0x100] sm:$0xff]
      %v1081 = vld [vmem:[%s1 + $0x108] sm:$0xff]
      %v1082 = vld [vmem:[%s1 + $0x110] sm:$0xff]
      %v1083 = vld [vmem:[%s1 + $0x118] sm:$0xff]
      %v1084 = vld [vmem:[%s1 + $0x120] sm:$0xff]
      %v1085 = vld [vmem:[%s1 + $0x128] sm:$0xff]
      %v1086 = vld [vmem:[%s1 + $0x130] sm:$0xff]
      %v1087 = vld [vmem:[%s1 + $0x138] sm:$0xff]
      %v1088 = vld [vmem:[%s1 + $0x140] sm:$0xff]
      %v1089 = vld [vmem:[%s1 + $0x148] sm:$0xff]
      %v1090 = vld [vmem:[%s1 + $0x150] sm:$0xff]
      %v1091 = vld [vmem:[%s1 + $0x158] sm:$0xff]
      %v1092 = vld [vmem:[%s1 + $0x160] sm:$0xff]
      %v1093 = vld [vmem:[%s1 + $0x168] sm:$0xff]
      %v1094 = vld [vmem:[%s1 + $0x170] sm:$0xff]
      %v1095 = vld [vmem:[%s1 + $0x178] sm:$0xff]
      %v1144 = vunpack.c.l.b16 %v1048
      %v1145 = vunpack.c.h.b16 %v1048
      %v1146 = vunpack.c.l.b16 %v1049
      %v1147 = vunpack.c.h.b16 %v1049
      %v1148 = vunpack.c.l.b16 %v1050
      %v1149 = vunpack.c.h.b16 %v1050
      %v1150 = vunpack.c.l.b16 %v1051
      %v1151 = vunpack.c.h.b16 %v1051
      %v1152 = vunpack.c.l.b16 %v1052
      %v1153 = vunpack.c.h.b16 %v1052
      %v1154 = vunpack.c.l.b16 %v1053
      %v1155 = vunpack.c.h.b16 %v1053
      %v1156 = vunpack.c.l.b16 %v1054
      %v1157 = vunpack.c.h.b16 %v1054
      %v1158 = vunpack.c.l.b16 %v1055
      %v1159 = vunpack.c.h.b16 %v1055
      %v1160 = vunpack.c.l.b16 %v1056
      %v1161 = vunpack.c.h.b16 %v1056
      %v1162 = vunpack.c.l.b16 %v1057
      %v1163 = vunpack.c.h.b16 %v1057
      %v1164 = vunpack.c.l.b16 %v1058
      %v1165 = vunpack.c.h.b16 %v1058
      %v1166 = vunpack.c.l.b16 %v1059
      %v1167 = vunpack.c.h.b16 %v1059
      %v1168 = vunpack.c.l.b16 %v1060
      %v1169 = vunpack.c.h.b16 %v1060
      %v1170 = vunpack.c.l.b16 %v1061
      %v1171 = vunpack.c.h.b16 %v1061
      %v1172 = vunpack.c.l.b16 %v1062
      %v1173 = vunpack.c.h.b16 %v1062
      %v1174 = vunpack.c.l.b16 %v1063
      %v1175 = vunpack.c.h.b16 %v1063
      %v1176 = vunpack.c.l.b16 %v1064
      %v1177 = vunpack.c.h.b16 %v1064
      %v1178 = vunpack.c.l.b16 %v1065
      %v1179 = vunpack.c.h.b16 %v1065
      %v1180 = vunpack.c.l.b16 %v1066
      %v1181 = vunpack.c.h.b16 %v1066
      %v1182 = vunpack.c.l.b16 %v1067
      %v1183 = vunpack.c.h.b16 %v1067
      %v1184 = vunpack.c.l.b16 %v1068
      %v1185 = vunpack.c.h.b16 %v1068
      %v1186 = vunpack.c.l.b16 %v1069
      %v1187 = vunpack.c.h.b16 %v1069
      %v1188 = vunpack.c.l.b16 %v1070
      %v1189 = vunpack.c.h.b16 %v1070
      %v1190 = vunpack.c.l.b16 %v1071
      %v1191 = vunpack.c.h.b16 %v1071
      %v1192 = vunpack.c.l.b16 %v1072
      %v1193 = vunpack.c.h.b16 %v1072
      %v1194 = vunpack.c.l.b16 %v1073
      %v1195 = vunpack.c.h.b16 %v1073
      %v1196 = vunpack.c.l.b16 %v1074
      %v1197 = vunpack.c.h.b16 %v1074
      %v1198 = vunpack.c.l.b16 %v1075
      %v1199 = vunpack.c.h.b16 %v1075
      %v1200 = vunpack.c.l.b16 %v1076
      %v1201 = vunpack.c.h.b16 %v1076
      %v1202 = vunpack.c.l.b16 %v1077
      %v1203 = vunpack.c.h.b16 %v1077
      %v1204 = vunpack.c.l.b16 %v1078
      %v1205 = vunpack.c.h.b16 %v1078
      %v1206 = vunpack.c.l.b16 %v1079
      %v1207 = vunpack.c.h.b16 %v1079
      %v1208 = vunpack.c.l.b16 %v1080
      %v1209 = vunpack.c.h.b16 %v1080
      %v1210 = vunpack.c.l.b16 %v1081
      %v1211 = vunpack.c.h.b16 %v1081
      %v1212 = vunpack.c.l.b16 %v1082
      %v1213 = vunpack.c.h.b16 %v1082
      %v1214 = vunpack.c.l.b16 %v1083
      %v1215 = vunpack.c.h.b16 %v1083
      %v1216 = vunpack.c.l.b16 %v1084
      %v1217 = vunpack.c.h.b16 %v1084
      %v1218 = vunpack.c.l.b16 %v1085
      %v1219 = vunpack.c.h.b16 %v1085
      %v1220 = vunpack.c.l.b16 %v1086
      %v1221 = vunpack.c.h.b16 %v1086
      %v1222 = vunpack.c.l.b16 %v1087
      %v1223 = vunpack.c.h.b16 %v1087
      %v1224 = vunpack.c.l.b16 %v1088
      %v1225 = vunpack.c.h.b16 %v1088
      %v1226 = vunpack.c.l.b16 %v1089
      %v1227 = vunpack.c.h.b16 %v1089
      %v1228 = vunpack.c.l.b16 %v1090
      %v1229 = vunpack.c.h.b16 %v1090
      %v1230 = vunpack.c.l.b16 %v1091
      %v1231 = vunpack.c.h.b16 %v1091
      %v1232 = vunpack.c.l.b16 %v1092
      %v1233 = vunpack.c.h.b16 %v1092
      %v1234 = vunpack.c.l.b16 %v1093
      %v1235 = vunpack.c.h.b16 %v1093
      %v1236 = vunpack.c.l.b16 %v1094
      %v1237 = vunpack.c.h.b16 %v1094
      %v1238 = vunpack.c.l.b16 %v1095
      %v1239 = vunpack.c.h.b16 %v1095
      %v1240 = vpack.c.b16 %v1146, %v1144
      %v1241 = vpack.c.b16 %v1147, %v1145
      %v1242 = vpack.c.b16 %v1150, %v1148
      %v1243 = vpack.c.b16 %v1151, %v1149
      %v1244 = vpack.c.b16 %v1154, %v1152
      %v1245 = vpack.c.b16 %v1155, %v1153
      %v1246 = vpack.c.b16 %v1158, %v1156
      %v1247 = vpack.c.b16 %v1159, %v1157
      %v1248 = vpack.c.b16 %v1162, %v1160
      %v1249 = vpack.c.b16 %v1163, %v1161
      %v1250 = vpack.c.b16 %v1166, %v1164
      %v1251 = vpack.c.b16 %v1167, %v1165
      %v1252 = vpack.c.b16 %v1170, %v1168
      %v1253 = vpack.c.b16 %v1171, %v1169
      %v1254 = vpack.c.b16 %v1174, %v1172
      %v1255 = vpack.c.b16 %v1175, %v1173
      %v1256 = vpack.c.b16 %v1178, %v1176
      %v1257 = vpack.c.b16 %v1179, %v1177
      %v1258 = vpack.c.b16 %v1182, %v1180
      %v1259 = vpack.c.b16 %v1183, %v1181
      %v1260 = vpack.c.b16 %v1186, %v1184
      %v1261 = vpack.c.b16 %v1187, %v1185
      %v1262 = vpack.c.b16 %v1190, %v1188
      %v1263 = vpack.c.b16 %v1191, %v1189
      %v1264 = vpack.c.b16 %v1194, %v1192
      %v1265 = vpack.c.b16 %v1195, %v1193
      %v1266 = vpack.c.b16 %v1198, %v1196
      %v1267 = vpack.c.b16 %v1199, %v1197
      %v1268 = vpack.c.b16 %v1202, %v1200
      %v1269 = vpack.c.b16 %v1203, %v1201
      %v1270 = vpack.c.b16 %v1206, %v1204
      %v1271 = vpack.c.b16 %v1207, %v1205
      %v1272 = vpack.c.b16 %v1210, %v1208
      %v1273 = vpack.c.b16 %v1211, %v1209
      %v1274 = vpack.c.b16 %v1214, %v1212
      %v1275 = vpack.c.b16 %v1215, %v1213
      %v1276 = vpack.c.b16 %v1218, %v1216
      %v1277 = vpack.c.b16 %v1219, %v1217
      %v1278 = vpack.c.b16 %v1222, %v1220
      %v1279 = vpack.c.b16 %v1223, %v1221
      %v1280 = vpack.c.b16 %v1226, %v1224
      %v1281 = vpack.c.b16 %v1227, %v1225
      %v1282 = vpack.c.b16 %v1230, %v1228
      %v1283 = vpack.c.b16 %v1231, %v1229
      %v1284 = vpack.c.b16 %v1234, %v1232
      %v1285 = vpack.c.b16 %v1235, %v1233
      %v1286 = vpack.c.b16 %v1238, %v1236
      %v1287 = vpack.c.b16 %v1239, %v1237
      %1336 = vmatprep.subr.bf16.mxu0 %v1241
      %1337 = vmatpush1.bf16.msra.mxu0 %v1240
      %1338 = vmatprep.subr.bf16.mxu0 %v1243
      %1339 = vmatpush1.bf16.msra.mxu0 %v1242
      %1340 = vmatprep.subr.bf16.mxu0 %v1245
      %1341 = vmatpush1.bf16.msra.mxu0 %v1244
      %1342 = vmatprep.subr.bf16.mxu0 %v1247
      %1343 = vmatpush1.bf16.msra.mxu0 %v1246
      %1344 = vmatprep.subr.bf16.mxu0 %v1249
      %1345 = vmatpush1.bf16.msra.mxu0 %v1248
      %1346 = vmatprep.subr.bf16.mxu0 %v1251
      %1347 = vmatpush1.bf16.msra.mxu0 %v1250
      %1348 = vmatprep.subr.bf16.mxu0 %v1253
      %1349 = vmatpush1.bf16.msra.mxu0 %v1252
      %1350 = vmatprep.subr.bf16.mxu0 %v1255
      %1351 = vmatpush1.bf16.msra.mxu0 %v1254
      %1352 = vmatprep.subr.bf16.mxu0 %v1257
      %1353 = vmatpush1.bf16.msra.mxu0 %v1256
      %1354 = vmatprep.subr.bf16.mxu0 %v1259
      %1355 = vmatpush1.bf16.msra.mxu0 %v1258
      %1356 = vmatprep.subr.bf16.mxu0 %v1261
      %1357 = vmatpush1.bf16.msra.mxu0 %v1260
      %1358 = vmatprep.subr.bf16.mxu0 %v1263
      %1359 = vmatpush1.bf16.msra.mxu0 %v1262
      %1360 = vmatprep.subr.bf16.mxu0 %v1265
      %1361 = vmatpush1.bf16.msra.mxu0 %v1264
      %1362 = vmatprep.subr.bf16.mxu0 %v1267
      %1363 = vmatpush1.bf16.msra.mxu0 %v1266
      %1364 = vmatprep.subr.bf16.mxu0 %v1269
      %1365 = vmatpush1.bf16.msra.mxu0 %v1268
      %1366 = vmatprep.subr.bf16.mxu0 %v1271
      %1367 = vmatpush1.bf16.msra.mxu0 %v1270
      %1368 = vmatprep.mubr.bf16.mxu0 %v953
      %1369 = vmatmul.mubr.bf16.gmra.mrb[0].mxu0 %v952
      %v1370 = vpop.f32.mrb[0].mxu0
      %v1371 = vadd.f32 0.0, %v1370
      %v1372 = vpop.f32.mrb[0].mxu0
      %v1373 = vadd.f32 0.0, %v1372
      %v1374 = vpop.f32.mrb[0].mxu0
      %v1375 = vadd.f32 0.0, %v1374
      %v1376 = vpop.f32.mrb[0].mxu0
      %v1377 = vadd.f32 0.0, %v1376
      %1378 = vmatprep.mubr.bf16.mxu0 %v956
      %1379 = vmatmul.mubr.bf16.gmra.mrb[0].mxu0 %v955
      %v1380 = vpop.f32.mrb[0].mxu0
      %v1381 = vadd.f32 0.0, %v1380
      %v1382 = vpop.f32.mrb[0].mxu0
      %v1383 = vadd.f32 0.0, %v1382
      %v1384 = vpop.f32.mrb[0].mxu0
      %v1385 = vadd.f32 0.0, %v1384
      %v1386 = vpop.f32.mrb[0].mxu0
      %v1387 = vadd.f32 0.0, %v1386
      %1388 = vmatprep.mubr.bf16.mxu0 %v959
      %1389 = vmatmul.mubr.bf16.gmra.mrb[0].mxu0 %v958
      %v1390 = vpop.f32.mrb[0].mxu0
      %v1391 = vadd.f32 0.0, %v1390
      %v1392 = vpop.f32.mrb[0].mxu0
      %v1393 = vadd.f32 0.0, %v1392
      %v1394 = vpop.f32.mrb[0].mxu0
      %v1395 = vadd.f32 0.0, %v1394
      %v1396 = vpop.f32.mrb[0].mxu0
      %v1397 = vadd.f32 0.0, %v1396
      %1398 = vmatprep.mubr.bf16.mxu0 %v962
      %1399 = vmatmul.mubr.bf16.gmra.mrb[0].mxu0 %v961
      %v1400 = vpop.f32.mrb[0].mxu0
      %v1401 = vadd.f32 0.0, %v1400
      %v1402 = vpop.f32.mrb[0].mxu0
      %v1403 = vadd.f32 0.0, %v1402
      %v1404 = vpop.f32.mrb[0].mxu0
      %v1405 = vadd.f32 0.0, %v1404
      %v1406 = vpop.f32.mrb[0].mxu0
      %v1407 = vadd.f32 0.0, %v1406
      %1408 = vmatprep.mubr.bf16.mxu0 %v965
      %1409 = vmatmul.mubr.bf16.gmra.mrb[0].mxu0 %v964
      %v1410 = vpop.f32.mrb[0].mxu0
      %v1411 = vadd.f32 0.0, %v1410
      %v1412 = vpop.f32.mrb[0].mxu0
      %v1413 = vadd.f32 0.0, %v1412
      %v1414 = vpop.f32.mrb[0].mxu0
      %v1415 = vadd.f32 0.0, %v1414
      %v1416 = vpop.f32.mrb[0].mxu0
      %v1417 = vadd.f32 0.0, %v1416
      %1418 = vmatprep.mubr.bf16.mxu0 %v968
      %1419 = vmatmul.mubr.bf16.gmra.mrb[0].mxu0 %v967
      %v1420 = vpop.f32.mrb[0].mxu0
      %v1421 = vadd.f32 0.0, %v1420
      %v1422 = vpop.f32.mrb[0].mxu0
      %v1423 = vadd.f32 0.0, %v1422
      %v1424 = vpop.f32.mrb[0].mxu0
      %v1425 = vadd.f32 0.0, %v1424
      %v1426 = vpop.f32.mrb[0].mxu0
      %v1427 = vadd.f32 0.0, %v1426
      %1428 = vmatprep.mubr.bf16.mxu0 %v971
      %1429 = vmatmul.mubr.bf16.gmra.mrb[0].mxu0 %v970
      %v1430 = vpop.f32.mrb[0].mxu0
      %v1431 = vadd.f32 0.0, %v1430
      %v1432 = vpop.f32.mrb[0].mxu0
      %v1433 = vadd.f32 0.0, %v1432
      %v1434 = vpop.f32.mrb[0].mxu0
      %v1435 = vadd.f32 0.0, %v1434
      %v1436 = vpop.f32.mrb[0].mxu0
      %v1437 = vadd.f32 0.0, %v1436
      %1438 = vmatprep.mubr.bf16.mxu0 %v974
      %1439 = vmatmul.mubr.bf16.gmra.mrb[0].mxu0 %v973
      %v1440 = vpop.f32.mrb[0].mxu0
      %v1441 = vadd.f32 0.0, %v1440
      %v1442 = vpop.f32.mrb[0].mxu0
      %v1443 = vadd.f32 0.0, %v1442
      %v1444 = vpop.f32.mrb[0].mxu0
      %v1445 = vadd.f32 0.0, %v1444
      %v1446 = vpop.f32.mrb[0].mxu0
      %v1447 = vadd.f32 0.0, %v1446
      %1448 = vmatprep.mubr.bf16.mxu0 %v977
      %1449 = vmatmul.mubr.bf16.gmra.mrb[0].mxu0 %v976
      %v1450 = vpop.f32.mrb[0].mxu0
      %v1451 = vadd.f32 0.0, %v1450
      %v1452 = vpop.f32.mrb[0].mxu0
      %v1453 = vadd.f32 0.0, %v1452
      %v1454 = vpop.f32.mrb[0].mxu0
      %v1455 = vadd.f32 0.0, %v1454
      %v1456 = vpop.f32.mrb[0].mxu0
      %v1457 = vadd.f32 0.0, %v1456
      %1458 = vmatprep.mubr.bf16.mxu0 %v980
      %1459 = vmatmul.mubr.bf16.gmra.mrb[0].mxu0 %v979
      %v1460 = vpop.f32.mrb[0].mxu0
      %v1461 = vadd.f32 0.0, %v1460
      %v1462 = vpop.f32.mrb[0].mxu0
      %v1463 = vadd.f32 0.0, %v1462
      %v1464 = vpop.f32.mrb[0].mxu0
      %v1465 = vadd.f32 0.0, %v1464
      %v1466 = vpop.f32.mrb[0].mxu0
      %v1467 = vadd.f32 0.0, %v1466
      %1468 = vmatprep.mubr.bf16.mxu0 %v983
      %1469 = vmatmul.mubr.bf16.gmra.mrb[0].mxu0 %v982
      %v1470 = vpop.f32.mrb[0].mxu0
      %v1471 = vadd.f32 0.0, %v1470
      %v1472 = vpop.f32.mrb[0].mxu0
      %v1473 = vadd.f32 0.0, %v1472
      %v1474 = vpop.f32.mrb[0].mxu0
      %v1475 = vadd.f32 0.0, %v1474
      %v1476 = vpop.f32.mrb[0].mxu0
      %v1477 = vadd.f32 0.0, %v1476
      %1478 = vmatprep.mubr.bf16.mxu0 %v986
      %1479 = vmatmul.mubr.bf16.gmra.mrb[0].mxu0 %v985
      %v1480 = vpop.f32.mrb[0].mxu0
      %v1481 = vadd.f32 0.0, %v1480
      %v1482 = vpop.f32.mrb[0].mxu0
      %v1483 = vadd.f32 0.0, %v1482
      %v1484 = vpop.f32.mrb[0].mxu0
      %v1485 = vadd.f32 0.0, %v1484
      %v1486 = vpop.f32.mrb[0].mxu0
      %v1487 = vadd.f32 0.0, %v1486
      %1488 = vmatprep.mubr.bf16.mxu0 %v989
      %1489 = vmatmul.mubr.bf16.gmra.mrb[0].mxu0 %v988
      %v1490 = vpop.f32.mrb[0].mxu0
      %v1491 = vadd.f32 0.0, %v1490
      %v1492 = vpop.f32.mrb[0].mxu0
      %v1493 = vadd.f32 0.0, %v1492
      %v1494 = vpop.f32.mrb[0].mxu0
      %v1495 = vadd.f32 0.0, %v1494
      %v1496 = vpop.f32.mrb[0].mxu0
      %v1497 = vadd.f32 0.0, %v1496
      %1498 = vmatprep.mubr.bf16.mxu0 %v992
      %1499 = vmatmul.mubr.bf16.gmra.mrb[0].mxu0 %v991
      %v1500 = vpop.f32.mrb[0].mxu0
      %v1501 = vadd.f32 0.0, %v1500
      %v1502 = vpop.f32.mrb[0].mxu0
      %v1503 = vadd.f32 0.0, %v1502
      %v1504 = vpop.f32.mrb[0].mxu0
      %v1505 = vadd.f32 0.0, %v1504
      %v1506 = vpop.f32.mrb[0].mxu0
      %v1507 = vadd.f32 0.0, %v1506
      %1508 = vmatprep.mubr.bf16.mxu0 %v995
      %1509 = vmatmul.mubr.bf16.gmra.mrb[0].mxu0 %v994
      %v1510 = vpop.f32.mrb[0].mxu0
      %v1511 = vadd.f32 0.0, %v1510
      %v1512 = vpop.f32.mrb[0].mxu0
      %v1513 = vadd.f32 0.0, %v1512
      %v1514 = vpop.f32.mrb[0].mxu0
      %v1515 = vadd.f32 0.0, %v1514
      %v1516 = vpop.f32.mrb[0].mxu0
      %v1517 = vadd.f32 0.0, %v1516
      %1518 = vmatprep.mubr.bf16.mxu0 %v998
      %1519 = vmatmul.mubr.bf16.gmra.mrb[0].mxu0 %v997
      %v1520 = vpop.f32.mrb[0].mxu0
      %v1521 = vadd.f32 0.0, %v1520
      %v1522 = vpop.f32.mrb[0].mxu0
      %v1523 = vadd.f32 0.0, %v1522
      %v1524 = vpop.f32.mrb[0].mxu0
      %v1525 = vadd.f32 0.0, %v1524
      %v1526 = vpop.f32.mrb[0].mxu0
      %v1527 = vadd.f32 0.0, %v1526
      %1528 = vmatprep.mubr.bf16.mxu0 %v1001
      %1529 = vmatmul.mubr.bf16.gmra.mrb[0].mxu0 %v1000
      %v1530 = vpop.f32.mrb[0].mxu0
      %v1531 = vadd.f32 0.0, %v1530
      %v1532 = vpop.f32.mrb[0].mxu0
      %v1533 = vadd.f32 0.0, %v1532
      %v1534 = vpop.f32.mrb[0].mxu0
      %v1535 = vadd.f32 0.0, %v1534
      %v1536 = vpop.f32.mrb[0].mxu0
      %v1537 = vadd.f32 0.0, %v1536
      %1538 = vmatprep.mubr.bf16.mxu0 %v1004
      %1539 = vmatmul.mubr.bf16.gmra.mrb[0].mxu0 %v1003
      %v1540 = vpop.f32.mrb[0].mxu0
      %v1541 = vadd.f32 0.0, %v1540
      %v1542 = vpop.f32.mrb[0].mxu0
      %v1543 = vadd.f32 0.0, %v1542
      %v1544 = vpop.f32.mrb[0].mxu0
      %v1545 = vadd.f32 0.0, %v1544
      %v1546 = vpop.f32.mrb[0].mxu0
      %v1547 = vadd.f32 0.0, %v1546
      %1548 = vmatprep.mubr.bf16.mxu0 %v1007
      %1549 = vmatmul.mubr.bf16.gmra.mrb[0].mxu0 %v1006
      %v1550 = vpop.f32.mrb[0].mxu0
      %v1551 = vadd.f32 0.0, %v1550
      %v1552 = vpop.f32.mrb[0].mxu0
      %v1553 = vadd.f32 0.0, %v1552
      %v1554 = vpop.f32.mrb[0].mxu0
      %v1555 = vadd.f32 0.0, %v1554
      %v1556 = vpop.f32.mrb[0].mxu0
      %v1557 = vadd.f32 0.0, %v1556
      %1558 = vmatprep.mubr.bf16.mxu0 %v1010
      %1559 = vmatmul.mubr.bf16.gmra.mrb[0].mxu0 %v1009
      %v1560 = vpop.f32.mrb[0].mxu0
      %v1561 = vadd.f32 0.0, %v1560
      %v1562 = vpop.f32.mrb[0].mxu0
      %v1563 = vadd.f32 0.0, %v1562
      %v1564 = vpop.f32.mrb[0].mxu0
      %v1565 = vadd.f32 0.0, %v1564
      %v1566 = vpop.f32.mrb[0].mxu0
      %v1567 = vadd.f32 0.0, %v1566
      %1568 = vmatprep.mubr.bf16.mxu0 %v1013
      %1569 = vmatmul.mubr.bf16.gmra.mrb[0].mxu0 %v1012
      %v1570 = vpop.f32.mrb[0].mxu0
      %v1571 = vadd.f32 0.0, %v1570
      %v1572 = vpop.f32.mrb[0].mxu0
      %v1573 = vadd.f32 0.0, %v1572
      %v1574 = vpop.f32.mrb[0].mxu0
      %v1575 = vadd.f32 0.0, %v1574
      %v1576 = vpop.f32.mrb[0].mxu0
      %v1577 = vadd.f32 0.0, %v1576
      %1578 = vmatprep.mubr.bf16.mxu0 %v1016
      %1579 = vmatmul.mubr.bf16.gmra.mrb[0].mxu0 %v1015
      %v1580 = vpop.f32.mrb[0].mxu0
      %v1581 = vadd.f32 0.0, %v1580
      %v1582 = vpop.f32.mrb[0].mxu0
      %v1583 = vadd.f32 0.0, %v1582
      %v1584 = vpop.f32.mrb[0].mxu0
      %v1585 = vadd.f32 0.0, %v1584
      %v1586 = vpop.f32.mrb[0].mxu0
      %v1587 = vadd.f32 0.0, %v1586
      %1588 = vmatprep.mubr.bf16.mxu0 %v1019
      %1589 = vmatmul.mubr.bf16.gmra.mrb[0].mxu0 %v1018
      %v1590 = vpop.f32.mrb[0].mxu0
      %v1591 = vadd.f32 0.0, %v1590
      %v1592 = vpop.f32.mrb[0].mxu0
      %v1593 = vadd.f32 0.0, %v1592
      %v1594 = vpop.f32.mrb[0].mxu0
      %v1595 = vadd.f32 0.0, %v1594
      %v1596 = vpop.f32.mrb[0].mxu0
      %v1597 = vadd.f32 0.0, %v1596
      %1598 = vmatprep.mubr.bf16.mxu0 %v1022
      %1599 = vmatmul.mubr.bf16.gmra.mrb[0].mxu0 %v1021
      %v1600 = vpop.f32.mrb[0].mxu0
      %v1601 = vadd.f32 0.0, %v1600
      %v1602 = vpop.f32.mrb[0].mxu0
      %v1603 = vadd.f32 0.0, %v1602
      %v1604 = vpop.f32.mrb[0].mxu0
      %v1605 = vadd.f32 0.0, %v1604
      %v1606 = vpop.f32.mrb[0].mxu0
      %v1607 = vadd.f32 0.0, %v1606
      %1608 = vmatprep.mubr.bf16.mxu0 %v1025
      %1609 = vmatmul.mubr.bf16.gmra.mrb[0].mxu0 %v1024
      %v1610 = vpop.f32.mrb[0].mxu0
      %v1611 = vadd.f32 0.0, %v1610
      %v1612 = vpop.f32.mrb[0].mxu0
      %v1613 = vadd.f32 0.0, %v1612
      %v1614 = vpop.f32.mrb[0].mxu0
      %v1615 = vadd.f32 0.0, %v1614
      %v1616 = vpop.f32.mrb[0].mxu0
      %v1617 = vadd.f32 0.0, %v1616
      %1618 = vmatprep.mubr.bf16.mxu0 %v1028
      %1619 = vmatmul.mubr.bf16.gmra.mrb[0].mxu0 %v1027
      %v1620 = vpop.f32.mrb[0].mxu0
      %v1621 = vadd.f32 0.0, %v1620
      %v1622 = vpop.f32.mrb[0].mxu0
      %v1623 = vadd.f32 0.0, %v1622
      %v1624 = vpop.f32.mrb[0].mxu0
      %v1625 = vadd.f32 0.0, %v1624
      %v1626 = vpop.f32.mrb[0].mxu0
      %v1627 = vadd.f32 0.0, %v1626
      %1628 = vmatprep.mubr.bf16.mxu0 %v1031
      %1629 = vmatmul.mubr.bf16.gmra.mrb[0].mxu0 %v1030
      %v1630 = vpop.f32.mrb[0].mxu0
      %v1631 = vadd.f32 0.0, %v1630
      %v1632 = vpop.f32.mrb[0].mxu0
      %v1633 = vadd.f32 0.0, %v1632
      %v1634 = vpop.f32.mrb[0].mxu0
      %v1635 = vadd.f32 0.0, %v1634
      %v1636 = vpop.f32.mrb[0].mxu0
      %v1637 = vadd.f32 0.0, %v1636
      %1638 = vmatprep.mubr.bf16.mxu0 %v1034
      %1639 = vmatmul.mubr.bf16.gmra.mrb[0].mxu0 %v1033
      %v1640 = vpop.f32.mrb[0].mxu0
      %v1641 = vadd.f32 0.0, %v1640
      %v1642 = vpop.f32.mrb[0].mxu0
      %v1643 = vadd.f32 0.0, %v1642
      %v1644 = vpop.f32.mrb[0].mxu0
      %v1645 = vadd.f32 0.0, %v1644
      %v1646 = vpop.f32.mrb[0].mxu0
      %v1647 = vadd.f32 0.0, %v1646
      %1648 = vmatprep.mubr.bf16.mxu0 %v1037
      %1649 = vmatmul.mubr.bf16.gmra.mrb[0].mxu0 %v1036
      %v1650 = vpop.f32.mrb[0].mxu0
      %v1651 = vadd.f32 0.0, %v1650
      %v1652 = vpop.f32.mrb[0].mxu0
      %v1653 = vadd.f32 0.0, %v1652
      %v1654 = vpop.f32.mrb[0].mxu0
      %v1655 = vadd.f32 0.0, %v1654
      %v1656 = vpop.f32.mrb[0].mxu0
      %v1657 = vadd.f32 0.0, %v1656
      %1658 = vmatprep.mubr.bf16.mxu0 %v1040
      %1659 = vmatmul.mubr.bf16.gmra.mrb[0].mxu0 %v1039
      %v1660 = vpop.f32.mrb[0].mxu0
      %v1661 = vadd.f32 0.0, %v1660
      %v1662 = vpop.f32.mrb[0].mxu0
      %v1663 = vadd.f32 0.0, %v1662
      %v1664 = vpop.f32.mrb[0].mxu0
      %v1665 = vadd.f32 0.0, %v1664
      %v1666 = vpop.f32.mrb[0].mxu0
      %v1667 = vadd.f32 0.0, %v1666
      %1668 = vmatprep.mubr.bf16.mxu0 %v1043
      %1669 = vmatmul.mubr.bf16.gmra.mrb[0].mxu0 %v1042
      %v1670 = vpop.f32.mrb[0].mxu0
      %v1671 = vadd.f32 0.0, %v1670
      %v1672 = vpop.f32.mrb[0].mxu0
      %v1673 = vadd.f32 0.0, %v1672
      %v1674 = vpop.f32.mrb[0].mxu0
      %v1675 = vadd.f32 0.0, %v1674
      %v1676 = vpop.f32.mrb[0].mxu0
      %v1677 = vadd.f32 0.0, %v1676
      %1678 = vmatprep.mubr.bf16.mxu0 %v1046
      %1679 = vmatmul.mubr.bf16.gmra.mrb[0].mxu0 %v1045
      %v1680 = vpop.f32.mrb[0].mxu0
      %v1681 = vadd.f32 0.0, %v1680
      %v1682 = vpop.f32.mrb[0].mxu0
      %v1683 = vadd.f32 0.0, %v1682
      %v1684 = vpop.f32.mrb[0].mxu0
      %v1685 = vadd.f32 0.0, %v1684
      %v1686 = vpop.f32.mrb[0].mxu0
      %v1687 = vadd.f32 0.0, %v1686
      %1688 = vdwg.mxu0
      %1689 = vmatprep.subr.bf16.mxu0 %v1273
      %1690 = vmatpush1.bf16.msra.mxu0 %v1272
      %1691 = vmatprep.subr.bf16.mxu0 %v1275
      %1692 = vmatpush1.bf16.msra.mxu0 %v1274
      %1693 = vmatprep.subr.bf16.mxu0 %v1277
      %1694 = vmatpush1.bf16.msra.mxu0 %v1276
      %1695 = vmatprep.subr.bf16.mxu0 %v1279
      %1696 = vmatpush1.bf16.msra.mxu0 %v1278
      %1697 = vmatprep.subr.bf16.mxu0 %v1281
      %1698 = vmatpush1.bf16.msra.mxu0 %v1280
      %1699 = vmatprep.subr.bf16.mxu0 %v1283
      %1700 = vmatpush1.bf16.msra.mxu0 %v1282
      %1701 = vmatprep.subr.bf16.mxu0 %v1285
      %1702 = vmatpush1.bf16.msra.mxu0 %v1284
      %1703 = vmatprep.subr.bf16.mxu0 %v1287
      %1704 = vmatpush1.bf16.msra.mxu0 %v1286
      %1705 = vmatprep.subr.bf16.mxu0 0
      %1706 = vmatpush1.bf16.msra.mxu0 0
      %1707 = vmatprep.subr.bf16.mxu0 0
      %1708 = vmatpush1.bf16.msra.mxu0 0
      %1709 = vmatprep.subr.bf16.mxu0 0
      %1710 = vmatpush1.bf16.msra.mxu0 0
      %1711 = vmatprep.subr.bf16.mxu0 0
      %1712 = vmatpush1.bf16.msra.mxu0 0
      %1713 = vmatprep.subr.bf16.mxu0 0
      %1714 = vmatpush1.bf16.msra.mxu0 0
      %1715 = vmatprep.subr.bf16.mxu0 0
      %1716 = vmatpush1.bf16.msra.mxu0 0
      %1717 = vmatprep.subr.bf16.mxu0 0
      %1718 = vmatpush1.bf16.msra.mxu0 0
      %1719 = vmatprep.subr.bf16.mxu0 0
      %1720 = vmatpush1.bf16.msra.mxu0 0
      %1721 = vmatprep.mubr.bf16.mxu0 0
      %1722 = vmatmul.mubr.bf16.gmra.mrb[0].mxu0 %v954
      %v1723 = vpop.f32.mrb[0].mxu0
      %v1724 = vadd.f32 %v1371, %v1723
      %v1725 = vpop.f32.mrb[0].mxu0
      %v1726 = vadd.f32 %v1373, %v1725
      %v1727 = vpop.f32.mrb[0].mxu0
      %v1728 = vadd.f32 %v1375, %v1727
      %v1729 = vpop.f32.mrb[0].mxu0
      %v1730 = vadd.f32 %v1377, %v1729
      %1731 = vmatprep.mubr.bf16.mxu0 0
      %1732 = vmatmul.mubr.bf16.gmra.mrb[0].mxu0 %v957
      %v1733 = vpop.f32.mrb[0].mxu0
      %v1734 = vadd.f32 %v1381, %v1733
      %v1735 = vpop.f32.mrb[0].mxu0
      %v1736 = vadd.f32 %v1383, %v1735
      %v1737 = vpop.f32.mrb[0].mxu0
      %v1738 = vadd.f32 %v1385, %v1737
      %v1739 = vpop.f32.mrb[0].mxu0
      %v1740 = vadd.f32 %v1387, %v1739
      %1741 = vmatprep.mubr.bf16.mxu0 0
      %1742 = vmatmul.mubr.bf16.gmra.mrb[0].mxu0 %v960
      %v1743 = vpop.f32.mrb[0].mxu0
      %v1744 = vadd.f32 %v1391, %v1743
      %v1745 = vpop.f32.mrb[0].mxu0
      %v1746 = vadd.f32 %v1393, %v1745
      %v1747 = vpop.f32.mrb[0].mxu0
      %v1748 = vadd.f32 %v1395, %v1747
      %v1749 = vpop.f32.mrb[0].mxu0
      %v1750 = vadd.f32 %v1397, %v1749
      %1751 = vmatprep.mubr.bf16.mxu0 0
      %1752 = vmatmul.mubr.bf16.gmra.mrb[0].mxu0 %v963
      %v1753 = vpop.f32.mrb[0].mxu0
      %v1754 = vadd.f32 %v1401, %v1753
      %v1755 = vpop.f32.mrb[0].mxu0
      %v1756 = vadd.f32 %v1403, %v1755
      %v1757 = vpop.f32.mrb[0].mxu0
      %v1758 = vadd.f32 %v1405, %v1757
      %v1759 = vpop.f32.mrb[0].mxu0
      %v1760 = vadd.f32 %v1407, %v1759
      %1761 = vmatprep.mubr.bf16.mxu0 0
      %1762 = vmatmul.mubr.bf16.gmra.mrb[0].mxu0 %v966
      %v1763 = vpop.f32.mrb[0].mxu0
      %v1764 = vadd.f32 %v1411, %v1763
      %v1765 = vpop.f32.mrb[0].mxu0
      %v1766 = vadd.f32 %v1413, %v1765
      %v1767 = vpop.f32.mrb[0].mxu0
      %v1768 = vadd.f32 %v1415, %v1767
      %v1769 = vpop.f32.mrb[0].mxu0
      %v1770 = vadd.f32 %v1417, %v1769
      %1771 = vmatprep.mubr.bf16.mxu0 0
      %1772 = vmatmul.mubr.bf16.gmra.mrb[0].mxu0 %v969
      %v1773 = vpop.f32.mrb[0].mxu0
      %v1774 = vadd.f32 %v1421, %v1773
      %v1775 = vpop.f32.mrb[0].mxu0
      %v1776 = vadd.f32 %v1423, %v1775
      %v1777 = vpop.f32.mrb[0].mxu0
      %v1778 = vadd.f32 %v1425, %v1777
      %v1779 = vpop.f32.mrb[0].mxu0
      %v1780 = vadd.f32 %v1427, %v1779
      %1781 = vmatprep.mubr.bf16.mxu0 0
      %1782 = vmatmul.mubr.bf16.gmra.mrb[0].mxu0 %v972
      %v1783 = vpop.f32.mrb[0].mxu0
      %v1784 = vadd.f32 %v1431, %v1783
      %v1785 = vpop.f32.mrb[0].mxu0
      %v1786 = vadd.f32 %v1433, %v1785
      %v1787 = vpop.f32.mrb[0].mxu0
      %v1788 = vadd.f32 %v1435, %v1787
      %v1789 = vpop.f32.mrb[0].mxu0
      %v1790 = vadd.f32 %v1437, %v1789
      %1791 = vmatprep.mubr.bf16.mxu0 0
      %1792 = vmatmul.mubr.bf16.gmra.mrb[0].mxu0 %v975
      %v1793 = vpop.f32.mrb[0].mxu0
      %v1794 = vadd.f32 %v1441, %v1793
      %v1795 = vpop.f32.mrb[0].mxu0
      %v1796 = vadd.f32 %v1443, %v1795
      %v1797 = vpop.f32.mrb[0].mxu0
      %v1798 = vadd.f32 %v1445, %v1797
      %v1799 = vpop.f32.mrb[0].mxu0
      %v1800 = vadd.f32 %v1447, %v1799
      %1801 = vmatprep.mubr.bf16.mxu0 0
      %1802 = vmatmul.mubr.bf16.gmra.mrb[0].mxu0 %v978
      %v1803 = vpop.f32.mrb[0].mxu0
      %v1804 = vadd.f32 %v1451, %v1803
      %v1805 = vpop.f32.mrb[0].mxu0
      %v1806 = vadd.f32 %v1453, %v1805
      %v1807 = vpop.f32.mrb[0].mxu0
      %v1808 = vadd.f32 %v1455, %v1807
      %v1809 = vpop.f32.mrb[0].mxu0
      %v1810 = vadd.f32 %v1457, %v1809
      %1811 = vmatprep.mubr.bf16.mxu0 0
      %1812 = vmatmul.mubr.bf16.gmra.mrb[0].mxu0 %v981
      %v1813 = vpop.f32.mrb[0].mxu0
      %v1814 = vadd.f32 %v1461, %v1813
      %v1815 = vpop.f32.mrb[0].mxu0
      %v1816 = vadd.f32 %v1463, %v1815
      %v1817 = vpop.f32.mrb[0].mxu0
      %v1818 = vadd.f32 %v1465, %v1817
      %v1819 = vpop.f32.mrb[0].mxu0
      %v1820 = vadd.f32 %v1467, %v1819
      %1821 = vmatprep.mubr.bf16.mxu0 0
      %1822 = vmatmul.mubr.bf16.gmra.mrb[0].mxu0 %v984
      %v1823 = vpop.f32.mrb[0].mxu0
      %v1824 = vadd.f32 %v1471, %v1823
      %v1825 = vpop.f32.mrb[0].mxu0
      %v1826 = vadd.f32 %v1473, %v1825
      %v1827 = vpop.f32.mrb[0].mxu0
      %v1828 = vadd.f32 %v1475, %v1827
      %v1829 = vpop.f32.mrb[0].mxu0
      %v1830 = vadd.f32 %v1477, %v1829
      %1831 = vmatprep.mubr.bf16.mxu0 0
      %1832 = vmatmul.mubr.bf16.gmra.mrb[0].mxu0 %v987
      %v1833 = vpop.f32.mrb[0].mxu0
      %v1834 = vadd.f32 %v1481, %v1833
      %v1835 = vpop.f32.mrb[0].mxu0
      %v1836 = vadd.f32 %v1483, %v1835
      %v1837 = vpop.f32.mrb[0].mxu0
      %v1838 = vadd.f32 %v1485, %v1837
      %v1839 = vpop.f32.mrb[0].mxu0
      %v1840 = vadd.f32 %v1487, %v1839
      %1841 = vmatprep.mubr.bf16.mxu0 0
      %1842 = vmatmul.mubr.bf16.gmra.mrb[0].mxu0 %v990
      %v1843 = vpop.f32.mrb[0].mxu0
      %v1844 = vadd.f32 %v1491, %v1843
      %v1845 = vpop.f32.mrb[0].mxu0
      %v1846 = vadd.f32 %v1493, %v1845
      %v1847 = vpop.f32.mrb[0].mxu0
      %v1848 = vadd.f32 %v1495, %v1847
      %v1849 = vpop.f32.mrb[0].mxu0
      %v1850 = vadd.f32 %v1497, %v1849
      %1851 = vmatprep.mubr.bf16.mxu0 0
      %1852 = vmatmul.mubr.bf16.gmra.mrb[0].mxu0 %v993
      %v1853 = vpop.f32.mrb[0].mxu0
      %v1854 = vadd.f32 %v1501, %v1853
      %v1855 = vpop.f32.mrb[0].mxu0
      %v1856 = vadd.f32 %v1503, %v1855
      %v1857 = vpop.f32.mrb[0].mxu0
      %v1858 = vadd.f32 %v1505, %v1857
      %v1859 = vpop.f32.mrb[0].mxu0
      %v1860 = vadd.f32 %v1507, %v1859
      %1861 = vmatprep.mubr.bf16.mxu0 0
      %1862 = vmatmul.mubr.bf16.gmra.mrb[0].mxu0 %v996
      %v1863 = vpop.f32.mrb[0].mxu0
      %v1864 = vadd.f32 %v1511, %v1863
      %v1865 = vpop.f32.mrb[0].mxu0
      %v1866 = vadd.f32 %v1513, %v1865
      %v1867 = vpop.f32.mrb[0].mxu0
      %v1868 = vadd.f32 %v1515, %v1867
      %v1869 = vpop.f32.mrb[0].mxu0
      %v1870 = vadd.f32 %v1517, %v1869
      %1871 = vmatprep.mubr.bf16.mxu0 0
      %1872 = vmatmul.mubr.bf16.gmra.mrb[0].mxu0 %v999
      %v1873 = vpop.f32.mrb[0].mxu0
      %v1874 = vadd.f32 %v1521, %v1873
      %v1875 = vpop.f32.mrb[0].mxu0
      %v1876 = vadd.f32 %v1523, %v1875
      %v1877 = vpop.f32.mrb[0].mxu0
      %v1878 = vadd.f32 %v1525, %v1877
      %v1879 = vpop.f32.mrb[0].mxu0
      %v1880 = vadd.f32 %v1527, %v1879
      %1881 = vmatprep.mubr.bf16.mxu0 0
      %1882 = vmatmul.mubr.bf16.gmra.mrb[0].mxu0 %v1002
      %v1883 = vpop.f32.mrb[0].mxu0
      %v1884 = vadd.f32 %v1531, %v1883
      %v1885 = vpop.f32.mrb[0].mxu0
      %v1886 = vadd.f32 %v1533, %v1885
      %v1887 = vpop.f32.mrb[0].mxu0
      %v1888 = vadd.f32 %v1535, %v1887
      %v1889 = vpop.f32.mrb[0].mxu0
      %v1890 = vadd.f32 %v1537, %v1889
      %1891 = vmatprep.mubr.bf16.mxu0 0
      %1892 = vmatmul.mubr.bf16.gmra.mrb[0].mxu0 %v1005
      %v1893 = vpop.f32.mrb[0].mxu0
      %v1894 = vadd.f32 %v1541, %v1893
      %v1895 = vpop.f32.mrb[0].mxu0
      %v1896 = vadd.f32 %v1543, %v1895
      %v1897 = vpop.f32.mrb[0].mxu0
      %v1898 = vadd.f32 %v1545, %v1897
      %v1899 = vpop.f32.mrb[0].mxu0
      %v1900 = vadd.f32 %v1547, %v1899
      %1901 = vmatprep.mubr.bf16.mxu0 0
      %1902 = vmatmul.mubr.bf16.gmra.mrb[0].mxu0 %v1008
      %v1903 = vpop.f32.mrb[0].mxu0
      %v1904 = vadd.f32 %v1551, %v1903
      %v1905 = vpop.f32.mrb[0].mxu0
      %v1906 = vadd.f32 %v1553, %v1905
      %v1907 = vpop.f32.mrb[0].mxu0
      %v1908 = vadd.f32 %v1555, %v1907
      %v1909 = vpop.f32.mrb[0].mxu0
      %v1910 = vadd.f32 %v1557, %v1909
      %1911 = vmatprep.mubr.bf16.mxu0 0
      %1912 = vmatmul.mubr.bf16.gmra.mrb[0].mxu0 %v1011
      %v1913 = vpop.f32.mrb[0].mxu0
      %v1914 = vadd.f32 %v1561, %v1913
      %v1915 = vpop.f32.mrb[0].mxu0
      %v1916 = vadd.f32 %v1563, %v1915
      %v1917 = vpop.f32.mrb[0].mxu0
      %v1918 = vadd.f32 %v1565, %v1917
      %v1919 = vpop.f32.mrb[0].mxu0
      %v1920 = vadd.f32 %v1567, %v1919
      %1921 = vmatprep.mubr.bf16.mxu0 0
      %1922 = vmatmul.mubr.bf16.gmra.mrb[0].mxu0 %v1014
      %v1923 = vpop.f32.mrb[0].mxu0
      %v1924 = vadd.f32 %v1571, %v1923
      %v1925 = vpop.f32.mrb[0].mxu0
      %v1926 = vadd.f32 %v1573, %v1925
      %v1927 = vpop.f32.mrb[0].mxu0
      %v1928 = vadd.f32 %v1575, %v1927
      %v1929 = vpop.f32.mrb[0].mxu0
      %v1930 = vadd.f32 %v1577, %v1929
      %1931 = vmatprep.mubr.bf16.mxu0 0
      %1932 = vmatmul.mubr.bf16.gmra.mrb[0].mxu0 %v1017
      %v1933 = vpop.f32.mrb[0].mxu0
      %v1934 = vadd.f32 %v1581, %v1933
      %v1935 = vpop.f32.mrb[0].mxu0
      %v1936 = vadd.f32 %v1583, %v1935
      %v1937 = vpop.f32.mrb[0].mxu0
      %v1938 = vadd.f32 %v1585, %v1937
      %v1939 = vpop.f32.mrb[0].mxu0
      %v1940 = vadd.f32 %v1587, %v1939
      %1941 = vmatprep.mubr.bf16.mxu0 0
      %1942 = vmatmul.mubr.bf16.gmra.mrb[0].mxu0 %v1020
      %v1943 = vpop.f32.mrb[0].mxu0
      %v1944 = vadd.f32 %v1591, %v1943
      %v1945 = vpop.f32.mrb[0].mxu0
      %v1946 = vadd.f32 %v1593, %v1945
      %v1947 = vpop.f32.mrb[0].mxu0
      %v1948 = vadd.f32 %v1595, %v1947
      %v1949 = vpop.f32.mrb[0].mxu0
      %v1950 = vadd.f32 %v1597, %v1949
      %1951 = vmatprep.mubr.bf16.mxu0 0
      %1952 = vmatmul.mubr.bf16.gmra.mrb[0].mxu0 %v1023
      %v1953 = vpop.f32.mrb[0].mxu0
      %v1954 = vadd.f32 %v1601, %v1953
      %v1955 = vpop.f32.mrb[0].mxu0
      %v1956 = vadd.f32 %v1603, %v1955
      %v1957 = vpop.f32.mrb[0].mxu0
      %v1958 = vadd.f32 %v1605, %v1957
      %v1959 = vpop.f32.mrb[0].mxu0
      %v1960 = vadd.f32 %v1607, %v1959
      %1961 = vmatprep.mubr.bf16.mxu0 0
      %1962 = vmatmul.mubr.bf16.gmra.mrb[0].mxu0 %v1026
      %v1963 = vpop.f32.mrb[0].mxu0
      %v1964 = vadd.f32 %v1611, %v1963
      %v1965 = vpop.f32.mrb[0].mxu0
      %v1966 = vadd.f32 %v1613, %v1965
      %v1967 = vpop.f32.mrb[0].mxu0
      %v1968 = vadd.f32 %v1615, %v1967
      %v1969 = vpop.f32.mrb[0].mxu0
      %v1970 = vadd.f32 %v1617, %v1969
      %1971 = vmatprep.mubr.bf16.mxu0 0
      %1972 = vmatmul.mubr.bf16.gmra.mrb[0].mxu0 %v1029
      %v1973 = vpop.f32.mrb[0].mxu0
      %v1974 = vadd.f32 %v1621, %v1973
      %v1975 = vpop.f32.mrb[0].mxu0
      %v1976 = vadd.f32 %v1623, %v1975
      %v1977 = vpop.f32.mrb[0].mxu0
      %v1978 = vadd.f32 %v1625, %v1977
      %v1979 = vpop.f32.mrb[0].mxu0
      %v1980 = vadd.f32 %v1627, %v1979
      %1981 = vmatprep.mubr.bf16.mxu0 0
      %1982 = vmatmul.mubr.bf16.gmra.mrb[0].mxu0 %v1032
      %v1983 = vpop.f32.mrb[0].mxu0
      %v1984 = vadd.f32 %v1631, %v1983
      %v1985 = vpop.f32.mrb[0].mxu0
      %v1986 = vadd.f32 %v1633, %v1985
      %v1987 = vpop.f32.mrb[0].mxu0
      %v1988 = vadd.f32 %v1635, %v1987
      %v1989 = vpop.f32.mrb[0].mxu0
      %v1990 = vadd.f32 %v1637, %v1989
      %1991 = vmatprep.mubr.bf16.mxu0 0
      %1992 = vmatmul.mubr.bf16.gmra.mrb[0].mxu0 %v1035
      %v1993 = vpop.f32.mrb[0].mxu0
      %v1994 = vadd.f32 %v1641, %v1993
      %v1995 = vpop.f32.mrb[0].mxu0
      %v1996 = vadd.f32 %v1643, %v1995
      %v1997 = vpop.f32.mrb[0].mxu0
      %v1998 = vadd.f32 %v1645, %v1997
      %v1999 = vpop.f32.mrb[0].mxu0
      %v2000 = vadd.f32 %v1647, %v1999
      %2001 = vmatprep.mubr.bf16.mxu0 0
      %2002 = vmatmul.mubr.bf16.gmra.mrb[0].mxu0 %v1038
      %v2003 = vpop.f32.mrb[0].mxu0
      %v2004 = vadd.f32 %v1651, %v2003
      %v2005 = vpop.f32.mrb[0].mxu0
      %v2006 = vadd.f32 %v1653, %v2005
      %v2007 = vpop.f32.mrb[0].mxu0
      %v2008 = vadd.f32 %v1655, %v2007
      %v2009 = vpop.f32.mrb[0].mxu0
      %v2010 = vadd.f32 %v1657, %v2009
      %2011 = vmatprep.mubr.bf16.mxu0 0
      %2012 = vmatmul.mubr.bf16.gmra.mrb[0].mxu0 %v1041
      %v2013 = vpop.f32.mrb[0].mxu0
      %v2014 = vadd.f32 %v1661, %v2013
      %v2015 = vpop.f32.mrb[0].mxu0
      %v2016 = vadd.f32 %v1663, %v2015
      %v2017 = vpop.f32.mrb[0].mxu0
      %v2018 = vadd.f32 %v1665, %v2017
      %v2019 = vpop.f32.mrb[0].mxu0
      %v2020 = vadd.f32 %v1667, %v2019
      %2021 = vmatprep.mubr.bf16.mxu0 0
      %2022 = vmatmul.mubr.bf16.gmra.mrb[0].mxu0 %v1044
      %v2023 = vpop.f32.mrb[0].mxu0
      %v2024 = vadd.f32 %v1671, %v2023
      %v2025 = vpop.f32.mrb[0].mxu0
      %v2026 = vadd.f32 %v1673, %v2025
      %v2027 = vpop.f32.mrb[0].mxu0
      %v2028 = vadd.f32 %v1675, %v2027
      %v2029 = vpop.f32.mrb[0].mxu0
      %v2030 = vadd.f32 %v1677, %v2029
      %2031 = vmatprep.mubr.bf16.mxu0 0
      %2032 = vmatmul.mubr.bf16.gmra.mrb[0].mxu0 %v1047
      %v2033 = vpop.f32.mrb[0].mxu0
      %v2034 = vadd.f32 %v1681, %v2033
      %v2035 = vpop.f32.mrb[0].mxu0
      %v2036 = vadd.f32 %v1683, %v2035
      %v2037 = vpop.f32.mrb[0].mxu0
      %v2038 = vadd.f32 %v1685, %v2037
      %v2039 = vpop.f32.mrb[0].mxu0
      %v2040 = vadd.f32 %v1687, %v2039
      %2041 = vdwg.mxu0
      %v2042 = vpack.c.bf16 %v1728, %v1724
      %v2043 = vpack.c.bf16 %v1738, %v1734
      %v2044 = vpack.c.bf16 %v1748, %v1744
      %v2045 = vpack.c.bf16 %v1758, %v1754
      %v2046 = vpack.c.bf16 %v1768, %v1764
      %v2047 = vpack.c.bf16 %v1778, %v1774
      %v2048 = vpack.c.bf16 %v1788, %v1784
      %v2049 = vpack.c.bf16 %v1798, %v1794
      %v2050 = vpack.c.bf16 %v1808, %v1804
      %v2051 = vpack.c.bf16 %v1818, %v1814
      %v2052 = vpack.c.bf16 %v1828, %v1824
      %v2053 = vpack.c.bf16 %v1838, %v1834
      %v2054 = vpack.c.bf16 %v1848, %v1844
      %v2055 = vpack.c.bf16 %v1858, %v1854
      %v2056 = vpack.c.bf16 %v1868, %v1864
      %v2057 = vpack.c.bf16 %v1878, %v1874
      %v2058 = vpack.c.bf16 %v1888, %v1884
      %v2059 = vpack.c.bf16 %v1898, %v1894
      %v2060 = vpack.c.bf16 %v1908, %v1904
      %v2061 = vpack.c.bf16 %v1918, %v1914
      %v2062 = vpack.c.bf16 %v1928, %v1924
      %v2063 = vpack.c.bf16 %v1938, %v1934
      %v2064 = vpack.c.bf16 %v1948, %v1944
      %v2065 = vpack.c.bf16 %v1958, %v1954
      %v2066 = vpack.c.bf16 %v1968, %v1964
      %v2067 = vpack.c.bf16 %v1978, %v1974
      %v2068 = vpack.c.bf16 %v1988, %v1984
      %v2069 = vpack.c.bf16 %v1998, %v1994
      %v2070 = vpack.c.bf16 %v2008, %v2004
      %v2071 = vpack.c.bf16 %v2018, %v2014
      %v2072 = vpack.c.bf16 %v2028, %v2024
      %v2073 = vpack.c.bf16 %v2038, %v2034
      %v2106 = vunpack.c.l.b16 %v2042
      %v2107 = vunpack.c.h.b16 %v2042
      %v2108 = vunpack.c.l.b16 %v2043
      %v2109 = vunpack.c.h.b16 %v2043
      %v2110 = vunpack.c.l.b16 %v2044
      %v2111 = vunpack.c.h.b16 %v2044
      %v2112 = vunpack.c.l.b16 %v2045
      %v2113 = vunpack.c.h.b16 %v2045
      %v2114 = vunpack.c.l.b16 %v2046
      %v2115 = vunpack.c.h.b16 %v2046
      %v2116 = vunpack.c.l.b16 %v2047
      %v2117 = vunpack.c.h.b16 %v2047
      %v2118 = vunpack.c.l.b16 %v2048
      %v2119 = vunpack.c.h.b16 %v2048
      %v2120 = vunpack.c.l.b16 %v2049
      %v2121 = vunpack.c.h.b16 %v2049
      %v2122 = vunpack.c.l.b16 %v2050
      %v2123 = vunpack.c.h.b16 %v2050
      %v2124 = vunpack.c.l.b16 %v2051
      %v2125 = vunpack.c.h.b16 %v2051
      %v2126 = vunpack.c.l.b16 %v2052
      %v2127 = vunpack.c.h.b16 %v2052
      %v2128 = vunpack.c.l.b16 %v2053
      %v2129 = vunpack.c.h.b16 %v2053
      %v2130 = vunpack.c.l.b16 %v2054
      %v2131 = vunpack.c.h.b16 %v2054
      %v2132 = vunpack.c.l.b16 %v2055
      %v2133 = vunpack.c.h.b16 %v2055
      %v2134 = vunpack.c.l.b16 %v2056
      %v2135 = vunpack.c.h.b16 %v2056
      %v2136 = vunpack.c.l.b16 %v2057
      %v2137 = vunpack.c.h.b16 %v2057
      %v2138 = vunpack.c.l.b16 %v2058
      %v2139 = vunpack.c.h.b16 %v2058
      %v2140 = vunpack.c.l.b16 %v2059
      %v2141 = vunpack.c.h.b16 %v2059
      %v2142 = vunpack.c.l.b16 %v2060
      %v2143 = vunpack.c.h.b16 %v2060
      %v2144 = vunpack.c.l.b16 %v2061
      %v2145 = vunpack.c.h.b16 %v2061
      %v2146 = vunpack.c.l.b16 %v2062
      %v2147 = vunpack.c.h.b16 %v2062
      %v2148 = vunpack.c.l.b16 %v2063
      %v2149 = vunpack.c.h.b16 %v2063
      %v2150 = vunpack.c.l.b16 %v2064
      %v2151 = vunpack.c.h.b16 %v2064
      %v2152 = vunpack.c.l.b16 %v2065
      %v2153 = vunpack.c.h.b16 %v2065
      %v2154 = vunpack.c.l.b16 %v2066
      %v2155 = vunpack.c.h.b16 %v2066
      %v2156 = vunpack.c.l.b16 %v2067
      %v2157 = vunpack.c.h.b16 %v2067
      %v2158 = vunpack.c.l.b16 %v2068
      %v2159 = vunpack.c.h.b16 %v2068
      %v2160 = vunpack.c.l.b16 %v2069
      %v2161 = vunpack.c.h.b16 %v2069
      %v2162 = vunpack.c.l.b16 %v2070
      %v2163 = vunpack.c.h.b16 %v2070
      %v2164 = vunpack.c.l.b16 %v2071
      %v2165 = vunpack.c.h.b16 %v2071
      %v2166 = vunpack.c.l.b16 %v2072
      %v2167 = vunpack.c.h.b16 %v2072
      %v2168 = vunpack.c.l.b16 %v2073
      %v2169 = vunpack.c.h.b16 %v2073
      %v2170 = vpack.c.b16 %v2106, %v2106
      %v2171 = vpack.c.b16 %v2107, %v2107
      %v2172 = vpack.c.b16 %v2108, %v2108
      %v2173 = vpack.c.b16 %v2109, %v2109
      %v2174 = vpack.c.b16 %v2110, %v2110
      %v2175 = vpack.c.b16 %v2111, %v2111
      %v2176 = vpack.c.b16 %v2112, %v2112
      %v2177 = vpack.c.b16 %v2113, %v2113
      %v2178 = vpack.c.b16 %v2114, %v2114
      %v2179 = vpack.c.b16 %v2115, %v2115
      %v2180 = vpack.c.b16 %v2116, %v2116
      %v2181 = vpack.c.b16 %v2117, %v2117
      %v2182 = vpack.c.b16 %v2118, %v2118
      %v2183 = vpack.c.b16 %v2119, %v2119
      %v2184 = vpack.c.b16 %v2120, %v2120
      %v2185 = vpack.c.b16 %v2121, %v2121
      %v2186 = vpack.c.b16 %v2122, %v2122
      %v2187 = vpack.c.b16 %v2123, %v2123
      %v2188 = vpack.c.b16 %v2124, %v2124
      %v2189 = vpack.c.b16 %v2125, %v2125
      %v2190 = vpack.c.b16 %v2126, %v2126
      %v2191 = vpack.c.b16 %v2127, %v2127
      %v2192 = vpack.c.b16 %v2128, %v2128
      %v2193 = vpack.c.b16 %v2129, %v2129
      %v2194 = vpack.c.b16 %v2130, %v2130
      %v2195 = vpack.c.b16 %v2131, %v2131
      %v2196 = vpack.c.b16 %v2132, %v2132
      %v2197 = vpack.c.b16 %v2133, %v2133
      %v2198 = vpack.c.b16 %v2134, %v2134
      %v2199 = vpack.c.b16 %v2135, %v2135
      %v2200 = vpack.c.b16 %v2136, %v2136
      %v2201 = vpack.c.b16 %v2137, %v2137
      %v2202 = vpack.c.b16 %v2138, %v2138
      %v2203 = vpack.c.b16 %v2139, %v2139
      %v2204 = vpack.c.b16 %v2140, %v2140
      %v2205 = vpack.c.b16 %v2141, %v2141
      %v2206 = vpack.c.b16 %v2142, %v2142
      %v2207 = vpack.c.b16 %v2143, %v2143
      %v2208 = vpack.c.b16 %v2144, %v2144
      %v2209 = vpack.c.b16 %v2145, %v2145
      %v2210 = vpack.c.b16 %v2146, %v2146
      %v2211 = vpack.c.b16 %v2147, %v2147
      %v2212 = vpack.c.b16 %v2148, %v2148
      %v2213 = vpack.c.b16 %v2149, %v2149
      %v2214 = vpack.c.b16 %v2150, %v2150
      %v2215 = vpack.c.b16 %v2151, %v2151
      %v2216 = vpack.c.b16 %v2152, %v2152
      %v2217 = vpack.c.b16 %v2153, %v2153
      %v2218 = vpack.c.b16 %v2154, %v2154
      %v2219 = vpack.c.b16 %v2155, %v2155
      %v2220 = vpack.c.b16 %v2156, %v2156
      %v2221 = vpack.c.b16 %v2157, %v2157
      %v2222 = vpack.c.b16 %v2158, %v2158
      %v2223 = vpack.c.b16 %v2159, %v2159
      %v2224 = vpack.c.b16 %v2160, %v2160
      %v2225 = vpack.c.b16 %v2161, %v2161
      %v2226 = vpack.c.b16 %v2162, %v2162
      %v2227 = vpack.c.b16 %v2163, %v2163
      %v2228 = vpack.c.b16 %v2164, %v2164
      %v2229 = vpack.c.b16 %v2165, %v2165
      %v2230 = vpack.c.b16 %v2166, %v2166
      %v2231 = vpack.c.b16 %v2167, %v2167
      %v2232 = vpack.c.b16 %v2168, %v2168
      %v2233 = vpack.c.b16 %v2169, %v2169
      %2298 = vst [vmem:[%s233] sm:$0xf] %v2170
      %2299 = vst [vmem:[%s233 + $0x4] sm:$0xf] %v2171
      %2300 = vst [vmem:[%s233 + $0x8] sm:$0xf] %v2172
      %2301 = vst [vmem:[%s233 + $0xc] sm:$0xf] %v2173
      %2302 = vst [vmem:[%s233 + $0x10] sm:$0xf] %v2174
      %2303 = vst [vmem:[%s233 + $0x14] sm:$0xf] %v2175
      %2304 = vst [vmem:[%s233 + $0x18] sm:$0xf] %v2176
      %2305 = vst [vmem:[%s233 + $0x1c] sm:$0xf] %v2177
      %2306 = vst [vmem:[%s233 + $0x20] sm:$0xf] %v2178
      %2307 = vst [vmem:[%s233 + $0x24] sm:$0xf] %v2179
      %2308 = vst [vmem:[%s233 + $0x28] sm:$0xf] %v2180
      %2309 = vst [vmem:[%s233 + $0x2c] sm:$0xf] %v2181
      %2310 = vst [vmem:[%s233 + $0x30] sm:$0xf] %v2182
      %2311 = vst [vmem:[%s233 + $0x34] sm:$0xf] %v2183
      %2312 = vst [vmem:[%s233 + $0x38] sm:$0xf] %v2184
      %2313 = vst [vmem:[%s233 + $0x3c] sm:$0xf] %v2185
      %2314 = vst [vmem:[%s233 + $0x40] sm:$0xf] %v2186
      %2315 = vst [vmem:[%s233 + $0x44] sm:$0xf] %v2187
      %2316 = vst [vmem:[%s233 + $0x48] sm:$0xf] %v2188
      %2317 = vst [vmem:[%s233 + $0x4c] sm:$0xf] %v2189
      %2318 = vst [vmem:[%s233 + $0x50] sm:$0xf] %v2190
      %2319 = vst [vmem:[%s233 + $0x54] sm:$0xf] %v2191
      %2320 = vst [vmem:[%s233 + $0x58] sm:$0xf] %v2192
      %2321 = vst [vmem:[%s233 + $0x5c] sm:$0xf] %v2193
      %2322 = vst [vmem:[%s233 + $0x60] sm:$0xf] %v2194
      %2323 = vst [vmem:[%s233 + $0x64] sm:$0xf] %v2195
      %2324 = vst [vmem:[%s233 + $0x68] sm:$0xf] %v2196
      %2325 = vst [vmem:[%s233 + $0x6c] sm:$0xf] %v2197
      %2326 = vst [vmem:[%s233 + $0x70] sm:$0xf] %v2198
      %2327 = vst [vmem:[%s233 + $0x74] sm:$0xf] %v2199
      %2328 = vst [vmem:[%s233 + $0x78] sm:$0xf] %v2200
      %2329 = vst [vmem:[%s233 + $0x7c] sm:$0xf] %v2201
      %2330 = vst [vmem:[%s233 + $0x80] sm:$0xf] %v2202
      %2331 = vst [vmem:[%s233 + $0x84] sm:$0xf] %v2203
      %2332 = vst [vmem:[%s233 + $0x88] sm:$0xf] %v2204
      %2333 = vst [vmem:[%s233 + $0x8c] sm:$0xf] %v2205
      %2334 = vst [vmem:[%s233 + $0x90] sm:$0xf] %v2206
      %2335 = vst [vmem:[%s233 + $0x94] sm:$0xf] %v2207
      %2336 = vst [vmem:[%s233 + $0x98] sm:$0xf] %v2208
      %2337 = vst [vmem:[%s233 + $0x9c] sm:$0xf] %v2209
      %2338 = vst [vmem:[%s233 + $0xa0] sm:$0xf] %v2210
      %2339 = vst [vmem:[%s233 + $0xa4] sm:$0xf] %v2211
      %2340 = vst [vmem:[%s233 + $0xa8] sm:$0xf] %v2212
      %2341 = vst [vmem:[%s233 + $0xac] sm:$0xf] %v2213
      %2342 = vst [vmem:[%s233 + $0xb0] sm:$0xf] %v2214
      %2343 = vst [vmem:[%s233 + $0xb4] sm:$0xf] %v2215
      %2344 = vst [vmem:[%s233 + $0xb8] sm:$0xf] %v2216
      %2345 = vst [vmem:[%s233 + $0xbc] sm:$0xf] %v2217
      %2346 = vst [vmem:[%s233 + $0xc0] sm:$0xf] %v2218
      %2347 = vst [vmem:[%s233 + $0xc4] sm:$0xf] %v2219
      %2348 = vst [vmem:[%s233 + $0xc8] sm:$0xf] %v2220
      %2349 = vst [vmem:[%s233 + $0xcc] sm:$0xf] %v2221
      %2350 = vst [vmem:[%s233 + $0xd0] sm:$0xf] %v2222
      %2351 = vst [vmem:[%s233 + $0xd4] sm:$0xf] %v2223
      %2352 = vst [vmem:[%s233 + $0xd8] sm:$0xf] %v2224
      %2353 = vst [vmem:[%s233 + $0xdc] sm:$0xf] %v2225
      %2354 = vst [vmem:[%s233 + $0xe0] sm:$0xf] %v2226
      %2355 = vst [vmem:[%s233 + $0xe4] sm:$0xf] %v2227
      %2356 = vst [vmem:[%s233 + $0xe8] sm:$0xf] %v2228
      %2357 = vst [vmem:[%s233 + $0xec] sm:$0xf] %v2229
      %2358 = vst [vmem:[%s233 + $0xf0] sm:$0xf] %v2230
      %2359 = vst [vmem:[%s233 + $0xf4] sm:$0xf] %v2231
      %2360 = vst [vmem:[%s233 + $0xf8] sm:$0xf] %v2232
      %2361 = vst [vmem:[%s233 + $0xfc] sm:$0xf] %v2233
      // Predicated region
      $region29: #{resnet_block.4} parent=27 // pred_check
        %p2362 = pneg %p244
      $region30: #{resnet_block.4} parent=27 // pred_check_branch
        %2364 = sbr.rel (%p2362) target = $region32
      $region31: #{resnet_block.4} parent=27 // pred_region
        %2365 = vst [vmem:[%s238] sm:$0x3] 0.0
      $region32: #{resnet_block.4} parent=27 // pred_fallthru
        _
      %v2366 = vadd.f32 %v1724, %v1728
      %v2367 = vadd.f32 %v2366, %v1734
      %v2368 = vadd.f32 %v2367, %v1738
      %v2369 = vadd.f32 %v2368, %v1744
      %v2370 = vadd.f32 %v2369, %v1748
      %v2371 = vadd.f32 %v2370, %v1754
      %v2372 = vadd.f32 %v2371, %v1758
      %v2373 = vadd.f32 %v2372, %v1764
      %v2374 = vadd.f32 %v2373, %v1768
      %v2375 = vadd.f32 %v2374, %v1774
      %v2376 = vadd.f32 %v2375, %v1778
      %v2377 = vadd.f32 %v2376, %v1784
      %v2378 = vadd.f32 %v2377, %v1788
      %v2379 = vadd.f32 %v2378, %v1794
      %v2380 = vadd.f32 %v2379, %v1798
      %v2381 = vadd.f32 %v2380, %v1804
      %v2382 = vadd.f32 %v2381, %v1808
      %v2383 = vadd.f32 %v2382, %v1814
      %v2384 = vadd.f32 %v2383, %v1818
      %v2385 = vadd.f32 %v2384, %v1824
      %v2386 = vadd.f32 %v2385, %v1828
      %v2387 = vadd.f32 %v2386, %v1834
      %v2388 = vadd.f32 %v2387, %v1838
      %v2389 = vadd.f32 %v2388, %v1844
      %v2390 = vadd.f32 %v2389, %v1848
      %v2391 = vadd.f32 %v2390, %v1854
      %v2392 = vadd.f32 %v2391, %v1858
      %v2393 = vadd.f32 %v2392, %v1864
      %v2394 = vadd.f32 %v2393, %v1868
      %v2395 = vadd.f32 %v2394, %v1874
      %v2396 = vadd.f32 %v2395, %v1878
      %v2397 = vadd.f32 %v2396, %v1884
      %v2398 = vadd.f32 %v2397, %v1888
      %v2399 = vadd.f32 %v2398, %v1894
      %v2400 = vadd.f32 %v2399, %v1898
      %v2401 = vadd.f32 %v2400, %v1904
      %v2402 = vadd.f32 %v2401, %v1908
      %v2403 = vadd.f32 %v2402, %v1914
      %v2404 = vadd.f32 %v2403, %v1918
      %v2405 = vadd.f32 %v2404, %v1924
      %v2406 = vadd.f32 %v2405, %v1928
      %v2407 = vadd.f32 %v2406, %v1934
      %v2408 = vadd.f32 %v2407, %v1938
      %v2409 = vadd.f32 %v2408, %v1944
      %v2410 = vadd.f32 %v2409, %v1948
      %v2411 = vadd.f32 %v2410, %v1954
      %v2412 = vadd.f32 %v2411, %v1958
      %v2413 = vadd.f32 %v2412, %v1964
      %v2414 = vadd.f32 %v2413, %v1968
      %v2415 = vadd.f32 %v2414, %v1974
      %v2416 = vadd.f32 %v2415, %v1978
      %v2417 = vadd.f32 %v2416, %v1984
      %v2418 = vadd.f32 %v2417, %v1988
      %v2419 = vadd.f32 %v2418, %v1994
      %v2420 = vadd.f32 %v2419, %v1998
      %v2421 = vadd.f32 %v2420, %v2004
      %v2422 = vadd.f32 %v2421, %v2008
      %v2423 = vadd.f32 %v2422, %v2014
      %v2424 = vadd.f32 %v2423, %v2018
      %v2425 = vadd.f32 %v2424, %v2024
      %v2426 = vadd.f32 %v2425, %v2028
      %v2427 = vadd.f32 %v2426, %v2034
      %v2428 = vadd.f32 %v2427, %v2038
      %v2429 = vrot.slane %v2428, 4
      %v2430 = vadd.f32 %v2428, %v2429
      %v2431 = vrot.slane %v2430, 2
      %v2432 = vadd.f32 %v2430, %v2431
      %v2433 = vrot.slane %v2432, 1
      %v2434 = vadd.f32 %v2432, %v2433
      %v2435 = vmul.f32 %v1724, %v1724
      %v2436 = vmul.f32 %v1728, %v1728
      %v2437 = vmul.f32 %v1734, %v1734
      %v2438 = vmul.f32 %v1738, %v1738
      %v2439 = vmul.f32 %v1744, %v1744
      %v2440 = vmul.f32 %v1748, %v1748
      %v2441 = vmul.f32 %v1754, %v1754
      %v2442 = vmul.f32 %v1758, %v1758
      %v2443 = vmul.f32 %v1764, %v1764
      %v2444 = vmul.f32 %v1768, %v1768
      %v2445 = vmul.f32 %v1774, %v1774
      %v2446 = vmul.f32 %v1778, %v1778
      %v2447 = vmul.f32 %v1784, %v1784
      %v2448 = vmul.f32 %v1788, %v1788
      %v2449 = vmul.f32 %v1794, %v1794
      %v2450 = vmul.f32 %v1798, %v1798
      %v2451 = vmul.f32 %v1804, %v1804
      %v2452 = vmul.f32 %v1808, %v1808
      %v2453 = vmul.f32 %v1814, %v1814
      %v2454 = vmul.f32 %v1818, %v1818
      %v2455 = vmul.f32 %v1824, %v1824
      %v2456 = vmul.f32 %v1828, %v1828
      %v2457 = vmul.f32 %v1834, %v1834
      %v2458 = vmul.f32 %v1838, %v1838
      %v2459 = vmul.f32 %v1844, %v1844
      %v2460 = vmul.f32 %v1848, %v1848
      %v2461 = vmul.f32 %v1854, %v1854
      %v2462 = vmul.f32 %v1858, %v1858
      %v2463 = vmul.f32 %v1864, %v1864
      %v2464 = vmul.f32 %v1868, %v1868
      %v2465 = vmul.f32 %v1874, %v1874
      %v2466 = vmul.f32 %v1878, %v1878
      %v2467 = vmul.f32 %v1884, %v1884
      %v2468 = vmul.f32 %v1888, %v1888
      %v2469 = vmul.f32 %v1894, %v1894
      %v2470 = vmul.f32 %v1898, %v1898
      %v2471 = vmul.f32 %v1904, %v1904
      %v2472 = vmul.f32 %v1908, %v1908
      %v2473 = vmul.f32 %v1914, %v1914
      %v2474 = vmul.f32 %v1918, %v1918
      %v2475 = vmul.f32 %v1924, %v1924
      %v2476 = vmul.f32 %v1928, %v1928
      %v2477 = vmul.f32 %v1934, %v1934
      %v2478 = vmul.f32 %v1938, %v1938
      %v2479 = vmul.f32 %v1944, %v1944
      %v2480 = vmul.f32 %v1948, %v1948
      %v2481 = vmul.f32 %v1954, %v1954
      %v2482 = vmul.f32 %v1958, %v1958
      %v2483 = vmul.f32 %v1964, %v1964
      %v2484 = vmul.f32 %v1968, %v1968
      %v2485 = vmul.f32 %v1974, %v1974
      %v2486 = vmul.f32 %v1978, %v1978
      %v2487 = vmul.f32 %v1984, %v1984
      %v2488 = vmul.f32 %v1988, %v1988
      %v2489 = vmul.f32 %v1994, %v1994
      %v2490 = vmul.f32 %v1998, %v1998
      %v2491 = vmul.f32 %v2004, %v2004
      %v2492 = vmul.f32 %v2008, %v2008
      %v2493 = vmul.f32 %v2014, %v2014
      %v2494 = vmul.f32 %v2018, %v2018
      %v2495 = vmul.f32 %v2024, %v2024
      %v2496 = vmul.f32 %v2028, %v2028
      %v2497 = vmul.f32 %v2034, %v2034
      %v2498 = vmul.f32 %v2038, %v2038
      %v2499 = vadd.f32 %v2435, %v2436
      %v2500 = vadd.f32 %v2499, %v2437
      %v2501 = vadd.f32 %v2500, %v2438
      %v2502 = vadd.f32 %v2501, %v2439
      %v2503 = vadd.f32 %v2502, %v2440
      %v2504 = vadd.f32 %v2503, %v2441
      %v2505 = vadd.f32 %v2504, %v2442
      %v2506 = vadd.f32 %v2505, %v2443
      %v2507 = vadd.f32 %v2506, %v2444
      %v2508 = vadd.f32 %v2507, %v2445
      %v2509 = vadd.f32 %v2508, %v2446
      %v2510 = vadd.f32 %v2509, %v2447
      %v2511 = vadd.f32 %v2510, %v2448
      %v2512 = vadd.f32 %v2511, %v2449
      %v2513 = vadd.f32 %v2512, %v2450
      %v2514 = vadd.f32 %v2513, %v2451
      %v2515 = vadd.f32 %v2514, %v2452
      %v2516 = vadd.f32 %v2515, %v2453
      %v2517 = vadd.f32 %v2516, %v2454
      %v2518 = vadd.f32 %v2517, %v2455
      %v2519 = vadd.f32 %v2518, %v2456
      %v2520 = vadd.f32 %v2519, %v2457
      %v2521 = vadd.f32 %v2520, %v2458
      %v2522 = vadd.f32 %v2521, %v2459
      %v2523 = vadd.f32 %v2522, %v2460
      %v2524 = vadd.f32 %v2523, %v2461
      %v2525 = vadd.f32 %v2524, %v2462
      %v2526 = vadd.f32 %v2525, %v2463
      %v2527 = vadd.f32 %v2526, %v2464
      %v2528 = vadd.f32 %v2527, %v2465
      %v2529 = vadd.f32 %v2528, %v2466
      %v2530 = vadd.f32 %v2529, %v2467
      %v2531 = vadd.f32 %v2530, %v2468
      %v2532 = vadd.f32 %v2531, %v2469
      %v2533 = vadd.f32 %v2532, %v2470
      %v2534 = vadd.f32 %v2533, %v2471
      %v2535 = vadd.f32 %v2534, %v2472
      %v2536 = vadd.f32 %v2535, %v2473
      %v2537 = vadd.f32 %v2536, %v2474
      %v2538 = vadd.f32 %v2537, %v2475
      %v2539 = vadd.f32 %v2538, %v2476
      %v2540 = vadd.f32 %v2539, %v2477
      %v2541 = vadd.f32 %v2540, %v2478
      %v2542 = vadd.f32 %v2541, %v2479
      %v2543 = vadd.f32 %v2542, %v2480
      %v2544 = vadd.f32 %v2543, %v2481
      %v2545 = vadd.f32 %v2544, %v2482
      %v2546 = vadd.f32 %v2545, %v2483
      %v2547 = vadd.f32 %v2546, %v2484
      %v2548 = vadd.f32 %v2547, %v2485
      %v2549 = vadd.f32 %v2548, %v2486
      %v2550 = vadd.f32 %v2549, %v2487
      %v2551 = vadd.f32 %v2550, %v2488
      %v2552 = vadd.f32 %v2551, %v2489
      %v2553 = vadd.f32 %v2552, %v2490
      %v2554 = vadd.f32 %v2553, %v2491
      %v2555 = vadd.f32 %v2554, %v2492
      %v2556 = vadd.f32 %v2555, %v2493
      %v2557 = vadd.f32 %v2556, %v2494
      %v2558 = vadd.f32 %v2557, %v2495
      %v2559 = vadd.f32 %v2558, %v2496
      %v2560 = vadd.f32 %v2559, %v2497
      %v2561 = vadd.f32 %v2560, %v2498
      %v2562 = vrot.slane %v2561, 4
      %v2563 = vadd.f32 %v2561, %v2562
      %v2564 = vrot.slane %v2563, 2
      %v2565 = vadd.f32 %v2563, %v2564
      %v2566 = vrot.slane %v2565, 1
      %v2567 = vadd.f32 %v2565, %v2566
      %vm2568 = vcmask 1040384
      %v2569 = vsel %vm2568, %v2434, %v2567
      %v2570 = vld [vmem:[%s238] sm:$0x3]
      %v2571 = vadd.f32 %v2570, %v2569
      %2572 = vst [vmem:[%s238] sm:$0x3] %v2571
      // Predicated region
      $region33: #{resnet_block.4} parent=27 // pred_check
        %p2573 = pneg %p244
      $region34: #{resnet_block.4} parent=27 // pred_check_branch
        %2575 = sbr.rel (%p2573) target = $region36
      $region35: #{resnet_block.4} parent=27 // pred_region
        %2576 = vst [vmem:[%s242] sm:$0x3] 0.0
      $region36: #{resnet_block.4} parent=27 // pred_fallthru
        _
      %v2577 = vadd.f32 %v1726, %v1730
      %v2578 = vadd.f32 %v2577, %v1736
      %v2579 = vadd.f32 %v2578, %v1740
      %v2580 = vadd.f32 %v2579, %v1746
      %v2581 = vadd.f32 %v2580, %v1750
      %v2582 = vadd.f32 %v2581, %v1756
      %v2583 = vadd.f32 %v2582, %v1760
      %v2584 = vadd.f32 %v2583, %v1766
      %v2585 = vadd.f32 %v2584, %v1770
      %v2586 = vadd.f32 %v2585, %v1776
      %v2587 = vadd.f32 %v2586, %v1780
      %v2588 = vadd.f32 %v2587, %v1786
      %v2589 = vadd.f32 %v2588, %v1790
      %v2590 = vadd.f32 %v2589, %v1796
      %v2591 = vadd.f32 %v2590, %v1800
      %v2592 = vadd.f32 %v2591, %v1806
      %v2593 = vadd.f32 %v2592, %v1810
      %v2594 = vadd.f32 %v2593, %v1816
      %v2595 = vadd.f32 %v2594, %v1820
      %v2596 = vadd.f32 %v2595, %v1826
      %v2597 = vadd.f32 %v2596, %v1830
      %v2598 = vadd.f32 %v2597, %v1836
      %v2599 = vadd.f32 %v2598, %v1840
      %v2600 = vadd.f32 %v2599, %v1846
      %v2601 = vadd.f32 %v2600, %v1850
      %v2602 = vadd.f32 %v2601, %v1856
      %v2603 = vadd.f32 %v2602, %v1860
      %v2604 = vadd.f32 %v2603, %v1866
      %v2605 = vadd.f32 %v2604, %v1870
      %v2606 = vadd.f32 %v2605, %v1876
      %v2607 = vadd.f32 %v2606, %v1880
      %v2608 = vadd.f32 %v2607, %v1886
      %v2609 = vadd.f32 %v2608, %v1890
      %v2610 = vadd.f32 %v2609, %v1896
      %v2611 = vadd.f32 %v2610, %v1900
      %v2612 = vadd.f32 %v2611, %v1906
      %v2613 = vadd.f32 %v2612, %v1910
      %v2614 = vadd.f32 %v2613, %v1916
      %v2615 = vadd.f32 %v2614, %v1920
      %v2616 = vadd.f32 %v2615, %v1926
      %v2617 = vadd.f32 %v2616, %v1930
      %v2618 = vadd.f32 %v2617, %v1936
      %v2619 = vadd.f32 %v2618, %v1940
      %v2620 = vadd.f32 %v2619, %v1946
      %v2621 = vadd.f32 %v2620, %v1950
      %v2622 = vadd.f32 %v2621, %v1956
      %v2623 = vadd.f32 %v2622, %v1960
      %v2624 = vadd.f32 %v2623, %v1966
      %v2625 = vadd.f32 %v2624, %v1970
      %v2626 = vadd.f32 %v2625, %v1976
      %v2627 = vadd.f32 %v2626, %v1980
      %v2628 = vadd.f32 %v2627, %v1986
      %v2629 = vadd.f32 %v2628, %v1990
      %v2630 = vadd.f32 %v2629, %v1996
      %v2631 = vadd.f32 %v2630, %v2000
      %v2632 = vadd.f32 %v2631, %v2006
      %v2633 = vadd.f32 %v2632, %v2010
      %v2634 = vadd.f32 %v2633, %v2016
      %v2635 = vadd.f32 %v2634, %v2020
      %v2636 = vadd.f32 %v2635, %v2026
      %v2637 = vadd.f32 %v2636, %v2030
      %v2638 = vadd.f32 %v2637, %v2036
      %v2639 = vadd.f32 %v2638, %v2040
      %v2640 = vrot.slane %v2639, 4
      %v2641 = vadd.f32 %v2639, %v2640
      %v2642 = vrot.slane %v2641, 2
      %v2643 = vadd.f32 %v2641, %v2642
      %v2644 = vrot.slane %v2643, 1
      %v2645 = vadd.f32 %v2643, %v2644
      %v2646 = vmul.f32 %v1726, %v1726
      %v2647 = vmul.f32 %v1730, %v1730
      %v2648 = vmul.f32 %v1736, %v1736
      %v2649 = vmul.f32 %v1740, %v1740
      %v2650 = vmul.f32 %v1746, %v1746
      %v2651 = vmul.f32 %v1750, %v1750
      %v2652 = vmul.f32 %v1756, %v1756
      %v2653 = vmul.f32 %v1760, %v1760
      %v2654 = vmul.f32 %v1766, %v1766
      %v2655 = vmul.f32 %v1770, %v1770
      %v2656 = vmul.f32 %v1776, %v1776
      %v2657 = vmul.f32 %v1780, %v1780
      %v2658 = vmul.f32 %v1786, %v1786
      %v2659 = vmul.f32 %v1790, %v1790
      %v2660 = vmul.f32 %v1796, %v1796
      %v2661 = vmul.f32 %v1800, %v1800
      %v2662 = vmul.f32 %v1806, %v1806
      %v2663 = vmul.f32 %v1810, %v1810
      %v2664 = vmul.f32 %v1816, %v1816
      %v2665 = vmul.f32 %v1820, %v1820
      %v2666 = vmul.f32 %v1826, %v1826
      %v2667 = vmul.f32 %v1830, %v1830
      %v2668 = vmul.f32 %v1836, %v1836
      %v2669 = vmul.f32 %v1840, %v1840
      %v2670 = vmul.f32 %v1846, %v1846
      %v2671 = vmul.f32 %v1850, %v1850
      %v2672 = vmul.f32 %v1856, %v1856
      %v2673 = vmul.f32 %v1860, %v1860
      %v2674 = vmul.f32 %v1866, %v1866
      %v2675 = vmul.f32 %v1870, %v1870
      %v2676 = vmul.f32 %v1876, %v1876
      %v2677 = vmul.f32 %v1880, %v1880
      %v2678 = vmul.f32 %v1886, %v1886
      %v2679 = vmul.f32 %v1890, %v1890
      %v2680 = vmul.f32 %v1896, %v1896
      %v2681 = vmul.f32 %v1900, %v1900
      %v2682 = vmul.f32 %v1906, %v1906
      %v2683 = vmul.f32 %v1910, %v1910
      %v2684 = vmul.f32 %v1916, %v1916
      %v2685 = vmul.f32 %v1920, %v1920
      %v2686 = vmul.f32 %v1926, %v1926
      %v2687 = vmul.f32 %v1930, %v1930
      %v2688 = vmul.f32 %v1936, %v1936
      %v2689 = vmul.f32 %v1940, %v1940
      %v2690 = vmul.f32 %v1946, %v1946
      %v2691 = vmul.f32 %v1950, %v1950
      %v2692 = vmul.f32 %v1956, %v1956
      %v2693 = vmul.f32 %v1960, %v1960
      %v2694 = vmul.f32 %v1966, %v1966
      %v2695 = vmul.f32 %v1970, %v1970
      %v2696 = vmul.f32 %v1976, %v1976
      %v2697 = vmul.f32 %v1980, %v1980
      %v2698 = vmul.f32 %v1986, %v1986
      %v2699 = vmul.f32 %v1990, %v1990
      %v2700 = vmul.f32 %v1996, %v1996
      %v2701 = vmul.f32 %v2000, %v2000
      %v2702 = vmul.f32 %v2006, %v2006
      %v2703 = vmul.f32 %v2010, %v2010
      %v2704 = vmul.f32 %v2016, %v2016
      %v2705 = vmul.f32 %v2020, %v2020
      %v2706 = vmul.f32 %v2026, %v2026
      %v2707 = vmul.f32 %v2030, %v2030
      %v2708 = vmul.f32 %v2036, %v2036
      %v2709 = vmul.f32 %v2040, %v2040
      %v2710 = vadd.f32 %v2646, %v2647
      %v2711 = vadd.f32 %v2710, %v2648
      %v2712 = vadd.f32 %v2711, %v2649
      %v2713 = vadd.f32 %v2712, %v2650
      %v2714 = vadd.f32 %v2713, %v2651
      %v2715 = vadd.f32 %v2714, %v2652
      %v2716 = vadd.f32 %v2715, %v2653
      %v2717 = vadd.f32 %v2716, %v2654
      %v2718 = vadd.f32 %v2717, %v2655
      %v2719 = vadd.f32 %v2718, %v2656
      %v2720 = vadd.f32 %v2719, %v2657
      %v2721 = vadd.f32 %v2720, %v2658
      %v2722 = vadd.f32 %v2721, %v2659
      %v2723 = vadd.f32 %v2722, %v2660
      %v2724 = vadd.f32 %v2723, %v2661
      %v2725 = vadd.f32 %v2724, %v2662
      %v2726 = vadd.f32 %v2725, %v2663
      %v2727 = vadd.f32 %v2726, %v2664
      %v2728 = vadd.f32 %v2727, %v2665
      %v2729 = vadd.f32 %v2728, %v2666
      %v2730 = vadd.f32 %v2729, %v2667
      %v2731 = vadd.f32 %v2730, %v2668
      %v2732 = vadd.f32 %v2731, %v2669
      %v2733 = vadd.f32 %v2732, %v2670
      %v2734 = vadd.f32 %v2733, %v2671
      %v2735 = vadd.f32 %v2734, %v2672
      %v2736 = vadd.f32 %v2735, %v2673
      %v2737 = vadd.f32 %v2736, %v2674
      %v2738 = vadd.f32 %v2737, %v2675
      %v2739 = vadd.f32 %v2738, %v2676
      %v2740 = vadd.f32 %v2739, %v2677
      %v2741 = vadd.f32 %v2740, %v2678
      %v2742 = vadd.f32 %v2741, %v2679
      %v2743 = vadd.f32 %v2742, %v2680
      %v2744 = vadd.f32 %v2743, %v2681
      %v2745 = vadd.f32 %v2744, %v2682
      %v2746 = vadd.f32 %v2745, %v2683
      %v2747 = vadd.f32 %v2746, %v2684
      %v2748 = vadd.f32 %v2747, %v2685
      %v2749 = vadd.f32 %v2748, %v2686
      %v2750 = vadd.f32 %v2749, %v2687
      %v2751 = vadd.f32 %v2750, %v2688
      %v2752 = vadd.f32 %v2751, %v2689
      %v2753 = vadd.f32 %v2752, %v2690
      %v2754 = vadd.f32 %v2753, %v2691
      %v2755 = vadd.f32 %v2754, %v2692
      %v2756 = vadd.f32 %v2755, %v2693
      %v2757 = vadd.f32 %v2756, %v2694
      %v2758 = vadd.f32 %v2757, %v2695
      %v2759 = vadd.f32 %v2758, %v2696
      %v2760 = vadd.f32 %v2759, %v2697
      %v2761 = vadd.f32 %v2760, %v2698
      %v2762 = vadd.f32 %v2761, %v2699
      %v2763 = vadd.f32 %v2762, %v2700
      %v2764 = vadd.f32 %v2763, %v2701
      %v2765 = vadd.f32 %v2764, %v2702
      %v2766 = vadd.f32 %v2765, %v2703
      %v2767 = vadd.f32 %v2766, %v2704
      %v2768 = vadd.f32 %v2767, %v2705
      %v2769 = vadd.f32 %v2768, %v2706
      %v2770 = vadd.f32 %v2769, %v2707
      %v2771 = vadd.f32 %v2770, %v2708
      %v2772 = vadd.f32 %v2771, %v2709
      %v2773 = vrot.slane %v2772, 4
      %v2774 = vadd.f32 %v2772, %v2773
      %v2775 = vrot.slane %v2774, 2
      %v2776 = vadd.f32 %v2774, %v2775
      %v2777 = vrot.slane %v2776, 1
      %v2778 = vadd.f32 %v2776, %v2777
      %v2779 = vsel %vm2568, %v2645, %v2778
      %v2780 = vld [vmem:[%s242] sm:$0x3]
      %v2781 = vadd.f32 %v2780, %v2779
      %2782 = vst [vmem:[%s242] sm:$0x3] %v2781
      %s2783 = sadd.s32 %s20, %s21
      %p2784 = scmp.lt.s32.totalorder %s2783, 1
      %s2785 = scalar_select %p2784, %s2783, 1
      %s2786 = smul.addr %s2785, 64
      %s2787 = smul.addr %s2786, 4
      %s2788 = scalar_lea.vmem %s2, %s2787
      %p2789 = scmp.lt.s32.totalorder %s20, 1
      %s2790 = scalar_select %p2789, %s20, 1
      %s2791 = smul.addr %s2790, 2
      %s2792 = scalar_lea.vmem %s3, %s2791
      %p2793 = scmp.lt.s32.totalorder %s20, 1
      %s2794 = scalar_select %p2793, %s20, 1
      %s2795 = smul.addr %s2794, 2
      %s2796 = scalar_lea.vmem %s4, %s2795
      // Predicated region
      $region37: #{resnet_block.4} parent=27 // pred_check
        %p2797 = pneg %p97
      $region38: #{resnet_block.4} parent=27 // pred_check_branch
        %2799 = sbr.rel (%p2797) target = $region40
      $region39: #{resnet_block.4} parent=27 // pred_region
        %s2800 = sadd.s32 %s20, %s21
      $region40: #{resnet_block.4} parent=27 // pred_fallthru
        _
      // Predicated region
      $region41: #{resnet_block.4} parent=27 // pred_check
        %p2801 = pneg %p123
      $region42: #{resnet_block.4} parent=27 // pred_check_branch
        %2803 = sbr.rel (%p2801) target = $region44
      $region43: #{resnet_block.4} parent=27 // pred_region
        _
      $region44: #{resnet_block.4} parent=27 // pred_fallthru
        _
      // Predicated region
      $region45: #{resnet_block.4} parent=27 // pred_check
        %p2804 = pneg %p149
      $region46: #{resnet_block.4} parent=27 // pred_check_branch
        %2806 = sbr.rel (%p2804) target = $region48
      $region47: #{resnet_block.4} parent=27 // pred_region
        _
      $region48: #{resnet_block.4} parent=27 // pred_fallthru
        _
    $region28: #{resnet_block.4} parent=5 // pred_fallthru
      _
    %p2807 = scmp.le.s32.totalorder 2, %s11
    // Predicated region
    $region49: #{resnet_block.4} parent=5 // pred_check
      %p2808 = pneg %p2807
    $region50: #{resnet_block.4} parent=5 // pred_check_branch
      %2810 = sbr.rel (%p2808) target = $region52
    $region51: #{resnet_block.4} parent=5 // pred_region
      %s2811 = ssub.s32 %s11, 2
      // Predicated region
      $region53: #{resnet_block.4} parent=51 // pred_check
        %p2812 = pneg %p103
      $region54: #{resnet_block.4} parent=51 // pred_check_branch
        %2814 = sbr.rel (%p2812) target = $region56
      $region55: #{resnet_block.4} parent=51 // pred_region
        %s2815 = sadd.s32 %s22, %s23
        %p2816 = scmp.lt.s32.totalorder %s2815, 1
        %s2817 = scalar_select %p2816, %s2815, 1
        %s2818 = smul.addr %s2817, 64
        %s2819 = smul.addr %s2818, 4
        %s2820 = scalar_lea.vmem %s2, %s2819
      $region56: #{resnet_block.4} parent=51 // pred_fallthru
        _
      // Predicated region
      $region57: #{resnet_block.4} parent=51 // pred_check
        %p2821 = pneg %p129
      $region58: #{resnet_block.4} parent=51 // pred_check_branch
        %2823 = sbr.rel (%p2821) target = $region60
      $region59: #{resnet_block.4} parent=51 // pred_region
        %p2824 = scmp.lt.s32.totalorder %s22, 1
        %s2825 = scalar_select %p2824, %s22, 1
        %s2826 = smul.addr %s2825, 2
        %s2827 = scalar_lea.vmem %s3, %s2826
      $region60: #{resnet_block.4} parent=51 // pred_fallthru
        _
      // Predicated region
      $region61: #{resnet_block.4} parent=51 // pred_check
        %p2828 = pneg %p155
      $region62: #{resnet_block.4} parent=51 // pred_check_branch
        %2830 = sbr.rel (%p2828) target = $region64
      $region63: #{resnet_block.4} parent=51 // pred_region
        %p2831 = scmp.lt.s32.totalorder %s22, 1
        %s2832 = scalar_select %p2831, %s22, 1
        %s2833 = smul.addr %s2832, 2
        %s2834 = scalar_lea.vmem %s4, %s2833
      $region64: #{resnet_block.4} parent=51 // pred_fallthru
        _
    $region52: #{resnet_block.4} parent=5 // pred_fallthru
      _
  $region6: #{resnet_block.4} parent=0 // loop_footer
    %s15 = sadd.s32 1, %s11
  $region7: #{resnet_block.4} parent=0 // loop_footer_branch
    %10 = sbr.rel target = $region3
  $region8: #{resnet_block.4} parent=0 // loop_exit
    _

// kernel: resnet_block.5
$region0: #{resnet_block.5}
  #allocation0 [shape = 'u32[]', space=smem, size = 0x4, offset = 0x4, fixed_abs, tag = 'smem constant byte address 0x4 - core index']
  #allocation1 [shape = 'u32[144,128]{1,0:T(1,128)}', space=vmem, size = 0x12000, scoped, tag = 'internal scratch']
  %s0 = inlined_call_operand.vmem [shape: bf16[2,512,128], index: 0, kind: input, shape index: {}]
  %s1 = inlined_call_operand.vmem [shape: f32[1,128], index: 1, kind: input, shape index: {}]
  %s2 = inlined_call_operand.vmem [shape: f32[1,128], index: 2, kind: input, shape index: {}]
  %s3 = inlined_call_operand.vmem [shape: bf16[384,128], index: 3, kind: input, shape index: {}]
  %s4 = inlined_call_operand.vmem [shape: bf16[2,512,128], index: 4, kind: output, shape index: {0}]
  %s5 = inlined_call_operand.vmem [shape: f32[2,2,128], index: 5, kind: output, shape index: {1}]
  %6 = xla_tuple %s4, %s5
  %s7 = sld [smem:[#allocation0]]
  $region61: #{resnet_block.5} parent=0
    _
  %s9 = ssub.s32 1, %s7
  %s10 = scalar_select 0, %s9, %s7
  loop: start=0, step=1, limit=4
  $region2: #{resnet_block.5} parent=0 // loop_pre_header
    _
  $region3: #{resnet_block.5} parent=0 // loop_header
    %s12 = sphi 0, %s16
    %p13 = scmp.ge.s32.totalorder %s12, 4
    %s19 = sphi 0, %s31
    %s20 = sphi 0, %s27
    %s21 = sphi 0, %s19
    %s22 = sphi 0, %s20
    %s23 = sphi 0, %s21
    %s24 = sphi 0, %s22
    %s36 = sphi 0, %s38
    %s39 = sphi 0, %s36
    %s40 = sphi 0, %s39
    %s56 = sphi 0, %s40
    %s60 = sphi 0, %s60
    %s62 = sphi 0, %s60
    %s63 = sphi 0, %s62
    %s77 = sphi 0, %s63
    %s81 = sphi 0, %s81
    %s83 = sphi 0, %s81
    %s84 = sphi 0, %s83
    %s98 = sphi 0, %s84
    %s102 = sphi 0, %s102
    %s104 = sphi 0, %s102
    %s105 = sphi 0, %s104
    %s119 = sphi 0, %s105
    %s127 = sphi 0, %s129
    %s130 = sphi 0, %s127
    %s131 = sphi 0, %s130
    %s147 = sphi 0, %s131
    %s153 = sphi 0, %s155
    %s156 = sphi 0, %s153
    %s157 = sphi 0, %s156
    %s173 = sphi 0, %s157
  $region4: #{resnet_block.5} parent=0 // loop_header_branch
    %15 = sbr.rel (%p13) target = $region8
  $region5: #{resnet_block.5} parent=0 // loop_body
    %s17 = ssub.s32 %s12, 1
    %s18 = ssub.s32 %s12, 2
    %s25 = sadd.s32 1, %s20
    %p26 = scmp.ge.s32.totalorder %s25, 1
    %s27 = scalar_select %p26, 0, %s25
    %s28 = sadd.s32 1, %s19
    %s29 = scalar_select %p26, %s28, %s19
    %p30 = scmp.ge.s32.totalorder %s29, 2
    %s31 = scalar_select %p30, 0, %s29
    %s32 = sadd.s32 %s19, %s20
    %s33 = sadd.s32 %s31, %s27
    %s34 = ssub.s32 %s32, %s33
    %p35 = scmp.eq.s32.totalorder %s34, 0
    %s37 = sadd.s32 %s36, 1
    %s38 = scalar_select %p35, %s36, %s37
    %p41 = pneg %p35
    %p42 = scmp.eq.s32.totalorder %s12, 1
    %p43 = por %p41, %p42
    %p44 = scmp.ne.s32.totalorder %s36, %s39
    %p45 = scmp.eq.s32.totalorder %s12, 0
    %p46 = por %p44, %p45
    %p47 = scmp.ne.s32.totalorder %s36, %s39
    %p48 = scmp.eq.s32.totalorder %s17, 1
    %p49 = por %p47, %p48
    %p50 = scmp.ne.s32.totalorder %s39, %s40
    %p51 = scmp.eq.s32.totalorder %s17, 0
    %p52 = por %p50, %p51
    %p53 = scmp.ne.s32.totalorder %s39, %s40
    %p54 = scmp.eq.s32.totalorder %s18, 1
    %p55 = por %p53, %p54
    %p57 = scmp.ne.s32.totalorder %s40, %s56
    %p58 = scmp.eq.s32.totalorder %s18, 0
    %p59 = por %p57, %p58
    %s61 = sadd.s32 %s60, 1
    %p64 = scmp.eq.s32.totalorder %s12, 1
    %p65 = scmp.ne.s32.totalorder %s60, %s62
    %p66 = scmp.eq.s32.totalorder %s12, 0
    %p67 = por %p65, %p66
    %p68 = scmp.ne.s32.totalorder %s60, %s62
    %p69 = scmp.eq.s32.totalorder %s17, 1
    %p70 = por %p68, %p69
    %p71 = scmp.ne.s32.totalorder %s62, %s63
    %p72 = scmp.eq.s32.totalorder %s17, 0
    %p73 = por %p71, %p72
    %p74 = scmp.ne.s32.totalorder %s62, %s63
    %p75 = scmp.eq.s32.totalorder %s18, 1
    %p76 = por %p74, %p75
    %p78 = scmp.ne.s32.totalorder %s63, %s77
    %p79 = scmp.eq.s32.totalorder %s18, 0
    %p80 = por %p78, %p79
    %s82 = sadd.s32 %s81, 1
    %p85 = scmp.eq.s32.totalorder %s12, 1
    %p86 = scmp.ne.s32.totalorder %s81, %s83
    %p87 = scmp.eq.s32.totalorder %s12, 0
    %p88 = por %p86, %p87
    %p89 = scmp.ne.s32.totalorder %s81, %s83
    %p90 = scmp.eq.s32.totalorder %s17, 1
    %p91 = por %p89, %p90
    %p92 = scmp.ne.s32.totalorder %s83, %s84
    %p93 = scmp.eq.s32.totalorder %s17, 0
    %p94 = por %p92, %p93
    %p95 = scmp.ne.s32.totalorder %s83, %s84
    %p96 = scmp.eq.s32.totalorder %s18, 1
    %p97 = por %p95, %p96
    %p99 = scmp.ne.s32.totalorder %s84, %s98
    %p100 = scmp.eq.s32.totalorder %s18, 0
    %p101 = por %p99, %p100
    %s103 = sadd.s32 %s102, 1
    %p106 = scmp.eq.s32.totalorder %s12, 1
    %p107 = scmp.ne.s32.totalorder %s102, %s104
    %p108 = scmp.eq.s32.totalorder %s12, 0
    %p109 = por %p107, %p108
    %p110 = scmp.ne.s32.totalorder %s102, %s104
    %p111 = scmp.eq.s32.totalorder %s17, 1
    %p112 = por %p110, %p111
    %p113 = scmp.ne.s32.totalorder %s104, %s105
    %p114 = scmp.eq.s32.totalorder %s17, 0
    %p115 = por %p113, %p114
    %p116 = scmp.ne.s32.totalorder %s104, %s105
    %p117 = scmp.eq.s32.totalorder %s18, 1
    %p118 = por %p116, %p117
    %p120 = scmp.ne.s32.totalorder %s105, %s119
    %p121 = scmp.eq.s32.totalorder %s18, 0
    %p122 = por %p120, %p121
    %s123 = sadd.s32 %s19, %s20
    %s124 = sadd.s32 %s31, %s27
    %s125 = ssub.s32 %s123, %s124
    %p126 = scmp.eq.s32.totalorder %s125, 0
    %s128 = sadd.s32 %s127, 1
    %s129 = scalar_select %p126, %s127, %s128
    %p132 = pneg %p126
    %p133 = scmp.eq.s32.totalorder %s12, 1
    %p134 = por %p132, %p133
    %p135 = scmp.ne.s32.totalorder %s127, %s130
    %p136 = scmp.eq.s32.totalorder %s12, 0
    %p137 = por %p135, %p136
    %p138 = scmp.ne.s32.totalorder %s127, %s130
    %p139 = scmp.eq.s32.totalorder %s17, 1
    %p140 = por %p138, %p139
    %p141 = scmp.ne.s32.totalorder %s130, %s131
    %p142 = scmp.eq.s32.totalorder %s17, 0
    %p143 = por %p141, %p142
    %p144 = scmp.ne.s32.totalorder %s130, %s131
    %p145 = scmp.eq.s32.totalorder %s18, 1
    %p146 = por %p144, %p145
    %p148 = scmp.ne.s32.totalorder %s131, %s147
    %p149 = scmp.eq.s32.totalorder %s18, 0
    %p150 = por %p148, %p149
    %s151 = ssub.s32 %s19, %s31
    %p152 = scmp.eq.s32.totalorder %s151, 0
    %s154 = sadd.s32 %s153, 1
    %s155 = scalar_select %p152, %s153, %s154
    %p158 = pneg %p152
    %p159 = scmp.eq.s32.totalorder %s12, 1
    %p160 = por %p158, %p159
    %p161 = scmp.ne.s32.totalorder %s153, %s156
    %p162 = scmp.eq.s32.totalorder %s12, 0
    %p163 = por %p161, %p162
    %p164 = scmp.ne.s32.totalorder %s153, %s156
    %p165 = scmp.eq.s32.totalorder %s17, 1
    %p166 = por %p164, %p165
    %p167 = scmp.ne.s32.totalorder %s156, %s157
    %p168 = scmp.eq.s32.totalorder %s17, 0
    %p169 = por %p167, %p168
    %p170 = scmp.ne.s32.totalorder %s156, %s157
    %p171 = scmp.eq.s32.totalorder %s18, 1
    %p172 = por %p170, %p171
    %p174 = scmp.ne.s32.totalorder %s157, %s173
    %p175 = scmp.eq.s32.totalorder %s18, 0
    %p176 = por %p174, %p175
    %p177 = scmp.le.s32.totalorder 1, %s12
    %p178 = scmp.lt.s32.totalorder %s12, 3
    %p179 = pnand %p177, %p178
    %p180 = pneg %p179
    // Predicated region
    $region9: #{resnet_block.5} parent=5 // pred_check
      _
    $region10: #{resnet_block.5} parent=5 // pred_check_branch
      %182 = sbr.rel (%p179) target = $region12
    $region11: #{resnet_block.5} parent=5 // pred_region
      %s183 = ssub.s32 %s12, 1
      // Predicated region
      $region13: #{resnet_block.5} parent=11 // pred_check
        %p184 = pneg %p73
      $region14: #{resnet_block.5} parent=11 // pred_check_branch
        %186 = sbr.rel (%p184) target = $region16
      $region15: #{resnet_block.5} parent=11 // pred_region
        _
      $region16: #{resnet_block.5} parent=11 // pred_fallthru
        _
      // Predicated region
      $region17: #{resnet_block.5} parent=11 // pred_check
        %p187 = pneg %p94
      $region18: #{resnet_block.5} parent=11 // pred_check_branch
        %189 = sbr.rel (%p187) target = $region20
      $region19: #{resnet_block.5} parent=11 // pred_region
        _
      $region20: #{resnet_block.5} parent=11 // pred_fallthru
        _
      // Predicated region
      $region21: #{resnet_block.5} parent=11 // pred_check
        %p190 = pneg %p115
      $region22: #{resnet_block.5} parent=11 // pred_check_branch
        %192 = sbr.rel (%p190) target = $region24
      $region23: #{resnet_block.5} parent=11 // pred_region
        _
      $region24: #{resnet_block.5} parent=11 // pred_fallthru
        _
    $region12: #{resnet_block.5} parent=5 // pred_fallthru
      _
    %p193 = scmp.lt.s32.totalorder %s12, 2
    // Predicated region
    $region25: #{resnet_block.5} parent=5 // pred_check
      %p194 = pneg %p193
    $region26: #{resnet_block.5} parent=5 // pred_check_branch
      %196 = sbr.rel (%p194) target = $region28
    $region27: #{resnet_block.5} parent=5 // pred_region
      // Predicated region
      $region29: #{resnet_block.5} parent=27 // pred_check
        %p197 = pneg %p46
      $region30: #{resnet_block.5} parent=27 // pred_check_branch
        %199 = sbr.rel (%p197) target = $region32
      $region31: #{resnet_block.5} parent=27 // pred_region
        %s200 = sadd.s32 %s19, %s20
        %p201 = scmp.lt.s32.totalorder %s200, 1
        %s202 = scalar_select %p201, %s200, 1
        %s203 = smul.addr %s202, 64
        %s204 = smul.addr %s203, 4
        %s205 = scalar_lea.vmem %s0, %s204
        %s206 = sadd.s32 %s19, %s20
      $region32: #{resnet_block.5} parent=27 // pred_fallthru
        _
    $region28: #{resnet_block.5} parent=5 // pred_fallthru
      _
    %p207 = scmp.le.s32.totalorder 1, %s12
    %p208 = scmp.lt.s32.totalorder %s12, 3
    %p209 = pnand %p207, %p208
    %p210 = pneg %p209
    // Predicated region
    $region33: #{resnet_block.5} parent=5 // pred_check
      _
    $region34: #{resnet_block.5} parent=5 // pred_check_branch
      %212 = sbr.rel (%p209) target = $region36
    $region35: #{resnet_block.5} parent=5 // pred_region
      %s213 = ssub.s32 %s12, 1
      %s214 = sadd.s32 %s21, %s22
      %p215 = scmp.lt.s32.totalorder %s214, 1
      %s216 = scalar_select %p215, %s214, 1
      %s217 = smul.addr %s216, 64
      %s218 = smul.addr %s217, 4
      %s219 = scalar_lea.vmem %s0, %s218
      %p220 = pneg %p52
      %p221 = pneg %p49
      %p222 = pneg %p73
      %p223 = pneg %p70
      %p224 = pneg %p94
      %p225 = pneg %p91
      %p226 = pneg %p115
      %p227 = pneg %p112
      %p228 = pneg %p143
      %p229 = pneg %p140
      %s230 = sadd.s32 %s21, %s22
      %p231 = scmp.lt.s32.totalorder %s230, 1
      %s232 = scalar_select %p231, %s230, 1
      %s233 = smul.addr %s232, 64
      %s234 = smul.addr %s233, 4
      %s235 = scalar_lea.vmem %s4, %s234
      %p236 = pneg %p169
      %p237 = pneg %p166
      %p238 = scmp.lt.s32.totalorder %s21, 1
      %s239 = scalar_select %p238, %s21, 1
      %s240 = smul.addr %s239, 2
      %s241 = scalar_lea.vmem %s5, %s240
      %s242 = sadd.s32 %s21, %s22
      %p243 = scmp.lt.s32.totalorder %s242, 1
      %s244 = scalar_select %p243, %s242, 1
      %s245 = smul.addr %s244, 64
      %s246 = smul.addr %s245, 4
      %s247 = scalar_lea.vmem %s0, %s246
      %s248 = sadd.s32 %s21, %s22
      %s249 = sadd.s32 %s21, %s22
      %p250 = scmp.lt.s32.totalorder %s249, 1
      %s251 = scalar_select %p250, %s249, 1
      %s252 = smul.addr %s251, 64
      %s253 = smul.addr %s252, 4
      %s254 = scalar_lea.vmem %s4, %s253
      %s255 = sadd.s32 %s21, %s22
      %p256 = scmp.lt.s32.totalorder %s21, 1
      %s257 = scalar_select %p256, %s21, 1
      %s258 = smul.addr %s257, 2
      %s259 = scalar_lea.vmem %s5, %s258
      %p261 = scmp.eq.s32.totalorder %s22, 0
      %v262 = vld [vmem:[%s247] sm:$0xf]
      %v263 = vld [vmem:[%s247 + $0x4] sm:$0xf]
      %v264 = vld [vmem:[%s247 + $0x8] sm:$0xf]
      %v265 = vld [vmem:[%s247 + $0xc] sm:$0xf]
      %v266 = vld [vmem:[%s247 + $0x10] sm:$0xf]
      %v267 = vld [vmem:[%s247 + $0x14] sm:$0xf]
      %v268 = vld [vmem:[%s247 + $0x18] sm:$0xf]
      %v269 = vld [vmem:[%s247 + $0x1c] sm:$0xf]
      %v270 = vld [vmem:[%s247 + $0x20] sm:$0xf]
      %v271 = vld [vmem:[%s247 + $0x24] sm:$0xf]
      %v272 = vld [vmem:[%s247 + $0x28] sm:$0xf]
      %v273 = vld [vmem:[%s247 + $0x2c] sm:$0xf]
      %v274 = vld [vmem:[%s247 + $0x30] sm:$0xf]
      %v275 = vld [vmem:[%s247 + $0x34] sm:$0xf]
      %v276 = vld [vmem:[%s247 + $0x38] sm:$0xf]
      %v277 = vld [vmem:[%s247 + $0x3c] sm:$0xf]
      %v278 = vld [vmem:[%s247 + $0x40] sm:$0xf]
      %v279 = vld [vmem:[%s247 + $0x44] sm:$0xf]
      %v280 = vld [vmem:[%s247 + $0x48] sm:$0xf]
      %v281 = vld [vmem:[%s247 + $0x4c] sm:$0xf]
      %v282 = vld [vmem:[%s247 + $0x50] sm:$0xf]
      %v283 = vld [vmem:[%s247 + $0x54] sm:$0xf]
      %v284 = vld [vmem:[%s247 + $0x58] sm:$0xf]
      %v285 = vld [vmem:[%s247 + $0x5c] sm:$0xf]
      %v286 = vld [vmem:[%s247 + $0x60] sm:$0xf]
      %v287 = vld [vmem:[%s247 + $0x64] sm:$0xf]
      %v288 = vld [vmem:[%s247 + $0x68] sm:$0xf]
      %v289 = vld [vmem:[%s247 + $0x6c] sm:$0xf]
      %v290 = vld [vmem:[%s247 + $0x70] sm:$0xf]
      %v291 = vld [vmem:[%s247 + $0x74] sm:$0xf]
      %v292 = vld [vmem:[%s247 + $0x78] sm:$0xf]
      %v293 = vld [vmem:[%s247 + $0x7c] sm:$0xf]
      %v294 = vld [vmem:[%s247 + $0x80] sm:$0xf]
      %v295 = vld [vmem:[%s247 + $0x84] sm:$0xf]
      %v296 = vld [vmem:[%s247 + $0x88] sm:$0xf]
      %v297 = vld [vmem:[%s247 + $0x8c] sm:$0xf]
      %v298 = vld [vmem:[%s247 + $0x90] sm:$0xf]
      %v299 = vld [vmem:[%s247 + $0x94] sm:$0xf]
      %v300 = vld [vmem:[%s247 + $0x98] sm:$0xf]
      %v301 = vld [vmem:[%s247 + $0x9c] sm:$0xf]
      %v302 = vld [vmem:[%s247 + $0xa0] sm:$0xf]
      %v303 = vld [vmem:[%s247 + $0xa4] sm:$0xf]
      %v304 = vld [vmem:[%s247 + $0xa8] sm:$0xf]
      %v305 = vld [vmem:[%s247 + $0xac] sm:$0xf]
      %v306 = vld [vmem:[%s247 + $0xb0] sm:$0xf]
      %v307 = vld [vmem:[%s247 + $0xb4] sm:$0xf]
      %v308 = vld [vmem:[%s247 + $0xb8] sm:$0xf]
      %v309 = vld [vmem:[%s247 + $0xbc] sm:$0xf]
      %v310 = vld [vmem:[%s247 + $0xc0] sm:$0xf]
      %v311 = vld [vmem:[%s247 + $0xc4] sm:$0xf]
      %v312 = vld [vmem:[%s247 + $0xc8] sm:$0xf]
      %v313 = vld [vmem:[%s247 + $0xcc] sm:$0xf]
      %v314 = vld [vmem:[%s247 + $0xd0] sm:$0xf]
      %v315 = vld [vmem:[%s247 + $0xd4] sm:$0xf]
      %v316 = vld [vmem:[%s247 + $0xd8] sm:$0xf]
      %v317 = vld [vmem:[%s247 + $0xdc] sm:$0xf]
      %v318 = vld [vmem:[%s247 + $0xe0] sm:$0xf]
      %v319 = vld [vmem:[%s247 + $0xe4] sm:$0xf]
      %v320 = vld [vmem:[%s247 + $0xe8] sm:$0xf]
      %v321 = vld [vmem:[%s247 + $0xec] sm:$0xf]
      %v322 = vld [vmem:[%s247 + $0xf0] sm:$0xf]
      %v323 = vld [vmem:[%s247 + $0xf4] sm:$0xf]
      %v324 = vld [vmem:[%s247 + $0xf8] sm:$0xf]
      %v325 = vld [vmem:[%s247 + $0xfc] sm:$0xf]
      %v326 = vunpack.c.l.bf16 %v262
      %v327 = vunpack.c.l.bf16 %v263
      %v328 = vunpack.c.l.bf16 %v264
      %v329 = vunpack.c.l.bf16 %v265
      %v330 = vunpack.c.l.bf16 %v266
      %v331 = vunpack.c.l.bf16 %v267
      %v332 = vunpack.c.l.bf16 %v268
      %v333 = vunpack.c.l.bf16 %v269
      %v334 = vunpack.c.l.bf16 %v270
      %v335 = vunpack.c.l.bf16 %v271
      %v336 = vunpack.c.l.bf16 %v272
      %v337 = vunpack.c.l.bf16 %v273
      %v338 = vunpack.c.l.bf16 %v274
      %v339 = vunpack.c.l.bf16 %v275
      %v340 = vunpack.c.l.bf16 %v276
      %v341 = vunpack.c.l.bf16 %v277
      %v342 = vunpack.c.l.bf16 %v278
      %v343 = vunpack.c.l.bf16 %v279
      %v344 = vunpack.c.l.bf16 %v280
      %v345 = vunpack.c.l.bf16 %v281
      %v346 = vunpack.c.l.bf16 %v282
      %v347 = vunpack.c.l.bf16 %v283
      %v348 = vunpack.c.l.bf16 %v284
      %v349 = vunpack.c.l.bf16 %v285
      %v350 = vunpack.c.l.bf16 %v286
      %v351 = vunpack.c.l.bf16 %v287
      %v352 = vunpack.c.l.bf16 %v288
      %v353 = vunpack.c.l.bf16 %v289
      %v354 = vunpack.c.l.bf16 %v290
      %v355 = vunpack.c.l.bf16 %v291
      %v356 = vunpack.c.l.bf16 %v292
      %v357 = vunpack.c.l.bf16 %v293
      %v358 = vunpack.c.l.bf16 %v294
      %v359 = vunpack.c.l.bf16 %v295
      %v360 = vunpack.c.l.bf16 %v296
      %v361 = vunpack.c.l.bf16 %v297
      %v362 = vunpack.c.l.bf16 %v298
      %v363 = vunpack.c.l.bf16 %v299
      %v364 = vunpack.c.l.bf16 %v300
      %v365 = vunpack.c.l.bf16 %v301
      %v366 = vunpack.c.l.bf16 %v302
      %v367 = vunpack.c.l.bf16 %v303
      %v368 = vunpack.c.l.bf16 %v304
      %v369 = vunpack.c.l.bf16 %v305
      %v370 = vunpack.c.l.bf16 %v306
      %v371 = vunpack.c.l.bf16 %v307
      %v372 = vunpack.c.l.bf16 %v308
      %v373 = vunpack.c.l.bf16 %v309
      %v374 = vunpack.c.l.bf16 %v310
      %v375 = vunpack.c.l.bf16 %v311
      %v376 = vunpack.c.l.bf16 %v312
      %v377 = vunpack.c.l.bf16 %v313
      %v378 = vunpack.c.l.bf16 %v314
      %v379 = vunpack.c.l.bf16 %v315
      %v380 = vunpack.c.l.bf16 %v316
      %v381 = vunpack.c.l.bf16 %v317
      %v382 = vunpack.c.l.bf16 %v318
      %v383 = vunpack.c.l.bf16 %v319
      %v384 = vunpack.c.l.bf16 %v320
      %v385 = vunpack.c.l.bf16 %v321
      %v386 = vunpack.c.l.bf16 %v322
      %v387 = vunpack.c.l.bf16 %v323
      %v388 = vunpack.c.l.bf16 %v324
      %v389 = vunpack.c.l.bf16 %v325
      %v390 = vld [vmem:[%s1] sm:$0x1]
      %v392 = vlaneseq
      %v393 = vshrl.u32 %v392, 7
      %v394 = vsub.s32 0, %v393
      %v395 = vrot.slane %v390, %v394
      %v397 = vmul.f32 %v326, %v395
      %v398 = vmul.f32 %v327, %v395
      %v399 = vmul.f32 %v328, %v395
      %v400 = vmul.f32 %v329, %v395
      %v401 = vmul.f32 %v330, %v395
      %v402 = vmul.f32 %v331, %v395
      %v403 = vmul.f32 %v332, %v395
      %v404 = vmul.f32 %v333, %v395
      %v405 = vmul.f32 %v334, %v395
      %v406 = vmul.f32 %v335, %v395
      %v407 = vmul.f32 %v336, %v395
      %v408 = vmul.f32 %v337, %v395
      %v409 = vmul.f32 %v338, %v395
      %v410 = vmul.f32 %v339, %v395
      %v411 = vmul.f32 %v340, %v395
      %v412 = vmul.f32 %v341, %v395
      %v413 = vmul.f32 %v342, %v395
      %v414 = vmul.f32 %v343, %v395
      %v415 = vmul.f32 %v344, %v395
      %v416 = vmul.f32 %v345, %v395
      %v417 = vmul.f32 %v346, %v395
      %v418 = vmul.f32 %v347, %v395
      %v419 = vmul.f32 %v348, %v395
      %v420 = vmul.f32 %v349, %v395
      %v421 = vmul.f32 %v350, %v395
      %v422 = vmul.f32 %v351, %v395
      %v423 = vmul.f32 %v352, %v395
      %v424 = vmul.f32 %v353, %v395
      %v425 = vmul.f32 %v354, %v395
      %v426 = vmul.f32 %v355, %v395
      %v427 = vmul.f32 %v356, %v395
      %v428 = vmul.f32 %v357, %v395
      %v429 = vmul.f32 %v358, %v395
      %v430 = vmul.f32 %v359, %v395
      %v431 = vmul.f32 %v360, %v395
      %v432 = vmul.f32 %v361, %v395
      %v433 = vmul.f32 %v362, %v395
      %v434 = vmul.f32 %v363, %v395
      %v435 = vmul.f32 %v364, %v395
      %v436 = vmul.f32 %v365, %v395
      %v437 = vmul.f32 %v366, %v395
      %v438 = vmul.f32 %v367, %v395
      %v439 = vmul.f32 %v368, %v395
      %v440 = vmul.f32 %v369, %v395
      %v441 = vmul.f32 %v370, %v395
      %v442 = vmul.f32 %v371, %v395
      %v443 = vmul.f32 %v372, %v395
      %v444 = vmul.f32 %v373, %v395
      %v445 = vmul.f32 %v374, %v395
      %v446 = vmul.f32 %v375, %v395
      %v447 = vmul.f32 %v376, %v395
      %v448 = vmul.f32 %v377, %v395
      %v449 = vmul.f32 %v378, %v395
      %v450 = vmul.f32 %v379, %v395
      %v451 = vmul.f32 %v380, %v395
      %v452 = vmul.f32 %v381, %v395
      %v453 = vmul.f32 %v382, %v395
      %v454 = vmul.f32 %v383, %v395
      %v455 = vmul.f32 %v384, %v395
      %v456 = vmul.f32 %v385, %v395
      %v457 = vmul.f32 %v386, %v395
      %v458 = vmul.f32 %v387, %v395
      %v459 = vmul.f32 %v388, %v395
      %v460 = vmul.f32 %v389, %v395
      %v461 = vld [vmem:[%s2] sm:$0x1]
      %v463 = vlaneseq
      %v464 = vshrl.u32 %v463, 7
      %v465 = vsub.s32 0, %v464
      %v466 = vrot.slane %v461, %v465
      %v468 = vadd.f32 %v397, %v466
      %v469 = vadd.f32 %v398, %v466
      %v470 = vadd.f32 %v399, %v466
      %v471 = vadd.f32 %v400, %v466
      %v472 = vadd.f32 %v401, %v466
      %v473 = vadd.f32 %v402, %v466
      %v474 = vadd.f32 %v403, %v466
      %v475 = vadd.f32 %v404, %v466
      %v476 = vadd.f32 %v405, %v466
      %v477 = vadd.f32 %v406, %v466
      %v478 = vadd.f32 %v407, %v466
      %v479 = vadd.f32 %v408, %v466
      %v480 = vadd.f32 %v409, %v466
      %v481 = vadd.f32 %v410, %v466
      %v482 = vadd.f32 %v411, %v466
      %v483 = vadd.f32 %v412, %v466
      %v484 = vadd.f32 %v413, %v466
      %v485 = vadd.f32 %v414, %v466
      %v486 = vadd.f32 %v415, %v466
      %v487 = vadd.f32 %v416, %v466
      %v488 = vadd.f32 %v417, %v466
      %v489 = vadd.f32 %v418, %v466
      %v490 = vadd.f32 %v419, %v466
      %v491 = vadd.f32 %v420, %v466
      %v492 = vadd.f32 %v421, %v466
      %v493 = vadd.f32 %v422, %v466
      %v494 = vadd.f32 %v423, %v466
      %v495 = vadd.f32 %v424, %v466
      %v496 = vadd.f32 %v425, %v466
      %v497 = vadd.f32 %v426, %v466
      %v498 = vadd.f32 %v427, %v466
      %v499 = vadd.f32 %v428, %v466
      %v500 = vadd.f32 %v429, %v466
      %v501 = vadd.f32 %v430, %v466
      %v502 = vadd.f32 %v431, %v466
      %v503 = vadd.f32 %v432, %v466
      %v504 = vadd.f32 %v433, %v466
      %v505 = vadd.f32 %v434, %v466
      %v506 = vadd.f32 %v435, %v466
      %v507 = vadd.f32 %v436, %v466
      %v508 = vadd.f32 %v437, %v466
      %v509 = vadd.f32 %v438, %v466
      %v510 = vadd.f32 %v439, %v466
      %v511 = vadd.f32 %v440, %v466
      %v512 = vadd.f32 %v441, %v466
      %v513 = vadd.f32 %v442, %v466
      %v514 = vadd.f32 %v443, %v466
      %v515 = vadd.f32 %v444, %v466
      %v516 = vadd.f32 %v445, %v466
      %v517 = vadd.f32 %v446, %v466
      %v518 = vadd.f32 %v447, %v466
      %v519 = vadd.f32 %v448, %v466
      %v520 = vadd.f32 %v449, %v466
      %v521 = vadd.f32 %v450, %v466
      %v522 = vadd.f32 %v451, %v466
      %v523 = vadd.f32 %v452, %v466
      %v524 = vadd.f32 %v453, %v466
      %v525 = vadd.f32 %v454, %v466
      %v526 = vadd.f32 %v455, %v466
      %v527 = vadd.f32 %v456, %v466
      %v528 = vadd.f32 %v457, %v466
      %v529 = vadd.f32 %v458, %v466
      %v530 = vadd.f32 %v459, %v466
      %v531 = vadd.f32 %v460, %v466
      %v532 = vmax.f32 %v468, 0.0
      %v533 = vmax.f32 %v469, 0.0
      %v534 = vmax.f32 %v470, 0.0
      %v535 = vmax.f32 %v471, 0.0
      %v536 = vmax.f32 %v472, 0.0
      %v537 = vmax.f32 %v473, 0.0
      %v538 = vmax.f32 %v474, 0.0
      %v539 = vmax.f32 %v475, 0.0
      %v540 = vmax.f32 %v476, 0.0
      %v541 = vmax.f32 %v477, 0.0
      %v542 = vmax.f32 %v478, 0.0
      %v543 = vmax.f32 %v479, 0.0
      %v544 = vmax.f32 %v480, 0.0
      %v545 = vmax.f32 %v481, 0.0
      %v546 = vmax.f32 %v482, 0.0
      %v547 = vmax.f32 %v483, 0.0
      %v548 = vmax.f32 %v484, 0.0
      %v549 = vmax.f32 %v485, 0.0
      %v550 = vmax.f32 %v486, 0.0
      %v551 = vmax.f32 %v487, 0.0
      %v552 = vmax.f32 %v488, 0.0
      %v553 = vmax.f32 %v489, 0.0
      %v554 = vmax.f32 %v490, 0.0
      %v555 = vmax.f32 %v491, 0.0
      %v556 = vmax.f32 %v492, 0.0
      %v557 = vmax.f32 %v493, 0.0
      %v558 = vmax.f32 %v494, 0.0
      %v559 = vmax.f32 %v495, 0.0
      %v560 = vmax.f32 %v496, 0.0
      %v561 = vmax.f32 %v497, 0.0
      %v562 = vmax.f32 %v498, 0.0
      %v563 = vmax.f32 %v499, 0.0
      %v564 = vmax.f32 %v500, 0.0
      %v565 = vmax.f32 %v501, 0.0
      %v566 = vmax.f32 %v502, 0.0
      %v567 = vmax.f32 %v503, 0.0
      %v568 = vmax.f32 %v504, 0.0
      %v569 = vmax.f32 %v505, 0.0
      %v570 = vmax.f32 %v506, 0.0
      %v571 = vmax.f32 %v507, 0.0
      %v572 = vmax.f32 %v508, 0.0
      %v573 = vmax.f32 %v509, 0.0
      %v574 = vmax.f32 %v510, 0.0
      %v575 = vmax.f32 %v511, 0.0
      %v576 = vmax.f32 %v512, 0.0
      %v577 = vmax.f32 %v513, 0.0
      %v578 = vmax.f32 %v514, 0.0
      %v579 = vmax.f32 %v515, 0.0
      %v580 = vmax.f32 %v516, 0.0
      %v581 = vmax.f32 %v517, 0.0
      %v582 = vmax.f32 %v518, 0.0
      %v583 = vmax.f32 %v519, 0.0
      %v584 = vmax.f32 %v520, 0.0
      %v585 = vmax.f32 %v521, 0.0
      %v586 = vmax.f32 %v522, 0.0
      %v587 = vmax.f32 %v523, 0.0
      %v588 = vmax.f32 %v524, 0.0
      %v589 = vmax.f32 %v525, 0.0
      %v590 = vmax.f32 %v526, 0.0
      %v591 = vmax.f32 %v527, 0.0
      %v592 = vmax.f32 %v528, 0.0
      %v593 = vmax.f32 %v529, 0.0
      %v594 = vmax.f32 %v530, 0.0
      %v595 = vmax.f32 %v531, 0.0
      %v596 = vlaneseq
      %v597 = vshrl.u32 %v596, 7
      %v598 = vadd.s32 %v597, 8
      %v599 = vadd.s32 %v597, 16
      %v600 = vadd.s32 %v597, 24
      %v601 = vadd.s32 %v597, 32
      %v602 = vadd.s32 %v597, 40
      %v603 = vadd.s32 %v597, 48
      %v604 = vadd.s32 %v597, 56
      %v605 = vadd.s32 %v597, 64
      %v606 = vadd.s32 %v597, 72
      %v607 = vadd.s32 %v597, 80
      %v608 = vadd.s32 %v597, 88
      %v609 = vadd.s32 %v597, 96
      %v610 = vadd.s32 %v597, 104
      %v611 = vadd.s32 %v597, 112
      %v612 = vadd.s32 %v597, 120
      %v613 = vadd.s32 %v597, 128
      %v614 = vadd.s32 %v597, 136
      %v615 = vadd.s32 %v597, 144
      %v616 = vadd.s32 %v597, 152
      %v617 = vadd.s32 %v597, 160
      %v618 = vadd.s32 %v597, 168
      %v619 = vadd.s32 %v597, 176
      %v620 = vadd.s32 %v597, 184
      %v621 = vadd.s32 %v597, 192
      %v622 = vadd.s32 %v597, 200
      %v623 = vadd.s32 %v597, 208
      %v624 = vadd.s32 %v597, 216
      %v625 = vadd.s32 %v597, 224
      %v626 = vadd.s32 %v597, 232
      %v627 = vadd.s32 %v597, 240
      %v628 = vadd.s32 %v597, 248
      %v629 = vadd.s32 %v597, 256
      %v630 = vadd.s32 %v597, 264
      %v631 = vadd.s32 %v597, 272
      %v632 = vadd.s32 %v597, 280
      %v633 = vadd.s32 %v597, 288
      %v634 = vadd.s32 %v597, 296
      %v635 = vadd.s32 %v597, 304
      %v636 = vadd.s32 %v597, 312
      %v637 = vadd.s32 %v597, 320
      %v638 = vadd.s32 %v597, 328
      %v639 = vadd.s32 %v597, 336
      %v640 = vadd.s32 %v597, 344
      %v641 = vadd.s32 %v597, 352
      %v642 = vadd.s32 %v597, 360
      %v643 = vadd.s32 %v597, 368
      %v644 = vadd.s32 %v597, 376
      %v645 = vadd.s32 %v597, 384
      %v646 = vadd.s32 %v597, 392
      %v647 = vadd.s32 %v597, 400
      %v648 = vadd.s32 %v597, 408
      %v649 = vadd.s32 %v597, 416
      %v650 = vadd.s32 %v597, 424
      %v651 = vadd.s32 %v597, 432
      %v652 = vadd.s32 %v597, 440
      %v653 = vadd.s32 %v597, 448
      %v654 = vadd.s32 %v597, 456
      %v655 = vadd.s32 %v597, 464
      %v656 = vadd.s32 %v597, 472
      %v657 = vadd.s32 %v597, 480
      %v658 = vadd.s32 %v597, 488
      %v659 = vadd.s32 %v597, 496
      %v660 = vadd.s32 %v597, 504
      %vm661 = vcmp.ge.s32.totalorder %v597, 1
      %vm662 = vcmp.ge.s32.totalorder %v598, 1
      %vm663 = vcmp.ge.s32.totalorder %v599, 1
      %vm664 = vcmp.ge.s32.totalorder %v600, 1
      %vm665 = vcmp.ge.s32.totalorder %v601, 1
      %vm666 = vcmp.ge.s32.totalorder %v602, 1
      %vm667 = vcmp.ge.s32.totalorder %v603, 1
      %vm668 = vcmp.ge.s32.totalorder %v604, 1
      %vm669 = vcmp.ge.s32.totalorder %v605, 1
      %vm670 = vcmp.ge.s32.totalorder %v606, 1
      %vm671 = vcmp.ge.s32.totalorder %v607, 1
      %vm672 = vcmp.ge.s32.totalorder %v608, 1
      %vm673 = vcmp.ge.s32.totalorder %v609, 1
      %vm674 = vcmp.ge.s32.totalorder %v610, 1
      %vm675 = vcmp.ge.s32.totalorder %v611, 1
      %vm676 = vcmp.ge.s32.totalorder %v612, 1
      %vm677 = vcmp.ge.s32.totalorder %v613, 1
      %vm678 = vcmp.ge.s32.totalorder %v614, 1
      %vm679 = vcmp.ge.s32.totalorder %v615, 1
      %vm680 = vcmp.ge.s32.totalorder %v616, 1
      %vm681 = vcmp.ge.s32.totalorder %v617, 1
      %vm682 = vcmp.ge.s32.totalorder %v618, 1
      %vm683 = vcmp.ge.s32.totalorder %v619, 1
      %vm684 = vcmp.ge.s32.totalorder %v620, 1
      %vm685 = vcmp.ge.s32.totalorder %v621, 1
      %vm686 = vcmp.ge.s32.totalorder %v622, 1
      %vm687 = vcmp.ge.s32.totalorder %v623, 1
      %vm688 = vcmp.ge.s32.totalorder %v624, 1
      %vm689 = vcmp.ge.s32.totalorder %v625, 1
      %vm690 = vcmp.ge.s32.totalorder %v626, 1
      %vm691 = vcmp.ge.s32.totalorder %v627, 1
      %vm692 = vcmp.ge.s32.totalorder %v628, 1
      %vm693 = vcmp.ge.s32.totalorder %v629, 1
      %vm694 = vcmp.ge.s32.totalorder %v630, 1
      %vm695 = vcmp.ge.s32.totalorder %v631, 1
      %vm696 = vcmp.ge.s32.totalorder %v632, 1
      %vm697 = vcmp.ge.s32.totalorder %v633, 1
      %vm698 = vcmp.ge.s32.totalorder %v634, 1
      %vm699 = vcmp.ge.s32.totalorder %v635, 1
      %vm700 = vcmp.ge.s32.totalorder %v636, 1
      %vm701 = vcmp.ge.s32.totalorder %v637, 1
      %vm702 = vcmp.ge.s32.totalorder %v638, 1
      %vm703 = vcmp.ge.s32.totalorder %v639, 1
      %vm704 = vcmp.ge.s32.totalorder %v640, 1
      %vm705 = vcmp.ge.s32.totalorder %v641, 1
      %vm706 = vcmp.ge.s32.totalorder %v642, 1
      %vm707 = vcmp.ge.s32.totalorder %v643, 1
      %vm708 = vcmp.ge.s32.totalorder %v644, 1
      %vm709 = vcmp.ge.s32.totalorder %v645, 1
      %vm710 = vcmp.ge.s32.totalorder %v646, 1
      %vm711 = vcmp.ge.s32.totalorder %v647, 1
      %vm712 = vcmp.ge.s32.totalorder %v648, 1
      %vm713 = vcmp.ge.s32.totalorder %v649, 1
      %vm714 = vcmp.ge.s32.totalorder %v650, 1
      %vm715 = vcmp.ge.s32.totalorder %v651, 1
      %vm716 = vcmp.ge.s32.totalorder %v652, 1
      %vm717 = vcmp.ge.s32.totalorder %v653, 1
      %vm718 = vcmp.ge.s32.totalorder %v654, 1
      %vm719 = vcmp.ge.s32.totalorder %v655, 1
      %vm720 = vcmp.ge.s32.totalorder %v656, 1
      %vm721 = vcmp.ge.s32.totalorder %v657, 1
      %vm722 = vcmp.ge.s32.totalorder %v658, 1
      %vm723 = vcmp.ge.s32.totalorder %v659, 1
      %vm724 = vcmp.ge.s32.totalorder %v660, 1
      %v725 = vrot.slane %v532, 7
      %v726 = vrot.slane %v533, 7
      %v727 = vrot.slane %v534, 7
      %v728 = vrot.slane %v535, 7
      %v729 = vrot.slane %v536, 7
      %v730 = vrot.slane %v537, 7
      %v731 = vrot.slane %v538, 7
      %v732 = vrot.slane %v539, 7
      %v733 = vrot.slane %v540, 7
      %v734 = vrot.slane %v541, 7
      %v735 = vrot.slane %v542, 7
      %v736 = vrot.slane %v543, 7
      %v737 = vrot.slane %v544, 7
      %v738 = vrot.slane %v545, 7
      %v739 = vrot.slane %v546, 7
      %v740 = vrot.slane %v547, 7
      %v741 = vrot.slane %v548, 7
      %v742 = vrot.slane %v549, 7
      %v743 = vrot.slane %v550, 7
      %v744 = vrot.slane %v551, 7
      %v745 = vrot.slane %v552, 7
      %v746 = vrot.slane %v553, 7
      %v747 = vrot.slane %v554, 7
      %v748 = vrot.slane %v555, 7
      %v749 = vrot.slane %v556, 7
      %v750 = vrot.slane %v557, 7
      %v751 = vrot.slane %v558, 7
      %v752 = vrot.slane %v559, 7
      %v753 = vrot.slane %v560, 7
      %v754 = vrot.slane %v561, 7
      %v755 = vrot.slane %v562, 7
      %v756 = vrot.slane %v563, 7
      %v757 = vrot.slane %v564, 7
      %v758 = vrot.slane %v565, 7
      %v759 = vrot.slane %v566, 7
      %v760 = vrot.slane %v567, 7
      %v761 = vrot.slane %v568, 7
      %v762 = vrot.slane %v569, 7
      %v763 = vrot.slane %v570, 7
      %v764 = vrot.slane %v571, 7
      %v765 = vrot.slane %v572, 7
      %v766 = vrot.slane %v573, 7
      %v767 = vrot.slane %v574, 7
      %v768 = vrot.slane %v575, 7
      %v769 = vrot.slane %v576, 7
      %v770 = vrot.slane %v577, 7
      %v771 = vrot.slane %v578, 7
      %v772 = vrot.slane %v579, 7
      %v773 = vrot.slane %v580, 7
      %v774 = vrot.slane %v581, 7
      %v775 = vrot.slane %v582, 7
      %v776 = vrot.slane %v583, 7
      %v777 = vrot.slane %v584, 7
      %v778 = vrot.slane %v585, 7
      %v779 = vrot.slane %v586, 7
      %v780 = vrot.slane %v587, 7
      %v781 = vrot.slane %v588, 7
      %v782 = vrot.slane %v589, 7
      %v783 = vrot.slane %v590, 7
      %v784 = vrot.slane %v591, 7
      %v785 = vrot.slane %v592, 7
      %v786 = vrot.slane %v593, 7
      %v787 = vrot.slane %v594, 7
      %v788 = vrot.slane %v595, 7
      %vm789 = vcmp.lt.s32.totalorder %v597, 1
      %v790 = vsel %vm789, %v787, %v788
      %v791 = vsel %vm789, %v786, %v787
      %v792 = vsel %vm789, %v785, %v786
      %v793 = vsel %vm789, %v784, %v785
      %v794 = vsel %vm789, %v783, %v784
      %v795 = vsel %vm789, %v782, %v783
      %v796 = vsel %vm789, %v781, %v782
      %v797 = vsel %vm789, %v780, %v781
      %v798 = vsel %vm789, %v779, %v780
      %v799 = vsel %vm789, %v778, %v779
      %v800 = vsel %vm789, %v777, %v778
      %v801 = vsel %vm789, %v776, %v777
      %v802 = vsel %vm789, %v775, %v776
      %v803 = vsel %vm789, %v774, %v775
      %v804 = vsel %vm789, %v773, %v774
      %v805 = vsel %vm789, %v772, %v773
      %v806 = vsel %vm789, %v771, %v772
      %v807 = vsel %vm789, %v770, %v771
      %v808 = vsel %vm789, %v769, %v770
      %v809 = vsel %vm789, %v768, %v769
      %v810 = vsel %vm789, %v767, %v768
      %v811 = vsel %vm789, %v766, %v767
      %v812 = vsel %vm789, %v765, %v766
      %v813 = vsel %vm789, %v764, %v765
      %v814 = vsel %vm789, %v763, %v764
      %v815 = vsel %vm789, %v762, %v763
      %v816 = vsel %vm789, %v761, %v762
      %v817 = vsel %vm789, %v760, %v761
      %v818 = vsel %vm789, %v759, %v760
      %v819 = vsel %vm789, %v758, %v759
      %v820 = vsel %vm789, %v757, %v758
      %v821 = vsel %vm789, %v756, %v757
      %v822 = vsel %vm789, %v755, %v756
      %v823 = vsel %vm789, %v754, %v755
      %v824 = vsel %vm789, %v753, %v754
      %v825 = vsel %vm789, %v752, %v753
      %v826 = vsel %vm789, %v751, %v752
      %v827 = vsel %vm789, %v750, %v751
      %v828 = vsel %vm789, %v749, %v750
      %v829 = vsel %vm789, %v748, %v749
      %v830 = vsel %vm789, %v747, %v748
      %v831 = vsel %vm789, %v746, %v747
      %v832 = vsel %vm789, %v745, %v746
      %v833 = vsel %vm789, %v744, %v745
      %v834 = vsel %vm789, %v743, %v744
      %v835 = vsel %vm789, %v742, %v743
      %v836 = vsel %vm789, %v741, %v742
      %v837 = vsel %vm789, %v740, %v741
      %v838 = vsel %vm789, %v739, %v740
      %v839 = vsel %vm789, %v738, %v739
      %v840 = vsel %vm789, %v737, %v738
      %v841 = vsel %vm789, %v736, %v737
      %v842 = vsel %vm789, %v735, %v736
      %v843 = vsel %vm789, %v734, %v735
      %v844 = vsel %vm789, %v733, %v734
      %v845 = vsel %vm789, %v732, %v733
      %v846 = vsel %vm789, %v731, %v732
      %v847 = vsel %vm789, %v730, %v731
      %v848 = vsel %vm789, %v729, %v730
      %v849 = vsel %vm789, %v728, %v729
      %v850 = vsel %vm789, %v727, %v728
      %v851 = vsel %vm789, %v726, %v727
      %v852 = vsel %vm789, %v725, %v726
      %v853 = vsel %vm789, %v788, %v725
      %v854 = vsel %vm661, %v853, 0.0
      %v855 = vsel %vm662, %v852, 0.0
      %v856 = vsel %vm663, %v851, 0.0
      %v857 = vsel %vm664, %v850, 0.0
      %v858 = vsel %vm665, %v849, 0.0
      %v859 = vsel %vm666, %v848, 0.0
      %v860 = vsel %vm667, %v847, 0.0
      %v861 = vsel %vm668, %v846, 0.0
      %v862 = vsel %vm669, %v845, 0.0
      %v863 = vsel %vm670, %v844, 0.0
      %v864 = vsel %vm671, %v843, 0.0
      %v865 = vsel %vm672, %v842, 0.0
      %v866 = vsel %vm673, %v841, 0.0
      %v867 = vsel %vm674, %v840, 0.0
      %v868 = vsel %vm675, %v839, 0.0
      %v869 = vsel %vm676, %v838, 0.0
      %v870 = vsel %vm677, %v837, 0.0
      %v871 = vsel %vm678, %v836, 0.0
      %v872 = vsel %vm679, %v835, 0.0
      %v873 = vsel %vm680, %v834, 0.0
      %v874 = vsel %vm681, %v833, 0.0
      %v875 = vsel %vm682, %v832, 0.0
      %v876 = vsel %vm683, %v831, 0.0
      %v877 = vsel %vm684, %v830, 0.0
      %v878 = vsel %vm685, %v829, 0.0
      %v879 = vsel %vm686, %v828, 0.0
      %v880 = vsel %vm687, %v827, 0.0
      %v881 = vsel %vm688, %v826, 0.0
      %v882 = vsel %vm689, %v825, 0.0
      %v883 = vsel %vm690, %v824, 0.0
      %v884 = vsel %vm691, %v823, 0.0
      %v885 = vsel %vm692, %v822, 0.0
      %v886 = vsel %vm693, %v821, 0.0
      %v887 = vsel %vm694, %v820, 0.0
      %v888 = vsel %vm695, %v819, 0.0
      %v889 = vsel %vm696, %v818, 0.0
      %v890 = vsel %vm697, %v817, 0.0
      %v891 = vsel %vm698, %v816, 0.0
      %v892 = vsel %vm699, %v815, 0.0
      %v893 = vsel %vm700, %v814, 0.0
      %v894 = vsel %vm701, %v813, 0.0
      %v895 = vsel %vm702, %v812, 0.0
      %v896 = vsel %vm703, %v811, 0.0
      %v897 = vsel %vm704, %v810, 0.0
      %v898 = vsel %vm705, %v809, 0.0
      %v899 = vsel %vm706, %v808, 0.0
      %v900 = vsel %vm707, %v807, 0.0
      %v901 = vsel %vm708, %v806, 0.0
      %v902 = vsel %vm709, %v805, 0.0
      %v903 = vsel %vm710, %v804, 0.0
      %v904 = vsel %vm711, %v803, 0.0
      %v905 = vsel %vm712, %v802, 0.0
      %v906 = vsel %vm713, %v801, 0.0
      %v907 = vsel %vm714, %v800, 0.0
      %v908 = vsel %vm715, %v799, 0.0
      %v909 = vsel %vm716, %v798, 0.0
      %v910 = vsel %vm717, %v797, 0.0
      %v911 = vsel %vm718, %v796, 0.0
      %v912 = vsel %vm719, %v795, 0.0
      %v913 = vsel %vm720, %v794, 0.0
      %v914 = vsel %vm721, %v793, 0.0
      %v915 = vsel %vm722, %v792, 0.0
      %v916 = vsel %vm723, %v791, 0.0
      %v917 = vsel %vm724, %v790, 0.0
      %vm918 = vcmp.le.s32.totalorder %v597, 510
      %vm919 = vcmp.le.s32.totalorder %v598, 510
      %vm920 = vcmp.le.s32.totalorder %v599, 510
      %vm921 = vcmp.le.s32.totalorder %v600, 510
      %vm922 = vcmp.le.s32.totalorder %v601, 510
      %vm923 = vcmp.le.s32.totalorder %v602, 510
      %vm924 = vcmp.le.s32.totalorder %v603, 510
      %vm925 = vcmp.le.s32.totalorder %v604, 510
      %vm926 = vcmp.le.s32.totalorder %v605, 510
      %vm927 = vcmp.le.s32.totalorder %v606, 510
      %vm928 = vcmp.le.s32.totalorder %v607, 510
      %vm929 = vcmp.le.s32.totalorder %v608, 510
      %vm930 = vcmp.le.s32.totalorder %v609, 510
      %vm931 = vcmp.le.s32.totalorder %v610, 510
      %vm932 = vcmp.le.s32.totalorder %v611, 510
      %vm933 = vcmp.le.s32.totalorder %v612, 510
      %vm934 = vcmp.le.s32.totalorder %v613, 510
      %vm935 = vcmp.le.s32.totalorder %v614, 510
      %vm936 = vcmp.le.s32.totalorder %v615, 510
      %vm937 = vcmp.le.s32.totalorder %v616, 510
      %vm938 = vcmp.le.s32.totalorder %v617, 510
      %vm939 = vcmp.le.s32.totalorder %v618, 510
      %vm940 = vcmp.le.s32.totalorder %v619, 510
      %vm941 = vcmp.le.s32.totalorder %v620, 510
      %vm942 = vcmp.le.s32.totalorder %v621, 510
      %vm943 = vcmp.le.s32.totalorder %v622, 510
      %vm944 = vcmp.le.s32.totalorder %v623, 510
      %vm945 = vcmp.le.s32.totalorder %v624, 510
      %vm946 = vcmp.le.s32.totalorder %v625, 510
      %vm947 = vcmp.le.s32.totalorder %v626, 510
      %vm948 = vcmp.le.s32.totalorder %v627, 510
      %vm949 = vcmp.le.s32.totalorder %v628, 510
      %vm950 = vcmp.le.s32.totalorder %v629, 510
      %vm951 = vcmp.le.s32.totalorder %v630, 510
      %vm952 = vcmp.le.s32.totalorder %v631, 510
      %vm953 = vcmp.le.s32.totalorder %v632, 510
      %vm954 = vcmp.le.s32.totalorder %v633, 510
      %vm955 = vcmp.le.s32.totalorder %v634, 510
      %vm956 = vcmp.le.s32.totalorder %v635, 510
      %vm957 = vcmp.le.s32.totalorder %v636, 510
      %vm958 = vcmp.le.s32.totalorder %v637, 510
      %vm959 = vcmp.le.s32.totalorder %v638, 510
      %vm960 = vcmp.le.s32.totalorder %v639, 510
      %vm961 = vcmp.le.s32.totalorder %v640, 510
      %vm962 = vcmp.le.s32.totalorder %v641, 510
      %vm963 = vcmp.le.s32.totalorder %v642, 510
      %vm964 = vcmp.le.s32.totalorder %v643, 510
      %vm965 = vcmp.le.s32.totalorder %v644, 510
      %vm966 = vcmp.le.s32.totalorder %v645, 510
      %vm967 = vcmp.le.s32.totalorder %v646, 510
      %vm968 = vcmp.le.s32.totalorder %v647, 510
      %vm969 = vcmp.le.s32.totalorder %v648, 510
      %vm970 = vcmp.le.s32.totalorder %v649, 510
      %vm971 = vcmp.le.s32.totalorder %v650, 510
      %vm972 = vcmp.le.s32.totalorder %v651, 510
      %vm973 = vcmp.le.s32.totalorder %v652, 510
      %vm974 = vcmp.le.s32.totalorder %v653, 510
      %vm975 = vcmp.le.s32.totalorder %v654, 510
      %vm976 = vcmp.le.s32.totalorder %v655, 510
      %vm977 = vcmp.le.s32.totalorder %v656, 510
      %vm978 = vcmp.le.s32.totalorder %v657, 510
      %vm979 = vcmp.le.s32.totalorder %v658, 510
      %vm980 = vcmp.le.s32.totalorder %v659, 510
      %vm981 = vcmp.le.s32.totalorder %v660, 510
      %v982 = vrot.slane %v532, 1
      %v983 = vrot.slane %v533, 1
      %v984 = vrot.slane %v534, 1
      %v985 = vrot.slane %v535, 1
      %v986 = vrot.slane %v536, 1
      %v987 = vrot.slane %v537, 1
      %v988 = vrot.slane %v538, 1
      %v989 = vrot.slane %v539, 1
      %v990 = vrot.slane %v540, 1
      %v991 = vrot.slane %v541, 1
      %v992 = vrot.slane %v542, 1
      %v993 = vrot.slane %v543, 1
      %v994 = vrot.slane %v544, 1
      %v995 = vrot.slane %v545, 1
      %v996 = vrot.slane %v546, 1
      %v997 = vrot.slane %v547, 1
      %v998 = vrot.slane %v548, 1
      %v999 = vrot.slane %v549, 1
      %v1000 = vrot.slane %v550, 1
      %v1001 = vrot.slane %v551, 1
      %v1002 = vrot.slane %v552, 1
      %v1003 = vrot.slane %v553, 1
      %v1004 = vrot.slane %v554, 1
      %v1005 = vrot.slane %v555, 1
      %v1006 = vrot.slane %v556, 1
      %v1007 = vrot.slane %v557, 1
      %v1008 = vrot.slane %v558, 1
      %v1009 = vrot.slane %v559, 1
      %v1010 = vrot.slane %v560, 1
      %v1011 = vrot.slane %v561, 1
      %v1012 = vrot.slane %v562, 1
      %v1013 = vrot.slane %v563, 1
      %v1014 = vrot.slane %v564, 1
      %v1015 = vrot.slane %v565, 1
      %v1016 = vrot.slane %v566, 1
      %v1017 = vrot.slane %v567, 1
      %v1018 = vrot.slane %v568, 1
      %v1019 = vrot.slane %v569, 1
      %v1020 = vrot.slane %v570, 1
      %v1021 = vrot.slane %v571, 1
      %v1022 = vrot.slane %v572, 1
      %v1023 = vrot.slane %v573, 1
      %v1024 = vrot.slane %v574, 1
      %v1025 = vrot.slane %v575, 1
      %v1026 = vrot.slane %v576, 1
      %v1027 = vrot.slane %v577, 1
      %v1028 = vrot.slane %v578, 1
      %v1029 = vrot.slane %v579, 1
      %v1030 = vrot.slane %v580, 1
      %v1031 = vrot.slane %v581, 1
      %v1032 = vrot.slane %v582, 1
      %v1033 = vrot.slane %v583, 1
      %v1034 = vrot.slane %v584, 1
      %v1035 = vrot.slane %v585, 1
      %v1036 = vrot.slane %v586, 1
      %v1037 = vrot.slane %v587, 1
      %v1038 = vrot.slane %v588, 1
      %v1039 = vrot.slane %v589, 1
      %v1040 = vrot.slane %v590, 1
      %v1041 = vrot.slane %v591, 1
      %v1042 = vrot.slane %v592, 1
      %v1043 = vrot.slane %v593, 1
      %v1044 = vrot.slane %v594, 1
      %v1045 = vrot.slane %v595, 1
      %vm1046 = vcmp.lt.s32.totalorder %v597, 7
      %v1047 = vsel %vm1046, %v1044, %v1045
      %v1048 = vsel %vm1046, %v1043, %v1044
      %v1049 = vsel %vm1046, %v1042, %v1043
      %v1050 = vsel %vm1046, %v1041, %v1042
      %v1051 = vsel %vm1046, %v1040, %v1041
      %v1052 = vsel %vm1046, %v1039, %v1040
      %v1053 = vsel %vm1046, %v1038, %v1039
      %v1054 = vsel %vm1046, %v1037, %v1038
      %v1055 = vsel %vm1046, %v1036, %v1037
      %v1056 = vsel %vm1046, %v1035, %v1036
      %v1057 = vsel %vm1046, %v1034, %v1035
      %v1058 = vsel %vm1046, %v1033, %v1034
      %v1059 = vsel %vm1046, %v1032, %v1033
      %v1060 = vsel %vm1046, %v1031, %v1032
      %v1061 = vsel %vm1046, %v1030, %v1031
      %v1062 = vsel %vm1046, %v1029, %v1030
      %v1063 = vsel %vm1046, %v1028, %v1029
      %v1064 = vsel %vm1046, %v1027, %v1028
      %v1065 = vsel %vm1046, %v1026, %v1027
      %v1066 = vsel %vm1046, %v1025, %v1026
      %v1067 = vsel %vm1046, %v1024, %v1025
      %v1068 = vsel %vm1046, %v1023, %v1024
      %v1069 = vsel %vm1046, %v1022, %v1023
      %v1070 = vsel %vm1046, %v1021, %v1022
      %v1071 = vsel %vm1046, %v1020, %v1021
      %v1072 = vsel %vm1046, %v1019, %v1020
      %v1073 = vsel %vm1046, %v1018, %v1019
      %v1074 = vsel %vm1046, %v1017, %v1018
      %v1075 = vsel %vm1046, %v1016, %v1017
      %v1076 = vsel %vm1046, %v1015, %v1016
      %v1077 = vsel %vm1046, %v1014, %v1015
      %v1078 = vsel %vm1046, %v1013, %v1014
      %v1079 = vsel %vm1046, %v1012, %v1013
      %v1080 = vsel %vm1046, %v1011, %v1012
      %v1081 = vsel %vm1046, %v1010, %v1011
      %v1082 = vsel %vm1046, %v1009, %v1010
      %v1083 = vsel %vm1046, %v1008, %v1009
      %v1084 = vsel %vm1046, %v1007, %v1008
      %v1085 = vsel %vm1046, %v1006, %v1007
      %v1086 = vsel %vm1046, %v1005, %v1006
      %v1087 = vsel %vm1046, %v1004, %v1005
      %v1088 = vsel %vm1046, %v1003, %v1004
      %v1089 = vsel %vm1046, %v1002, %v1003
      %v1090 = vsel %vm1046, %v1001, %v1002
      %v1091 = vsel %vm1046, %v1000, %v1001
      %v1092 = vsel %vm1046, %v999, %v1000
      %v1093 = vsel %vm1046, %v998, %v999
      %v1094 = vsel %vm1046, %v997, %v998
      %v1095 = vsel %vm1046, %v996, %v997
      %v1096 = vsel %vm1046, %v995, %v996
      %v1097 = vsel %vm1046, %v994, %v995
      %v1098 = vsel %vm1046, %v993, %v994
      %v1099 = vsel %vm1046, %v992, %v993
      %v1100 = vsel %vm1046, %v991, %v992
      %v1101 = vsel %vm1046, %v990, %v991
      %v1102 = vsel %vm1046, %v989, %v990
      %v1103 = vsel %vm1046, %v988, %v989
      %v1104 = vsel %vm1046, %v987, %v988
      %v1105 = vsel %vm1046, %v986, %v987
      %v1106 = vsel %vm1046, %v985, %v986
      %v1107 = vsel %vm1046, %v984, %v985
      %v1108 = vsel %vm1046, %v983, %v984
      %v1109 = vsel %vm1046, %v982, %v983
      %v1110 = vsel %vm1046, %v1045, %v982
      %v1111 = vsel %vm918, %v1109, 0.0
      %v1112 = vsel %vm919, %v1108, 0.0
      %v1113 = vsel %vm920, %v1107, 0.0
      %v1114 = vsel %vm921, %v1106, 0.0
      %v1115 = vsel %vm922, %v1105, 0.0
      %v1116 = vsel %vm923, %v1104, 0.0
      %v1117 = vsel %vm924, %v1103, 0.0
      %v1118 = vsel %vm925, %v1102, 0.0
      %v1119 = vsel %vm926, %v1101, 0.0
      %v1120 = vsel %vm927, %v1100, 0.0
      %v1121 = vsel %vm928, %v1099, 0.0
      %v1122 = vsel %vm929, %v1098, 0.0
      %v1123 = vsel %vm930, %v1097, 0.0
      %v1124 = vsel %vm931, %v1096, 0.0
      %v1125 = vsel %vm932, %v1095, 0.0
      %v1126 = vsel %vm933, %v1094, 0.0
      %v1127 = vsel %vm934, %v1093, 0.0
      %v1128 = vsel %vm935, %v1092, 0.0
      %v1129 = vsel %vm936, %v1091, 0.0
      %v1130 = vsel %vm937, %v1090, 0.0
      %v1131 = vsel %vm938, %v1089, 0.0
      %v1132 = vsel %vm939, %v1088, 0.0
      %v1133 = vsel %vm940, %v1087, 0.0
      %v1134 = vsel %vm941, %v1086, 0.0
      %v1135 = vsel %vm942, %v1085, 0.0
      %v1136 = vsel %vm943, %v1084, 0.0
      %v1137 = vsel %vm944, %v1083, 0.0
      %v1138 = vsel %vm945, %v1082, 0.0
      %v1139 = vsel %vm946, %v1081, 0.0
      %v1140 = vsel %vm947, %v1080, 0.0
      %v1141 = vsel %vm948, %v1079, 0.0
      %v1142 = vsel %vm949, %v1078, 0.0
      %v1143 = vsel %vm950, %v1077, 0.0
      %v1144 = vsel %vm951, %v1076, 0.0
      %v1145 = vsel %vm952, %v1075, 0.0
      %v1146 = vsel %vm953, %v1074, 0.0
      %v1147 = vsel %vm954, %v1073, 0.0
      %v1148 = vsel %vm955, %v1072, 0.0
      %v1149 = vsel %vm956, %v1071, 0.0
      %v1150 = vsel %vm957, %v1070, 0.0
      %v1151 = vsel %vm958, %v1069, 0.0
      %v1152 = vsel %vm959, %v1068, 0.0
      %v1153 = vsel %vm960, %v1067, 0.0
      %v1154 = vsel %vm961, %v1066, 0.0
      %v1155 = vsel %vm962, %v1065, 0.0
      %v1156 = vsel %vm963, %v1064, 0.0
      %v1157 = vsel %vm964, %v1063, 0.0
      %v1158 = vsel %vm965, %v1062, 0.0
      %v1159 = vsel %vm966, %v1061, 0.0
      %v1160 = vsel %vm967, %v1060, 0.0
      %v1161 = vsel %vm968, %v1059, 0.0
      %v1162 = vsel %vm969, %v1058, 0.0
      %v1163 = vsel %vm970, %v1057, 0.0
      %v1164 = vsel %vm971, %v1056, 0.0
      %v1165 = vsel %vm972, %v1055, 0.0
      %v1166 = vsel %vm973, %v1054, 0.0
      %v1167 = vsel %vm974, %v1053, 0.0
      %v1168 = vsel %vm975, %v1052, 0.0
      %v1169 = vsel %vm976, %v1051, 0.0
      %v1170 = vsel %vm977, %v1050, 0.0
      %v1171 = vsel %vm978, %v1049, 0.0
      %v1172 = vsel %vm979, %v1048, 0.0
      %v1173 = vsel %vm980, %v1047, 0.0
      %v1174 = vsel %vm981, %v1110, 0.0
      %v1175 = vpack.c.bf16 %v855, %v854
      %v1176 = vpack.c.bf16 %v533, %v532
      %v1177 = vpack.c.bf16 %v1112, %v1111
      %v1178 = vpack.c.bf16 %v857, %v856
      %v1179 = vpack.c.bf16 %v535, %v534
      %v1180 = vpack.c.bf16 %v1114, %v1113
      %v1181 = vpack.c.bf16 %v859, %v858
      %v1182 = vpack.c.bf16 %v537, %v536
      %v1183 = vpack.c.bf16 %v1116, %v1115
      %v1184 = vpack.c.bf16 %v861, %v860
      %v1185 = vpack.c.bf16 %v539, %v538
      %v1186 = vpack.c.bf16 %v1118, %v1117
      %v1187 = vpack.c.bf16 %v863, %v862
      %v1188 = vpack.c.bf16 %v541, %v540
      %v1189 = vpack.c.bf16 %v1120, %v1119
      %v1190 = vpack.c.bf16 %v865, %v864
      %v1191 = vpack.c.bf16 %v543, %v542
      %v1192 = vpack.c.bf16 %v1122, %v1121
      %v1193 = vpack.c.bf16 %v867, %v866
      %v1194 = vpack.c.bf16 %v545, %v544
      %v1195 = vpack.c.bf16 %v1124, %v1123
      %v1196 = vpack.c.bf16 %v869, %v868
      %v1197 = vpack.c.bf16 %v547, %v546
      %v1198 = vpack.c.bf16 %v1126, %v1125
      %v1199 = vpack.c.bf16 %v871, %v870
      %v1200 = vpack.c.bf16 %v549, %v548
      %v1201 = vpack.c.bf16 %v1128, %v1127
      %v1202 = vpack.c.bf16 %v873, %v872
      %v1203 = vpack.c.bf16 %v551, %v550
      %v1204 = vpack.c.bf16 %v1130, %v1129
      %v1205 = vpack.c.bf16 %v875, %v874
      %v1206 = vpack.c.bf16 %v553, %v552
      %v1207 = vpack.c.bf16 %v1132, %v1131
      %v1208 = vpack.c.bf16 %v877, %v876
      %v1209 = vpack.c.bf16 %v555, %v554
      %v1210 = vpack.c.bf16 %v1134, %v1133
      %v1211 = vpack.c.bf16 %v879, %v878
      %v1212 = vpack.c.bf16 %v557, %v556
      %v1213 = vpack.c.bf16 %v1136, %v1135
      %v1214 = vpack.c.bf16 %v881, %v880
      %v1215 = vpack.c.bf16 %v559, %v558
      %v1216 = vpack.c.bf16 %v1138, %v1137
      %v1217 = vpack.c.bf16 %v883, %v882
      %v1218 = vpack.c.bf16 %v561, %v560
      %v1219 = vpack.c.bf16 %v1140, %v1139
      %v1220 = vpack.c.bf16 %v885, %v884
      %v1221 = vpack.c.bf16 %v563, %v562
      %v1222 = vpack.c.bf16 %v1142, %v1141
      %v1223 = vpack.c.bf16 %v887, %v886
      %v1224 = vpack.c.bf16 %v565, %v564
      %v1225 = vpack.c.bf16 %v1144, %v1143
      %v1226 = vpack.c.bf16 %v889, %v888
      %v1227 = vpack.c.bf16 %v567, %v566
      %v1228 = vpack.c.bf16 %v1146, %v1145
      %v1229 = vpack.c.bf16 %v891, %v890
      %v1230 = vpack.c.bf16 %v569, %v568
      %v1231 = vpack.c.bf16 %v1148, %v1147
      %v1232 = vpack.c.bf16 %v893, %v892
      %v1233 = vpack.c.bf16 %v571, %v570
      %v1234 = vpack.c.bf16 %v1150, %v1149
      %v1235 = vpack.c.bf16 %v895, %v894
      %v1236 = vpack.c.bf16 %v573, %v572
      %v1237 = vpack.c.bf16 %v1152, %v1151
      %v1238 = vpack.c.bf16 %v897, %v896
      %v1239 = vpack.c.bf16 %v575, %v574
      %v1240 = vpack.c.bf16 %v1154, %v1153
      %v1241 = vpack.c.bf16 %v899, %v898
      %v1242 = vpack.c.bf16 %v577, %v576
      %v1243 = vpack.c.bf16 %v1156, %v1155
      %v1244 = vpack.c.bf16 %v901, %v900
      %v1245 = vpack.c.bf16 %v579, %v578
      %v1246 = vpack.c.bf16 %v1158, %v1157
      %v1247 = vpack.c.bf16 %v903, %v902
      %v1248 = vpack.c.bf16 %v581, %v580
      %v1249 = vpack.c.bf16 %v1160, %v1159
      %v1250 = vpack.c.bf16 %v905, %v904
      %v1251 = vpack.c.bf16 %v583, %v582
      %v1252 = vpack.c.bf16 %v1162, %v1161
      %v1253 = vpack.c.bf16 %v907, %v906
      %v1254 = vpack.c.bf16 %v585, %v584
      %v1255 = vpack.c.bf16 %v1164, %v1163
      %v1256 = vpack.c.bf16 %v909, %v908
      %v1257 = vpack.c.bf16 %v587, %v586
      %v1258 = vpack.c.bf16 %v1166, %v1165
      %v1259 = vpack.c.bf16 %v911, %v910
      %v1260 = vpack.c.bf16 %v589, %v588
      %v1261 = vpack.c.bf16 %v1168, %v1167
      %v1262 = vpack.c.bf16 %v913, %v912
      %v1263 = vpack.c.bf16 %v591, %v590
      %v1264 = vpack.c.bf16 %v1170, %v1169
      %v1265 = vpack.c.bf16 %v915, %v914
      %v1266 = vpack.c.bf16 %v593, %v592
      %v1267 = vpack.c.bf16 %v1172, %v1171
      %v1268 = vpack.c.bf16 %v917, %v916
      %v1269 = vpack.c.bf16 %v595, %v594
      %v1270 = vpack.c.bf16 %v1174, %v1173
      %v1271 = vld [vmem:[%s3] sm:$0xf]
      %v1272 = vld [vmem:[%s3 + $0x4] sm:$0xf]
      %v1273 = vld [vmem:[%s3 + $0x8] sm:$0xf]
      %v1274 = vld [vmem:[%s3 + $0xc] sm:$0xf]
      %v1275 = vld [vmem:[%s3 + $0x10] sm:$0xf]
      %v1276 = vld [vmem:[%s3 + $0x14] sm:$0xf]
      %v1277 = vld [vmem:[%s3 + $0x18] sm:$0xf]
      %v1278 = vld [vmem:[%s3 + $0x1c] sm:$0xf]
      %v1279 = vld [vmem:[%s3 + $0x20] sm:$0xf]
      %v1280 = vld [vmem:[%s3 + $0x24] sm:$0xf]
      %v1281 = vld [vmem:[%s3 + $0x28] sm:$0xf]
      %v1282 = vld [vmem:[%s3 + $0x2c] sm:$0xf]
      %v1283 = vld [vmem:[%s3 + $0x30] sm:$0xf]
      %v1284 = vld [vmem:[%s3 + $0x34] sm:$0xf]
      %v1285 = vld [vmem:[%s3 + $0x38] sm:$0xf]
      %v1286 = vld [vmem:[%s3 + $0x3c] sm:$0xf]
      %v1287 = vld [vmem:[%s3 + $0x40] sm:$0xf]
      %v1288 = vld [vmem:[%s3 + $0x44] sm:$0xf]
      %v1289 = vld [vmem:[%s3 + $0x48] sm:$0xf]
      %v1290 = vld [vmem:[%s3 + $0x4c] sm:$0xf]
      %v1291 = vld [vmem:[%s3 + $0x50] sm:$0xf]
      %v1292 = vld [vmem:[%s3 + $0x54] sm:$0xf]
      %v1293 = vld [vmem:[%s3 + $0x58] sm:$0xf]
      %v1294 = vld [vmem:[%s3 + $0x5c] sm:$0xf]
      %v1295 = vld [vmem:[%s3 + $0x60] sm:$0xf]
      %v1296 = vld [vmem:[%s3 + $0x64] sm:$0xf]
      %v1297 = vld [vmem:[%s3 + $0x68] sm:$0xf]
      %v1298 = vld [vmem:[%s3 + $0x6c] sm:$0xf]
      %v1299 = vld [vmem:[%s3 + $0x70] sm:$0xf]
      %v1300 = vld [vmem:[%s3 + $0x74] sm:$0xf]
      %v1301 = vld [vmem:[%s3 + $0x78] sm:$0xf]
      %v1302 = vld [vmem:[%s3 + $0x7c] sm:$0xf]
      %v1303 = vld [vmem:[%s3 + $0x80] sm:$0xf]
      %v1304 = vld [vmem:[%s3 + $0x84] sm:$0xf]
      %v1305 = vld [vmem:[%s3 + $0x88] sm:$0xf]
      %v1306 = vld [vmem:[%s3 + $0x8c] sm:$0xf]
      %v1307 = vld [vmem:[%s3 + $0x90] sm:$0xf]
      %v1308 = vld [vmem:[%s3 + $0x94] sm:$0xf]
      %v1309 = vld [vmem:[%s3 + $0x98] sm:$0xf]
      %v1310 = vld [vmem:[%s3 + $0x9c] sm:$0xf]
      %v1311 = vld [vmem:[%s3 + $0xa0] sm:$0xf]
      %v1312 = vld [vmem:[%s3 + $0xa4] sm:$0xf]
      %v1313 = vld [vmem:[%s3 + $0xa8] sm:$0xf]
      %v1314 = vld [vmem:[%s3 + $0xac] sm:$0xf]
      %v1315 = vld [vmem:[%s3 + $0xb0] sm:$0xf]
      %v1316 = vld [vmem:[%s3 + $0xb4] sm:$0xf]
      %v1317 = vld [vmem:[%s3 + $0xb8] sm:$0xf]
      %v1318 = vld [vmem:[%s3 + $0xbc] sm:$0xf]
      %v1367 = vunpack.c.l.b16 %v1271
      %v1368 = vunpack.c.l.b16 %v1272
      %v1369 = vunpack.c.l.b16 %v1273
      %v1370 = vunpack.c.l.b16 %v1274
      %v1371 = vunpack.c.l.b16 %v1275
      %v1372 = vunpack.c.l.b16 %v1276
      %v1373 = vunpack.c.l.b16 %v1277
      %v1374 = vunpack.c.l.b16 %v1278
      %v1375 = vunpack.c.l.b16 %v1279
      %v1376 = vunpack.c.l.b16 %v1280
      %v1377 = vunpack.c.l.b16 %v1281
      %v1378 = vunpack.c.l.b16 %v1282
      %v1379 = vunpack.c.l.b16 %v1283
      %v1380 = vunpack.c.l.b16 %v1284
      %v1381 = vunpack.c.l.b16 %v1285
      %v1382 = vunpack.c.l.b16 %v1286
      %v1383 = vunpack.c.l.b16 %v1287
      %v1384 = vunpack.c.l.b16 %v1288
      %v1385 = vunpack.c.l.b16 %v1289
      %v1386 = vunpack.c.l.b16 %v1290
      %v1387 = vunpack.c.l.b16 %v1291
      %v1388 = vunpack.c.l.b16 %v1292
      %v1389 = vunpack.c.l.b16 %v1293
      %v1390 = vunpack.c.l.b16 %v1294
      %v1391 = vunpack.c.l.b16 %v1295
      %v1392 = vunpack.c.l.b16 %v1296
      %v1393 = vunpack.c.l.b16 %v1297
      %v1394 = vunpack.c.l.b16 %v1298
      %v1395 = vunpack.c.l.b16 %v1299
      %v1396 = vunpack.c.l.b16 %v1300
      %v1397 = vunpack.c.l.b16 %v1301
      %v1398 = vunpack.c.l.b16 %v1302
      %v1399 = vunpack.c.l.b16 %v1303
      %v1400 = vunpack.c.l.b16 %v1304
      %v1401 = vunpack.c.l.b16 %v1305
      %v1402 = vunpack.c.l.b16 %v1306
      %v1403 = vunpack.c.l.b16 %v1307
      %v1404 = vunpack.c.l.b16 %v1308
      %v1405 = vunpack.c.l.b16 %v1309
      %v1406 = vunpack.c.l.b16 %v1310
      %v1407 = vunpack.c.l.b16 %v1311
      %v1408 = vunpack.c.l.b16 %v1312
      %v1409 = vunpack.c.l.b16 %v1313
      %v1410 = vunpack.c.l.b16 %v1314
      %v1411 = vunpack.c.l.b16 %v1315
      %v1412 = vunpack.c.l.b16 %v1316
      %v1413 = vunpack.c.l.b16 %v1317
      %v1414 = vunpack.c.l.b16 %v1318
      %v1415 = vpack.c.b16 %v1368, %v1367
      %v1416 = vpack.c.b16 %v1370, %v1369
      %v1417 = vpack.c.b16 %v1372, %v1371
      %v1418 = vpack.c.b16 %v1374, %v1373
      %v1419 = vpack.c.b16 %v1376, %v1375
      %v1420 = vpack.c.b16 %v1378, %v1377
      %v1421 = vpack.c.b16 %v1380, %v1379
      %v1422 = vpack.c.b16 %v1382, %v1381
      %v1423 = vpack.c.b16 %v1384, %v1383
      %v1424 = vpack.c.b16 %v1386, %v1385
      %v1425 = vpack.c.b16 %v1388, %v1387
      %v1426 = vpack.c.b16 %v1390, %v1389
      %v1427 = vpack.c.b16 %v1392, %v1391
      %v1428 = vpack.c.b16 %v1394, %v1393
      %v1429 = vpack.c.b16 %v1396, %v1395
      %v1430 = vpack.c.b16 %v1398, %v1397
      %v1431 = vpack.c.b16 %v1400, %v1399
      %v1432 = vpack.c.b16 %v1402, %v1401
      %v1433 = vpack.c.b16 %v1404, %v1403
      %v1434 = vpack.c.b16 %v1406, %v1405
      %v1435 = vpack.c.b16 %v1408, %v1407
      %v1436 = vpack.c.b16 %v1410, %v1409
      %v1437 = vpack.c.b16 %v1412, %v1411
      %v1438 = vpack.c.b16 %v1414, %v1413
      %1463 = vmatprep.subr.bf16.mxu0 0
      %1464 = vmatpush1.bf16.msra.mxu0 %v1415
      %1465 = vmatprep.subr.bf16.mxu0 0
      %1466 = vmatpush1.bf16.msra.mxu0 %v1416
      %1467 = vmatprep.subr.bf16.mxu0 0
      %1468 = vmatpush1.bf16.msra.mxu0 %v1417
      %1469 = vmatprep.subr.bf16.mxu0 0
      %1470 = vmatpush1.bf16.msra.mxu0 %v1418
      %1471 = vmatprep.subr.bf16.mxu0 0
      %1472 = vmatpush1.bf16.msra.mxu0 %v1419
      %1473 = vmatprep.subr.bf16.mxu0 0
      %1474 = vmatpush1.bf16.msra.mxu0 %v1420
      %1475 = vmatprep.subr.bf16.mxu0 0
      %1476 = vmatpush1.bf16.msra.mxu0 %v1421
      %1477 = vmatprep.subr.bf16.mxu0 0
      %1478 = vmatpush1.bf16.msra.mxu0 %v1422
      %1479 = vmatprep.subr.bf16.mxu0 0
      %1480 = vmatpush1.bf16.msra.mxu0 %v1423
      %1481 = vmatprep.subr.bf16.mxu0 0
      %1482 = vmatpush1.bf16.msra.mxu0 %v1424
      %1483 = vmatprep.subr.bf16.mxu0 0
      %1484 = vmatpush1.bf16.msra.mxu0 %v1425
      %1485 = vmatprep.subr.bf16.mxu0 0
      %1486 = vmatpush1.bf16.msra.mxu0 %v1426
      %1487 = vmatprep.subr.bf16.mxu0 0
      %1488 = vmatpush1.bf16.msra.mxu0 %v1427
      %1489 = vmatprep.subr.bf16.mxu0 0
      %1490 = vmatpush1.bf16.msra.mxu0 %v1428
      %1491 = vmatprep.subr.bf16.mxu0 0
      %1492 = vmatpush1.bf16.msra.mxu0 %v1429
      %1493 = vmatprep.subr.bf16.mxu0 0
      %1494 = vmatpush1.bf16.msra.mxu0 %v1430
      %1495 = vmatprep.mubr.bf16.mxu0 %v1176
      %1496 = vmatmul.mubr.bf16.gmra.mrb[0].mxu0 %v1175
      %v1497 = vpop.f32.mrb[0].mxu0
      %v1498 = vadd.f32 0.0, %v1497
      %v1499 = vpop.f32.mrb[0].mxu0
      %v1500 = vpop.f32.mrb[0].mxu0
      %v1501 = vadd.f32 0.0, %v1500
      %v1502 = vpop.f32.mrb[0].mxu0
      %1503 = vmatprep.mubr.bf16.mxu0 %v1179
      %1504 = vmatmul.mubr.bf16.gmra.mrb[0].mxu0 %v1178
      %v1505 = vpop.f32.mrb[0].mxu0
      %v1506 = vadd.f32 0.0, %v1505
      %v1507 = vpop.f32.mrb[0].mxu0
      %v1508 = vpop.f32.mrb[0].mxu0
      %v1509 = vadd.f32 0.0, %v1508
      %v1510 = vpop.f32.mrb[0].mxu0
      %1511 = vmatprep.mubr.bf16.mxu0 %v1182
      %1512 = vmatmul.mubr.bf16.gmra.mrb[0].mxu0 %v1181
      %v1513 = vpop.f32.mrb[0].mxu0
      %v1514 = vadd.f32 0.0, %v1513
      %v1515 = vpop.f32.mrb[0].mxu0
      %v1516 = vpop.f32.mrb[0].mxu0
      %v1517 = vadd.f32 0.0, %v1516
      %v1518 = vpop.f32.mrb[0].mxu0
      %1519 = vmatprep.mubr.bf16.mxu0 %v1185
      %1520 = vmatmul.mubr.bf16.gmra.mrb[0].mxu0 %v1184
      %v1521 = vpop.f32.mrb[0].mxu0
      %v1522 = vadd.f32 0.0, %v1521
      %v1523 = vpop.f32.mrb[0].mxu0
      %v1524 = vpop.f32.mrb[0].mxu0
      %v1525 = vadd.f32 0.0, %v1524
      %v1526 = vpop.f32.mrb[0].mxu0
      %1527 = vmatprep.mubr.bf16.mxu0 %v1188
      %1528 = vmatmul.mubr.bf16.gmra.mrb[0].mxu0 %v1187
      %v1529 = vpop.f32.mrb[0].mxu0
      %v1530 = vadd.f32 0.0, %v1529
      %v1531 = vpop.f32.mrb[0].mxu0
      %v1532 = vpop.f32.mrb[0].mxu0
      %v1533 = vadd.f32 0.0, %v1532
      %v1534 = vpop.f32.mrb[0].mxu0
      %1535 = vmatprep.mubr.bf16.mxu0 %v1191
      %1536 = vmatmul.mubr.bf16.gmra.mrb[0].mxu0 %v1190
      %v1537 = vpop.f32.mrb[0].mxu0
      %v1538 = vadd.f32 0.0, %v1537
      %v1539 = vpop.f32.mrb[0].mxu0
      %v1540 = vpop.f32.mrb[0].mxu0
      %v1541 = vadd.f32 0.0, %v1540
      %v1542 = vpop.f32.mrb[0].mxu0
      %1543 = vmatprep.mubr.bf16.mxu0 %v1194
      %1544 = vmatmul.mubr.bf16.gmra.mrb[0].mxu0 %v1193
      %v1545 = vpop.f32.mrb[0].mxu0
      %v1546 = vadd.f32 0.0, %v1545
      %v1547 = vpop.f32.mrb[0].mxu0
      %v1548 = vpop.f32.mrb[0].mxu0
      %v1549 = vadd.f32 0.0, %v1548
      %v1550 = vpop.f32.mrb[0].mxu0
      %1551 = vmatprep.mubr.bf16.mxu0 %v1197
      %1552 = vmatmul.mubr.bf16.gmra.mrb[0].mxu0 %v1196
      %v1553 = vpop.f32.mrb[0].mxu0
      %v1554 = vadd.f32 0.0, %v1553
      %v1555 = vpop.f32.mrb[0].mxu0
      %v1556 = vpop.f32.mrb[0].mxu0
      %v1557 = vadd.f32 0.0, %v1556
      %v1558 = vpop.f32.mrb[0].mxu0
      %1559 = vmatprep.mubr.bf16.mxu0 %v1200
      %1560 = vmatmul.mubr.bf16.gmra.mrb[0].mxu0 %v1199
      %v1561 = vpop.f32.mrb[0].mxu0
      %v1562 = vadd.f32 0.0, %v1561
      %v1563 = vpop.f32.mrb[0].mxu0
      %v1564 = vpop.f32.mrb[0].mxu0
      %v1565 = vadd.f32 0.0, %v1564
      %v1566 = vpop.f32.mrb[0].mxu0
      %1567 = vmatprep.mubr.bf16.mxu0 %v1203
      %1568 = vmatmul.mubr.bf16.gmra.mrb[0].mxu0 %v1202
      %v1569 = vpop.f32.mrb[0].mxu0
      %v1570 = vadd.f32 0.0, %v1569
      %v1571 = vpop.f32.mrb[0].mxu0
      %v1572 = vpop.f32.mrb[0].mxu0
      %v1573 = vadd.f32 0.0, %v1572
      %v1574 = vpop.f32.mrb[0].mxu0
      %1575 = vmatprep.mubr.bf16.mxu0 %v1206
      %1576 = vmatmul.mubr.bf16.gmra.mrb[0].mxu0 %v1205
      %v1577 = vpop.f32.mrb[0].mxu0
      %v1578 = vadd.f32 0.0, %v1577
      %v1579 = vpop.f32.mrb[0].mxu0
      %v1580 = vpop.f32.mrb[0].mxu0
      %v1581 = vadd.f32 0.0, %v1580
      %v1582 = vpop.f32.mrb[0].mxu0
      %1583 = vmatprep.mubr.bf16.mxu0 %v1209
      %1584 = vmatmul.mubr.bf16.gmra.mrb[0].mxu0 %v1208
      %v1585 = vpop.f32.mrb[0].mxu0
      %v1586 = vadd.f32 0.0, %v1585
      %v1587 = vpop.f32.mrb[0].mxu0
      %v1588 = vpop.f32.mrb[0].mxu0
      %v1589 = vadd.f32 0.0, %v1588
      %v1590 = vpop.f32.mrb[0].mxu0
      %1591 = vmatprep.mubr.bf16.mxu0 %v1212
      %1592 = vmatmul.mubr.bf16.gmra.mrb[0].mxu0 %v1211
      %v1593 = vpop.f32.mrb[0].mxu0
      %v1594 = vadd.f32 0.0, %v1593
      %v1595 = vpop.f32.mrb[0].mxu0
      %v1596 = vpop.f32.mrb[0].mxu0
      %v1597 = vadd.f32 0.0, %v1596
      %v1598 = vpop.f32.mrb[0].mxu0
      %1599 = vmatprep.mubr.bf16.mxu0 %v1215
      %1600 = vmatmul.mubr.bf16.gmra.mrb[0].mxu0 %v1214
      %v1601 = vpop.f32.mrb[0].mxu0
      %v1602 = vadd.f32 0.0, %v1601
      %v1603 = vpop.f32.mrb[0].mxu0
      %v1604 = vpop.f32.mrb[0].mxu0
      %v1605 = vadd.f32 0.0, %v1604
      %v1606 = vpop.f32.mrb[0].mxu0
      %1607 = vmatprep.mubr.bf16.mxu0 %v1218
      %1608 = vmatmul.mubr.bf16.gmra.mrb[0].mxu0 %v1217
      %v1609 = vpop.f32.mrb[0].mxu0
      %v1610 = vadd.f32 0.0, %v1609
      %v1611 = vpop.f32.mrb[0].mxu0
      %v1612 = vpop.f32.mrb[0].mxu0
      %v1613 = vadd.f32 0.0, %v1612
      %v1614 = vpop.f32.mrb[0].mxu0
      %1615 = vmatprep.mubr.bf16.mxu0 %v1221
      %1616 = vmatmul.mubr.bf16.gmra.mrb[0].mxu0 %v1220
      %v1617 = vpop.f32.mrb[0].mxu0
      %v1618 = vadd.f32 0.0, %v1617
      %v1619 = vpop.f32.mrb[0].mxu0
      %v1620 = vpop.f32.mrb[0].mxu0
      %v1621 = vadd.f32 0.0, %v1620
      %v1622 = vpop.f32.mrb[0].mxu0
      %1623 = vmatprep.mubr.bf16.mxu0 %v1224
      %1624 = vmatmul.mubr.bf16.gmra.mrb[0].mxu0 %v1223
      %v1625 = vpop.f32.mrb[0].mxu0
      %v1626 = vadd.f32 0.0, %v1625
      %v1627 = vpop.f32.mrb[0].mxu0
      %v1628 = vpop.f32.mrb[0].mxu0
      %v1629 = vadd.f32 0.0, %v1628
      %v1630 = vpop.f32.mrb[0].mxu0
      %1631 = vmatprep.mubr.bf16.mxu0 %v1227
      %1632 = vmatmul.mubr.bf16.gmra.mrb[0].mxu0 %v1226
      %v1633 = vpop.f32.mrb[0].mxu0
      %v1634 = vadd.f32 0.0, %v1633
      %v1635 = vpop.f32.mrb[0].mxu0
      %v1636 = vpop.f32.mrb[0].mxu0
      %v1637 = vadd.f32 0.0, %v1636
      %v1638 = vpop.f32.mrb[0].mxu0
      %1639 = vmatprep.mubr.bf16.mxu0 %v1230
      %1640 = vmatmul.mubr.bf16.gmra.mrb[0].mxu0 %v1229
      %v1641 = vpop.f32.mrb[0].mxu0
      %v1642 = vadd.f32 0.0, %v1641
      %v1643 = vpop.f32.mrb[0].mxu0
      %v1644 = vpop.f32.mrb[0].mxu0
      %v1645 = vadd.f32 0.0, %v1644
      %v1646 = vpop.f32.mrb[0].mxu0
      %1647 = vmatprep.mubr.bf16.mxu0 %v1233
      %1648 = vmatmul.mubr.bf16.gmra.mrb[0].mxu0 %v1232
      %v1649 = vpop.f32.mrb[0].mxu0
      %v1650 = vadd.f32 0.0, %v1649
      %v1651 = vpop.f32.mrb[0].mxu0
      %v1652 = vpop.f32.mrb[0].mxu0
      %v1653 = vadd.f32 0.0, %v1652
      %v1654 = vpop.f32.mrb[0].mxu0
      %1655 = vmatprep.mubr.bf16.mxu0 %v1236
      %1656 = vmatmul.mubr.bf16.gmra.mrb[0].mxu0 %v1235
      %v1657 = vpop.f32.mrb[0].mxu0
      %v1658 = vadd.f32 0.0, %v1657
      %v1659 = vpop.f32.mrb[0].mxu0
      %v1660 = vpop.f32.mrb[0].mxu0
      %v1661 = vadd.f32 0.0, %v1660
      %v1662 = vpop.f32.mrb[0].mxu0
      %1663 = vmatprep.mubr.bf16.mxu0 %v1239
      %1664 = vmatmul.mubr.bf16.gmra.mrb[0].mxu0 %v1238
      %v1665 = vpop.f32.mrb[0].mxu0
      %v1666 = vadd.f32 0.0, %v1665
      %v1667 = vpop.f32.mrb[0].mxu0
      %v1668 = vpop.f32.mrb[0].mxu0
      %v1669 = vadd.f32 0.0, %v1668
      %v1670 = vpop.f32.mrb[0].mxu0
      %1671 = vmatprep.mubr.bf16.mxu0 %v1242
      %1672 = vmatmul.mubr.bf16.gmra.mrb[0].mxu0 %v1241
      %v1673 = vpop.f32.mrb[0].mxu0
      %v1674 = vadd.f32 0.0, %v1673
      %v1675 = vpop.f32.mrb[0].mxu0
      %v1676 = vpop.f32.mrb[0].mxu0
      %v1677 = vadd.f32 0.0, %v1676
      %v1678 = vpop.f32.mrb[0].mxu0
      %1679 = vmatprep.mubr.bf16.mxu0 %v1245
      %1680 = vmatmul.mubr.bf16.gmra.mrb[0].mxu0 %v1244
      %v1681 = vpop.f32.mrb[0].mxu0
      %v1682 = vadd.f32 0.0, %v1681
      %v1683 = vpop.f32.mrb[0].mxu0
      %v1684 = vpop.f32.mrb[0].mxu0
      %v1685 = vadd.f32 0.0, %v1684
      %v1686 = vpop.f32.mrb[0].mxu0
      %1687 = vmatprep.mubr.bf16.mxu0 %v1248
      %1688 = vmatmul.mubr.bf16.gmra.mrb[0].mxu0 %v1247
      %v1689 = vpop.f32.mrb[0].mxu0
      %v1690 = vadd.f32 0.0, %v1689
      %v1691 = vpop.f32.mrb[0].mxu0
      %v1692 = vpop.f32.mrb[0].mxu0
      %v1693 = vadd.f32 0.0, %v1692
      %v1694 = vpop.f32.mrb[0].mxu0
      %1695 = vmatprep.mubr.bf16.mxu0 %v1251
      %1696 = vmatmul.mubr.bf16.gmra.mrb[0].mxu0 %v1250
      %v1697 = vpop.f32.mrb[0].mxu0
      %v1698 = vadd.f32 0.0, %v1697
      %v1699 = vpop.f32.mrb[0].mxu0
      %v1700 = vpop.f32.mrb[0].mxu0
      %v1701 = vadd.f32 0.0, %v1700
      %v1702 = vpop.f32.mrb[0].mxu0
      %1703 = vmatprep.mubr.bf16.mxu0 %v1254
      %1704 = vmatmul.mubr.bf16.gmra.mrb[0].mxu0 %v1253
      %v1705 = vpop.f32.mrb[0].mxu0
      %v1706 = vadd.f32 0.0, %v1705
      %v1707 = vpop.f32.mrb[0].mxu0
      %v1708 = vpop.f32.mrb[0].mxu0
      %v1709 = vadd.f32 0.0, %v1708
      %v1710 = vpop.f32.mrb[0].mxu0
      %1711 = vmatprep.mubr.bf16.mxu0 %v1257
      %1712 = vmatmul.mubr.bf16.gmra.mrb[0].mxu0 %v1256
      %v1713 = vpop.f32.mrb[0].mxu0
      %v1714 = vadd.f32 0.0, %v1713
      %v1715 = vpop.f32.mrb[0].mxu0
      %v1716 = vpop.f32.mrb[0].mxu0
      %v1717 = vadd.f32 0.0, %v1716
      %v1718 = vpop.f32.mrb[0].mxu0
      %1719 = vmatprep.mubr.bf16.mxu0 %v1260
      %1720 = vmatmul.mubr.bf16.gmra.mrb[0].mxu0 %v1259
      %v1721 = vpop.f32.mrb[0].mxu0
      %v1722 = vadd.f32 0.0, %v1721
      %v1723 = vpop.f32.mrb[0].mxu0
      %v1724 = vpop.f32.mrb[0].mxu0
      %v1725 = vadd.f32 0.0, %v1724
      %v1726 = vpop.f32.mrb[0].mxu0
      %1727 = vmatprep.mubr.bf16.mxu0 %v1263
      %1728 = vmatmul.mubr.bf16.gmra.mrb[0].mxu0 %v1262
      %v1729 = vpop.f32.mrb[0].mxu0
      %v1730 = vadd.f32 0.0, %v1729
      %v1731 = vpop.f32.mrb[0].mxu0
      %v1732 = vpop.f32.mrb[0].mxu0
      %v1733 = vadd.f32 0.0, %v1732
      %v1734 = vpop.f32.mrb[0].mxu0
      %1735 = vmatprep.mubr.bf16.mxu0 %v1266
      %1736 = vmatmul.mubr.bf16.gmra.mrb[0].mxu0 %v1265
      %v1737 = vpop.f32.mrb[0].mxu0
      %v1738 = vadd.f32 0.0, %v1737
      %v1739 = vpop.f32.mrb[0].mxu0
      %v1740 = vpop.f32.mrb[0].mxu0
      %v1741 = vadd.f32 0.0, %v1740
      %v1742 = vpop.f32.mrb[0].mxu0
      %1743 = vmatprep.mubr.bf16.mxu0 %v1269
      %1744 = vmatmul.mubr.bf16.gmra.mrb[0].mxu0 %v1268
      %v1745 = vpop.f32.mrb[0].mxu0
      %v1746 = vadd.f32 0.0, %v1745
      %v1747 = vpop.f32.mrb[0].mxu0
      %v1748 = vpop.f32.mrb[0].mxu0
      %v1749 = vadd.f32 0.0, %v1748
      %v1750 = vpop.f32.mrb[0].mxu0
      %1751 = vdwg.mxu0
      %1752 = vmatprep.subr.bf16.mxu0 0
      %1753 = vmatpush1.bf16.msra.mxu0 %v1431
      %1754 = vmatprep.subr.bf16.mxu0 0
      %1755 = vmatpush1.bf16.msra.mxu0 %v1432
      %1756 = vmatprep.subr.bf16.mxu0 0
      %1757 = vmatpush1.bf16.msra.mxu0 %v1433
      %1758 = vmatprep.subr.bf16.mxu0 0
      %1759 = vmatpush1.bf16.msra.mxu0 %v1434
      %1760 = vmatprep.subr.bf16.mxu0 0
      %1761 = vmatpush1.bf16.msra.mxu0 %v1435
      %1762 = vmatprep.subr.bf16.mxu0 0
      %1763 = vmatpush1.bf16.msra.mxu0 %v1436
      %1764 = vmatprep.subr.bf16.mxu0 0
      %1765 = vmatpush1.bf16.msra.mxu0 %v1437
      %1766 = vmatprep.subr.bf16.mxu0 0
      %1767 = vmatpush1.bf16.msra.mxu0 %v1438
      %1768 = vmatprep.subr.bf16.mxu0 0
      %1769 = vmatpush1.bf16.msra.mxu0 0
      %1770 = vmatprep.subr.bf16.mxu0 0
      %1771 = vmatpush1.bf16.msra.mxu0 0
      %1772 = vmatprep.subr.bf16.mxu0 0
      %1773 = vmatpush1.bf16.msra.mxu0 0
      %1774 = vmatprep.subr.bf16.mxu0 0
      %1775 = vmatpush1.bf16.msra.mxu0 0
      %1776 = vmatprep.subr.bf16.mxu0 0
      %1777 = vmatpush1.bf16.msra.mxu0 0
      %1778 = vmatprep.subr.bf16.mxu0 0
      %1779 = vmatpush1.bf16.msra.mxu0 0
      %1780 = vmatprep.subr.bf16.mxu0 0
      %1781 = vmatpush1.bf16.msra.mxu0 0
      %1782 = vmatprep.subr.bf16.mxu0 0
      %1783 = vmatpush1.bf16.msra.mxu0 0
      %1784 = vmatprep.mubr.bf16.mxu0 0
      %1785 = vmatmul.mubr.bf16.gmra.mrb[0].mxu0 %v1177
      %v1786 = vpop.f32.mrb[0].mxu0
      %v1787 = vadd.f32 %v1498, %v1786
      %v1788 = vpop.f32.mrb[0].mxu0
      %v1789 = vpop.f32.mrb[0].mxu0
      %v1790 = vadd.f32 %v1501, %v1789
      %v1791 = vpop.f32.mrb[0].mxu0
      %1792 = vmatprep.mubr.bf16.mxu0 0
      %1793 = vmatmul.mubr.bf16.gmra.mrb[0].mxu0 %v1180
      %v1794 = vpop.f32.mrb[0].mxu0
      %v1795 = vadd.f32 %v1506, %v1794
      %v1796 = vpop.f32.mrb[0].mxu0
      %v1797 = vpop.f32.mrb[0].mxu0
      %v1798 = vadd.f32 %v1509, %v1797
      %v1799 = vpop.f32.mrb[0].mxu0
      %1800 = vmatprep.mubr.bf16.mxu0 0
      %1801 = vmatmul.mubr.bf16.gmra.mrb[0].mxu0 %v1183
      %v1802 = vpop.f32.mrb[0].mxu0
      %v1803 = vadd.f32 %v1514, %v1802
      %v1804 = vpop.f32.mrb[0].mxu0
      %v1805 = vpop.f32.mrb[0].mxu0
      %v1806 = vadd.f32 %v1517, %v1805
      %v1807 = vpop.f32.mrb[0].mxu0
      %1808 = vmatprep.mubr.bf16.mxu0 0
      %1809 = vmatmul.mubr.bf16.gmra.mrb[0].mxu0 %v1186
      %v1810 = vpop.f32.mrb[0].mxu0
      %v1811 = vadd.f32 %v1522, %v1810
      %v1812 = vpop.f32.mrb[0].mxu0
      %v1813 = vpop.f32.mrb[0].mxu0
      %v1814 = vadd.f32 %v1525, %v1813
      %v1815 = vpop.f32.mrb[0].mxu0
      %1816 = vmatprep.mubr.bf16.mxu0 0
      %1817 = vmatmul.mubr.bf16.gmra.mrb[0].mxu0 %v1189
      %v1818 = vpop.f32.mrb[0].mxu0
      %v1819 = vadd.f32 %v1530, %v1818
      %v1820 = vpop.f32.mrb[0].mxu0
      %v1821 = vpop.f32.mrb[0].mxu0
      %v1822 = vadd.f32 %v1533, %v1821
      %v1823 = vpop.f32.mrb[0].mxu0
      %1824 = vmatprep.mubr.bf16.mxu0 0
      %1825 = vmatmul.mubr.bf16.gmra.mrb[0].mxu0 %v1192
      %v1826 = vpop.f32.mrb[0].mxu0
      %v1827 = vadd.f32 %v1538, %v1826
      %v1828 = vpop.f32.mrb[0].mxu0
      %v1829 = vpop.f32.mrb[0].mxu0
      %v1830 = vadd.f32 %v1541, %v1829
      %v1831 = vpop.f32.mrb[0].mxu0
      %1832 = vmatprep.mubr.bf16.mxu0 0
      %1833 = vmatmul.mubr.bf16.gmra.mrb[0].mxu0 %v1195
      %v1834 = vpop.f32.mrb[0].mxu0
      %v1835 = vadd.f32 %v1546, %v1834
      %v1836 = vpop.f32.mrb[0].mxu0
      %v1837 = vpop.f32.mrb[0].mxu0
      %v1838 = vadd.f32 %v1549, %v1837
      %v1839 = vpop.f32.mrb[0].mxu0
      %1840 = vmatprep.mubr.bf16.mxu0 0
      %1841 = vmatmul.mubr.bf16.gmra.mrb[0].mxu0 %v1198
      %v1842 = vpop.f32.mrb[0].mxu0
      %v1843 = vadd.f32 %v1554, %v1842
      %v1844 = vpop.f32.mrb[0].mxu0
      %v1845 = vpop.f32.mrb[0].mxu0
      %v1846 = vadd.f32 %v1557, %v1845
      %v1847 = vpop.f32.mrb[0].mxu0
      %1848 = vmatprep.mubr.bf16.mxu0 0
      %1849 = vmatmul.mubr.bf16.gmra.mrb[0].mxu0 %v1201
      %v1850 = vpop.f32.mrb[0].mxu0
      %v1851 = vadd.f32 %v1562, %v1850
      %v1852 = vpop.f32.mrb[0].mxu0
      %v1853 = vpop.f32.mrb[0].mxu0
      %v1854 = vadd.f32 %v1565, %v1853
      %v1855 = vpop.f32.mrb[0].mxu0
      %1856 = vmatprep.mubr.bf16.mxu0 0
      %1857 = vmatmul.mubr.bf16.gmra.mrb[0].mxu0 %v1204
      %v1858 = vpop.f32.mrb[0].mxu0
      %v1859 = vadd.f32 %v1570, %v1858
      %v1860 = vpop.f32.mrb[0].mxu0
      %v1861 = vpop.f32.mrb[0].mxu0
      %v1862 = vadd.f32 %v1573, %v1861
      %v1863 = vpop.f32.mrb[0].mxu0
      %1864 = vmatprep.mubr.bf16.mxu0 0
      %1865 = vmatmul.mubr.bf16.gmra.mrb[0].mxu0 %v1207
      %v1866 = vpop.f32.mrb[0].mxu0
      %v1867 = vadd.f32 %v1578, %v1866
      %v1868 = vpop.f32.mrb[0].mxu0
      %v1869 = vpop.f32.mrb[0].mxu0
      %v1870 = vadd.f32 %v1581, %v1869
      %v1871 = vpop.f32.mrb[0].mxu0
      %1872 = vmatprep.mubr.bf16.mxu0 0
      %1873 = vmatmul.mubr.bf16.gmra.mrb[0].mxu0 %v1210
      %v1874 = vpop.f32.mrb[0].mxu0
      %v1875 = vadd.f32 %v1586, %v1874
      %v1876 = vpop.f32.mrb[0].mxu0
      %v1877 = vpop.f32.mrb[0].mxu0
      %v1878 = vadd.f32 %v1589, %v1877
      %v1879 = vpop.f32.mrb[0].mxu0
      %1880 = vmatprep.mubr.bf16.mxu0 0
      %1881 = vmatmul.mubr.bf16.gmra.mrb[0].mxu0 %v1213
      %v1882 = vpop.f32.mrb[0].mxu0
      %v1883 = vadd.f32 %v1594, %v1882
      %v1884 = vpop.f32.mrb[0].mxu0
      %v1885 = vpop.f32.mrb[0].mxu0
      %v1886 = vadd.f32 %v1597, %v1885
      %v1887 = vpop.f32.mrb[0].mxu0
      %1888 = vmatprep.mubr.bf16.mxu0 0
      %1889 = vmatmul.mubr.bf16.gmra.mrb[0].mxu0 %v1216
      %v1890 = vpop.f32.mrb[0].mxu0
      %v1891 = vadd.f32 %v1602, %v1890
      %v1892 = vpop.f32.mrb[0].mxu0
      %v1893 = vpop.f32.mrb[0].mxu0
      %v1894 = vadd.f32 %v1605, %v1893
      %v1895 = vpop.f32.mrb[0].mxu0
      %1896 = vmatprep.mubr.bf16.mxu0 0
      %1897 = vmatmul.mubr.bf16.gmra.mrb[0].mxu0 %v1219
      %v1898 = vpop.f32.mrb[0].mxu0
      %v1899 = vadd.f32 %v1610, %v1898
      %v1900 = vpop.f32.mrb[0].mxu0
      %v1901 = vpop.f32.mrb[0].mxu0
      %v1902 = vadd.f32 %v1613, %v1901
      %v1903 = vpop.f32.mrb[0].mxu0
      %1904 = vmatprep.mubr.bf16.mxu0 0
      %1905 = vmatmul.mubr.bf16.gmra.mrb[0].mxu0 %v1222
      %v1906 = vpop.f32.mrb[0].mxu0
      %v1907 = vadd.f32 %v1618, %v1906
      %v1908 = vpop.f32.mrb[0].mxu0
      %v1909 = vpop.f32.mrb[0].mxu0
      %v1910 = vadd.f32 %v1621, %v1909
      %v1911 = vpop.f32.mrb[0].mxu0
      %1912 = vmatprep.mubr.bf16.mxu0 0
      %1913 = vmatmul.mubr.bf16.gmra.mrb[0].mxu0 %v1225
      %v1914 = vpop.f32.mrb[0].mxu0
      %v1915 = vadd.f32 %v1626, %v1914
      %v1916 = vpop.f32.mrb[0].mxu0
      %v1917 = vpop.f32.mrb[0].mxu0
      %v1918 = vadd.f32 %v1629, %v1917
      %v1919 = vpop.f32.mrb[0].mxu0
      %1920 = vmatprep.mubr.bf16.mxu0 0
      %1921 = vmatmul.mubr.bf16.gmra.mrb[0].mxu0 %v1228
      %v1922 = vpop.f32.mrb[0].mxu0
      %v1923 = vadd.f32 %v1634, %v1922
      %v1924 = vpop.f32.mrb[0].mxu0
      %v1925 = vpop.f32.mrb[0].mxu0
      %v1926 = vadd.f32 %v1637, %v1925
      %v1927 = vpop.f32.mrb[0].mxu0
      %1928 = vmatprep.mubr.bf16.mxu0 0
      %1929 = vmatmul.mubr.bf16.gmra.mrb[0].mxu0 %v1231
      %v1930 = vpop.f32.mrb[0].mxu0
      %v1931 = vadd.f32 %v1642, %v1930
      %v1932 = vpop.f32.mrb[0].mxu0
      %v1933 = vpop.f32.mrb[0].mxu0
      %v1934 = vadd.f32 %v1645, %v1933
      %v1935 = vpop.f32.mrb[0].mxu0
      %1936 = vmatprep.mubr.bf16.mxu0 0
      %1937 = vmatmul.mubr.bf16.gmra.mrb[0].mxu0 %v1234
      %v1938 = vpop.f32.mrb[0].mxu0
      %v1939 = vadd.f32 %v1650, %v1938
      %v1940 = vpop.f32.mrb[0].mxu0
      %v1941 = vpop.f32.mrb[0].mxu0
      %v1942 = vadd.f32 %v1653, %v1941
      %v1943 = vpop.f32.mrb[0].mxu0
      %1944 = vmatprep.mubr.bf16.mxu0 0
      %1945 = vmatmul.mubr.bf16.gmra.mrb[0].mxu0 %v1237
      %v1946 = vpop.f32.mrb[0].mxu0
      %v1947 = vadd.f32 %v1658, %v1946
      %v1948 = vpop.f32.mrb[0].mxu0
      %v1949 = vpop.f32.mrb[0].mxu0
      %v1950 = vadd.f32 %v1661, %v1949
      %v1951 = vpop.f32.mrb[0].mxu0
      %1952 = vmatprep.mubr.bf16.mxu0 0
      %1953 = vmatmul.mubr.bf16.gmra.mrb[0].mxu0 %v1240
      %v1954 = vpop.f32.mrb[0].mxu0
      %v1955 = vadd.f32 %v1666, %v1954
      %v1956 = vpop.f32.mrb[0].mxu0
      %v1957 = vpop.f32.mrb[0].mxu0
      %v1958 = vadd.f32 %v1669, %v1957
      %v1959 = vpop.f32.mrb[0].mxu0
      %1960 = vmatprep.mubr.bf16.mxu0 0
      %1961 = vmatmul.mubr.bf16.gmra.mrb[0].mxu0 %v1243
      %v1962 = vpop.f32.mrb[0].mxu0
      %v1963 = vadd.f32 %v1674, %v1962
      %v1964 = vpop.f32.mrb[0].mxu0
      %v1965 = vpop.f32.mrb[0].mxu0
      %v1966 = vadd.f32 %v1677, %v1965
      %v1967 = vpop.f32.mrb[0].mxu0
      %1968 = vmatprep.mubr.bf16.mxu0 0
      %1969 = vmatmul.mubr.bf16.gmra.mrb[0].mxu0 %v1246
      %v1970 = vpop.f32.mrb[0].mxu0
      %v1971 = vadd.f32 %v1682, %v1970
      %v1972 = vpop.f32.mrb[0].mxu0
      %v1973 = vpop.f32.mrb[0].mxu0
      %v1974 = vadd.f32 %v1685, %v1973
      %v1975 = vpop.f32.mrb[0].mxu0
      %1976 = vmatprep.mubr.bf16.mxu0 0
      %1977 = vmatmul.mubr.bf16.gmra.mrb[0].mxu0 %v1249
      %v1978 = vpop.f32.mrb[0].mxu0
      %v1979 = vadd.f32 %v1690, %v1978
      %v1980 = vpop.f32.mrb[0].mxu0
      %v1981 = vpop.f32.mrb[0].mxu0
      %v1982 = vadd.f32 %v1693, %v1981
      %v1983 = vpop.f32.mrb[0].mxu0
      %1984 = vmatprep.mubr.bf16.mxu0 0
      %1985 = vmatmul.mubr.bf16.gmra.mrb[0].mxu0 %v1252
      %v1986 = vpop.f32.mrb[0].mxu0
      %v1987 = vadd.f32 %v1698, %v1986
      %v1988 = vpop.f32.mrb[0].mxu0
      %v1989 = vpop.f32.mrb[0].mxu0
      %v1990 = vadd.f32 %v1701, %v1989
      %v1991 = vpop.f32.mrb[0].mxu0
      %1992 = vmatprep.mubr.bf16.mxu0 0
      %1993 = vmatmul.mubr.bf16.gmra.mrb[0].mxu0 %v1255
      %v1994 = vpop.f32.mrb[0].mxu0
      %v1995 = vadd.f32 %v1706, %v1994
      %v1996 = vpop.f32.mrb[0].mxu0
      %v1997 = vpop.f32.mrb[0].mxu0
      %v1998 = vadd.f32 %v1709, %v1997
      %v1999 = vpop.f32.mrb[0].mxu0
      %2000 = vmatprep.mubr.bf16.mxu0 0
      %2001 = vmatmul.mubr.bf16.gmra.mrb[0].mxu0 %v1258
      %v2002 = vpop.f32.mrb[0].mxu0
      %v2003 = vadd.f32 %v1714, %v2002
      %v2004 = vpop.f32.mrb[0].mxu0
      %v2005 = vpop.f32.mrb[0].mxu0
      %v2006 = vadd.f32 %v1717, %v2005
      %v2007 = vpop.f32.mrb[0].mxu0
      %2008 = vmatprep.mubr.bf16.mxu0 0
      %2009 = vmatmul.mubr.bf16.gmra.mrb[0].mxu0 %v1261
      %v2010 = vpop.f32.mrb[0].mxu0
      %v2011 = vadd.f32 %v1722, %v2010
      %v2012 = vpop.f32.mrb[0].mxu0
      %v2013 = vpop.f32.mrb[0].mxu0
      %v2014 = vadd.f32 %v1725, %v2013
      %v2015 = vpop.f32.mrb[0].mxu0
      %2016 = vmatprep.mubr.bf16.mxu0 0
      %2017 = vmatmul.mubr.bf16.gmra.mrb[0].mxu0 %v1264
      %v2018 = vpop.f32.mrb[0].mxu0
      %v2019 = vadd.f32 %v1730, %v2018
      %v2020 = vpop.f32.mrb[0].mxu0
      %v2021 = vpop.f32.mrb[0].mxu0
      %v2022 = vadd.f32 %v1733, %v2021
      %v2023 = vpop.f32.mrb[0].mxu0
      %2024 = vmatprep.mubr.bf16.mxu0 0
      %2025 = vmatmul.mubr.bf16.gmra.mrb[0].mxu0 %v1267
      %v2026 = vpop.f32.mrb[0].mxu0
      %v2027 = vadd.f32 %v1738, %v2026
      %v2028 = vpop.f32.mrb[0].mxu0
      %v2029 = vpop.f32.mrb[0].mxu0
      %v2030 = vadd.f32 %v1741, %v2029
      %v2031 = vpop.f32.mrb[0].mxu0
      %2032 = vmatprep.mubr.bf16.mxu0 0
      %2033 = vmatmul.mubr.bf16.gmra.mrb[0].mxu0 %v1270
      %v2034 = vpop.f32.mrb[0].mxu0
      %v2035 = vadd.f32 %v1746, %v2034
      %v2036 = vpop.f32.mrb[0].mxu0
      %v2037 = vpop.f32.mrb[0].mxu0
      %v2038 = vadd.f32 %v1749, %v2037
      %v2039 = vpop.f32.mrb[0].mxu0
      %2040 = vdwg.mxu0
      %v2041 = vpack.c.bf16 %v1790, %v1787
      %v2042 = vpack.c.bf16 %v1798, %v1795
      %v2043 = vpack.c.bf16 %v1806, %v1803
      %v2044 = vpack.c.bf16 %v1814, %v1811
      %v2045 = vpack.c.bf16 %v1822, %v1819
      %v2046 = vpack.c.bf16 %v1830, %v1827
      %v2047 = vpack.c.bf16 %v1838, %v1835
      %v2048 = vpack.c.bf16 %v1846, %v1843
      %v2049 = vpack.c.bf16 %v1854, %v1851
      %v2050 = vpack.c.bf16 %v1862, %v1859
      %v2051 = vpack.c.bf16 %v1870, %v1867
      %v2052 = vpack.c.bf16 %v1878, %v1875
      %v2053 = vpack.c.bf16 %v1886, %v1883
      %v2054 = vpack.c.bf16 %v1894, %v1891
      %v2055 = vpack.c.bf16 %v1902, %v1899
      %v2056 = vpack.c.bf16 %v1910, %v1907
      %v2057 = vpack.c.bf16 %v1918, %v1915
      %v2058 = vpack.c.bf16 %v1926, %v1923
      %v2059 = vpack.c.bf16 %v1934, %v1931
      %v2060 = vpack.c.bf16 %v1942, %v1939
      %v2061 = vpack.c.bf16 %v1950, %v1947
      %v2062 = vpack.c.bf16 %v1958, %v1955
      %v2063 = vpack.c.bf16 %v1966, %v1963
      %v2064 = vpack.c.bf16 %v1974, %v1971
      %v2065 = vpack.c.bf16 %v1982, %v1979
      %v2066 = vpack.c.bf16 %v1990, %v1987
      %v2067 = vpack.c.bf16 %v1998, %v1995
      %v2068 = vpack.c.bf16 %v2006, %v2003
      %v2069 = vpack.c.bf16 %v2014, %v2011
      %v2070 = vpack.c.bf16 %v2022, %v2019
      %v2071 = vpack.c.bf16 %v2030, %v2027
      %v2072 = vpack.c.bf16 %v2038, %v2035
      %v2105 = vunpack.c.l.b16 %v2041
      %v2106 = vunpack.c.h.b16 %v2041
      %v2107 = vunpack.c.l.b16 %v2042
      %v2108 = vunpack.c.h.b16 %v2042
      %v2109 = vunpack.c.l.b16 %v2043
      %v2110 = vunpack.c.h.b16 %v2043
      %v2111 = vunpack.c.l.b16 %v2044
      %v2112 = vunpack.c.h.b16 %v2044
      %v2113 = vunpack.c.l.b16 %v2045
      %v2114 = vunpack.c.h.b16 %v2045
      %v2115 = vunpack.c.l.b16 %v2046
      %v2116 = vunpack.c.h.b16 %v2046
      %v2117 = vunpack.c.l.b16 %v2047
      %v2118 = vunpack.c.h.b16 %v2047
      %v2119 = vunpack.c.l.b16 %v2048
      %v2120 = vunpack.c.h.b16 %v2048
      %v2121 = vunpack.c.l.b16 %v2049
      %v2122 = vunpack.c.h.b16 %v2049
      %v2123 = vunpack.c.l.b16 %v2050
      %v2124 = vunpack.c.h.b16 %v2050
      %v2125 = vunpack.c.l.b16 %v2051
      %v2126 = vunpack.c.h.b16 %v2051
      %v2127 = vunpack.c.l.b16 %v2052
      %v2128 = vunpack.c.h.b16 %v2052
      %v2129 = vunpack.c.l.b16 %v2053
      %v2130 = vunpack.c.h.b16 %v2053
      %v2131 = vunpack.c.l.b16 %v2054
      %v2132 = vunpack.c.h.b16 %v2054
      %v2133 = vunpack.c.l.b16 %v2055
      %v2134 = vunpack.c.h.b16 %v2055
      %v2135 = vunpack.c.l.b16 %v2056
      %v2136 = vunpack.c.h.b16 %v2056
      %v2137 = vunpack.c.l.b16 %v2057
      %v2138 = vunpack.c.h.b16 %v2057
      %v2139 = vunpack.c.l.b16 %v2058
      %v2140 = vunpack.c.h.b16 %v2058
      %v2141 = vunpack.c.l.b16 %v2059
      %v2142 = vunpack.c.h.b16 %v2059
      %v2143 = vunpack.c.l.b16 %v2060
      %v2144 = vunpack.c.h.b16 %v2060
      %v2145 = vunpack.c.l.b16 %v2061
      %v2146 = vunpack.c.h.b16 %v2061
      %v2147 = vunpack.c.l.b16 %v2062
      %v2148 = vunpack.c.h.b16 %v2062
      %v2149 = vunpack.c.l.b16 %v2063
      %v2150 = vunpack.c.h.b16 %v2063
      %v2151 = vunpack.c.l.b16 %v2064
      %v2152 = vunpack.c.h.b16 %v2064
      %v2153 = vunpack.c.l.b16 %v2065
      %v2154 = vunpack.c.h.b16 %v2065
      %v2155 = vunpack.c.l.b16 %v2066
      %v2156 = vunpack.c.h.b16 %v2066
      %v2157 = vunpack.c.l.b16 %v2067
      %v2158 = vunpack.c.h.b16 %v2067
      %v2159 = vunpack.c.l.b16 %v2068
      %v2160 = vunpack.c.h.b16 %v2068
      %v2161 = vunpack.c.l.b16 %v2069
      %v2162 = vunpack.c.h.b16 %v2069
      %v2163 = vunpack.c.l.b16 %v2070
      %v2164 = vunpack.c.h.b16 %v2070
      %v2165 = vunpack.c.l.b16 %v2071
      %v2166 = vunpack.c.h.b16 %v2071
      %v2167 = vunpack.c.l.b16 %v2072
      %v2168 = vunpack.c.h.b16 %v2072
      %v2169 = vpack.c.b16 %v2105, %v2105
      %v2170 = vpack.c.b16 %v2106, %v2106
      %v2171 = vpack.c.b16 %v2107, %v2107
      %v2172 = vpack.c.b16 %v2108, %v2108
      %v2173 = vpack.c.b16 %v2109, %v2109
      %v2174 = vpack.c.b16 %v2110, %v2110
      %v2175 = vpack.c.b16 %v2111, %v2111
      %v2176 = vpack.c.b16 %v2112, %v2112
      %v2177 = vpack.c.b16 %v2113, %v2113
      %v2178 = vpack.c.b16 %v2114, %v2114
      %v2179 = vpack.c.b16 %v2115, %v2115
      %v2180 = vpack.c.b16 %v2116, %v2116
      %v2181 = vpack.c.b16 %v2117, %v2117
      %v2182 = vpack.c.b16 %v2118, %v2118
      %v2183 = vpack.c.b16 %v2119, %v2119
      %v2184 = vpack.c.b16 %v2120, %v2120
      %v2185 = vpack.c.b16 %v2121, %v2121
      %v2186 = vpack.c.b16 %v2122, %v2122
      %v2187 = vpack.c.b16 %v2123, %v2123
      %v2188 = vpack.c.b16 %v2124, %v2124
      %v2189 = vpack.c.b16 %v2125, %v2125
      %v2190 = vpack.c.b16 %v2126, %v2126
      %v2191 = vpack.c.b16 %v2127, %v2127
      %v2192 = vpack.c.b16 %v2128, %v2128
      %v2193 = vpack.c.b16 %v2129, %v2129
      %v2194 = vpack.c.b16 %v2130, %v2130
      %v2195 = vpack.c.b16 %v2131, %v2131
      %v2196 = vpack.c.b16 %v2132, %v2132
      %v2197 = vpack.c.b16 %v2133, %v2133
      %v2198 = vpack.c.b16 %v2134, %v2134
      %v2199 = vpack.c.b16 %v2135, %v2135
      %v2200 = vpack.c.b16 %v2136, %v2136
      %v2201 = vpack.c.b16 %v2137, %v2137
      %v2202 = vpack.c.b16 %v2138, %v2138
      %v2203 = vpack.c.b16 %v2139, %v2139
      %v2204 = vpack.c.b16 %v2140, %v2140
      %v2205 = vpack.c.b16 %v2141, %v2141
      %v2206 = vpack.c.b16 %v2142, %v2142
      %v2207 = vpack.c.b16 %v2143, %v2143
      %v2208 = vpack.c.b16 %v2144, %v2144
      %v2209 = vpack.c.b16 %v2145, %v2145
      %v2210 = vpack.c.b16 %v2146, %v2146
      %v2211 = vpack.c.b16 %v2147, %v2147
      %v2212 = vpack.c.b16 %v2148, %v2148
      %v2213 = vpack.c.b16 %v2149, %v2149
      %v2214 = vpack.c.b16 %v2150, %v2150
      %v2215 = vpack.c.b16 %v2151, %v2151
      %v2216 = vpack.c.b16 %v2152, %v2152
      %v2217 = vpack.c.b16 %v2153, %v2153
      %v2218 = vpack.c.b16 %v2154, %v2154
      %v2219 = vpack.c.b16 %v2155, %v2155
      %v2220 = vpack.c.b16 %v2156, %v2156
      %v2221 = vpack.c.b16 %v2157, %v2157
      %v2222 = vpack.c.b16 %v2158, %v2158
      %v2223 = vpack.c.b16 %v2159, %v2159
      %v2224 = vpack.c.b16 %v2160, %v2160
      %v2225 = vpack.c.b16 %v2161, %v2161
      %v2226 = vpack.c.b16 %v2162, %v2162
      %v2227 = vpack.c.b16 %v2163, %v2163
      %v2228 = vpack.c.b16 %v2164, %v2164
      %v2229 = vpack.c.b16 %v2165, %v2165
      %v2230 = vpack.c.b16 %v2166, %v2166
      %v2231 = vpack.c.b16 %v2167, %v2167
      %v2232 = vpack.c.b16 %v2168, %v2168
      %2297 = vst [vmem:[%s254] sm:$0xf] %v2169
      %2298 = vst [vmem:[%s254 + $0x4] sm:$0xf] %v2170
      %2299 = vst [vmem:[%s254 + $0x8] sm:$0xf] %v2171
      %2300 = vst [vmem:[%s254 + $0xc] sm:$0xf] %v2172
      %2301 = vst [vmem:[%s254 + $0x10] sm:$0xf] %v2173
      %2302 = vst [vmem:[%s254 + $0x14] sm:$0xf] %v2174
      %2303 = vst [vmem:[%s254 + $0x18] sm:$0xf] %v2175
      %2304 = vst [vmem:[%s254 + $0x1c] sm:$0xf] %v2176
      %2305 = vst [vmem:[%s254 + $0x20] sm:$0xf] %v2177
      %2306 = vst [vmem:[%s254 + $0x24] sm:$0xf] %v2178
      %2307 = vst [vmem:[%s254 + $0x28] sm:$0xf] %v2179
      %2308 = vst [vmem:[%s254 + $0x2c] sm:$0xf] %v2180
      %2309 = vst [vmem:[%s254 + $0x30] sm:$0xf] %v2181
      %2310 = vst [vmem:[%s254 + $0x34] sm:$0xf] %v2182
      %2311 = vst [vmem:[%s254 + $0x38] sm:$0xf] %v2183
      %2312 = vst [vmem:[%s254 + $0x3c] sm:$0xf] %v2184
      %2313 = vst [vmem:[%s254 + $0x40] sm:$0xf] %v2185
      %2314 = vst [vmem:[%s254 + $0x44] sm:$0xf] %v2186
      %2315 = vst [vmem:[%s254 + $0x48] sm:$0xf] %v2187
      %2316 = vst [vmem:[%s254 + $0x4c] sm:$0xf] %v2188
      %2317 = vst [vmem:[%s254 + $0x50] sm:$0xf] %v2189
      %2318 = vst [vmem:[%s254 + $0x54] sm:$0xf] %v2190
      %2319 = vst [vmem:[%s254 + $0x58] sm:$0xf] %v2191
      %2320 = vst [vmem:[%s254 + $0x5c] sm:$0xf] %v2192
      %2321 = vst [vmem:[%s254 + $0x60] sm:$0xf] %v2193
      %2322 = vst [vmem:[%s254 + $0x64] sm:$0xf] %v2194
      %2323 = vst [vmem:[%s254 + $0x68] sm:$0xf] %v2195
      %2324 = vst [vmem:[%s254 + $0x6c] sm:$0xf] %v2196
      %2325 = vst [vmem:[%s254 + $0x70] sm:$0xf] %v2197
      %2326 = vst [vmem:[%s254 + $0x74] sm:$0xf] %v2198
      %2327 = vst [vmem:[%s254 + $0x78] sm:$0xf] %v2199
      %2328 = vst [vmem:[%s254 + $0x7c] sm:$0xf] %v2200
      %2329 = vst [vmem:[%s254 + $0x80] sm:$0xf] %v2201
      %2330 = vst [vmem:[%s254 + $0x84] sm:$0xf] %v2202
      %2331 = vst [vmem:[%s254 + $0x88] sm:$0xf] %v2203
      %2332 = vst [vmem:[%s254 + $0x8c] sm:$0xf] %v2204
      %2333 = vst [vmem:[%s254 + $0x90] sm:$0xf] %v2205
      %2334 = vst [vmem:[%s254 + $0x94] sm:$0xf] %v2206
      %2335 = vst [vmem:[%s254 + $0x98] sm:$0xf] %v2207
      %2336 = vst [vmem:[%s254 + $0x9c] sm:$0xf] %v2208
      %2337 = vst [vmem:[%s254 + $0xa0] sm:$0xf] %v2209
      %2338 = vst [vmem:[%s254 + $0xa4] sm:$0xf] %v2210
      %2339 = vst [vmem:[%s254 + $0xa8] sm:$0xf] %v2211
      %2340 = vst [vmem:[%s254 + $0xac] sm:$0xf] %v2212
      %2341 = vst [vmem:[%s254 + $0xb0] sm:$0xf] %v2213
      %2342 = vst [vmem:[%s254 + $0xb4] sm:$0xf] %v2214
      %2343 = vst [vmem:[%s254 + $0xb8] sm:$0xf] %v2215
      %2344 = vst [vmem:[%s254 + $0xbc] sm:$0xf] %v2216
      %2345 = vst [vmem:[%s254 + $0xc0] sm:$0xf] %v2217
      %2346 = vst [vmem:[%s254 + $0xc4] sm:$0xf] %v2218
      %2347 = vst [vmem:[%s254 + $0xc8] sm:$0xf] %v2219
      %2348 = vst [vmem:[%s254 + $0xcc] sm:$0xf] %v2220
      %2349 = vst [vmem:[%s254 + $0xd0] sm:$0xf] %v2221
      %2350 = vst [vmem:[%s254 + $0xd4] sm:$0xf] %v2222
      %2351 = vst [vmem:[%s254 + $0xd8] sm:$0xf] %v2223
      %2352 = vst [vmem:[%s254 + $0xdc] sm:$0xf] %v2224
      %2353 = vst [vmem:[%s254 + $0xe0] sm:$0xf] %v2225
      %2354 = vst [vmem:[%s254 + $0xe4] sm:$0xf] %v2226
      %2355 = vst [vmem:[%s254 + $0xe8] sm:$0xf] %v2227
      %2356 = vst [vmem:[%s254 + $0xec] sm:$0xf] %v2228
      %2357 = vst [vmem:[%s254 + $0xf0] sm:$0xf] %v2229
      %2358 = vst [vmem:[%s254 + $0xf4] sm:$0xf] %v2230
      %2359 = vst [vmem:[%s254 + $0xf8] sm:$0xf] %v2231
      %2360 = vst [vmem:[%s254 + $0xfc] sm:$0xf] %v2232
      // Predicated region
      $region37: #{resnet_block.5} parent=35 // pred_check
        %p2361 = pneg %p261
      $region38: #{resnet_block.5} parent=35 // pred_check_branch
        %2363 = sbr.rel (%p2361) target = $region40
      $region39: #{resnet_block.5} parent=35 // pred_region
        %2364 = vst [vmem:[%s259] sm:$0x3] 0.0
      $region40: #{resnet_block.5} parent=35 // pred_fallthru
        _
      %v2365 = vadd.f32 %v1787, %v1790
      %v2366 = vadd.f32 %v2365, %v1795
      %v2367 = vadd.f32 %v2366, %v1798
      %v2368 = vadd.f32 %v2367, %v1803
      %v2369 = vadd.f32 %v2368, %v1806
      %v2370 = vadd.f32 %v2369, %v1811
      %v2371 = vadd.f32 %v2370, %v1814
      %v2372 = vadd.f32 %v2371, %v1819
      %v2373 = vadd.f32 %v2372, %v1822
      %v2374 = vadd.f32 %v2373, %v1827
      %v2375 = vadd.f32 %v2374, %v1830
      %v2376 = vadd.f32 %v2375, %v1835
      %v2377 = vadd.f32 %v2376, %v1838
      %v2378 = vadd.f32 %v2377, %v1843
      %v2379 = vadd.f32 %v2378, %v1846
      %v2380 = vadd.f32 %v2379, %v1851
      %v2381 = vadd.f32 %v2380, %v1854
      %v2382 = vadd.f32 %v2381, %v1859
      %v2383 = vadd.f32 %v2382, %v1862
      %v2384 = vadd.f32 %v2383, %v1867
      %v2385 = vadd.f32 %v2384, %v1870
      %v2386 = vadd.f32 %v2385, %v1875
      %v2387 = vadd.f32 %v2386, %v1878
      %v2388 = vadd.f32 %v2387, %v1883
      %v2389 = vadd.f32 %v2388, %v1886
      %v2390 = vadd.f32 %v2389, %v1891
      %v2391 = vadd.f32 %v2390, %v1894
      %v2392 = vadd.f32 %v2391, %v1899
      %v2393 = vadd.f32 %v2392, %v1902
      %v2394 = vadd.f32 %v2393, %v1907
      %v2395 = vadd.f32 %v2394, %v1910
      %v2396 = vadd.f32 %v2395, %v1915
      %v2397 = vadd.f32 %v2396, %v1918
      %v2398 = vadd.f32 %v2397, %v1923
      %v2399 = vadd.f32 %v2398, %v1926
      %v2400 = vadd.f32 %v2399, %v1931
      %v2401 = vadd.f32 %v2400, %v1934
      %v2402 = vadd.f32 %v2401, %v1939
      %v2403 = vadd.f32 %v2402, %v1942
      %v2404 = vadd.f32 %v2403, %v1947
      %v2405 = vadd.f32 %v2404, %v1950
      %v2406 = vadd.f32 %v2405, %v1955
      %v2407 = vadd.f32 %v2406, %v1958
      %v2408 = vadd.f32 %v2407, %v1963
      %v2409 = vadd.f32 %v2408, %v1966
      %v2410 = vadd.f32 %v2409, %v1971
      %v2411 = vadd.f32 %v2410, %v1974
      %v2412 = vadd.f32 %v2411, %v1979
      %v2413 = vadd.f32 %v2412, %v1982
      %v2414 = vadd.f32 %v2413, %v1987
      %v2415 = vadd.f32 %v2414, %v1990
      %v2416 = vadd.f32 %v2415, %v1995
      %v2417 = vadd.f32 %v2416, %v1998
      %v2418 = vadd.f32 %v2417, %v2003
      %v2419 = vadd.f32 %v2418, %v2006
      %v2420 = vadd.f32 %v2419, %v2011
      %v2421 = vadd.f32 %v2420, %v2014
      %v2422 = vadd.f32 %v2421, %v2019
      %v2423 = vadd.f32 %v2422, %v2022
      %v2424 = vadd.f32 %v2423, %v2027
      %v2425 = vadd.f32 %v2424, %v2030
      %v2426 = vadd.f32 %v2425, %v2035
      %v2427 = vadd.f32 %v2426, %v2038
      %v2428 = vrot.slane %v2427, 4
      %v2429 = vadd.f32 %v2427, %v2428
      %v2430 = vrot.slane %v2429, 2
      %v2431 = vadd.f32 %v2429, %v2430
      %v2432 = vrot.slane %v2431, 1
      %v2433 = vadd.f32 %v2431, %v2432
      %v2434 = vmul.f32 %v1787, %v1787
      %v2435 = vmul.f32 %v1790, %v1790
      %v2436 = vmul.f32 %v1795, %v1795
      %v2437 = vmul.f32 %v1798, %v1798
      %v2438 = vmul.f32 %v1803, %v1803
      %v2439 = vmul.f32 %v1806, %v1806
      %v2440 = vmul.f32 %v1811, %v1811
      %v2441 = vmul.f32 %v1814, %v1814
      %v2442 = vmul.f32 %v1819, %v1819
      %v2443 = vmul.f32 %v1822, %v1822
      %v2444 = vmul.f32 %v1827, %v1827
      %v2445 = vmul.f32 %v1830, %v1830
      %v2446 = vmul.f32 %v1835, %v1835
      %v2447 = vmul.f32 %v1838, %v1838
      %v2448 = vmul.f32 %v1843, %v1843
      %v2449 = vmul.f32 %v1846, %v1846
      %v2450 = vmul.f32 %v1851, %v1851
      %v2451 = vmul.f32 %v1854, %v1854
      %v2452 = vmul.f32 %v1859, %v1859
      %v2453 = vmul.f32 %v1862, %v1862
      %v2454 = vmul.f32 %v1867, %v1867
      %v2455 = vmul.f32 %v1870, %v1870
      %v2456 = vmul.f32 %v1875, %v1875
      %v2457 = vmul.f32 %v1878, %v1878
      %v2458 = vmul.f32 %v1883, %v1883
      %v2459 = vmul.f32 %v1886, %v1886
      %v2460 = vmul.f32 %v1891, %v1891
      %v2461 = vmul.f32 %v1894, %v1894
      %v2462 = vmul.f32 %v1899, %v1899
      %v2463 = vmul.f32 %v1902, %v1902
      %v2464 = vmul.f32 %v1907, %v1907
      %v2465 = vmul.f32 %v1910, %v1910
      %v2466 = vmul.f32 %v1915, %v1915
      %v2467 = vmul.f32 %v1918, %v1918
      %v2468 = vmul.f32 %v1923, %v1923
      %v2469 = vmul.f32 %v1926, %v1926
      %v2470 = vmul.f32 %v1931, %v1931
      %v2471 = vmul.f32 %v1934, %v1934
      %v2472 = vmul.f32 %v1939, %v1939
      %v2473 = vmul.f32 %v1942, %v1942
      %v2474 = vmul.f32 %v1947, %v1947
      %v2475 = vmul.f32 %v1950, %v1950
      %v2476 = vmul.f32 %v1955, %v1955
      %v2477 = vmul.f32 %v1958, %v1958
      %v2478 = vmul.f32 %v1963, %v1963
      %v2479 = vmul.f32 %v1966, %v1966
      %v2480 = vmul.f32 %v1971, %v1971
      %v2481 = vmul.f32 %v1974, %v1974
      %v2482 = vmul.f32 %v1979, %v1979
      %v2483 = vmul.f32 %v1982, %v1982
      %v2484 = vmul.f32 %v1987, %v1987
      %v2485 = vmul.f32 %v1990, %v1990
      %v2486 = vmul.f32 %v1995, %v1995
      %v2487 = vmul.f32 %v1998, %v1998
      %v2488 = vmul.f32 %v2003, %v2003
      %v2489 = vmul.f32 %v2006, %v2006
      %v2490 = vmul.f32 %v2011, %v2011
      %v2491 = vmul.f32 %v2014, %v2014
      %v2492 = vmul.f32 %v2019, %v2019
      %v2493 = vmul.f32 %v2022, %v2022
      %v2494 = vmul.f32 %v2027, %v2027
      %v2495 = vmul.f32 %v2030, %v2030
      %v2496 = vmul.f32 %v2035, %v2035
      %v2497 = vmul.f32 %v2038, %v2038
      %v2498 = vadd.f32 %v2434, %v2435
      %v2499 = vadd.f32 %v2498, %v2436
      %v2500 = vadd.f32 %v2499, %v2437
      %v2501 = vadd.f32 %v2500, %v2438
      %v2502 = vadd.f32 %v2501, %v2439
      %v2503 = vadd.f32 %v2502, %v2440
      %v2504 = vadd.f32 %v2503, %v2441
      %v2505 = vadd.f32 %v2504, %v2442
      %v2506 = vadd.f32 %v2505, %v2443
      %v2507 = vadd.f32 %v2506, %v2444
      %v2508 = vadd.f32 %v2507, %v2445
      %v2509 = vadd.f32 %v2508, %v2446
      %v2510 = vadd.f32 %v2509, %v2447
      %v2511 = vadd.f32 %v2510, %v2448
      %v2512 = vadd.f32 %v2511, %v2449
      %v2513 = vadd.f32 %v2512, %v2450
      %v2514 = vadd.f32 %v2513, %v2451
      %v2515 = vadd.f32 %v2514, %v2452
      %v2516 = vadd.f32 %v2515, %v2453
      %v2517 = vadd.f32 %v2516, %v2454
      %v2518 = vadd.f32 %v2517, %v2455
      %v2519 = vadd.f32 %v2518, %v2456
      %v2520 = vadd.f32 %v2519, %v2457
      %v2521 = vadd.f32 %v2520, %v2458
      %v2522 = vadd.f32 %v2521, %v2459
      %v2523 = vadd.f32 %v2522, %v2460
      %v2524 = vadd.f32 %v2523, %v2461
      %v2525 = vadd.f32 %v2524, %v2462
      %v2526 = vadd.f32 %v2525, %v2463
      %v2527 = vadd.f32 %v2526, %v2464
      %v2528 = vadd.f32 %v2527, %v2465
      %v2529 = vadd.f32 %v2528, %v2466
      %v2530 = vadd.f32 %v2529, %v2467
      %v2531 = vadd.f32 %v2530, %v2468
      %v2532 = vadd.f32 %v2531, %v2469
      %v2533 = vadd.f32 %v2532, %v2470
      %v2534 = vadd.f32 %v2533, %v2471
      %v2535 = vadd.f32 %v2534, %v2472
      %v2536 = vadd.f32 %v2535, %v2473
      %v2537 = vadd.f32 %v2536, %v2474
      %v2538 = vadd.f32 %v2537, %v2475
      %v2539 = vadd.f32 %v2538, %v2476
      %v2540 = vadd.f32 %v2539, %v2477
      %v2541 = vadd.f32 %v2540, %v2478
      %v2542 = vadd.f32 %v2541, %v2479
      %v2543 = vadd.f32 %v2542, %v2480
      %v2544 = vadd.f32 %v2543, %v2481
      %v2545 = vadd.f32 %v2544, %v2482
      %v2546 = vadd.f32 %v2545, %v2483
      %v2547 = vadd.f32 %v2546, %v2484
      %v2548 = vadd.f32 %v2547, %v2485
      %v2549 = vadd.f32 %v2548, %v2486
      %v2550 = vadd.f32 %v2549, %v2487
      %v2551 = vadd.f32 %v2550, %v2488
      %v2552 = vadd.f32 %v2551, %v2489
      %v2553 = vadd.f32 %v2552, %v2490
      %v2554 = vadd.f32 %v2553, %v2491
      %v2555 = vadd.f32 %v2554, %v2492
      %v2556 = vadd.f32 %v2555, %v2493
      %v2557 = vadd.f32 %v2556, %v2494
      %v2558 = vadd.f32 %v2557, %v2495
      %v2559 = vadd.f32 %v2558, %v2496
      %v2560 = vadd.f32 %v2559, %v2497
      %v2561 = vrot.slane %v2560, 4
      %v2562 = vadd.f32 %v2560, %v2561
      %v2563 = vrot.slane %v2562, 2
      %v2564 = vadd.f32 %v2562, %v2563
      %v2565 = vrot.slane %v2564, 1
      %v2566 = vadd.f32 %v2564, %v2565
      %vm2567 = vcmask 1040384
      %v2568 = vsel %vm2567, %v2433, %v2566
      %v2569 = vld [vmem:[%s259] sm:$0x3]
      %v2570 = vadd.f32 %v2569, %v2568
      %2571 = vst [vmem:[%s259] sm:$0x3] %v2570
      %s2572 = sadd.s32 %s21, %s22
      %p2573 = scmp.lt.s32.totalorder %s2572, 1
      %s2574 = scalar_select %p2573, %s2572, 1
      %s2575 = smul.addr %s2574, 64
      %s2576 = smul.addr %s2575, 4
      %s2577 = scalar_lea.vmem %s4, %s2576
      %p2578 = scmp.lt.s32.totalorder %s21, 1
      %s2579 = scalar_select %p2578, %s21, 1
      %s2580 = smul.addr %s2579, 2
      %s2581 = scalar_lea.vmem %s5, %s2580
      // Predicated region
      $region41: #{resnet_block.5} parent=35 // pred_check
        %p2582 = pneg %p140
      $region42: #{resnet_block.5} parent=35 // pred_check_branch
        %2584 = sbr.rel (%p2582) target = $region44
      $region43: #{resnet_block.5} parent=35 // pred_region
        %s2585 = sadd.s32 %s21, %s22
      $region44: #{resnet_block.5} parent=35 // pred_fallthru
        _
      // Predicated region
      $region45: #{resnet_block.5} parent=35 // pred_check
        %p2586 = pneg %p166
      $region46: #{resnet_block.5} parent=35 // pred_check_branch
        %2588 = sbr.rel (%p2586) target = $region48
      $region47: #{resnet_block.5} parent=35 // pred_region
        _
      $region48: #{resnet_block.5} parent=35 // pred_fallthru
        _
    $region36: #{resnet_block.5} parent=5 // pred_fallthru
      _
    %p2589 = scmp.le.s32.totalorder 2, %s12
    // Predicated region
    $region49: #{resnet_block.5} parent=5 // pred_check
      %p2590 = pneg %p2589
    $region50: #{resnet_block.5} parent=5 // pred_check_branch
      %2592 = sbr.rel (%p2590) target = $region52
    $region51: #{resnet_block.5} parent=5 // pred_region
      %s2593 = ssub.s32 %s12, 2
      // Predicated region
      $region53: #{resnet_block.5} parent=51 // pred_check
        %p2594 = pneg %p146
      $region54: #{resnet_block.5} parent=51 // pred_check_branch
        %2596 = sbr.rel (%p2594) target = $region56
      $region55: #{resnet_block.5} parent=51 // pred_region
        %s2597 = sadd.s32 %s23, %s24
        %p2598 = scmp.lt.s32.totalorder %s2597, 1
        %s2599 = scalar_select %p2598, %s2597, 1
        %s2600 = smul.addr %s2599, 64
        %s2601 = smul.addr %s2600, 4
        %s2602 = scalar_lea.vmem %s4, %s2601
      $region56: #{resnet_block.5} parent=51 // pred_fallthru
        _
      // Predicated region
      $region57: #{resnet_block.5} parent=51 // pred_check
        %p2603 = pneg %p172
      $region58: #{resnet_block.5} parent=51 // pred_check_branch
        %2605 = sbr.rel (%p2603) target = $region60
      $region59: #{resnet_block.5} parent=51 // pred_region
        %p2606 = scmp.lt.s32.totalorder %s23, 1
        %s2607 = scalar_select %p2606, %s23, 1
        %s2608 = smul.addr %s2607, 2
        %s2609 = scalar_lea.vmem %s5, %s2608
      $region60: #{resnet_block.5} parent=51 // pred_fallthru
        _
    $region52: #{resnet_block.5} parent=5 // pred_fallthru
      _
  $region6: #{resnet_block.5} parent=0 // loop_footer
    %s16 = sadd.s32 1, %s12
  $region7: #{resnet_block.5} parent=0 // loop_footer_branch
    %11 = sbr.rel target = $region3
  $region8: #{resnet_block.5} parent=0 // loop_exit
    _

</llo_original>
